<compile_context>
chip_gen: v5e
topology: v5e:2x2
jax: 0.10.0
libtpu: 0.0.40
codegen_flags: <defaults>
</compile_context>

<pallas_src>
import math

import jax
import jax.numpy as jnp
from jax.experimental import pallas as pl
from jax.experimental.pallas import tpu as pltpu

LATENT_DIMS = 2
IN_DIM = 784            # 1 * 28 * 28
PAD_DIM = 896           # 7 * 128 (lane-aligned output feature dim)
HID_DIM = 512


# --------------------------------------------------------------------------
# Kernel
# --------------------------------------------------------------------------
def autoencoder_kernel(x_ref,                 # (bm, 784)  bf16
                       w1_ref, b1_ref,        # (784,512) bf16, (1,512) f32
                       w23_ref, b23_ref,      # (512,512) bf16, (1,512) f32   (fused latent)
                       w4_ref, b4_ref,        # (512,896) bf16, (1,896) f32
                       out_ref):              # (bm, 896) f32
    x = x_ref[...]

    # Encoder linear1 + ReLU (bf16 MXU, f32 accumulation)
    h1 = jnp.dot(x, w1_ref[...], preferred_element_type=jnp.float32) + b1_ref[...]
    h1 = jnp.maximum(h1, 0.0).astype(jnp.bfloat16)

    # Fused (encoder linear2 -> decoder linear1) + ReLU
    h2 = jnp.dot(h1, w23_ref[...], preferred_element_type=jnp.float32) + b23_ref[...]
    h2 = jnp.maximum(h2, 0.0).astype(jnp.bfloat16)

    # Decoder linear2 + sigmoid
    y = jnp.dot(h2, w4_ref[...], preferred_element_type=jnp.float32) + b4_ref[...]
    out_ref[...] = jax.nn.sigmoid(y).astype(out_ref.dtype)


# --------------------------------------------------------------------------
# Wrapper
# --------------------------------------------------------------------------
def prepare_params(params):
    """One-time weight preprocessing (fusion, padding, bf16 cast) — hoisted out
    of the per-call forward path."""
    (w1, b1), (w2, b2), (w3, b3), (w4, b4) = params

    # Fuse the two latent matmuls (no nonlinearity between them): exact.
    w23 = (w2 @ w3).astype(jnp.bfloat16)                 # (512, 512)
    b23 = (b2 @ w3 + b3).astype(jnp.float32)             # (1, 512)

    # Pad only the decoder output feature dim 784 -> 896 (7*128).
    fpad = PAD_DIM - IN_DIM
    w4p = jnp.pad(w4, ((0, 0), (0, fpad))).astype(jnp.bfloat16)   # (512, 896)
    b4p = jnp.pad(b4, ((0, 0), (0, fpad))).astype(jnp.float32)    # (1, 896)

    return (w1.astype(jnp.bfloat16), b1.astype(jnp.float32),
            w23, b23, w4p, b4p)


def _round_up(n, m):
    return ((n + m - 1) // m) * m


def _choose_bm(batch, max_bm=512):
    """Adaptive batch tile: no garbage rows for small B, >=2 grid steps when
    possible (so v7x's two TensorCores both get work), capped so the VMEM
    footprint stays small on v7x (64 MiB) / v5e (16 MiB scoped default)."""
    if batch <= 8:
        return _round_up(max(batch, 1), 8)
    return min(max_bm, _round_up(-(-batch // 2), 8))


def autoencoder_forward(x_nchw, prepared, *, max_bm=512, single_buffer_weights=True):
    """x_nchw: (B, 1, 28, 28) float32 -> (B, 1, 28, 28) float32."""
    w1, b1, w23, b23, w4, b4 = prepared

    B = x_nchw.shape[0]
    # torch.flatten(x, 1); bf16 for the MXU and to halve input DMA bytes.
    x = x_nchw.reshape(B, IN_DIM).astype(jnp.bfloat16)

    bm = _choose_bm(B, max_bm)
    n_tiles = pl.cdiv(B, bm)
    B_pad = n_tiles * bm
    if B_pad != B:
        x = jnp.pad(x, ((0, B_pad - B), (0, 0)))

    def const_spec(shape):
        # Block index never changes across the grid -> single-buffer it.
        if single_buffer_weights:
            return pl.BlockSpec(shape, lambda i: (0,) * len(shape),
                                pipeline_mode=pl.Buffered(1))
        return pl.BlockSpec(shape, lambda i: (0,) * len(shape))

    out_flat = pl.pallas_call(
        autoencoder_kernel,
        out_shape=jax.ShapeDtypeStruct((B_pad, PAD_DIM), jnp.float32),
        grid_spec=pltpu.PrefetchScalarGridSpec(
            num_scalar_prefetch=0,
            grid=(n_tiles,),
            in_specs=[
                pl.BlockSpec((bm, IN_DIM), lambda i: (i, 0)),   # x tile (full 784 last dim)
                const_spec(w1.shape), const_spec(b1.shape),
                const_spec(w23.shape), const_spec(b23.shape),
                const_spec(w4.shape), const_spec(b4.shape),
            ],
            out_specs=pl.BlockSpec((bm, PAD_DIM), lambda i: (i, 0)),
        ),
        compiler_params=pltpu.CompilerParams(
            dimension_semantics=("parallel",),
            vmem_limit_bytes=32 * 1024 * 1024,   # explicit for v5e's 16 MiB scoped default
        ),
    )(x, w1, b1, w23, b23, w4, b4)

    # Slice away batch / output-feature padding and restore NCHW.
    return out_flat[:B, :IN_DIM].reshape(B, 1, 28, 28)


# --------------------------------------------------------------------------
# Params / reference
# --------------------------------------------------------------------------
def init_params(key):
    """Deterministic params matching nn.Linear shapes; PyTorch-style uniform init.

    Weights are stored as (fan_in, fan_out) so the kernel computes x @ W + b,
    matching torch's x @ W.T with W of shape (fan_out, fan_in).
    """
    def linear(key, fan_in, fan_out):
        kw, kb = jax.random.split(key)
        bound = 1.0 / math.sqrt(fan_in)
        w = jax.random.uniform(kw, (fan_in, fan_out), jnp.float32, -bound, bound)
        b = jax.random.uniform(kb, (1, fan_out), jnp.float32, -bound, bound)
        return w, b

    k1, k2, k3, k4 = jax.random.split(key, 4)
    return (
        linear(k1, IN_DIM, HID_DIM),        # encoder.linear1
        linear(k2, HID_DIM, LATENT_DIMS),   # encoder.linear2
        linear(k3, LATENT_DIMS, HID_DIM),   # decoder.linear1
        linear(k4, HID_DIM, IN_DIM),        # decoder.linear2
    )


def reference_forward(x_nchw, params):
    """Pure-JAX f32 reference of the PyTorch forward (unfused), for correctness."""
    (w1, b1), (w2, b2), (w3, b3), (w4, b4) = params
    B = x_nchw.shape[0]
    x = x_nchw.reshape(B, IN_DIM)
    h1 = jnp.maximum(x @ w1 + b1, 0.0)
    z = h1 @ w2 + b2
    h2 = jnp.maximum(z @ w3 + b3, 0.0)
    y = jax.nn.sigmoid(h2 @ w4 + b4)
    return y.reshape(B, 1, 28, 28)


# --------------------------------------------------------------------------
# Main
# --------------------------------------------------------------------------
if __name__ == "__main__":
    key = jax.random.PRNGKey(0)
    k_params, k_x = jax.random.split(key)

    params = init_params(k_params)
    prepared = prepare_params(params)           # one-time weight prep (hoisted)
    x = jax.random.normal(k_x, (8, 1, 28, 28), jnp.float32)   # small batch of "MNIST" images

    def _run(single_buffer):
        o = autoencoder_forward(x, prepared, single_buffer_weights=single_buffer)
        return jax.block_until_ready(o)

    try:
        out = _run(True)
    except Exception:
        # Fallback if this jax version rejects pl.Buffered(1) single-buffering.
        out = _run(False)

    ref = reference_forward(x, params)
    assert out.shape == (8, 1, 28, 28)
    # bf16 matmuls + fused latent matmul change rounding/accumulation order;
    # sigmoid outputs agree to well under 2e-2.
    assert jnp.allclose(out, ref, atol=2e-2, rtol=2e-2), "mismatch vs. pure-JAX reference"

    print("KERNEL_OK")
</pallas_src>

<mosaic_0001>
module attributes {stable_mosaic.version = 11 : i64} {
  func.func @autoencoder_kernel(%arg0: i32, %arg1: memref<8x784xbf16, #tpu.memory_space<vmem>>, %arg2: memref<784x512xbf16, #tpu.memory_space<vmem>>, %arg3: memref<1x512xf32, #tpu.memory_space<vmem>>, %arg4: memref<512x512xbf16, #tpu.memory_space<vmem>>, %arg5: memref<1x512xf32, #tpu.memory_space<vmem>>, %arg6: memref<512x896xbf16, #tpu.memory_space<vmem>>, %arg7: memref<1x896xf32, #tpu.memory_space<vmem>>, %arg8: memref<8x896xf32, #tpu.memory_space<vmem>>) attributes {dimension_semantics = [#tpu.dimension_semantics<parallel>], iteration_bounds = array<i64: 1>, scalar_prefetch = 0 : i64, scratch_operands = 0 : i64, tpu.core_type = #tpu.core_type<tc>, window_params = [{transform_indices = @transform_0, window_bounds = array<i64: 8, 784>}, {pipeline_mode = #tpu.pipeline_mode<synchronous>, transform_indices = @transform_1, window_bounds = array<i64: 784, 512>}, {pipeline_mode = #tpu.pipeline_mode<synchronous>, transform_indices = @transform_2, window_bounds = array<i64: 1, 512>}, {pipeline_mode = #tpu.pipeline_mode<synchronous>, transform_indices = @transform_3, window_bounds = array<i64: 512, 512>}, {pipeline_mode = #tpu.pipeline_mode<synchronous>, transform_indices = @transform_4, window_bounds = array<i64: 1, 512>}, {pipeline_mode = #tpu.pipeline_mode<synchronous>, transform_indices = @transform_5, window_bounds = array<i64: 512, 896>}, {pipeline_mode = #tpu.pipeline_mode<synchronous>, transform_indices = @transform_6, window_bounds = array<i64: 1, 896>}, {transform_indices = @transform_7, window_bounds = array<i64: 8, 896>}]} {
    %c0 = arith.constant 0 : index
    %c0_0 = arith.constant 0 : index
    %0 = vector.load %arg1[%c0, %c0_0] : memref<8x784xbf16, #tpu.memory_space<vmem>>, vector<8x784xbf16>
    %c0_1 = arith.constant 0 : index
    %c0_2 = arith.constant 0 : index
    %1 = vector.load %arg2[%c0_1, %c0_2] : memref<784x512xbf16, #tpu.memory_space<vmem>>, vector<784x512xbf16>
    %cst = arith.constant dense<0.000000e+00> : vector<8x512xf32>
    %2 = tpu.matmul %0, %1, %cst {dimension_numbers = #tpu.dot_dimension_numbers<[1], [0], [0], [1], [0, 0, 1, 1], [], []>} : vector<8x784xbf16>, vector<784x512xbf16>, vector<8x512xf32> -> vector<8x512xf32>
    %c0_3 = arith.constant 0 : index
    %c0_4 = arith.constant 0 : index
    %3 = vector.load %arg3[%c0_3, %c0_4] : memref<1x512xf32, #tpu.memory_space<vmem>>, vector<1x512xf32>
    %4 = vector.broadcast %3 : vector<1x512xf32> to vector<8x512xf32>
    %5 = arith.addf %2, %4 : vector<8x512xf32>
    %cst_5 = arith.constant 0.000000e+00 : f32
    %6 = vector.broadcast %cst_5 : f32 to vector<8x512xf32>
    %7 = arith.maximumf %5, %6 : vector<8x512xf32>
    %8 = arith.truncf %7 : vector<8x512xf32> to vector<8x512xbf16>
    %c0_6 = arith.constant 0 : index
    %c0_7 = arith.constant 0 : index
    %9 = vector.load %arg4[%c0_6, %c0_7] : memref<512x512xbf16, #tpu.memory_space<vmem>>, vector<512x512xbf16>
    %cst_8 = arith.constant dense<0.000000e+00> : vector<8x512xf32>
    %10 = tpu.matmul %8, %9, %cst_8 {dimension_numbers = #tpu.dot_dimension_numbers<[1], [0], [0], [1], [0, 0, 1, 1], [], []>} : vector<8x512xbf16>, vector<512x512xbf16>, vector<8x512xf32> -> vector<8x512xf32>
    %c0_9 = arith.constant 0 : index
    %c0_10 = arith.constant 0 : index
    %11 = vector.load %arg5[%c0_9, %c0_10] : memref<1x512xf32, #tpu.memory_space<vmem>>, vector<1x512xf32>
    %12 = vector.broadcast %11 : vector<1x512xf32> to vector<8x512xf32>
    %13 = arith.addf %10, %12 : vector<8x512xf32>
    %cst_11 = arith.constant 0.000000e+00 : f32
    %14 = vector.broadcast %cst_11 : f32 to vector<8x512xf32>
    %15 = arith.maximumf %13, %14 : vector<8x512xf32>
    %16 = arith.truncf %15 : vector<8x512xf32> to vector<8x512xbf16>
    %c0_12 = arith.constant 0 : index
    %c0_13 = arith.constant 0 : index
    %17 = vector.load %arg6[%c0_12, %c0_13] : memref<512x896xbf16, #tpu.memory_space<vmem>>, vector<512x896xbf16>
    %cst_14 = arith.constant dense<0.000000e+00> : vector<8x896xf32>
    %18 = tpu.matmul %16, %17, %cst_14 {dimension_numbers = #tpu.dot_dimension_numbers<[1], [0], [0], [1], [0, 0, 1, 1], [], []>} : vector<8x512xbf16>, vector<512x896xbf16>, vector<8x896xf32> -> vector<8x896xf32>
    %c0_15 = arith.constant 0 : index
    %c0_16 = arith.constant 0 : index
    %19 = vector.load %arg7[%c0_15, %c0_16] : memref<1x896xf32, #tpu.memory_space<vmem>>, vector<1x896xf32>
    %20 = vector.broadcast %19 : vector<1x896xf32> to vector<8x896xf32>
    %21 = arith.addf %18, %20 : vector<8x896xf32>
    %22 = arith.negf %21 : vector<8x896xf32>
    %23 = math.exp %22 : vector<8x896xf32>
    %cst_17 = arith.constant 1.000000e+00 : f32
    %24 = vector.broadcast %cst_17 : f32 to vector<8x896xf32>
    %25 = arith.addf %24, %23 : vector<8x896xf32>
    %26 = arith.divf %24, %25 : vector<8x896xf32>
    %c0_18 = arith.constant 0 : index
    %c0_19 = arith.constant 0 : index
    %27 = vector.load %arg8[%c0_18, %c0_19] : memref<8x896xf32, #tpu.memory_space<vmem>>, vector<8x896xf32>
    tpu.vector_store %arg8[%c0_18, %c0_19], %26 {strides = array<i32>} : memref<8x896xf32, #tpu.memory_space<vmem>>, vector<8x896xf32>,
    return
  }
  func.func @transform_0(%arg0: i32) -> (i32, i32) {
    %c0_i32 = arith.constant 0 : i32
    %c0_i32_0 = arith.constant 0 : i32
    return %arg0, %c0_i32 : i32, i32
  }
  func.func @transform_1(%arg0: i32) -> (i32, i32) {
    %c0_i32 = arith.constant 0 : i32
    %c0_i32_0 = arith.constant 0 : i32
    %c0_i32_1 = arith.constant 0 : i32
    return %c0_i32, %c0_i32_0 : i32, i32
  }
  func.func @transform_2(%arg0: i32) -> (i32, i32) {
    %c0_i32 = arith.constant 0 : i32
    %c0_i32_0 = arith.constant 0 : i32
    %c0_i32_1 = arith.constant 0 : i32
    return %c0_i32, %c0_i32_0 : i32, i32
  }
  func.func @transform_3(%arg0: i32) -> (i32, i32) {
    %c0_i32 = arith.constant 0 : i32
    %c0_i32_0 = arith.constant 0 : i32
    %c0_i32_1 = arith.constant 0 : i32
    return %c0_i32, %c0_i32_0 : i32, i32
  }
  func.func @transform_4(%arg0: i32) -> (i32, i32) {
    %c0_i32 = arith.constant 0 : i32
    %c0_i32_0 = arith.constant 0 : i32
    %c0_i32_1 = arith.constant 0 : i32
    return %c0_i32, %c0_i32_0 : i32, i32
  }
  func.func @transform_5(%arg0: i32) -> (i32, i32) {
    %c0_i32 = arith.constant 0 : i32
    %c0_i32_0 = arith.constant 0 : i32
    %c0_i32_1 = arith.constant 0 : i32
    return %c0_i32, %c0_i32_0 : i32, i32
  }
  func.func @transform_6(%arg0: i32) -> (i32, i32) {
    %c0_i32 = arith.constant 0 : i32
    %c0_i32_0 = arith.constant 0 : i32
    %c0_i32_1 = arith.constant 0 : i32
    return %c0_i32, %c0_i32_0 : i32, i32
  }
  func.func @transform_7(%arg0: i32) -> (i32, i32) {
    %c0_i32 = arith.constant 0 : i32
    %c0_i32_0 = arith.constant 0 : i32
    return %arg0, %c0_i32 : i32, i32
  }
}

module attributes {stable_mosaic.version = 11 : i64} {
  func.func @autoencoder_kernel(%arg0: i32, %arg1: memref<8x784xbf16, #tpu.memory_space<vmem>>, %arg2: memref<784x512xbf16, #tpu.memory_space<vmem>>, %arg3: memref<1x512xf32, #tpu.memory_space<vmem>>, %arg4: memref<512x512xbf16, #tpu.memory_space<vmem>>, %arg5: memref<1x512xf32, #tpu.memory_space<vmem>>, %arg6: memref<512x896xbf16, #tpu.memory_space<vmem>>, %arg7: memref<1x896xf32, #tpu.memory_space<vmem>>, %arg8: memref<8x896xf32, #tpu.memory_space<vmem>>) attributes {dimension_semantics = [#tpu.dimension_semantics<parallel>], iteration_bounds = array<i64: 1>, scalar_prefetch = 0 : i64, scratch_operands = 0 : i64, tpu.core_type = #tpu.core_type<tc>, window_params = [{transform_indices = @transform_0, window_bounds = array<i64: 8, 784>}, {pipeline_mode = #tpu.pipeline_mode<synchronous>, transform_indices = @transform_1, window_bounds = array<i64: 784, 512>}, {pipeline_mode = #tpu.pipeline_mode<synchronous>, transform_indices = @transform_2, window_bounds = array<i64: 1, 512>}, {pipeline_mode = #tpu.pipeline_mode<synchronous>, transform_indices = @transform_3, window_bounds = array<i64: 512, 512>}, {pipeline_mode = #tpu.pipeline_mode<synchronous>, transform_indices = @transform_4, window_bounds = array<i64: 1, 512>}, {pipeline_mode = #tpu.pipeline_mode<synchronous>, transform_indices = @transform_5, window_bounds = array<i64: 512, 896>}, {pipeline_mode = #tpu.pipeline_mode<synchronous>, transform_indices = @transform_6, window_bounds = array<i64: 1, 896>}, {transform_indices = @transform_7, window_bounds = array<i64: 8, 896>}]} {
    %c0 = arith.constant 0 : index
    %c0_0 = arith.constant 0 : index
    %0 = vector.load %arg1[%c0, %c0_0] : memref<8x784xbf16, #tpu.memory_space<vmem>>, vector<8x784xbf16>
    %c0_1 = arith.constant 0 : index
    %c0_2 = arith.constant 0 : index
    %1 = vector.load %arg2[%c0_1, %c0_2] : memref<784x512xbf16, #tpu.memory_space<vmem>>, vector<784x512xbf16>
    %cst = arith.constant dense<0.000000e+00> : vector<8x512xf32>
    %2 = tpu.matmul %0, %1, %cst {dimension_numbers = #tpu.dot_dimension_numbers<[1], [0], [0], [1], [0, 0, 1, 1], [], []>} : vector<8x784xbf16>, vector<784x512xbf16>, vector<8x512xf32> -> vector<8x512xf32>
    %c0_3 = arith.constant 0 : index
    %c0_4 = arith.constant 0 : index
    %3 = vector.load %arg3[%c0_3, %c0_4] : memref<1x512xf32, #tpu.memory_space<vmem>>, vector<1x512xf32>
    %4 = vector.broadcast %3 : vector<1x512xf32> to vector<8x512xf32>
    %5 = arith.addf %2, %4 : vector<8x512xf32>
    %cst_5 = arith.constant 0.000000e+00 : f32
    %6 = vector.broadcast %cst_5 : f32 to vector<8x512xf32>
    %7 = arith.maximumf %5, %6 : vector<8x512xf32>
    %8 = arith.truncf %7 : vector<8x512xf32> to vector<8x512xbf16>
    %c0_6 = arith.constant 0 : index
    %c0_7 = arith.constant 0 : index
    %9 = vector.load %arg4[%c0_6, %c0_7] : memref<512x512xbf16, #tpu.memory_space<vmem>>, vector<512x512xbf16>
    %cst_8 = arith.constant dense<0.000000e+00> : vector<8x512xf32>
    %10 = tpu.matmul %8, %9, %cst_8 {dimension_numbers = #tpu.dot_dimension_numbers<[1], [0], [0], [1], [0, 0, 1, 1], [], []>} : vector<8x512xbf16>, vector<512x512xbf16>, vector<8x512xf32> -> vector<8x512xf32>
    %c0_9 = arith.constant 0 : index
    %c0_10 = arith.constant 0 : index
    %11 = vector.load %arg5[%c0_9, %c0_10] : memref<1x512xf32, #tpu.memory_space<vmem>>, vector<1x512xf32>
    %12 = vector.broadcast %11 : vector<1x512xf32> to vector<8x512xf32>
    %13 = arith.addf %10, %12 : vector<8x512xf32>
    %cst_11 = arith.constant 0.000000e+00 : f32
    %14 = vector.broadcast %cst_11 : f32 to vector<8x512xf32>
    %15 = arith.maximumf %13, %14 : vector<8x512xf32>
    %16 = arith.truncf %15 : vector<8x512xf32> to vector<8x512xbf16>
    %c0_12 = arith.constant 0 : index
    %c0_13 = arith.constant 0 : index
    %17 = vector.load %arg6[%c0_12, %c0_13] : memref<512x896xbf16, #tpu.memory_space<vmem>>, vector<512x896xbf16>
    %cst_14 = arith.constant dense<0.000000e+00> : vector<8x896xf32>
    %18 = tpu.matmul %16, %17, %cst_14 {dimension_numbers = #tpu.dot_dimension_numbers<[1], [0], [0], [1], [0, 0, 1, 1], [], []>} : vector<8x512xbf16>, vector<512x896xbf16>, vector<8x896xf32> -> vector<8x896xf32>
    %c0_15 = arith.constant 0 : index
    %c0_16 = arith.constant 0 : index
    %19 = vector.load %arg7[%c0_15, %c0_16] : memref<1x896xf32, #tpu.memory_space<vmem>>, vector<1x896xf32>
    %20 = vector.broadcast %19 : vector<1x896xf32> to vector<8x896xf32>
    %21 = arith.addf %18, %20 : vector<8x896xf32>
    %22 = arith.negf %21 : vector<8x896xf32>
    %23 = math.exp %22 : vector<8x896xf32>
    %cst_17 = arith.constant 1.000000e+00 : f32
    %24 = vector.broadcast %cst_17 : f32 to vector<8x896xf32>
    %25 = arith.addf %24, %23 : vector<8x896xf32>
    %26 = arith.divf %24, %25 : vector<8x896xf32>
    %c0_18 = arith.constant 0 : index
    %c0_19 = arith.constant 0 : index
    %27 = vector.load %arg8[%c0_18, %c0_19] : memref<8x896xf32, #tpu.memory_space<vmem>>, vector<8x896xf32>
    tpu.vector_store %arg8[%c0_18, %c0_19], %26 {strides = array<i32>} : memref<8x896xf32, #tpu.memory_space<vmem>>, vector<8x896xf32>,
    return
  }
  func.func @transform_0(%arg0: i32) -> (i32, i32) {
    %c0_i32 = arith.constant 0 : i32
    %c0_i32_0 = arith.constant 0 : i32
    return %arg0, %c0_i32 : i32, i32
  }
  func.func @transform_1(%arg0: i32) -> (i32, i32) {
    %c0_i32 = arith.constant 0 : i32
    %c0_i32_0 = arith.constant 0 : i32
    %c0_i32_1 = arith.constant 0 : i32
    return %c0_i32, %c0_i32_0 : i32, i32
  }
  func.func @transform_2(%arg0: i32) -> (i32, i32) {
    %c0_i32 = arith.constant 0 : i32
    %c0_i32_0 = arith.constant 0 : i32
    %c0_i32_1 = arith.constant 0 : i32
    return %c0_i32, %c0_i32_0 : i32, i32
  }
  func.func @transform_3(%arg0: i32) -> (i32, i32) {
    %c0_i32 = arith.constant 0 : i32
    %c0_i32_0 = arith.constant 0 : i32
    %c0_i32_1 = arith.constant 0 : i32
    return %c0_i32, %c0_i32_0 : i32, i32
  }
  func.func @transform_4(%arg0: i32) -> (i32, i32) {
    %c0_i32 = arith.constant 0 : i32
    %c0_i32_0 = arith.constant 0 : i32
    %c0_i32_1 = arith.constant 0 : i32
    return %c0_i32, %c0_i32_0 : i32, i32
  }
  func.func @transform_5(%arg0: i32) -> (i32, i32) {
    %c0_i32 = arith.constant 0 : i32
    %c0_i32_0 = arith.constant 0 : i32
    %c0_i32_1 = arith.constant 0 : i32
    return %c0_i32, %c0_i32_0 : i32, i32
  }
  func.func @transform_6(%arg0: i32) -> (i32, i32) {
    %c0_i32 = arith.constant 0 : i32
    %c0_i32_0 = arith.constant 0 : i32
    %c0_i32_1 = arith.constant 0 : i32
    return %c0_i32, %c0_i32_0 : i32, i32
  }
  func.func @transform_7(%arg0: i32) -> (i32, i32) {
    %c0_i32 = arith.constant 0 : i32
    %c0_i32_0 = arith.constant 0 : i32
    return %arg0, %c0_i32 : i32, i32
  }
}

</mosaic_0001>

<llo_original>
// kernel: tpu_custom_call.1
$region0: #{tpu_custom_call.1}
  #allocation0 [shape = 'u32[]', space=smem, size = 0x4, offset = 0x4, fixed_abs, tag = 'smem constant byte address 0x4 - core index']
  #allocation1 [shape = 'u32[72,128]{1,0:T(1,128)}', space=vmem, size = 0x9000, scoped, tag = 'internal scratch']
  %s0 = inlined_call_operand.hbm [shape: bf16[8,784], index: 0, kind: input, shape index: {}]
  %s1 = inlined_call_operand.hbm [shape: bf16[784,512], index: 1, kind: input, shape index: {}]
  %s2 = inlined_call_operand.hbm [shape: f32[1,512], index: 2, kind: input, shape index: {}]
  %s3 = inlined_call_operand.hbm [shape: bf16[512,512], index: 3, kind: input, shape index: {}]
  %s4 = inlined_call_operand.hbm [shape: f32[1,512], index: 4, kind: input, shape index: {}]
  %s5 = inlined_call_operand.hbm [shape: bf16[512,896], index: 5, kind: input, shape index: {}]
  %s6 = inlined_call_operand.hbm [shape: f32[1,896], index: 6, kind: input, shape index: {}]
  %s7 = inlined_call_operand.hbm [shape: f32[8,896], index: 7, kind: output, shape index: {}]
  %s8 = sld [smem:[#allocation0]]
  $region66: #{tpu_custom_call.1} parent=0
    _
  %s10 = ssub.s32 1, %s8
  %s11 = scalar_select 0, %s10, %s8
  $region1: #{tpu_custom_call.1} parent=0
    #allocation2 [shape = 'u8[14336]{0}', space=vmem, size = 0x3800, scoped, tag = 'input window, operand 0, single buffered']
    #allocation3 [shape = 's32[1]{0}', space=sflag, size = 0x4, scoped, tag = 'scoped memory for tpu_custom_call.1']
    #allocation4 [shape = 's32[1]{0}', space=sflag, size = 0x4, scoped, tag = 'scoped memory for tpu_custom_call.1']
    #allocation5 [shape = 'u8[802816]{0}', space=vmem, size = 0xc4000, scoped, tag = 'input window, operand 1, single buffered']
    #allocation6 [shape = 's32[1]{0}', space=sflag, size = 0x4, scoped, tag = 'scoped memory for tpu_custom_call.1']
    #allocation7 [shape = 'u8[2048]{0}', space=vmem, size = 0x800, scoped, tag = 'input window, operand 2, single buffered']
    #allocation8 [shape = 'u8[524288]{0}', space=vmem, size = 0x80000, scoped, tag = 'input window, operand 3, single buffered']
    #allocation9 [shape = 's32[1]{0}', space=sflag, size = 0x4, scoped, tag = 'scoped memory for tpu_custom_call.1']
    #allocation10 [shape = 'u8[2048]{0}', space=vmem, size = 0x800, scoped, tag = 'input window, operand 4, single buffered']
    #allocation11 [shape = 'u8[917504]{0}', space=vmem, size = 0xe0000, scoped, tag = 'input window, operand 5, single buffered']
    #allocation12 [shape = 's32[1]{0}', space=sflag, size = 0x4, scoped, tag = 'scoped memory for tpu_custom_call.1']
    #allocation13 [shape = 'u8[3584]{0}', space=vmem, size = 0x1000, scoped, tag = 'input window, operand 6, single buffered']
    #allocation14 [shape = 'u8[28672]{0}', space=vmem, size = 0x7000, scoped, tag = 'output window, operand 0, single buffered']
    %12 = vsyncpa [#allocation3], 0
    %13 = vsyncpa [#allocation6], 0
    %14 = vsyncpa [#allocation9], 0
    %15 = vsyncpa [#allocation12], 0
    %16 = vsyncpa [#allocation4], 0
    // Predicated region
    $region2: #{tpu_custom_call.1} parent=1 // pred_check
      _
    $region3: #{tpu_custom_call.1} parent=1 // pred_check_branch
      %18 = sbr.rel (0) target = $region5
    $region4: #{tpu_custom_call.1} parent=1 // pred_region
      %20 = vsyncadd [#allocation3], 0
      %s22 = sshll.u32 %s0, 4
      %s23 = int_to_ptr.hbm [resolvable:$true] %s22
      %s24 = sshll.u32 [#allocation2], 4
      %s25 = int_to_ptr.vmem [resolvable:$true] %s24
      %27 = dma.hbm_to_vmem [thread:$0]  %s23, 448, %s25, [#allocation3]
    $region5: #{tpu_custom_call.1} parent=1 // pred_fallthru
      _
    // Predicated region
    $region6: #{tpu_custom_call.1} parent=1 // pred_check
      _
    $region7: #{tpu_custom_call.1} parent=1 // pred_check_branch
      %29 = sbr.rel (0) target = $region9
    $region8: #{tpu_custom_call.1} parent=1 // pred_region
      %31 = vsyncadd [#allocation6], 0
      %s32 = sshll.u32 %s1, 4
      %s33 = int_to_ptr.hbm [resolvable:$true] %s32
      %s34 = sshll.u32 [#allocation5], 4
      %s35 = int_to_ptr.vmem [resolvable:$true] %s34
      %40 = dma.hbm_to_vmem [thread:$0]  %s33, 25088, %s35, [#allocation6], 256, 256, 16
    $region9: #{tpu_custom_call.1} parent=1 // pred_fallthru
      _
    // Predicated region
    $region10: #{tpu_custom_call.1} parent=1 // pred_check
      _
    $region11: #{tpu_custom_call.1} parent=1 // pred_check_branch
      %42 = sbr.rel (0) target = $region13
    $region12: #{tpu_custom_call.1} parent=1 // pred_region
      %44 = vsyncadd [#allocation6], 0
      %s46 = sshll.u32 %s2, 4
      %s47 = int_to_ptr.hbm [resolvable:$true] %s46
      %s48 = sshll.u32 [#allocation7], 4
      %s49 = int_to_ptr.vmem [resolvable:$true] %s48
      %51 = dma.hbm_to_vmem [thread:$0]  %s47, 64, %s49, [#allocation6]
    $region13: #{tpu_custom_call.1} parent=1 // pred_fallthru
      _
    // Predicated region
    $region14: #{tpu_custom_call.1} parent=1 // pred_check
      _
    $region15: #{tpu_custom_call.1} parent=1 // pred_check_branch
      %53 = sbr.rel (0) target = $region17
    $region16: #{tpu_custom_call.1} parent=1 // pred_region
      %55 = vsyncadd [#allocation9], 0
      %s56 = sshll.u32 %s3, 4
      %s57 = int_to_ptr.hbm [resolvable:$true] %s56
      %s58 = sshll.u32 [#allocation8], 4
      %s59 = int_to_ptr.vmem [resolvable:$true] %s58
      %64 = dma.hbm_to_vmem [thread:$0]  %s57, 16384, %s59, [#allocation9], 256, 256, 16
    $region17: #{tpu_custom_call.1} parent=1 // pred_fallthru
      _
    // Predicated region
    $region18: #{tpu_custom_call.1} parent=1 // pred_check
      _
    $region19: #{tpu_custom_call.1} parent=1 // pred_check_branch
      %66 = sbr.rel (0) target = $region21
    $region20: #{tpu_custom_call.1} parent=1 // pred_region
      %68 = vsyncadd [#allocation9], 0
      %s70 = sshll.u32 %s4, 4
      %s71 = int_to_ptr.hbm [resolvable:$true] %s70
      %s72 = sshll.u32 [#allocation10], 4
      %s73 = int_to_ptr.vmem [resolvable:$true] %s72
      %75 = dma.hbm_to_vmem [thread:$0]  %s71, 64, %s73, [#allocation9]
    $region21: #{tpu_custom_call.1} parent=1 // pred_fallthru
      _
    // Predicated region
    $region22: #{tpu_custom_call.1} parent=1 // pred_check
      _
    $region23: #{tpu_custom_call.1} parent=1 // pred_check_branch
      %77 = sbr.rel (0) target = $region25
    $region24: #{tpu_custom_call.1} parent=1 // pred_region
      %79 = vsyncadd [#allocation12], 0
      %s80 = sshll.u32 %s5, 4
      %s81 = int_to_ptr.hbm [resolvable:$true] %s80
      %s82 = sshll.u32 [#allocation11], 4
      %s83 = int_to_ptr.vmem [resolvable:$true] %s82
      %88 = dma.hbm_to_vmem [thread:$0]  %s81, 28672, %s83, [#allocation12], 448, 448, 28
    $region25: #{tpu_custom_call.1} parent=1 // pred_fallthru
      _
    // Predicated region
    $region26: #{tpu_custom_call.1} parent=1 // pred_check
      _
    $region27: #{tpu_custom_call.1} parent=1 // pred_check_branch
      %90 = sbr.rel (0) target = $region29
    $region28: #{tpu_custom_call.1} parent=1 // pred_region
      %92 = vsyncadd [#allocation12], 0
      %s94 = sshll.u32 %s6, 4
      %s95 = int_to_ptr.hbm [resolvable:$true] %s94
      %s96 = sshll.u32 [#allocation13], 4
      %s97 = int_to_ptr.vmem [resolvable:$true] %s96
      %99 = dma.hbm_to_vmem [thread:$0]  %s95, 112, %s97, [#allocation12]
    $region29: #{tpu_custom_call.1} parent=1 // pred_fallthru
      _
    // Predicated region
    $region30: #{tpu_custom_call.1} parent=1 // pred_check
      _
    $region31: #{tpu_custom_call.1} parent=1 // pred_check_branch
      %101 = sbr.rel (0) target = $region33
    $region32: #{tpu_custom_call.1} parent=1 // pred_region
      %103 = dma.done [#allocation3], 448
    $region33: #{tpu_custom_call.1} parent=1 // pred_fallthru
      _
    // Predicated region
    $region34: #{tpu_custom_call.1} parent=1 // pred_check
      _
    $region35: #{tpu_custom_call.1} parent=1 // pred_check_branch
      %105 = sbr.rel (0) target = $region37
    $region36: #{tpu_custom_call.1} parent=1 // pred_region
      %107 = dma.done [#allocation6], 25088
    $region37: #{tpu_custom_call.1} parent=1 // pred_fallthru
      _
    // Predicated region
    $region38: #{tpu_custom_call.1} parent=1 // pred_check
      _
    $region39: #{tpu_custom_call.1} parent=1 // pred_check_branch
      %109 = sbr.rel (0) target = $region41
    $region40: #{tpu_custom_call.1} parent=1 // pred_region
      %111 = dma.done [#allocation6], 64
    $region41: #{tpu_custom_call.1} parent=1 // pred_fallthru
      _
    // Predicated region
    $region42: #{tpu_custom_call.1} parent=1 // pred_check
      _
    $region43: #{tpu_custom_call.1} parent=1 // pred_check_branch
      %113 = sbr.rel (0) target = $region45
    $region44: #{tpu_custom_call.1} parent=1 // pred_region
      %115 = dma.done [#allocation9], 16384
    $region45: #{tpu_custom_call.1} parent=1 // pred_fallthru
      _
    // Predicated region
    $region46: #{tpu_custom_call.1} parent=1 // pred_check
      _
    $region47: #{tpu_custom_call.1} parent=1 // pred_check_branch
      %117 = sbr.rel (0) target = $region49
    $region48: #{tpu_custom_call.1} parent=1 // pred_region
      %119 = dma.done [#allocation9], 64
    $region49: #{tpu_custom_call.1} parent=1 // pred_fallthru
      _
    // Predicated region
    $region50: #{tpu_custom_call.1} parent=1 // pred_check
      _
    $region51: #{tpu_custom_call.1} parent=1 // pred_check_branch
      %121 = sbr.rel (0) target = $region53
    $region52: #{tpu_custom_call.1} parent=1 // pred_region
      %123 = dma.done [#allocation12], 28672
    $region53: #{tpu_custom_call.1} parent=1 // pred_fallthru
      _
    // Predicated region
    $region54: #{tpu_custom_call.1} parent=1 // pred_check
      _
    $region55: #{tpu_custom_call.1} parent=1 // pred_check_branch
      %125 = sbr.rel (0) target = $region57
    $region56: #{tpu_custom_call.1} parent=1 // pred_region
      %127 = dma.done [#allocation12], 112
    $region57: #{tpu_custom_call.1} parent=1 // pred_fallthru
      _
    %v129 = vld [vmem:[#allocation2] sm:$0xff]
    %v130 = vld [vmem:[#allocation2 + $0x8] sm:$0xff]
    %v131 = vld [vmem:[#allocation2 + $0x10] sm:$0xff]
    %v132 = vld [vmem:[#allocation2 + $0x18] sm:$0xf]
    %v133 = vld [vmem:[#allocation5] sm:$0xff]
    %v134 = vld [vmem:[#allocation5 + $0x8] sm:$0xff]
    %v135 = vld [vmem:[#allocation5 + $0x10] sm:$0xff]
    %v136 = vld [vmem:[#allocation5 + $0x18] sm:$0xff]
    %v137 = vld [vmem:[#allocation5 + $0x20] sm:$0xff]
    %v138 = vld [vmem:[#allocation5 + $0x28] sm:$0xff]
    %v139 = vld [vmem:[#allocation5 + $0x30] sm:$0xff]
    %v140 = vld [vmem:[#allocation5 + $0x38] sm:$0xff]
    %v141 = vld [vmem:[#allocation5 + $0x40] sm:$0xff]
    %v142 = vld [vmem:[#allocation5 + $0x48] sm:$0xff]
    %v143 = vld [vmem:[#allocation5 + $0x50] sm:$0xff]
    %v144 = vld [vmem:[#allocation5 + $0x58] sm:$0xff]
    %v145 = vld [vmem:[#allocation5 + $0x60] sm:$0xff]
    %v146 = vld [vmem:[#allocation5 + $0x68] sm:$0xff]
    %v147 = vld [vmem:[#allocation5 + $0x70] sm:$0xff]
    %v148 = vld [vmem:[#allocation5 + $0x78] sm:$0xff]
    %v149 = vld [vmem:[#allocation5 + $0x80] sm:$0xff]
    %v150 = vld [vmem:[#allocation5 + $0x88] sm:$0xff]
    %v151 = vld [vmem:[#allocation5 + $0x90] sm:$0xff]
    %v152 = vld [vmem:[#allocation5 + $0x98] sm:$0xff]
    %v153 = vld [vmem:[#allocation5 + $0xa0] sm:$0xff]
    %v154 = vld [vmem:[#allocation5 + $0xa8] sm:$0xff]
    %v155 = vld [vmem:[#allocation5 + $0xb0] sm:$0xff]
    %v156 = vld [vmem:[#allocation5 + $0xb8] sm:$0xff]
    %v157 = vld [vmem:[#allocation5 + $0xc0] sm:$0xff]
    %v158 = vld [vmem:[#allocation5 + $0xc8] sm:$0xff]
    %v159 = vld [vmem:[#allocation5 + $0xd0] sm:$0xff]
    %v160 = vld [vmem:[#allocation5 + $0xd8] sm:$0xff]
    %v161 = vld [vmem:[#allocation5 + $0xe0] sm:$0xff]
    %v162 = vld [vmem:[#allocation5 + $0xe8] sm:$0xff]
    %v163 = vld [vmem:[#allocation5 + $0xf0] sm:$0xff]
    %v164 = vld [vmem:[#allocation5 + $0xf8] sm:$0xff]
    %v165 = vld [vmem:[#allocation5 + $0x100] sm:$0xff]
    %v166 = vld [vmem:[#allocation5 + $0x108] sm:$0xff]
    %v167 = vld [vmem:[#allocation5 + $0x110] sm:$0xff]
    %v168 = vld [vmem:[#allocation5 + $0x118] sm:$0xff]
    %v169 = vld [vmem:[#allocation5 + $0x120] sm:$0xff]
    %v170 = vld [vmem:[#allocation5 + $0x128] sm:$0xff]
    %v171 = vld [vmem:[#allocation5 + $0x130] sm:$0xff]
    %v172 = vld [vmem:[#allocation5 + $0x138] sm:$0xff]
    %v173 = vld [vmem:[#allocation5 + $0x140] sm:$0xff]
    %v174 = vld [vmem:[#allocation5 + $0x148] sm:$0xff]
    %v175 = vld [vmem:[#allocation5 + $0x150] sm:$0xff]
    %v176 = vld [vmem:[#allocation5 + $0x158] sm:$0xff]
    %v177 = vld [vmem:[#allocation5 + $0x160] sm:$0xff]
    %v178 = vld [vmem:[#allocation5 + $0x168] sm:$0xff]
    %v179 = vld [vmem:[#allocation5 + $0x170] sm:$0xff]
    %v180 = vld [vmem:[#allocation5 + $0x178] sm:$0xff]
    %v181 = vld [vmem:[#allocation5 + $0x180] sm:$0xff]
    %v182 = vld [vmem:[#allocation5 + $0x188] sm:$0xff]
    %v183 = vld [vmem:[#allocation5 + $0x190] sm:$0xff]
    %v184 = vld [vmem:[#allocation5 + $0x198] sm:$0xff]
    %v185 = vld [vmem:[#allocation5 + $0x1a0] sm:$0xff]
    %v186 = vld [vmem:[#allocation5 + $0x1a8] sm:$0xff]
    %v187 = vld [vmem:[#allocation5 + $0x1b0] sm:$0xff]
    %v188 = vld [vmem:[#allocation5 + $0x1b8] sm:$0xff]
    %v189 = vld [vmem:[#allocation5 + $0x1c0] sm:$0xff]
    %v190 = vld [vmem:[#allocation5 + $0x1c8] sm:$0xff]
    %v191 = vld [vmem:[#allocation5 + $0x1d0] sm:$0xff]
    %v192 = vld [vmem:[#allocation5 + $0x1d8] sm:$0xff]
    %v193 = vld [vmem:[#allocation5 + $0x1e0] sm:$0xff]
    %v194 = vld [vmem:[#allocation5 + $0x1e8] sm:$0xff]
    %v195 = vld [vmem:[#allocation5 + $0x1f0] sm:$0xff]
    %v196 = vld [vmem:[#allocation5 + $0x1f8] sm:$0xff]
    %v197 = vld [vmem:[#allocation5 + $0x200] sm:$0xff]
    %v198 = vld [vmem:[#allocation5 + $0x208] sm:$0xff]
    %v199 = vld [vmem:[#allocation5 + $0x210] sm:$0xff]
    %v200 = vld [vmem:[#allocation5 + $0x218] sm:$0xff]
    %v201 = vld [vmem:[#allocation5 + $0x220] sm:$0xff]
    %v202 = vld [vmem:[#allocation5 + $0x228] sm:$0xff]
    %v203 = vld [vmem:[#allocation5 + $0x230] sm:$0xff]
    %v204 = vld [vmem:[#allocation5 + $0x238] sm:$0xff]
    %v205 = vld [vmem:[#allocation5 + $0x240] sm:$0xff]
    %v206 = vld [vmem:[#allocation5 + $0x248] sm:$0xff]
    %v207 = vld [vmem:[#allocation5 + $0x250] sm:$0xff]
    %v208 = vld [vmem:[#allocation5 + $0x258] sm:$0xff]
    %v209 = vld [vmem:[#allocation5 + $0x260] sm:$0xff]
    %v210 = vld [vmem:[#allocation5 + $0x268] sm:$0xff]
    %v211 = vld [vmem:[#allocation5 + $0x270] sm:$0xff]
    %v212 = vld [vmem:[#allocation5 + $0x278] sm:$0xff]
    %v213 = vld [vmem:[#allocation5 + $0x280] sm:$0xff]
    %v214 = vld [vmem:[#allocation5 + $0x288] sm:$0xff]
    %v215 = vld [vmem:[#allocation5 + $0x290] sm:$0xff]
    %v216 = vld [vmem:[#allocation5 + $0x298] sm:$0xff]
    %v217 = vld [vmem:[#allocation5 + $0x2a0] sm:$0xff]
    %v218 = vld [vmem:[#allocation5 + $0x2a8] sm:$0xff]
    %v219 = vld [vmem:[#allocation5 + $0x2b0] sm:$0xff]
    %v220 = vld [vmem:[#allocation5 + $0x2b8] sm:$0xff]
    %v221 = vld [vmem:[#allocation5 + $0x2c0] sm:$0xff]
    %v222 = vld [vmem:[#allocation5 + $0x2c8] sm:$0xff]
    %v223 = vld [vmem:[#allocation5 + $0x2d0] sm:$0xff]
    %v224 = vld [vmem:[#allocation5 + $0x2d8] sm:$0xff]
    %v225 = vld [vmem:[#allocation5 + $0x2e0] sm:$0xff]
    %v226 = vld [vmem:[#allocation5 + $0x2e8] sm:$0xff]
    %v227 = vld [vmem:[#allocation5 + $0x2f0] sm:$0xff]
    %v228 = vld [vmem:[#allocation5 + $0x2f8] sm:$0xff]
    %v229 = vld [vmem:[#allocation5 + $0x300] sm:$0xff]
    %v230 = vld [vmem:[#allocation5 + $0x308] sm:$0xff]
    %v231 = vld [vmem:[#allocation5 + $0x310] sm:$0xff]
    %v232 = vld [vmem:[#allocation5 + $0x318] sm:$0xff]
    %v233 = vld [vmem:[#allocation5 + $0x320] sm:$0xff]
    %v234 = vld [vmem:[#allocation5 + $0x328] sm:$0xff]
    %v235 = vld [vmem:[#allocation5 + $0x330] sm:$0xff]
    %v236 = vld [vmem:[#allocation5 + $0x338] sm:$0xff]
    %v237 = vld [vmem:[#allocation5 + $0x340] sm:$0xff]
    %v238 = vld [vmem:[#allocation5 + $0x348] sm:$0xff]
    %v239 = vld [vmem:[#allocation5 + $0x350] sm:$0xff]
    %v240 = vld [vmem:[#allocation5 + $0x358] sm:$0xff]
    %v241 = vld [vmem:[#allocation5 + $0x360] sm:$0xff]
    %v242 = vld [vmem:[#allocation5 + $0x368] sm:$0xff]
    %v243 = vld [vmem:[#allocation5 + $0x370] sm:$0xff]
    %v244 = vld [vmem:[#allocation5 + $0x378] sm:$0xff]
    %v245 = vld [vmem:[#allocation5 + $0x380] sm:$0xff]
    %v246 = vld [vmem:[#allocation5 + $0x388] sm:$0xff]
    %v247 = vld [vmem:[#allocation5 + $0x390] sm:$0xff]
    %v248 = vld [vmem:[#allocation5 + $0x398] sm:$0xff]
    %v249 = vld [vmem:[#allocation5 + $0x3a0] sm:$0xff]
    %v250 = vld [vmem:[#allocation5 + $0x3a8] sm:$0xff]
    %v251 = vld [vmem:[#allocation5 + $0x3b0] sm:$0xff]
    %v252 = vld [vmem:[#allocation5 + $0x3b8] sm:$0xff]
    %v253 = vld [vmem:[#allocation5 + $0x3c0] sm:$0xff]
    %v254 = vld [vmem:[#allocation5 + $0x3c8] sm:$0xff]
    %v255 = vld [vmem:[#allocation5 + $0x3d0] sm:$0xff]
    %v256 = vld [vmem:[#allocation5 + $0x3d8] sm:$0xff]
    %v257 = vld [vmem:[#allocation5 + $0x3e0] sm:$0xff]
    %v258 = vld [vmem:[#allocation5 + $0x3e8] sm:$0xff]
    %v259 = vld [vmem:[#allocation5 + $0x3f0] sm:$0xff]
    %v260 = vld [vmem:[#allocation5 + $0x3f8] sm:$0xff]
    %v261 = vld [vmem:[#allocation5 + $0x400] sm:$0xff]
    %v262 = vld [vmem:[#allocation5 + $0x408] sm:$0xff]
    %v263 = vld [vmem:[#allocation5 + $0x410] sm:$0xff]
    %v264 = vld [vmem:[#allocation5 + $0x418] sm:$0xff]
    %v265 = vld [vmem:[#allocation5 + $0x420] sm:$0xff]
    %v266 = vld [vmem:[#allocation5 + $0x428] sm:$0xff]
    %v267 = vld [vmem:[#allocation5 + $0x430] sm:$0xff]
    %v268 = vld [vmem:[#allocation5 + $0x438] sm:$0xff]
    %v269 = vld [vmem:[#allocation5 + $0x440] sm:$0xff]
    %v270 = vld [vmem:[#allocation5 + $0x448] sm:$0xff]
    %v271 = vld [vmem:[#allocation5 + $0x450] sm:$0xff]
    %v272 = vld [vmem:[#allocation5 + $0x458] sm:$0xff]
    %v273 = vld [vmem:[#allocation5 + $0x460] sm:$0xff]
    %v274 = vld [vmem:[#allocation5 + $0x468] sm:$0xff]
    %v275 = vld [vmem:[#allocation5 + $0x470] sm:$0xff]
    %v276 = vld [vmem:[#allocation5 + $0x478] sm:$0xff]
    %v277 = vld [vmem:[#allocation5 + $0x480] sm:$0xff]
    %v278 = vld [vmem:[#allocation5 + $0x488] sm:$0xff]
    %v279 = vld [vmem:[#allocation5 + $0x490] sm:$0xff]
    %v280 = vld [vmem:[#allocation5 + $0x498] sm:$0xff]
    %v281 = vld [vmem:[#allocation5 + $0x4a0] sm:$0xff]
    %v282 = vld [vmem:[#allocation5 + $0x4a8] sm:$0xff]
    %v283 = vld [vmem:[#allocation5 + $0x4b0] sm:$0xff]
    %v284 = vld [vmem:[#allocation5 + $0x4b8] sm:$0xff]
    %v285 = vld [vmem:[#allocation5 + $0x4c0] sm:$0xff]
    %v286 = vld [vmem:[#allocation5 + $0x4c8] sm:$0xff]
    %v287 = vld [vmem:[#allocation5 + $0x4d0] sm:$0xff]
    %v288 = vld [vmem:[#allocation5 + $0x4d8] sm:$0xff]
    %v289 = vld [vmem:[#allocation5 + $0x4e0] sm:$0xff]
    %v290 = vld [vmem:[#allocation5 + $0x4e8] sm:$0xff]
    %v291 = vld [vmem:[#allocation5 + $0x4f0] sm:$0xff]
    %v292 = vld [vmem:[#allocation5 + $0x4f8] sm:$0xff]
    %v293 = vld [vmem:[#allocation5 + $0x500] sm:$0xff]
    %v294 = vld [vmem:[#allocation5 + $0x508] sm:$0xff]
    %v295 = vld [vmem:[#allocation5 + $0x510] sm:$0xff]
    %v296 = vld [vmem:[#allocation5 + $0x518] sm:$0xff]
    %v297 = vld [vmem:[#allocation5 + $0x520] sm:$0xff]
    %v298 = vld [vmem:[#allocation5 + $0x528] sm:$0xff]
    %v299 = vld [vmem:[#allocation5 + $0x530] sm:$0xff]
    %v300 = vld [vmem:[#allocation5 + $0x538] sm:$0xff]
    %v301 = vld [vmem:[#allocation5 + $0x540] sm:$0xff]
    %v302 = vld [vmem:[#allocation5 + $0x548] sm:$0xff]
    %v303 = vld [vmem:[#allocation5 + $0x550] sm:$0xff]
    %v304 = vld [vmem:[#allocation5 + $0x558] sm:$0xff]
    %v305 = vld [vmem:[#allocation5 + $0x560] sm:$0xff]
    %v306 = vld [vmem:[#allocation5 + $0x568] sm:$0xff]
    %v307 = vld [vmem:[#allocation5 + $0x570] sm:$0xff]
    %v308 = vld [vmem:[#allocation5 + $0x578] sm:$0xff]
    %v309 = vld [vmem:[#allocation5 + $0x580] sm:$0xff]
    %v310 = vld [vmem:[#allocation5 + $0x588] sm:$0xff]
    %v311 = vld [vmem:[#allocation5 + $0x590] sm:$0xff]
    %v312 = vld [vmem:[#allocation5 + $0x598] sm:$0xff]
    %v313 = vld [vmem:[#allocation5 + $0x5a0] sm:$0xff]
    %v314 = vld [vmem:[#allocation5 + $0x5a8] sm:$0xff]
    %v315 = vld [vmem:[#allocation5 + $0x5b0] sm:$0xff]
    %v316 = vld [vmem:[#allocation5 + $0x5b8] sm:$0xff]
    %v317 = vld [vmem:[#allocation5 + $0x5c0] sm:$0xff]
    %v318 = vld [vmem:[#allocation5 + $0x5c8] sm:$0xff]
    %v319 = vld [vmem:[#allocation5 + $0x5d0] sm:$0xff]
    %v320 = vld [vmem:[#allocation5 + $0x5d8] sm:$0xff]
    %v321 = vld [vmem:[#allocation5 + $0x5e0] sm:$0xff]
    %v322 = vld [vmem:[#allocation5 + $0x5e8] sm:$0xff]
    %v323 = vld [vmem:[#allocation5 + $0x5f0] sm:$0xff]
    %v324 = vld [vmem:[#allocation5 + $0x5f8] sm:$0xff]
    %v325 = vld [vmem:[#allocation5 + $0x600] sm:$0xff]
    %v326 = vld [vmem:[#allocation5 + $0x608] sm:$0xff]
    %v327 = vld [vmem:[#allocation5 + $0x610] sm:$0xff]
    %v328 = vld [vmem:[#allocation5 + $0x618] sm:$0xff]
    %v329 = vld [vmem:[#allocation7] sm:$0xf]
    %v331 = vperm.slane %v329, 0
    %v332 = vperm.slane %v329, 1
    %v333 = vperm.slane %v329, 2
    %v334 = vperm.slane %v329, 3
    %v343 = vunpack.c.l.b16 %v129
    %v344 = vunpack.c.h.b16 %v129
    %v345 = vunpack.c.l.b16 %v130
    %v346 = vunpack.c.h.b16 %v130
    %v347 = vunpack.c.l.b16 %v131
    %v348 = vunpack.c.h.b16 %v131
    %v349 = vunpack.c.l.b16 %v132
    %v350 = vpack.c.b16 %v343, %v343
    %v351 = vpack.c.b16 %v344, %v344
    %v352 = vpack.c.b16 %v345, %v345
    %v353 = vpack.c.b16 %v346, %v346
    %v354 = vpack.c.b16 %v347, %v347
    %v355 = vpack.c.b16 %v348, %v348
    %v356 = vpack.c.b16 %v349, %v349
    %v559 = vunpack.c.l.b16 %v133
    %v560 = vunpack.c.h.b16 %v133
    %v561 = vunpack.c.l.b16 %v134
    %v562 = vunpack.c.h.b16 %v134
    %v563 = vunpack.c.l.b16 %v135
    %v564 = vunpack.c.h.b16 %v135
    %v565 = vunpack.c.l.b16 %v136
    %v566 = vunpack.c.h.b16 %v136
    %v567 = vunpack.c.l.b16 %v137
    %v568 = vunpack.c.h.b16 %v137
    %v569 = vunpack.c.l.b16 %v138
    %v570 = vunpack.c.h.b16 %v138
    %v571 = vunpack.c.l.b16 %v139
    %v572 = vunpack.c.h.b16 %v139
    %v573 = vunpack.c.l.b16 %v140
    %v574 = vunpack.c.h.b16 %v140
    %v575 = vunpack.c.l.b16 %v141
    %v576 = vunpack.c.h.b16 %v141
    %v577 = vunpack.c.l.b16 %v142
    %v578 = vunpack.c.h.b16 %v142
    %v579 = vunpack.c.l.b16 %v143
    %v580 = vunpack.c.h.b16 %v143
    %v581 = vunpack.c.l.b16 %v144
    %v582 = vunpack.c.h.b16 %v144
    %v583 = vunpack.c.l.b16 %v145
    %v584 = vunpack.c.h.b16 %v145
    %v585 = vunpack.c.l.b16 %v146
    %v586 = vunpack.c.h.b16 %v146
    %v587 = vunpack.c.l.b16 %v147
    %v588 = vunpack.c.h.b16 %v147
    %v589 = vunpack.c.l.b16 %v148
    %v590 = vunpack.c.h.b16 %v148
    %v591 = vunpack.c.l.b16 %v149
    %v592 = vunpack.c.h.b16 %v149
    %v593 = vunpack.c.l.b16 %v150
    %v594 = vunpack.c.h.b16 %v150
    %v595 = vunpack.c.l.b16 %v151
    %v596 = vunpack.c.h.b16 %v151
    %v597 = vunpack.c.l.b16 %v152
    %v598 = vunpack.c.h.b16 %v152
    %v599 = vunpack.c.l.b16 %v153
    %v600 = vunpack.c.h.b16 %v153
    %v601 = vunpack.c.l.b16 %v154
    %v602 = vunpack.c.h.b16 %v154
    %v603 = vunpack.c.l.b16 %v155
    %v604 = vunpack.c.h.b16 %v155
    %v605 = vunpack.c.l.b16 %v156
    %v606 = vunpack.c.h.b16 %v156
    %v607 = vunpack.c.l.b16 %v157
    %v608 = vunpack.c.h.b16 %v157
    %v609 = vunpack.c.l.b16 %v158
    %v610 = vunpack.c.h.b16 %v158
    %v611 = vunpack.c.l.b16 %v159
    %v612 = vunpack.c.h.b16 %v159
    %v613 = vunpack.c.l.b16 %v160
    %v614 = vunpack.c.h.b16 %v160
    %v615 = vunpack.c.l.b16 %v161
    %v616 = vunpack.c.h.b16 %v161
    %v617 = vunpack.c.l.b16 %v162
    %v618 = vunpack.c.h.b16 %v162
    %v619 = vunpack.c.l.b16 %v163
    %v620 = vunpack.c.h.b16 %v163
    %v621 = vunpack.c.l.b16 %v164
    %v622 = vunpack.c.h.b16 %v164
    %v623 = vunpack.c.l.b16 %v165
    %v624 = vunpack.c.h.b16 %v165
    %v625 = vunpack.c.l.b16 %v166
    %v626 = vunpack.c.h.b16 %v166
    %v627 = vunpack.c.l.b16 %v167
    %v628 = vunpack.c.h.b16 %v167
    %v629 = vunpack.c.l.b16 %v168
    %v630 = vunpack.c.h.b16 %v168
    %v631 = vunpack.c.l.b16 %v169
    %v632 = vunpack.c.h.b16 %v169
    %v633 = vunpack.c.l.b16 %v170
    %v634 = vunpack.c.h.b16 %v170
    %v635 = vunpack.c.l.b16 %v171
    %v636 = vunpack.c.h.b16 %v171
    %v637 = vunpack.c.l.b16 %v172
    %v638 = vunpack.c.h.b16 %v172
    %v639 = vunpack.c.l.b16 %v173
    %v640 = vunpack.c.h.b16 %v173
    %v641 = vunpack.c.l.b16 %v174
    %v642 = vunpack.c.h.b16 %v174
    %v643 = vunpack.c.l.b16 %v175
    %v644 = vunpack.c.h.b16 %v175
    %v645 = vunpack.c.l.b16 %v176
    %v646 = vunpack.c.h.b16 %v176
    %v647 = vunpack.c.l.b16 %v177
    %v648 = vunpack.c.h.b16 %v177
    %v649 = vunpack.c.l.b16 %v178
    %v650 = vunpack.c.h.b16 %v178
    %v651 = vunpack.c.l.b16 %v179
    %v652 = vunpack.c.h.b16 %v179
    %v653 = vunpack.c.l.b16 %v180
    %v654 = vunpack.c.h.b16 %v180
    %v655 = vunpack.c.l.b16 %v181
    %v656 = vunpack.c.h.b16 %v181
    %v657 = vunpack.c.l.b16 %v182
    %v658 = vunpack.c.h.b16 %v182
    %v659 = vunpack.c.l.b16 %v183
    %v660 = vunpack.c.h.b16 %v183
    %v661 = vunpack.c.l.b16 %v184
    %v662 = vunpack.c.h.b16 %v184
    %v663 = vunpack.c.l.b16 %v185
    %v664 = vunpack.c.h.b16 %v185
    %v665 = vunpack.c.l.b16 %v186
    %v666 = vunpack.c.h.b16 %v186
    %v667 = vunpack.c.l.b16 %v187
    %v668 = vunpack.c.h.b16 %v187
    %v669 = vunpack.c.l.b16 %v188
    %v670 = vunpack.c.h.b16 %v188
    %v671 = vunpack.c.l.b16 %v189
    %v672 = vunpack.c.h.b16 %v189
    %v673 = vunpack.c.l.b16 %v190
    %v674 = vunpack.c.h.b16 %v190
    %v675 = vunpack.c.l.b16 %v191
    %v676 = vunpack.c.h.b16 %v191
    %v677 = vunpack.c.l.b16 %v192
    %v678 = vunpack.c.h.b16 %v192
    %v679 = vunpack.c.l.b16 %v193
    %v680 = vunpack.c.h.b16 %v193
    %v681 = vunpack.c.l.b16 %v194
    %v682 = vunpack.c.h.b16 %v194
    %v683 = vunpack.c.l.b16 %v195
    %v684 = vunpack.c.h.b16 %v195
    %v685 = vunpack.c.l.b16 %v196
    %v686 = vunpack.c.h.b16 %v196
    %v687 = vunpack.c.l.b16 %v197
    %v688 = vunpack.c.h.b16 %v197
    %v689 = vunpack.c.l.b16 %v198
    %v690 = vunpack.c.h.b16 %v198
    %v691 = vunpack.c.l.b16 %v199
    %v692 = vunpack.c.h.b16 %v199
    %v693 = vunpack.c.l.b16 %v200
    %v694 = vunpack.c.h.b16 %v200
    %v695 = vunpack.c.l.b16 %v201
    %v696 = vunpack.c.h.b16 %v201
    %v697 = vunpack.c.l.b16 %v202
    %v698 = vunpack.c.h.b16 %v202
    %v699 = vunpack.c.l.b16 %v203
    %v700 = vunpack.c.h.b16 %v203
    %v701 = vunpack.c.l.b16 %v204
    %v702 = vunpack.c.h.b16 %v204
    %v703 = vunpack.c.l.b16 %v205
    %v704 = vunpack.c.h.b16 %v205
    %v705 = vunpack.c.l.b16 %v206
    %v706 = vunpack.c.h.b16 %v206
    %v707 = vunpack.c.l.b16 %v207
    %v708 = vunpack.c.h.b16 %v207
    %v709 = vunpack.c.l.b16 %v208
    %v710 = vunpack.c.h.b16 %v208
    %v711 = vunpack.c.l.b16 %v209
    %v712 = vunpack.c.h.b16 %v209
    %v713 = vunpack.c.l.b16 %v210
    %v714 = vunpack.c.h.b16 %v210
    %v715 = vunpack.c.l.b16 %v211
    %v716 = vunpack.c.h.b16 %v211
    %v717 = vunpack.c.l.b16 %v212
    %v718 = vunpack.c.h.b16 %v212
    %v719 = vunpack.c.l.b16 %v213
    %v720 = vunpack.c.h.b16 %v213
    %v721 = vunpack.c.l.b16 %v214
    %v722 = vunpack.c.h.b16 %v214
    %v723 = vunpack.c.l.b16 %v215
    %v724 = vunpack.c.h.b16 %v215
    %v725 = vunpack.c.l.b16 %v216
    %v726 = vunpack.c.h.b16 %v216
    %v727 = vunpack.c.l.b16 %v217
    %v728 = vunpack.c.h.b16 %v217
    %v729 = vunpack.c.l.b16 %v218
    %v730 = vunpack.c.h.b16 %v218
    %v731 = vunpack.c.l.b16 %v219
    %v732 = vunpack.c.h.b16 %v219
    %v733 = vunpack.c.l.b16 %v220
    %v734 = vunpack.c.h.b16 %v220
    %v735 = vunpack.c.l.b16 %v221
    %v736 = vunpack.c.h.b16 %v221
    %v737 = vunpack.c.l.b16 %v222
    %v738 = vunpack.c.h.b16 %v222
    %v739 = vunpack.c.l.b16 %v223
    %v740 = vunpack.c.h.b16 %v223
    %v741 = vunpack.c.l.b16 %v224
    %v742 = vunpack.c.h.b16 %v224
    %v743 = vunpack.c.l.b16 %v225
    %v744 = vunpack.c.h.b16 %v225
    %v745 = vunpack.c.l.b16 %v226
    %v746 = vunpack.c.h.b16 %v226
    %v747 = vunpack.c.l.b16 %v227
    %v748 = vunpack.c.h.b16 %v227
    %v749 = vunpack.c.l.b16 %v228
    %v750 = vunpack.c.h.b16 %v228
    %v751 = vunpack.c.l.b16 %v229
    %v752 = vunpack.c.h.b16 %v229
    %v753 = vunpack.c.l.b16 %v230
    %v754 = vunpack.c.h.b16 %v230
    %v755 = vunpack.c.l.b16 %v231
    %v756 = vunpack.c.h.b16 %v231
    %v757 = vunpack.c.l.b16 %v232
    %v758 = vunpack.c.h.b16 %v232
    %v759 = vunpack.c.l.b16 %v233
    %v760 = vunpack.c.h.b16 %v233
    %v761 = vunpack.c.l.b16 %v234
    %v762 = vunpack.c.h.b16 %v234
    %v763 = vunpack.c.l.b16 %v235
    %v764 = vunpack.c.h.b16 %v235
    %v765 = vunpack.c.l.b16 %v236
    %v766 = vunpack.c.h.b16 %v236
    %v767 = vunpack.c.l.b16 %v237
    %v768 = vunpack.c.h.b16 %v237
    %v769 = vunpack.c.l.b16 %v238
    %v770 = vunpack.c.h.b16 %v238
    %v771 = vunpack.c.l.b16 %v239
    %v772 = vunpack.c.h.b16 %v239
    %v773 = vunpack.c.l.b16 %v240
    %v774 = vunpack.c.h.b16 %v240
    %v775 = vunpack.c.l.b16 %v241
    %v776 = vunpack.c.h.b16 %v241
    %v777 = vunpack.c.l.b16 %v242
    %v778 = vunpack.c.h.b16 %v242
    %v779 = vunpack.c.l.b16 %v243
    %v780 = vunpack.c.h.b16 %v243
    %v781 = vunpack.c.l.b16 %v244
    %v782 = vunpack.c.h.b16 %v244
    %v783 = vunpack.c.l.b16 %v245
    %v784 = vunpack.c.h.b16 %v245
    %v785 = vunpack.c.l.b16 %v246
    %v786 = vunpack.c.h.b16 %v246
    %v787 = vunpack.c.l.b16 %v247
    %v788 = vunpack.c.h.b16 %v247
    %v789 = vunpack.c.l.b16 %v248
    %v790 = vunpack.c.h.b16 %v248
    %v791 = vunpack.c.l.b16 %v249
    %v792 = vunpack.c.h.b16 %v249
    %v793 = vunpack.c.l.b16 %v250
    %v794 = vunpack.c.h.b16 %v250
    %v795 = vunpack.c.l.b16 %v251
    %v796 = vunpack.c.h.b16 %v251
    %v797 = vunpack.c.l.b16 %v252
    %v798 = vunpack.c.h.b16 %v252
    %v799 = vunpack.c.l.b16 %v253
    %v800 = vunpack.c.h.b16 %v253
    %v801 = vunpack.c.l.b16 %v254
    %v802 = vunpack.c.h.b16 %v254
    %v803 = vunpack.c.l.b16 %v255
    %v804 = vunpack.c.h.b16 %v255
    %v805 = vunpack.c.l.b16 %v256
    %v806 = vunpack.c.h.b16 %v256
    %v807 = vunpack.c.l.b16 %v257
    %v808 = vunpack.c.h.b16 %v257
    %v809 = vunpack.c.l.b16 %v258
    %v810 = vunpack.c.h.b16 %v258
    %v811 = vunpack.c.l.b16 %v259
    %v812 = vunpack.c.h.b16 %v259
    %v813 = vunpack.c.l.b16 %v260
    %v814 = vunpack.c.h.b16 %v260
    %v815 = vunpack.c.l.b16 %v261
    %v816 = vunpack.c.h.b16 %v261
    %v817 = vunpack.c.l.b16 %v262
    %v818 = vunpack.c.h.b16 %v262
    %v819 = vunpack.c.l.b16 %v263
    %v820 = vunpack.c.h.b16 %v263
    %v821 = vunpack.c.l.b16 %v264
    %v822 = vunpack.c.h.b16 %v264
    %v823 = vunpack.c.l.b16 %v265
    %v824 = vunpack.c.h.b16 %v265
    %v825 = vunpack.c.l.b16 %v266
    %v826 = vunpack.c.h.b16 %v266
    %v827 = vunpack.c.l.b16 %v267
    %v828 = vunpack.c.h.b16 %v267
    %v829 = vunpack.c.l.b16 %v268
    %v830 = vunpack.c.h.b16 %v268
    %v831 = vunpack.c.l.b16 %v269
    %v832 = vunpack.c.h.b16 %v269
    %v833 = vunpack.c.l.b16 %v270
    %v834 = vunpack.c.h.b16 %v270
    %v835 = vunpack.c.l.b16 %v271
    %v836 = vunpack.c.h.b16 %v271
    %v837 = vunpack.c.l.b16 %v272
    %v838 = vunpack.c.h.b16 %v272
    %v839 = vunpack.c.l.b16 %v273
    %v840 = vunpack.c.h.b16 %v273
    %v841 = vunpack.c.l.b16 %v274
    %v842 = vunpack.c.h.b16 %v274
    %v843 = vunpack.c.l.b16 %v275
    %v844 = vunpack.c.h.b16 %v275
    %v845 = vunpack.c.l.b16 %v276
    %v846 = vunpack.c.h.b16 %v276
    %v847 = vunpack.c.l.b16 %v277
    %v848 = vunpack.c.h.b16 %v277
    %v849 = vunpack.c.l.b16 %v278
    %v850 = vunpack.c.h.b16 %v278
    %v851 = vunpack.c.l.b16 %v279
    %v852 = vunpack.c.h.b16 %v279
    %v853 = vunpack.c.l.b16 %v280
    %v854 = vunpack.c.h.b16 %v280
    %v855 = vunpack.c.l.b16 %v281
    %v856 = vunpack.c.h.b16 %v281
    %v857 = vunpack.c.l.b16 %v282
    %v858 = vunpack.c.h.b16 %v282
    %v859 = vunpack.c.l.b16 %v283
    %v860 = vunpack.c.h.b16 %v283
    %v861 = vunpack.c.l.b16 %v284
    %v862 = vunpack.c.h.b16 %v284
    %v863 = vunpack.c.l.b16 %v285
    %v864 = vunpack.c.h.b16 %v285
    %v865 = vunpack.c.l.b16 %v286
    %v866 = vunpack.c.h.b16 %v286
    %v867 = vunpack.c.l.b16 %v287
    %v868 = vunpack.c.h.b16 %v287
    %v869 = vunpack.c.l.b16 %v288
    %v870 = vunpack.c.h.b16 %v288
    %v871 = vunpack.c.l.b16 %v289
    %v872 = vunpack.c.h.b16 %v289
    %v873 = vunpack.c.l.b16 %v290
    %v874 = vunpack.c.h.b16 %v290
    %v875 = vunpack.c.l.b16 %v291
    %v876 = vunpack.c.h.b16 %v291
    %v877 = vunpack.c.l.b16 %v292
    %v878 = vunpack.c.h.b16 %v292
    %v879 = vunpack.c.l.b16 %v293
    %v880 = vunpack.c.h.b16 %v293
    %v881 = vunpack.c.l.b16 %v294
    %v882 = vunpack.c.h.b16 %v294
    %v883 = vunpack.c.l.b16 %v295
    %v884 = vunpack.c.h.b16 %v295
    %v885 = vunpack.c.l.b16 %v296
    %v886 = vunpack.c.h.b16 %v296
    %v887 = vunpack.c.l.b16 %v297
    %v888 = vunpack.c.h.b16 %v297
    %v889 = vunpack.c.l.b16 %v298
    %v890 = vunpack.c.h.b16 %v298
    %v891 = vunpack.c.l.b16 %v299
    %v892 = vunpack.c.h.b16 %v299
    %v893 = vunpack.c.l.b16 %v300
    %v894 = vunpack.c.h.b16 %v300
    %v895 = vunpack.c.l.b16 %v301
    %v896 = vunpack.c.h.b16 %v301
    %v897 = vunpack.c.l.b16 %v302
    %v898 = vunpack.c.h.b16 %v302
    %v899 = vunpack.c.l.b16 %v303
    %v900 = vunpack.c.h.b16 %v303
    %v901 = vunpack.c.l.b16 %v304
    %v902 = vunpack.c.h.b16 %v304
    %v903 = vunpack.c.l.b16 %v305
    %v904 = vunpack.c.h.b16 %v305
    %v905 = vunpack.c.l.b16 %v306
    %v906 = vunpack.c.h.b16 %v306
    %v907 = vunpack.c.l.b16 %v307
    %v908 = vunpack.c.h.b16 %v307
    %v909 = vunpack.c.l.b16 %v308
    %v910 = vunpack.c.h.b16 %v308
    %v911 = vunpack.c.l.b16 %v309
    %v912 = vunpack.c.h.b16 %v309
    %v913 = vunpack.c.l.b16 %v310
    %v914 = vunpack.c.h.b16 %v310
    %v915 = vunpack.c.l.b16 %v311
    %v916 = vunpack.c.h.b16 %v311
    %v917 = vunpack.c.l.b16 %v312
    %v918 = vunpack.c.h.b16 %v312
    %v919 = vunpack.c.l.b16 %v313
    %v920 = vunpack.c.h.b16 %v313
    %v921 = vunpack.c.l.b16 %v314
    %v922 = vunpack.c.h.b16 %v314
    %v923 = vunpack.c.l.b16 %v315
    %v924 = vunpack.c.h.b16 %v315
    %v925 = vunpack.c.l.b16 %v316
    %v926 = vunpack.c.h.b16 %v316
    %v927 = vunpack.c.l.b16 %v317
    %v928 = vunpack.c.h.b16 %v317
    %v929 = vunpack.c.l.b16 %v318
    %v930 = vunpack.c.h.b16 %v318
    %v931 = vunpack.c.l.b16 %v319
    %v932 = vunpack.c.h.b16 %v319
    %v933 = vunpack.c.l.b16 %v320
    %v934 = vunpack.c.h.b16 %v320
    %v935 = vunpack.c.l.b16 %v321
    %v936 = vunpack.c.h.b16 %v321
    %v937 = vunpack.c.l.b16 %v322
    %v938 = vunpack.c.h.b16 %v322
    %v939 = vunpack.c.l.b16 %v323
    %v940 = vunpack.c.h.b16 %v323
    %v941 = vunpack.c.l.b16 %v324
    %v942 = vunpack.c.h.b16 %v324
    %v943 = vunpack.c.l.b16 %v325
    %v944 = vunpack.c.h.b16 %v325
    %v945 = vunpack.c.l.b16 %v326
    %v946 = vunpack.c.h.b16 %v326
    %v947 = vunpack.c.l.b16 %v327
    %v948 = vunpack.c.h.b16 %v327
    %v949 = vunpack.c.l.b16 %v328
    %v950 = vunpack.c.h.b16 %v328
    %v951 = vpack.c.b16 %v563, %v559
    %v952 = vpack.c.b16 %v564, %v560
    %v953 = vpack.c.b16 %v565, %v561
    %v954 = vpack.c.b16 %v566, %v562
    %v955 = vpack.c.b16 %v571, %v567
    %v956 = vpack.c.b16 %v572, %v568
    %v957 = vpack.c.b16 %v573, %v569
    %v958 = vpack.c.b16 %v574, %v570
    %v959 = vpack.c.b16 %v579, %v575
    %v960 = vpack.c.b16 %v580, %v576
    %v961 = vpack.c.b16 %v581, %v577
    %v962 = vpack.c.b16 %v582, %v578
    %v963 = vpack.c.b16 %v587, %v583
    %v964 = vpack.c.b16 %v588, %v584
    %v965 = vpack.c.b16 %v589, %v585
    %v966 = vpack.c.b16 %v590, %v586
    %v967 = vpack.c.b16 %v595, %v591
    %v968 = vpack.c.b16 %v596, %v592
    %v969 = vpack.c.b16 %v597, %v593
    %v970 = vpack.c.b16 %v598, %v594
    %v971 = vpack.c.b16 %v603, %v599
    %v972 = vpack.c.b16 %v604, %v600
    %v973 = vpack.c.b16 %v605, %v601
    %v974 = vpack.c.b16 %v606, %v602
    %v975 = vpack.c.b16 %v611, %v607
    %v976 = vpack.c.b16 %v612, %v608
    %v977 = vpack.c.b16 %v613, %v609
    %v978 = vpack.c.b16 %v614, %v610
    %v979 = vpack.c.b16 %v619, %v615
    %v980 = vpack.c.b16 %v620, %v616
    %v981 = vpack.c.b16 %v621, %v617
    %v982 = vpack.c.b16 %v622, %v618
    %v983 = vpack.c.b16 %v627, %v623
    %v984 = vpack.c.b16 %v628, %v624
    %v985 = vpack.c.b16 %v629, %v625
    %v986 = vpack.c.b16 %v630, %v626
    %v987 = vpack.c.b16 %v635, %v631
    %v988 = vpack.c.b16 %v636, %v632
    %v989 = vpack.c.b16 %v637, %v633
    %v990 = vpack.c.b16 %v638, %v634
    %v991 = vpack.c.b16 %v643, %v639
    %v992 = vpack.c.b16 %v644, %v640
    %v993 = vpack.c.b16 %v645, %v641
    %v994 = vpack.c.b16 %v646, %v642
    %v995 = vpack.c.b16 %v651, %v647
    %v996 = vpack.c.b16 %v652, %v648
    %v997 = vpack.c.b16 %v653, %v649
    %v998 = vpack.c.b16 %v654, %v650
    %v999 = vpack.c.b16 %v659, %v655
    %v1000 = vpack.c.b16 %v660, %v656
    %v1001 = vpack.c.b16 %v661, %v657
    %v1002 = vpack.c.b16 %v662, %v658
    %v1003 = vpack.c.b16 %v667, %v663
    %v1004 = vpack.c.b16 %v668, %v664
    %v1005 = vpack.c.b16 %v669, %v665
    %v1006 = vpack.c.b16 %v670, %v666
    %v1007 = vpack.c.b16 %v675, %v671
    %v1008 = vpack.c.b16 %v676, %v672
    %v1009 = vpack.c.b16 %v677, %v673
    %v1010 = vpack.c.b16 %v678, %v674
    %v1011 = vpack.c.b16 %v683, %v679
    %v1012 = vpack.c.b16 %v684, %v680
    %v1013 = vpack.c.b16 %v685, %v681
    %v1014 = vpack.c.b16 %v686, %v682
    %v1015 = vpack.c.b16 %v691, %v687
    %v1016 = vpack.c.b16 %v692, %v688
    %v1017 = vpack.c.b16 %v693, %v689
    %v1018 = vpack.c.b16 %v694, %v690
    %v1019 = vpack.c.b16 %v699, %v695
    %v1020 = vpack.c.b16 %v700, %v696
    %v1021 = vpack.c.b16 %v701, %v697
    %v1022 = vpack.c.b16 %v702, %v698
    %v1023 = vpack.c.b16 %v707, %v703
    %v1024 = vpack.c.b16 %v708, %v704
    %v1025 = vpack.c.b16 %v709, %v705
    %v1026 = vpack.c.b16 %v710, %v706
    %v1027 = vpack.c.b16 %v715, %v711
    %v1028 = vpack.c.b16 %v716, %v712
    %v1029 = vpack.c.b16 %v717, %v713
    %v1030 = vpack.c.b16 %v718, %v714
    %v1031 = vpack.c.b16 %v723, %v719
    %v1032 = vpack.c.b16 %v724, %v720
    %v1033 = vpack.c.b16 %v725, %v721
    %v1034 = vpack.c.b16 %v726, %v722
    %v1035 = vpack.c.b16 %v731, %v727
    %v1036 = vpack.c.b16 %v732, %v728
    %v1037 = vpack.c.b16 %v733, %v729
    %v1038 = vpack.c.b16 %v734, %v730
    %v1039 = vpack.c.b16 %v739, %v735
    %v1040 = vpack.c.b16 %v740, %v736
    %v1041 = vpack.c.b16 %v741, %v737
    %v1042 = vpack.c.b16 %v742, %v738
    %v1043 = vpack.c.b16 %v747, %v743
    %v1044 = vpack.c.b16 %v748, %v744
    %v1045 = vpack.c.b16 %v749, %v745
    %v1046 = vpack.c.b16 %v750, %v746
    %v1047 = vpack.c.b16 %v755, %v751
    %v1048 = vpack.c.b16 %v756, %v752
    %v1049 = vpack.c.b16 %v757, %v753
    %v1050 = vpack.c.b16 %v758, %v754
    %v1051 = vpack.c.b16 %v763, %v759
    %v1052 = vpack.c.b16 %v764, %v760
    %v1053 = vpack.c.b16 %v765, %v761
    %v1054 = vpack.c.b16 %v766, %v762
    %v1055 = vpack.c.b16 %v771, %v767
    %v1056 = vpack.c.b16 %v772, %v768
    %v1057 = vpack.c.b16 %v773, %v769
    %v1058 = vpack.c.b16 %v774, %v770
    %v1059 = vpack.c.b16 %v779, %v775
    %v1060 = vpack.c.b16 %v780, %v776
    %v1061 = vpack.c.b16 %v781, %v777
    %v1062 = vpack.c.b16 %v782, %v778
    %v1063 = vpack.c.b16 %v787, %v783
    %v1064 = vpack.c.b16 %v788, %v784
    %v1065 = vpack.c.b16 %v789, %v785
    %v1066 = vpack.c.b16 %v790, %v786
    %v1067 = vpack.c.b16 %v795, %v791
    %v1068 = vpack.c.b16 %v796, %v792
    %v1069 = vpack.c.b16 %v797, %v793
    %v1070 = vpack.c.b16 %v798, %v794
    %v1071 = vpack.c.b16 %v803, %v799
    %v1072 = vpack.c.b16 %v804, %v800
    %v1073 = vpack.c.b16 %v805, %v801
    %v1074 = vpack.c.b16 %v806, %v802
    %v1075 = vpack.c.b16 %v811, %v807
    %v1076 = vpack.c.b16 %v812, %v808
    %v1077 = vpack.c.b16 %v813, %v809
    %v1078 = vpack.c.b16 %v814, %v810
    %v1079 = vpack.c.b16 %v819, %v815
    %v1080 = vpack.c.b16 %v820, %v816
    %v1081 = vpack.c.b16 %v821, %v817
    %v1082 = vpack.c.b16 %v822, %v818
    %v1083 = vpack.c.b16 %v827, %v823
    %v1084 = vpack.c.b16 %v828, %v824
    %v1085 = vpack.c.b16 %v829, %v825
    %v1086 = vpack.c.b16 %v830, %v826
    %v1087 = vpack.c.b16 %v835, %v831
    %v1088 = vpack.c.b16 %v836, %v832
    %v1089 = vpack.c.b16 %v837, %v833
    %v1090 = vpack.c.b16 %v838, %v834
    %v1091 = vpack.c.b16 %v843, %v839
    %v1092 = vpack.c.b16 %v844, %v840
    %v1093 = vpack.c.b16 %v845, %v841
    %v1094 = vpack.c.b16 %v846, %v842
    %v1095 = vpack.c.b16 %v851, %v847
    %v1096 = vpack.c.b16 %v852, %v848
    %v1097 = vpack.c.b16 %v853, %v849
    %v1098 = vpack.c.b16 %v854, %v850
    %v1099 = vpack.c.b16 %v859, %v855
    %v1100 = vpack.c.b16 %v860, %v856
    %v1101 = vpack.c.b16 %v861, %v857
    %v1102 = vpack.c.b16 %v862, %v858
    %v1103 = vpack.c.b16 %v867, %v863
    %v1104 = vpack.c.b16 %v868, %v864
    %v1105 = vpack.c.b16 %v869, %v865
    %v1106 = vpack.c.b16 %v870, %v866
    %v1107 = vpack.c.b16 %v875, %v871
    %v1108 = vpack.c.b16 %v876, %v872
    %v1109 = vpack.c.b16 %v877, %v873
    %v1110 = vpack.c.b16 %v878, %v874
    %v1111 = vpack.c.b16 %v883, %v879
    %v1112 = vpack.c.b16 %v884, %v880
    %v1113 = vpack.c.b16 %v885, %v881
    %v1114 = vpack.c.b16 %v886, %v882
    %v1115 = vpack.c.b16 %v891, %v887
    %v1116 = vpack.c.b16 %v892, %v888
    %v1117 = vpack.c.b16 %v893, %v889
    %v1118 = vpack.c.b16 %v894, %v890
    %v1119 = vpack.c.b16 %v899, %v895
    %v1120 = vpack.c.b16 %v900, %v896
    %v1121 = vpack.c.b16 %v901, %v897
    %v1122 = vpack.c.b16 %v902, %v898
    %v1123 = vpack.c.b16 %v907, %v903
    %v1124 = vpack.c.b16 %v908, %v904
    %v1125 = vpack.c.b16 %v909, %v905
    %v1126 = vpack.c.b16 %v910, %v906
    %v1127 = vpack.c.b16 %v915, %v911
    %v1128 = vpack.c.b16 %v916, %v912
    %v1129 = vpack.c.b16 %v917, %v913
    %v1130 = vpack.c.b16 %v918, %v914
    %v1131 = vpack.c.b16 %v923, %v919
    %v1132 = vpack.c.b16 %v924, %v920
    %v1133 = vpack.c.b16 %v925, %v921
    %v1134 = vpack.c.b16 %v926, %v922
    %v1135 = vpack.c.b16 %v931, %v927
    %v1136 = vpack.c.b16 %v932, %v928
    %v1137 = vpack.c.b16 %v933, %v929
    %v1138 = vpack.c.b16 %v934, %v930
    %v1139 = vpack.c.b16 %v939, %v935
    %v1140 = vpack.c.b16 %v940, %v936
    %v1141 = vpack.c.b16 %v941, %v937
    %v1142 = vpack.c.b16 %v942, %v938
    %v1143 = vpack.c.b16 %v947, %v943
    %v1144 = vpack.c.b16 %v948, %v944
    %v1145 = vpack.c.b16 %v949, %v945
    %v1146 = vpack.c.b16 %v950, %v946
    %vm1343 = vcmask 130048
    %v1345 = vsel %vm1343, %v356, 0
    %1347 = vmatpush.bf16.msra.mxu0 %v979
    %1348 = vmatpush.bf16.msra.mxu0 %v975
    %1349 = vmatpush.bf16.msra.mxu0 %v971
    %1350 = vmatpush.bf16.msra.mxu0 %v967
    %1351 = vmatpush.bf16.msra.mxu0 %v963
    %1352 = vmatpush.bf16.msra.mxu0 %v959
    %1353 = vmatpush.bf16.msra.mxu0 %v955
    %1354 = vmatpush.bf16.msra.mxu0 %v951
    %1355 = vmatmul.bf16.gmra.mxu0 %v350
    %v1356 = vpop.f32.mrf.mxu0
    %v1357 = vadd.f32 %v331, %v1356
    %v1358 = vpop.f32.mrf.mxu0
    %1359 = vdwg.mxu0
    %1360 = vmatpush.bf16.msra.mxu0 %v1011
    %1361 = vmatpush.bf16.msra.mxu0 %v1007
    %1362 = vmatpush.bf16.msra.mxu0 %v1003
    %1363 = vmatpush.bf16.msra.mxu0 %v999
    %1364 = vmatpush.bf16.msra.mxu0 %v995
    %1365 = vmatpush.bf16.msra.mxu0 %v991
    %1366 = vmatpush.bf16.msra.mxu0 %v987
    %1367 = vmatpush.bf16.msra.mxu0 %v983
    %1368 = vmatmul.bf16.gmra.mxu0 %v351
    %v1369 = vpop.f32.mrf.mxu0
    %v1370 = vadd.f32 %v1357, %v1369
    %v1371 = vpop.f32.mrf.mxu0
    %1372 = vdwg.mxu0
    %1373 = vmatpush.bf16.msra.mxu0 %v1043
    %1374 = vmatpush.bf16.msra.mxu0 %v1039
    %1375 = vmatpush.bf16.msra.mxu0 %v1035
    %1376 = vmatpush.bf16.msra.mxu0 %v1031
    %1377 = vmatpush.bf16.msra.mxu0 %v1027
    %1378 = vmatpush.bf16.msra.mxu0 %v1023
    %1379 = vmatpush.bf16.msra.mxu0 %v1019
    %1380 = vmatpush.bf16.msra.mxu0 %v1015
    %1381 = vmatmul.bf16.gmra.mxu0 %v352
    %v1382 = vpop.f32.mrf.mxu0
    %v1383 = vadd.f32 %v1370, %v1382
    %v1384 = vpop.f32.mrf.mxu0
    %1385 = vdwg.mxu0
    %1386 = vmatpush.bf16.msra.mxu0 %v1075
    %1387 = vmatpush.bf16.msra.mxu0 %v1071
    %1388 = vmatpush.bf16.msra.mxu0 %v1067
    %1389 = vmatpush.bf16.msra.mxu0 %v1063
    %1390 = vmatpush.bf16.msra.mxu0 %v1059
    %1391 = vmatpush.bf16.msra.mxu0 %v1055
    %1392 = vmatpush.bf16.msra.mxu0 %v1051
    %1393 = vmatpush.bf16.msra.mxu0 %v1047
    %1394 = vmatmul.bf16.gmra.mxu0 %v353
    %v1395 = vpop.f32.mrf.mxu0
    %v1396 = vadd.f32 %v1383, %v1395
    %v1397 = vpop.f32.mrf.mxu0
    %1398 = vdwg.mxu0
    %1399 = vmatpush.bf16.msra.mxu0 %v1107
    %1400 = vmatpush.bf16.msra.mxu0 %v1103
    %1401 = vmatpush.bf16.msra.mxu0 %v1099
    %1402 = vmatpush.bf16.msra.mxu0 %v1095
    %1403 = vmatpush.bf16.msra.mxu0 %v1091
    %1404 = vmatpush.bf16.msra.mxu0 %v1087
    %1405 = vmatpush.bf16.msra.mxu0 %v1083
    %1406 = vmatpush.bf16.msra.mxu0 %v1079
    %1407 = vmatmul.bf16.gmra.mxu0 %v354
    %v1408 = vpop.f32.mrf.mxu0
    %v1409 = vadd.f32 %v1396, %v1408
    %v1410 = vpop.f32.mrf.mxu0
    %1411 = vdwg.mxu0
    %1412 = vmatpush.bf16.msra.mxu0 %v1139
    %1413 = vmatpush.bf16.msra.mxu0 %v1135
    %1414 = vmatpush.bf16.msra.mxu0 %v1131
    %1415 = vmatpush.bf16.msra.mxu0 %v1127
    %1416 = vmatpush.bf16.msra.mxu0 %v1123
    %1417 = vmatpush.bf16.msra.mxu0 %v1119
    %1418 = vmatpush.bf16.msra.mxu0 %v1115
    %1419 = vmatpush.bf16.msra.mxu0 %v1111
    %1420 = vmatmul.bf16.gmra.mxu0 %v355
    %v1421 = vpop.f32.mrf.mxu0
    %v1422 = vadd.f32 %v1409, %v1421
    %v1423 = vpop.f32.mrf.mxu0
    %1424 = vdwg.mxu0
    %1425 = vmatpush.bf16.msra.mxu0 0
    %1426 = vmatpush.bf16.msra.mxu0 0
    %1427 = vmatpush.bf16.msra.mxu0 0
    %1428 = vmatpush.bf16.msra.mxu0 0
    %1429 = vmatpush.bf16.msra.mxu0 0
    %1430 = vmatpush.bf16.msra.mxu0 0
    %1431 = vmatpush.bf16.msra.mxu0 0
    %1432 = vmatpush.bf16.msra.mxu0 %v1143
    %1433 = vmatmul.bf16.gmra.mxu0 %v1345
    %v1434 = vpop.f32.mrf.mxu0
    %v1435 = vadd.f32 %v1422, %v1434
    %v1436 = vpop.f32.mrf.mxu0
    %1437 = vdwg.mxu0
    %1438 = vmatpush.bf16.msra.mxu0 %v980
    %1439 = vmatpush.bf16.msra.mxu0 %v976
    %1440 = vmatpush.bf16.msra.mxu0 %v972
    %1441 = vmatpush.bf16.msra.mxu0 %v968
    %1442 = vmatpush.bf16.msra.mxu0 %v964
    %1443 = vmatpush.bf16.msra.mxu0 %v960
    %1444 = vmatpush.bf16.msra.mxu0 %v956
    %1445 = vmatpush.bf16.msra.mxu0 %v952
    %1446 = vmatmul.bf16.gmra.mxu0 %v350
    %v1447 = vpop.f32.mrf.mxu0
    %v1448 = vadd.f32 %v332, %v1447
    %v1449 = vpop.f32.mrf.mxu0
    %1450 = vdwg.mxu0
    %1451 = vmatpush.bf16.msra.mxu0 %v1012
    %1452 = vmatpush.bf16.msra.mxu0 %v1008
    %1453 = vmatpush.bf16.msra.mxu0 %v1004
    %1454 = vmatpush.bf16.msra.mxu0 %v1000
    %1455 = vmatpush.bf16.msra.mxu0 %v996
    %1456 = vmatpush.bf16.msra.mxu0 %v992
    %1457 = vmatpush.bf16.msra.mxu0 %v988
    %1458 = vmatpush.bf16.msra.mxu0 %v984
    %1459 = vmatmul.bf16.gmra.mxu0 %v351
    %v1460 = vpop.f32.mrf.mxu0
    %v1461 = vadd.f32 %v1448, %v1460
    %v1462 = vpop.f32.mrf.mxu0
    %1463 = vdwg.mxu0
    %1464 = vmatpush.bf16.msra.mxu0 %v1044
    %1465 = vmatpush.bf16.msra.mxu0 %v1040
    %1466 = vmatpush.bf16.msra.mxu0 %v1036
    %1467 = vmatpush.bf16.msra.mxu0 %v1032
    %1468 = vmatpush.bf16.msra.mxu0 %v1028
    %1469 = vmatpush.bf16.msra.mxu0 %v1024
    %1470 = vmatpush.bf16.msra.mxu0 %v1020
    %1471 = vmatpush.bf16.msra.mxu0 %v1016
    %1472 = vmatmul.bf16.gmra.mxu0 %v352
    %v1473 = vpop.f32.mrf.mxu0
    %v1474 = vadd.f32 %v1461, %v1473
    %v1475 = vpop.f32.mrf.mxu0
    %1476 = vdwg.mxu0
    %1477 = vmatpush.bf16.msra.mxu0 %v1076
    %1478 = vmatpush.bf16.msra.mxu0 %v1072
    %1479 = vmatpush.bf16.msra.mxu0 %v1068
    %1480 = vmatpush.bf16.msra.mxu0 %v1064
    %1481 = vmatpush.bf16.msra.mxu0 %v1060
    %1482 = vmatpush.bf16.msra.mxu0 %v1056
    %1483 = vmatpush.bf16.msra.mxu0 %v1052
    %1484 = vmatpush.bf16.msra.mxu0 %v1048
    %1485 = vmatmul.bf16.gmra.mxu0 %v353
    %v1486 = vpop.f32.mrf.mxu0
    %v1487 = vadd.f32 %v1474, %v1486
    %v1488 = vpop.f32.mrf.mxu0
    %1489 = vdwg.mxu0
    %1490 = vmatpush.bf16.msra.mxu0 %v1108
    %1491 = vmatpush.bf16.msra.mxu0 %v1104
    %1492 = vmatpush.bf16.msra.mxu0 %v1100
    %1493 = vmatpush.bf16.msra.mxu0 %v1096
    %1494 = vmatpush.bf16.msra.mxu0 %v1092
    %1495 = vmatpush.bf16.msra.mxu0 %v1088
    %1496 = vmatpush.bf16.msra.mxu0 %v1084
    %1497 = vmatpush.bf16.msra.mxu0 %v1080
    %1498 = vmatmul.bf16.gmra.mxu0 %v354
    %v1499 = vpop.f32.mrf.mxu0
    %v1500 = vadd.f32 %v1487, %v1499
    %v1501 = vpop.f32.mrf.mxu0
    %1502 = vdwg.mxu0
    %1503 = vmatpush.bf16.msra.mxu0 %v1140
    %1504 = vmatpush.bf16.msra.mxu0 %v1136
    %1505 = vmatpush.bf16.msra.mxu0 %v1132
    %1506 = vmatpush.bf16.msra.mxu0 %v1128
    %1507 = vmatpush.bf16.msra.mxu0 %v1124
    %1508 = vmatpush.bf16.msra.mxu0 %v1120
    %1509 = vmatpush.bf16.msra.mxu0 %v1116
    %1510 = vmatpush.bf16.msra.mxu0 %v1112
    %1511 = vmatmul.bf16.gmra.mxu0 %v355
    %v1512 = vpop.f32.mrf.mxu0
    %v1513 = vadd.f32 %v1500, %v1512
    %v1514 = vpop.f32.mrf.mxu0
    %1515 = vdwg.mxu0
    %1516 = vmatpush.bf16.msra.mxu0 0
    %1517 = vmatpush.bf16.msra.mxu0 0
    %1518 = vmatpush.bf16.msra.mxu0 0
    %1519 = vmatpush.bf16.msra.mxu0 0
    %1520 = vmatpush.bf16.msra.mxu0 0
    %1521 = vmatpush.bf16.msra.mxu0 0
    %1522 = vmatpush.bf16.msra.mxu0 0
    %1523 = vmatpush.bf16.msra.mxu0 %v1144
    %1524 = vmatmul.bf16.gmra.mxu0 %v1345
    %v1525 = vpop.f32.mrf.mxu0
    %v1526 = vadd.f32 %v1513, %v1525
    %v1527 = vpop.f32.mrf.mxu0
    %1528 = vdwg.mxu0
    %1529 = vmatpush.bf16.msra.mxu0 %v981
    %1530 = vmatpush.bf16.msra.mxu0 %v977
    %1531 = vmatpush.bf16.msra.mxu0 %v973
    %1532 = vmatpush.bf16.msra.mxu0 %v969
    %1533 = vmatpush.bf16.msra.mxu0 %v965
    %1534 = vmatpush.bf16.msra.mxu0 %v961
    %1535 = vmatpush.bf16.msra.mxu0 %v957
    %1536 = vmatpush.bf16.msra.mxu0 %v953
    %1537 = vmatmul.bf16.gmra.mxu0 %v350
    %v1538 = vpop.f32.mrf.mxu0
    %v1539 = vadd.f32 %v333, %v1538
    %v1540 = vpop.f32.mrf.mxu0
    %1541 = vdwg.mxu0
    %1542 = vmatpush.bf16.msra.mxu0 %v1013
    %1543 = vmatpush.bf16.msra.mxu0 %v1009
    %1544 = vmatpush.bf16.msra.mxu0 %v1005
    %1545 = vmatpush.bf16.msra.mxu0 %v1001
    %1546 = vmatpush.bf16.msra.mxu0 %v997
    %1547 = vmatpush.bf16.msra.mxu0 %v993
    %1548 = vmatpush.bf16.msra.mxu0 %v989
    %1549 = vmatpush.bf16.msra.mxu0 %v985
    %1550 = vmatmul.bf16.gmra.mxu0 %v351
    %v1551 = vpop.f32.mrf.mxu0
    %v1552 = vadd.f32 %v1539, %v1551
    %v1553 = vpop.f32.mrf.mxu0
    %1554 = vdwg.mxu0
    %1555 = vmatpush.bf16.msra.mxu0 %v1045
    %1556 = vmatpush.bf16.msra.mxu0 %v1041
    %1557 = vmatpush.bf16.msra.mxu0 %v1037
    %1558 = vmatpush.bf16.msra.mxu0 %v1033
    %1559 = vmatpush.bf16.msra.mxu0 %v1029
    %1560 = vmatpush.bf16.msra.mxu0 %v1025
    %1561 = vmatpush.bf16.msra.mxu0 %v1021
    %1562 = vmatpush.bf16.msra.mxu0 %v1017
    %1563 = vmatmul.bf16.gmra.mxu0 %v352
    %v1564 = vpop.f32.mrf.mxu0
    %v1565 = vadd.f32 %v1552, %v1564
    %v1566 = vpop.f32.mrf.mxu0
    %1567 = vdwg.mxu0
    %1568 = vmatpush.bf16.msra.mxu0 %v1077
    %1569 = vmatpush.bf16.msra.mxu0 %v1073
    %1570 = vmatpush.bf16.msra.mxu0 %v1069
    %1571 = vmatpush.bf16.msra.mxu0 %v1065
    %1572 = vmatpush.bf16.msra.mxu0 %v1061
    %1573 = vmatpush.bf16.msra.mxu0 %v1057
    %1574 = vmatpush.bf16.msra.mxu0 %v1053
    %1575 = vmatpush.bf16.msra.mxu0 %v1049
    %1576 = vmatmul.bf16.gmra.mxu0 %v353
    %v1577 = vpop.f32.mrf.mxu0
    %v1578 = vadd.f32 %v1565, %v1577
    %v1579 = vpop.f32.mrf.mxu0
    %1580 = vdwg.mxu0
    %1581 = vmatpush.bf16.msra.mxu0 %v1109
    %1582 = vmatpush.bf16.msra.mxu0 %v1105
    %1583 = vmatpush.bf16.msra.mxu0 %v1101
    %1584 = vmatpush.bf16.msra.mxu0 %v1097
    %1585 = vmatpush.bf16.msra.mxu0 %v1093
    %1586 = vmatpush.bf16.msra.mxu0 %v1089
    %1587 = vmatpush.bf16.msra.mxu0 %v1085
    %1588 = vmatpush.bf16.msra.mxu0 %v1081
    %1589 = vmatmul.bf16.gmra.mxu0 %v354
    %v1590 = vpop.f32.mrf.mxu0
    %v1591 = vadd.f32 %v1578, %v1590
    %v1592 = vpop.f32.mrf.mxu0
    %1593 = vdwg.mxu0
    %1594 = vmatpush.bf16.msra.mxu0 %v1141
    %1595 = vmatpush.bf16.msra.mxu0 %v1137
    %1596 = vmatpush.bf16.msra.mxu0 %v1133
    %1597 = vmatpush.bf16.msra.mxu0 %v1129
    %1598 = vmatpush.bf16.msra.mxu0 %v1125
    %1599 = vmatpush.bf16.msra.mxu0 %v1121
    %1600 = vmatpush.bf16.msra.mxu0 %v1117
    %1601 = vmatpush.bf16.msra.mxu0 %v1113
    %1602 = vmatmul.bf16.gmra.mxu0 %v355
    %v1603 = vpop.f32.mrf.mxu0
    %v1604 = vadd.f32 %v1591, %v1603
    %v1605 = vpop.f32.mrf.mxu0
    %1606 = vdwg.mxu0
    %1607 = vmatpush.bf16.msra.mxu0 0
    %1608 = vmatpush.bf16.msra.mxu0 0
    %1609 = vmatpush.bf16.msra.mxu0 0
    %1610 = vmatpush.bf16.msra.mxu0 0
    %1611 = vmatpush.bf16.msra.mxu0 0
    %1612 = vmatpush.bf16.msra.mxu0 0
    %1613 = vmatpush.bf16.msra.mxu0 0
    %1614 = vmatpush.bf16.msra.mxu0 %v1145
    %1615 = vmatmul.bf16.gmra.mxu0 %v1345
    %v1616 = vpop.f32.mrf.mxu0
    %v1617 = vadd.f32 %v1604, %v1616
    %v1618 = vpop.f32.mrf.mxu0
    %1619 = vdwg.mxu0
    %1620 = vmatpush.bf16.msra.mxu0 %v982
    %1621 = vmatpush.bf16.msra.mxu0 %v978
    %1622 = vmatpush.bf16.msra.mxu0 %v974
    %1623 = vmatpush.bf16.msra.mxu0 %v970
    %1624 = vmatpush.bf16.msra.mxu0 %v966
    %1625 = vmatpush.bf16.msra.mxu0 %v962
    %1626 = vmatpush.bf16.msra.mxu0 %v958
    %1627 = vmatpush.bf16.msra.mxu0 %v954
    %1628 = vmatmul.bf16.gmra.mxu0 %v350
    %v1629 = vpop.f32.mrf.mxu0
    %v1630 = vadd.f32 %v334, %v1629
    %v1631 = vpop.f32.mrf.mxu0
    %1632 = vdwg.mxu0
    %1633 = vmatpush.bf16.msra.mxu0 %v1014
    %1634 = vmatpush.bf16.msra.mxu0 %v1010
    %1635 = vmatpush.bf16.msra.mxu0 %v1006
    %1636 = vmatpush.bf16.msra.mxu0 %v1002
    %1637 = vmatpush.bf16.msra.mxu0 %v998
    %1638 = vmatpush.bf16.msra.mxu0 %v994
    %1639 = vmatpush.bf16.msra.mxu0 %v990
    %1640 = vmatpush.bf16.msra.mxu0 %v986
    %1641 = vmatmul.bf16.gmra.mxu0 %v351
    %v1642 = vpop.f32.mrf.mxu0
    %v1643 = vadd.f32 %v1630, %v1642
    %v1644 = vpop.f32.mrf.mxu0
    %1645 = vdwg.mxu0
    %1646 = vmatpush.bf16.msra.mxu0 %v1046
    %1647 = vmatpush.bf16.msra.mxu0 %v1042
    %1648 = vmatpush.bf16.msra.mxu0 %v1038
    %1649 = vmatpush.bf16.msra.mxu0 %v1034
    %1650 = vmatpush.bf16.msra.mxu0 %v1030
    %1651 = vmatpush.bf16.msra.mxu0 %v1026
    %1652 = vmatpush.bf16.msra.mxu0 %v1022
    %1653 = vmatpush.bf16.msra.mxu0 %v1018
    %1654 = vmatmul.bf16.gmra.mxu0 %v352
    %v1655 = vpop.f32.mrf.mxu0
    %v1656 = vadd.f32 %v1643, %v1655
    %v1657 = vpop.f32.mrf.mxu0
    %1658 = vdwg.mxu0
    %1659 = vmatpush.bf16.msra.mxu0 %v1078
    %1660 = vmatpush.bf16.msra.mxu0 %v1074
    %1661 = vmatpush.bf16.msra.mxu0 %v1070
    %1662 = vmatpush.bf16.msra.mxu0 %v1066
    %1663 = vmatpush.bf16.msra.mxu0 %v1062
    %1664 = vmatpush.bf16.msra.mxu0 %v1058
    %1665 = vmatpush.bf16.msra.mxu0 %v1054
    %1666 = vmatpush.bf16.msra.mxu0 %v1050
    %1667 = vmatmul.bf16.gmra.mxu0 %v353
    %v1668 = vpop.f32.mrf.mxu0
    %v1669 = vadd.f32 %v1656, %v1668
    %v1670 = vpop.f32.mrf.mxu0
    %1671 = vdwg.mxu0
    %1672 = vmatpush.bf16.msra.mxu0 %v1110
    %1673 = vmatpush.bf16.msra.mxu0 %v1106
    %1674 = vmatpush.bf16.msra.mxu0 %v1102
    %1675 = vmatpush.bf16.msra.mxu0 %v1098
    %1676 = vmatpush.bf16.msra.mxu0 %v1094
    %1677 = vmatpush.bf16.msra.mxu0 %v1090
    %1678 = vmatpush.bf16.msra.mxu0 %v1086
    %1679 = vmatpush.bf16.msra.mxu0 %v1082
    %1680 = vmatmul.bf16.gmra.mxu0 %v354
    %v1681 = vpop.f32.mrf.mxu0
    %v1682 = vadd.f32 %v1669, %v1681
    %v1683 = vpop.f32.mrf.mxu0
    %1684 = vdwg.mxu0
    %1685 = vmatpush.bf16.msra.mxu0 %v1142
    %1686 = vmatpush.bf16.msra.mxu0 %v1138
    %1687 = vmatpush.bf16.msra.mxu0 %v1134
    %1688 = vmatpush.bf16.msra.mxu0 %v1130
    %1689 = vmatpush.bf16.msra.mxu0 %v1126
    %1690 = vmatpush.bf16.msra.mxu0 %v1122
    %1691 = vmatpush.bf16.msra.mxu0 %v1118
    %1692 = vmatpush.bf16.msra.mxu0 %v1114
    %1693 = vmatmul.bf16.gmra.mxu0 %v355
    %v1694 = vpop.f32.mrf.mxu0
    %v1695 = vadd.f32 %v1682, %v1694
    %v1696 = vpop.f32.mrf.mxu0
    %1697 = vdwg.mxu0
    %1698 = vmatpush.bf16.msra.mxu0 0
    %1699 = vmatpush.bf16.msra.mxu0 0
    %1700 = vmatpush.bf16.msra.mxu0 0
    %1701 = vmatpush.bf16.msra.mxu0 0
    %1702 = vmatpush.bf16.msra.mxu0 0
    %1703 = vmatpush.bf16.msra.mxu0 0
    %1704 = vmatpush.bf16.msra.mxu0 0
    %1705 = vmatpush.bf16.msra.mxu0 %v1146
    %1706 = vmatmul.bf16.gmra.mxu0 %v1345
    %v1707 = vpop.f32.mrf.mxu0
    %v1708 = vadd.f32 %v1695, %v1707
    %v1709 = vpop.f32.mrf.mxu0
    %1710 = vdwg.mxu0
    %v1711 = vmax.f32 %v1435, 0.0
    %v1712 = vmax.f32 %v1526, 0.0
    %v1713 = vmax.f32 %v1617, 0.0
    %v1714 = vmax.f32 %v1708, 0.0
    %v1715 = vpack.c.bf16 %v1711, %v1711
    %v1716 = vpack.c.bf16 %v1712, %v1712
    %v1717 = vpack.c.bf16 %v1713, %v1713
    %v1718 = vpack.c.bf16 %v1714, %v1714
    %v1719 = vld [vmem:[#allocation8] sm:$0xff]
    %v1720 = vld [vmem:[#allocation8 + $0x8] sm:$0xff]
    %v1721 = vld [vmem:[#allocation8 + $0x10] sm:$0xff]
    %v1722 = vld [vmem:[#allocation8 + $0x18] sm:$0xff]
    %v1723 = vld [vmem:[#allocation8 + $0x20] sm:$0xff]
    %v1724 = vld [vmem:[#allocation8 + $0x28] sm:$0xff]
    %v1725 = vld [vmem:[#allocation8 + $0x30] sm:$0xff]
    %v1726 = vld [vmem:[#allocation8 + $0x38] sm:$0xff]
    %v1727 = vld [vmem:[#allocation8 + $0x40] sm:$0xff]
    %v1728 = vld [vmem:[#allocation8 + $0x48] sm:$0xff]
    %v1729 = vld [vmem:[#allocation8 + $0x50] sm:$0xff]
    %v1730 = vld [vmem:[#allocation8 + $0x58] sm:$0xff]
    %v1731 = vld [vmem:[#allocation8 + $0x60] sm:$0xff]
    %v1732 = vld [vmem:[#allocation8 + $0x68] sm:$0xff]
    %v1733 = vld [vmem:[#allocation8 + $0x70] sm:$0xff]
    %v1734 = vld [vmem:[#allocation8 + $0x78] sm:$0xff]
    %v1735 = vld [vmem:[#allocation8 + $0x80] sm:$0xff]
    %v1736 = vld [vmem:[#allocation8 + $0x88] sm:$0xff]
    %v1737 = vld [vmem:[#allocation8 + $0x90] sm:$0xff]
    %v1738 = vld [vmem:[#allocation8 + $0x98] sm:$0xff]
    %v1739 = vld [vmem:[#allocation8 + $0xa0] sm:$0xff]
    %v1740 = vld [vmem:[#allocation8 + $0xa8] sm:$0xff]
    %v1741 = vld [vmem:[#allocation8 + $0xb0] sm:$0xff]
    %v1742 = vld [vmem:[#allocation8 + $0xb8] sm:$0xff]
    %v1743 = vld [vmem:[#allocation8 + $0xc0] sm:$0xff]
    %v1744 = vld [vmem:[#allocation8 + $0xc8] sm:$0xff]
    %v1745 = vld [vmem:[#allocation8 + $0xd0] sm:$0xff]
    %v1746 = vld [vmem:[#allocation8 + $0xd8] sm:$0xff]
    %v1747 = vld [vmem:[#allocation8 + $0xe0] sm:$0xff]
    %v1748 = vld [vmem:[#allocation8 + $0xe8] sm:$0xff]
    %v1749 = vld [vmem:[#allocation8 + $0xf0] sm:$0xff]
    %v1750 = vld [vmem:[#allocation8 + $0xf8] sm:$0xff]
    %v1751 = vld [vmem:[#allocation8 + $0x100] sm:$0xff]
    %v1752 = vld [vmem:[#allocation8 + $0x108] sm:$0xff]
    %v1753 = vld [vmem:[#allocation8 + $0x110] sm:$0xff]
    %v1754 = vld [vmem:[#allocation8 + $0x118] sm:$0xff]
    %v1755 = vld [vmem:[#allocation8 + $0x120] sm:$0xff]
    %v1756 = vld [vmem:[#allocation8 + $0x128] sm:$0xff]
    %v1757 = vld [vmem:[#allocation8 + $0x130] sm:$0xff]
    %v1758 = vld [vmem:[#allocation8 + $0x138] sm:$0xff]
    %v1759 = vld [vmem:[#allocation8 + $0x140] sm:$0xff]
    %v1760 = vld [vmem:[#allocation8 + $0x148] sm:$0xff]
    %v1761 = vld [vmem:[#allocation8 + $0x150] sm:$0xff]
    %v1762 = vld [vmem:[#allocation8 + $0x158] sm:$0xff]
    %v1763 = vld [vmem:[#allocation8 + $0x160] sm:$0xff]
    %v1764 = vld [vmem:[#allocation8 + $0x168] sm:$0xff]
    %v1765 = vld [vmem:[#allocation8 + $0x170] sm:$0xff]
    %v1766 = vld [vmem:[#allocation8 + $0x178] sm:$0xff]
    %v1767 = vld [vmem:[#allocation8 + $0x180] sm:$0xff]
    %v1768 = vld [vmem:[#allocation8 + $0x188] sm:$0xff]
    %v1769 = vld [vmem:[#allocation8 + $0x190] sm:$0xff]
    %v1770 = vld [vmem:[#allocation8 + $0x198] sm:$0xff]
    %v1771 = vld [vmem:[#allocation8 + $0x1a0] sm:$0xff]
    %v1772 = vld [vmem:[#allocation8 + $0x1a8] sm:$0xff]
    %v1773 = vld [vmem:[#allocation8 + $0x1b0] sm:$0xff]
    %v1774 = vld [vmem:[#allocation8 + $0x1b8] sm:$0xff]
    %v1775 = vld [vmem:[#allocation8 + $0x1c0] sm:$0xff]
    %v1776 = vld [vmem:[#allocation8 + $0x1c8] sm:$0xff]
    %v1777 = vld [vmem:[#allocation8 + $0x1d0] sm:$0xff]
    %v1778 = vld [vmem:[#allocation8 + $0x1d8] sm:$0xff]
    %v1779 = vld [vmem:[#allocation8 + $0x1e0] sm:$0xff]
    %v1780 = vld [vmem:[#allocation8 + $0x1e8] sm:$0xff]
    %v1781 = vld [vmem:[#allocation8 + $0x1f0] sm:$0xff]
    %v1782 = vld [vmem:[#allocation8 + $0x1f8] sm:$0xff]
    %v1783 = vld [vmem:[#allocation8 + $0x200] sm:$0xff]
    %v1784 = vld [vmem:[#allocation8 + $0x208] sm:$0xff]
    %v1785 = vld [vmem:[#allocation8 + $0x210] sm:$0xff]
    %v1786 = vld [vmem:[#allocation8 + $0x218] sm:$0xff]
    %v1787 = vld [vmem:[#allocation8 + $0x220] sm:$0xff]
    %v1788 = vld [vmem:[#allocation8 + $0x228] sm:$0xff]
    %v1789 = vld [vmem:[#allocation8 + $0x230] sm:$0xff]
    %v1790 = vld [vmem:[#allocation8 + $0x238] sm:$0xff]
    %v1791 = vld [vmem:[#allocation8 + $0x240] sm:$0xff]
    %v1792 = vld [vmem:[#allocation8 + $0x248] sm:$0xff]
    %v1793 = vld [vmem:[#allocation8 + $0x250] sm:$0xff]
    %v1794 = vld [vmem:[#allocation8 + $0x258] sm:$0xff]
    %v1795 = vld [vmem:[#allocation8 + $0x260] sm:$0xff]
    %v1796 = vld [vmem:[#allocation8 + $0x268] sm:$0xff]
    %v1797 = vld [vmem:[#allocation8 + $0x270] sm:$0xff]
    %v1798 = vld [vmem:[#allocation8 + $0x278] sm:$0xff]
    %v1799 = vld [vmem:[#allocation8 + $0x280] sm:$0xff]
    %v1800 = vld [vmem:[#allocation8 + $0x288] sm:$0xff]
    %v1801 = vld [vmem:[#allocation8 + $0x290] sm:$0xff]
    %v1802 = vld [vmem:[#allocation8 + $0x298] sm:$0xff]
    %v1803 = vld [vmem:[#allocation8 + $0x2a0] sm:$0xff]
    %v1804 = vld [vmem:[#allocation8 + $0x2a8] sm:$0xff]
    %v1805 = vld [vmem:[#allocation8 + $0x2b0] sm:$0xff]
    %v1806 = vld [vmem:[#allocation8 + $0x2b8] sm:$0xff]
    %v1807 = vld [vmem:[#allocation8 + $0x2c0] sm:$0xff]
    %v1808 = vld [vmem:[#allocation8 + $0x2c8] sm:$0xff]
    %v1809 = vld [vmem:[#allocation8 + $0x2d0] sm:$0xff]
    %v1810 = vld [vmem:[#allocation8 + $0x2d8] sm:$0xff]
    %v1811 = vld [vmem:[#allocation8 + $0x2e0] sm:$0xff]
    %v1812 = vld [vmem:[#allocation8 + $0x2e8] sm:$0xff]
    %v1813 = vld [vmem:[#allocation8 + $0x2f0] sm:$0xff]
    %v1814 = vld [vmem:[#allocation8 + $0x2f8] sm:$0xff]
    %v1815 = vld [vmem:[#allocation8 + $0x300] sm:$0xff]
    %v1816 = vld [vmem:[#allocation8 + $0x308] sm:$0xff]
    %v1817 = vld [vmem:[#allocation8 + $0x310] sm:$0xff]
    %v1818 = vld [vmem:[#allocation8 + $0x318] sm:$0xff]
    %v1819 = vld [vmem:[#allocation8 + $0x320] sm:$0xff]
    %v1820 = vld [vmem:[#allocation8 + $0x328] sm:$0xff]
    %v1821 = vld [vmem:[#allocation8 + $0x330] sm:$0xff]
    %v1822 = vld [vmem:[#allocation8 + $0x338] sm:$0xff]
    %v1823 = vld [vmem:[#allocation8 + $0x340] sm:$0xff]
    %v1824 = vld [vmem:[#allocation8 + $0x348] sm:$0xff]
    %v1825 = vld [vmem:[#allocation8 + $0x350] sm:$0xff]
    %v1826 = vld [vmem:[#allocation8 + $0x358] sm:$0xff]
    %v1827 = vld [vmem:[#allocation8 + $0x360] sm:$0xff]
    %v1828 = vld [vmem:[#allocation8 + $0x368] sm:$0xff]
    %v1829 = vld [vmem:[#allocation8 + $0x370] sm:$0xff]
    %v1830 = vld [vmem:[#allocation8 + $0x378] sm:$0xff]
    %v1831 = vld [vmem:[#allocation8 + $0x380] sm:$0xff]
    %v1832 = vld [vmem:[#allocation8 + $0x388] sm:$0xff]
    %v1833 = vld [vmem:[#allocation8 + $0x390] sm:$0xff]
    %v1834 = vld [vmem:[#allocation8 + $0x398] sm:$0xff]
    %v1835 = vld [vmem:[#allocation8 + $0x3a0] sm:$0xff]
    %v1836 = vld [vmem:[#allocation8 + $0x3a8] sm:$0xff]
    %v1837 = vld [vmem:[#allocation8 + $0x3b0] sm:$0xff]
    %v1838 = vld [vmem:[#allocation8 + $0x3b8] sm:$0xff]
    %v1839 = vld [vmem:[#allocation8 + $0x3c0] sm:$0xff]
    %v1840 = vld [vmem:[#allocation8 + $0x3c8] sm:$0xff]
    %v1841 = vld [vmem:[#allocation8 + $0x3d0] sm:$0xff]
    %v1842 = vld [vmem:[#allocation8 + $0x3d8] sm:$0xff]
    %v1843 = vld [vmem:[#allocation8 + $0x3e0] sm:$0xff]
    %v1844 = vld [vmem:[#allocation8 + $0x3e8] sm:$0xff]
    %v1845 = vld [vmem:[#allocation8 + $0x3f0] sm:$0xff]
    %v1846 = vld [vmem:[#allocation8 + $0x3f8] sm:$0xff]
    %v1847 = vld [vmem:[#allocation10] sm:$0xf]
    %v1849 = vperm.slane %v1847, 0
    %v1850 = vperm.slane %v1847, 1
    %v1851 = vperm.slane %v1847, 2
    %v1852 = vperm.slane %v1847, 3
    %v1985 = vunpack.c.l.b16 %v1719
    %v1986 = vunpack.c.h.b16 %v1719
    %v1987 = vunpack.c.l.b16 %v1720
    %v1988 = vunpack.c.h.b16 %v1720
    %v1989 = vunpack.c.l.b16 %v1721
    %v1990 = vunpack.c.h.b16 %v1721
    %v1991 = vunpack.c.l.b16 %v1722
    %v1992 = vunpack.c.h.b16 %v1722
    %v1993 = vunpack.c.l.b16 %v1723
    %v1994 = vunpack.c.h.b16 %v1723
    %v1995 = vunpack.c.l.b16 %v1724
    %v1996 = vunpack.c.h.b16 %v1724
    %v1997 = vunpack.c.l.b16 %v1725
    %v1998 = vunpack.c.h.b16 %v1725
    %v1999 = vunpack.c.l.b16 %v1726
    %v2000 = vunpack.c.h.b16 %v1726
    %v2001 = vunpack.c.l.b16 %v1727
    %v2002 = vunpack.c.h.b16 %v1727
    %v2003 = vunpack.c.l.b16 %v1728
    %v2004 = vunpack.c.h.b16 %v1728
    %v2005 = vunpack.c.l.b16 %v1729
    %v2006 = vunpack.c.h.b16 %v1729
    %v2007 = vunpack.c.l.b16 %v1730
    %v2008 = vunpack.c.h.b16 %v1730
    %v2009 = vunpack.c.l.b16 %v1731
    %v2010 = vunpack.c.h.b16 %v1731
    %v2011 = vunpack.c.l.b16 %v1732
    %v2012 = vunpack.c.h.b16 %v1732
    %v2013 = vunpack.c.l.b16 %v1733
    %v2014 = vunpack.c.h.b16 %v1733
    %v2015 = vunpack.c.l.b16 %v1734
    %v2016 = vunpack.c.h.b16 %v1734
    %v2017 = vunpack.c.l.b16 %v1735
    %v2018 = vunpack.c.h.b16 %v1735
    %v2019 = vunpack.c.l.b16 %v1736
    %v2020 = vunpack.c.h.b16 %v1736
    %v2021 = vunpack.c.l.b16 %v1737
    %v2022 = vunpack.c.h.b16 %v1737
    %v2023 = vunpack.c.l.b16 %v1738
    %v2024 = vunpack.c.h.b16 %v1738
    %v2025 = vunpack.c.l.b16 %v1739
    %v2026 = vunpack.c.h.b16 %v1739
    %v2027 = vunpack.c.l.b16 %v1740
    %v2028 = vunpack.c.h.b16 %v1740
    %v2029 = vunpack.c.l.b16 %v1741
    %v2030 = vunpack.c.h.b16 %v1741
    %v2031 = vunpack.c.l.b16 %v1742
    %v2032 = vunpack.c.h.b16 %v1742
    %v2033 = vunpack.c.l.b16 %v1743
    %v2034 = vunpack.c.h.b16 %v1743
    %v2035 = vunpack.c.l.b16 %v1744
    %v2036 = vunpack.c.h.b16 %v1744
    %v2037 = vunpack.c.l.b16 %v1745
    %v2038 = vunpack.c.h.b16 %v1745
    %v2039 = vunpack.c.l.b16 %v1746
    %v2040 = vunpack.c.h.b16 %v1746
    %v2041 = vunpack.c.l.b16 %v1747
    %v2042 = vunpack.c.h.b16 %v1747
    %v2043 = vunpack.c.l.b16 %v1748
    %v2044 = vunpack.c.h.b16 %v1748
    %v2045 = vunpack.c.l.b16 %v1749
    %v2046 = vunpack.c.h.b16 %v1749
    %v2047 = vunpack.c.l.b16 %v1750
    %v2048 = vunpack.c.h.b16 %v1750
    %v2049 = vunpack.c.l.b16 %v1751
    %v2050 = vunpack.c.h.b16 %v1751
    %v2051 = vunpack.c.l.b16 %v1752
    %v2052 = vunpack.c.h.b16 %v1752
    %v2053 = vunpack.c.l.b16 %v1753
    %v2054 = vunpack.c.h.b16 %v1753
    %v2055 = vunpack.c.l.b16 %v1754
    %v2056 = vunpack.c.h.b16 %v1754
    %v2057 = vunpack.c.l.b16 %v1755
    %v2058 = vunpack.c.h.b16 %v1755
    %v2059 = vunpack.c.l.b16 %v1756
    %v2060 = vunpack.c.h.b16 %v1756
    %v2061 = vunpack.c.l.b16 %v1757
    %v2062 = vunpack.c.h.b16 %v1757
    %v2063 = vunpack.c.l.b16 %v1758
    %v2064 = vunpack.c.h.b16 %v1758
    %v2065 = vunpack.c.l.b16 %v1759
    %v2066 = vunpack.c.h.b16 %v1759
    %v2067 = vunpack.c.l.b16 %v1760
    %v2068 = vunpack.c.h.b16 %v1760
    %v2069 = vunpack.c.l.b16 %v1761
    %v2070 = vunpack.c.h.b16 %v1761
    %v2071 = vunpack.c.l.b16 %v1762
    %v2072 = vunpack.c.h.b16 %v1762
    %v2073 = vunpack.c.l.b16 %v1763
    %v2074 = vunpack.c.h.b16 %v1763
    %v2075 = vunpack.c.l.b16 %v1764
    %v2076 = vunpack.c.h.b16 %v1764
    %v2077 = vunpack.c.l.b16 %v1765
    %v2078 = vunpack.c.h.b16 %v1765
    %v2079 = vunpack.c.l.b16 %v1766
    %v2080 = vunpack.c.h.b16 %v1766
    %v2081 = vunpack.c.l.b16 %v1767
    %v2082 = vunpack.c.h.b16 %v1767
    %v2083 = vunpack.c.l.b16 %v1768
    %v2084 = vunpack.c.h.b16 %v1768
    %v2085 = vunpack.c.l.b16 %v1769
    %v2086 = vunpack.c.h.b16 %v1769
    %v2087 = vunpack.c.l.b16 %v1770
    %v2088 = vunpack.c.h.b16 %v1770
    %v2089 = vunpack.c.l.b16 %v1771
    %v2090 = vunpack.c.h.b16 %v1771
    %v2091 = vunpack.c.l.b16 %v1772
    %v2092 = vunpack.c.h.b16 %v1772
    %v2093 = vunpack.c.l.b16 %v1773
    %v2094 = vunpack.c.h.b16 %v1773
    %v2095 = vunpack.c.l.b16 %v1774
    %v2096 = vunpack.c.h.b16 %v1774
    %v2097 = vunpack.c.l.b16 %v1775
    %v2098 = vunpack.c.h.b16 %v1775
    %v2099 = vunpack.c.l.b16 %v1776
    %v2100 = vunpack.c.h.b16 %v1776
    %v2101 = vunpack.c.l.b16 %v1777
    %v2102 = vunpack.c.h.b16 %v1777
    %v2103 = vunpack.c.l.b16 %v1778
    %v2104 = vunpack.c.h.b16 %v1778
    %v2105 = vunpack.c.l.b16 %v1779
    %v2106 = vunpack.c.h.b16 %v1779
    %v2107 = vunpack.c.l.b16 %v1780
    %v2108 = vunpack.c.h.b16 %v1780
    %v2109 = vunpack.c.l.b16 %v1781
    %v2110 = vunpack.c.h.b16 %v1781
    %v2111 = vunpack.c.l.b16 %v1782
    %v2112 = vunpack.c.h.b16 %v1782
    %v2113 = vunpack.c.l.b16 %v1783
    %v2114 = vunpack.c.h.b16 %v1783
    %v2115 = vunpack.c.l.b16 %v1784
    %v2116 = vunpack.c.h.b16 %v1784
    %v2117 = vunpack.c.l.b16 %v1785
    %v2118 = vunpack.c.h.b16 %v1785
    %v2119 = vunpack.c.l.b16 %v1786
    %v2120 = vunpack.c.h.b16 %v1786
    %v2121 = vunpack.c.l.b16 %v1787
    %v2122 = vunpack.c.h.b16 %v1787
    %v2123 = vunpack.c.l.b16 %v1788
    %v2124 = vunpack.c.h.b16 %v1788
    %v2125 = vunpack.c.l.b16 %v1789
    %v2126 = vunpack.c.h.b16 %v1789
    %v2127 = vunpack.c.l.b16 %v1790
    %v2128 = vunpack.c.h.b16 %v1790
    %v2129 = vunpack.c.l.b16 %v1791
    %v2130 = vunpack.c.h.b16 %v1791
    %v2131 = vunpack.c.l.b16 %v1792
    %v2132 = vunpack.c.h.b16 %v1792
    %v2133 = vunpack.c.l.b16 %v1793
    %v2134 = vunpack.c.h.b16 %v1793
    %v2135 = vunpack.c.l.b16 %v1794
    %v2136 = vunpack.c.h.b16 %v1794
    %v2137 = vunpack.c.l.b16 %v1795
    %v2138 = vunpack.c.h.b16 %v1795
    %v2139 = vunpack.c.l.b16 %v1796
    %v2140 = vunpack.c.h.b16 %v1796
    %v2141 = vunpack.c.l.b16 %v1797
    %v2142 = vunpack.c.h.b16 %v1797
    %v2143 = vunpack.c.l.b16 %v1798
    %v2144 = vunpack.c.h.b16 %v1798
    %v2145 = vunpack.c.l.b16 %v1799
    %v2146 = vunpack.c.h.b16 %v1799
    %v2147 = vunpack.c.l.b16 %v1800
    %v2148 = vunpack.c.h.b16 %v1800
    %v2149 = vunpack.c.l.b16 %v1801
    %v2150 = vunpack.c.h.b16 %v1801
    %v2151 = vunpack.c.l.b16 %v1802
    %v2152 = vunpack.c.h.b16 %v1802
    %v2153 = vunpack.c.l.b16 %v1803
    %v2154 = vunpack.c.h.b16 %v1803
    %v2155 = vunpack.c.l.b16 %v1804
    %v2156 = vunpack.c.h.b16 %v1804
    %v2157 = vunpack.c.l.b16 %v1805
    %v2158 = vunpack.c.h.b16 %v1805
    %v2159 = vunpack.c.l.b16 %v1806
    %v2160 = vunpack.c.h.b16 %v1806
    %v2161 = vunpack.c.l.b16 %v1807
    %v2162 = vunpack.c.h.b16 %v1807
    %v2163 = vunpack.c.l.b16 %v1808
    %v2164 = vunpack.c.h.b16 %v1808
    %v2165 = vunpack.c.l.b16 %v1809
    %v2166 = vunpack.c.h.b16 %v1809
    %v2167 = vunpack.c.l.b16 %v1810
    %v2168 = vunpack.c.h.b16 %v1810
    %v2169 = vunpack.c.l.b16 %v1811
    %v2170 = vunpack.c.h.b16 %v1811
    %v2171 = vunpack.c.l.b16 %v1812
    %v2172 = vunpack.c.h.b16 %v1812
    %v2173 = vunpack.c.l.b16 %v1813
    %v2174 = vunpack.c.h.b16 %v1813
    %v2175 = vunpack.c.l.b16 %v1814
    %v2176 = vunpack.c.h.b16 %v1814
    %v2177 = vunpack.c.l.b16 %v1815
    %v2178 = vunpack.c.h.b16 %v1815
    %v2179 = vunpack.c.l.b16 %v1816
    %v2180 = vunpack.c.h.b16 %v1816
    %v2181 = vunpack.c.l.b16 %v1817
    %v2182 = vunpack.c.h.b16 %v1817
    %v2183 = vunpack.c.l.b16 %v1818
    %v2184 = vunpack.c.h.b16 %v1818
    %v2185 = vunpack.c.l.b16 %v1819
    %v2186 = vunpack.c.h.b16 %v1819
    %v2187 = vunpack.c.l.b16 %v1820
    %v2188 = vunpack.c.h.b16 %v1820
    %v2189 = vunpack.c.l.b16 %v1821
    %v2190 = vunpack.c.h.b16 %v1821
    %v2191 = vunpack.c.l.b16 %v1822
    %v2192 = vunpack.c.h.b16 %v1822
    %v2193 = vunpack.c.l.b16 %v1823
    %v2194 = vunpack.c.h.b16 %v1823
    %v2195 = vunpack.c.l.b16 %v1824
    %v2196 = vunpack.c.h.b16 %v1824
    %v2197 = vunpack.c.l.b16 %v1825
    %v2198 = vunpack.c.h.b16 %v1825
    %v2199 = vunpack.c.l.b16 %v1826
    %v2200 = vunpack.c.h.b16 %v1826
    %v2201 = vunpack.c.l.b16 %v1827
    %v2202 = vunpack.c.h.b16 %v1827
    %v2203 = vunpack.c.l.b16 %v1828
    %v2204 = vunpack.c.h.b16 %v1828
    %v2205 = vunpack.c.l.b16 %v1829
    %v2206 = vunpack.c.h.b16 %v1829
    %v2207 = vunpack.c.l.b16 %v1830
    %v2208 = vunpack.c.h.b16 %v1830
    %v2209 = vunpack.c.l.b16 %v1831
    %v2210 = vunpack.c.h.b16 %v1831
    %v2211 = vunpack.c.l.b16 %v1832
    %v2212 = vunpack.c.h.b16 %v1832
    %v2213 = vunpack.c.l.b16 %v1833
    %v2214 = vunpack.c.h.b16 %v1833
    %v2215 = vunpack.c.l.b16 %v1834
    %v2216 = vunpack.c.h.b16 %v1834
    %v2217 = vunpack.c.l.b16 %v1835
    %v2218 = vunpack.c.h.b16 %v1835
    %v2219 = vunpack.c.l.b16 %v1836
    %v2220 = vunpack.c.h.b16 %v1836
    %v2221 = vunpack.c.l.b16 %v1837
    %v2222 = vunpack.c.h.b16 %v1837
    %v2223 = vunpack.c.l.b16 %v1838
    %v2224 = vunpack.c.h.b16 %v1838
    %v2225 = vunpack.c.l.b16 %v1839
    %v2226 = vunpack.c.h.b16 %v1839
    %v2227 = vunpack.c.l.b16 %v1840
    %v2228 = vunpack.c.h.b16 %v1840
    %v2229 = vunpack.c.l.b16 %v1841
    %v2230 = vunpack.c.h.b16 %v1841
    %v2231 = vunpack.c.l.b16 %v1842
    %v2232 = vunpack.c.h.b16 %v1842
    %v2233 = vunpack.c.l.b16 %v1843
    %v2234 = vunpack.c.h.b16 %v1843
    %v2235 = vunpack.c.l.b16 %v1844
    %v2236 = vunpack.c.h.b16 %v1844
    %v2237 = vunpack.c.l.b16 %v1845
    %v2238 = vunpack.c.h.b16 %v1845
    %v2239 = vunpack.c.l.b16 %v1846
    %v2240 = vunpack.c.h.b16 %v1846
    %v2241 = vpack.c.b16 %v1989, %v1985
    %v2242 = vpack.c.b16 %v1990, %v1986
    %v2243 = vpack.c.b16 %v1991, %v1987
    %v2244 = vpack.c.b16 %v1992, %v1988
    %v2245 = vpack.c.b16 %v1997, %v1993
    %v2246 = vpack.c.b16 %v1998, %v1994
    %v2247 = vpack.c.b16 %v1999, %v1995
    %v2248 = vpack.c.b16 %v2000, %v1996
    %v2249 = vpack.c.b16 %v2005, %v2001
    %v2250 = vpack.c.b16 %v2006, %v2002
    %v2251 = vpack.c.b16 %v2007, %v2003
    %v2252 = vpack.c.b16 %v2008, %v2004
    %v2253 = vpack.c.b16 %v2013, %v2009
    %v2254 = vpack.c.b16 %v2014, %v2010
    %v2255 = vpack.c.b16 %v2015, %v2011
    %v2256 = vpack.c.b16 %v2016, %v2012
    %v2257 = vpack.c.b16 %v2021, %v2017
    %v2258 = vpack.c.b16 %v2022, %v2018
    %v2259 = vpack.c.b16 %v2023, %v2019
    %v2260 = vpack.c.b16 %v2024, %v2020
    %v2261 = vpack.c.b16 %v2029, %v2025
    %v2262 = vpack.c.b16 %v2030, %v2026
    %v2263 = vpack.c.b16 %v2031, %v2027
    %v2264 = vpack.c.b16 %v2032, %v2028
    %v2265 = vpack.c.b16 %v2037, %v2033
    %v2266 = vpack.c.b16 %v2038, %v2034
    %v2267 = vpack.c.b16 %v2039, %v2035
    %v2268 = vpack.c.b16 %v2040, %v2036
    %v2269 = vpack.c.b16 %v2045, %v2041
    %v2270 = vpack.c.b16 %v2046, %v2042
    %v2271 = vpack.c.b16 %v2047, %v2043
    %v2272 = vpack.c.b16 %v2048, %v2044
    %v2273 = vpack.c.b16 %v2053, %v2049
    %v2274 = vpack.c.b16 %v2054, %v2050
    %v2275 = vpack.c.b16 %v2055, %v2051
    %v2276 = vpack.c.b16 %v2056, %v2052
    %v2277 = vpack.c.b16 %v2061, %v2057
    %v2278 = vpack.c.b16 %v2062, %v2058
    %v2279 = vpack.c.b16 %v2063, %v2059
    %v2280 = vpack.c.b16 %v2064, %v2060
    %v2281 = vpack.c.b16 %v2069, %v2065
    %v2282 = vpack.c.b16 %v2070, %v2066
    %v2283 = vpack.c.b16 %v2071, %v2067
    %v2284 = vpack.c.b16 %v2072, %v2068
    %v2285 = vpack.c.b16 %v2077, %v2073
    %v2286 = vpack.c.b16 %v2078, %v2074
    %v2287 = vpack.c.b16 %v2079, %v2075
    %v2288 = vpack.c.b16 %v2080, %v2076
    %v2289 = vpack.c.b16 %v2085, %v2081
    %v2290 = vpack.c.b16 %v2086, %v2082
    %v2291 = vpack.c.b16 %v2087, %v2083
    %v2292 = vpack.c.b16 %v2088, %v2084
    %v2293 = vpack.c.b16 %v2093, %v2089
    %v2294 = vpack.c.b16 %v2094, %v2090
    %v2295 = vpack.c.b16 %v2095, %v2091
    %v2296 = vpack.c.b16 %v2096, %v2092
    %v2297 = vpack.c.b16 %v2101, %v2097
    %v2298 = vpack.c.b16 %v2102, %v2098
    %v2299 = vpack.c.b16 %v2103, %v2099
    %v2300 = vpack.c.b16 %v2104, %v2100
    %v2301 = vpack.c.b16 %v2109, %v2105
    %v2302 = vpack.c.b16 %v2110, %v2106
    %v2303 = vpack.c.b16 %v2111, %v2107
    %v2304 = vpack.c.b16 %v2112, %v2108
    %v2305 = vpack.c.b16 %v2117, %v2113
    %v2306 = vpack.c.b16 %v2118, %v2114
    %v2307 = vpack.c.b16 %v2119, %v2115
    %v2308 = vpack.c.b16 %v2120, %v2116
    %v2309 = vpack.c.b16 %v2125, %v2121
    %v2310 = vpack.c.b16 %v2126, %v2122
    %v2311 = vpack.c.b16 %v2127, %v2123
    %v2312 = vpack.c.b16 %v2128, %v2124
    %v2313 = vpack.c.b16 %v2133, %v2129
    %v2314 = vpack.c.b16 %v2134, %v2130
    %v2315 = vpack.c.b16 %v2135, %v2131
    %v2316 = vpack.c.b16 %v2136, %v2132
    %v2317 = vpack.c.b16 %v2141, %v2137
    %v2318 = vpack.c.b16 %v2142, %v2138
    %v2319 = vpack.c.b16 %v2143, %v2139
    %v2320 = vpack.c.b16 %v2144, %v2140
    %v2321 = vpack.c.b16 %v2149, %v2145
    %v2322 = vpack.c.b16 %v2150, %v2146
    %v2323 = vpack.c.b16 %v2151, %v2147
    %v2324 = vpack.c.b16 %v2152, %v2148
    %v2325 = vpack.c.b16 %v2157, %v2153
    %v2326 = vpack.c.b16 %v2158, %v2154
    %v2327 = vpack.c.b16 %v2159, %v2155
    %v2328 = vpack.c.b16 %v2160, %v2156
    %v2329 = vpack.c.b16 %v2165, %v2161
    %v2330 = vpack.c.b16 %v2166, %v2162
    %v2331 = vpack.c.b16 %v2167, %v2163
    %v2332 = vpack.c.b16 %v2168, %v2164
    %v2333 = vpack.c.b16 %v2173, %v2169
    %v2334 = vpack.c.b16 %v2174, %v2170
    %v2335 = vpack.c.b16 %v2175, %v2171
    %v2336 = vpack.c.b16 %v2176, %v2172
    %v2337 = vpack.c.b16 %v2181, %v2177
    %v2338 = vpack.c.b16 %v2182, %v2178
    %v2339 = vpack.c.b16 %v2183, %v2179
    %v2340 = vpack.c.b16 %v2184, %v2180
    %v2341 = vpack.c.b16 %v2189, %v2185
    %v2342 = vpack.c.b16 %v2190, %v2186
    %v2343 = vpack.c.b16 %v2191, %v2187
    %v2344 = vpack.c.b16 %v2192, %v2188
    %v2345 = vpack.c.b16 %v2197, %v2193
    %v2346 = vpack.c.b16 %v2198, %v2194
    %v2347 = vpack.c.b16 %v2199, %v2195
    %v2348 = vpack.c.b16 %v2200, %v2196
    %v2349 = vpack.c.b16 %v2205, %v2201
    %v2350 = vpack.c.b16 %v2206, %v2202
    %v2351 = vpack.c.b16 %v2207, %v2203
    %v2352 = vpack.c.b16 %v2208, %v2204
    %v2353 = vpack.c.b16 %v2213, %v2209
    %v2354 = vpack.c.b16 %v2214, %v2210
    %v2355 = vpack.c.b16 %v2215, %v2211
    %v2356 = vpack.c.b16 %v2216, %v2212
    %v2357 = vpack.c.b16 %v2221, %v2217
    %v2358 = vpack.c.b16 %v2222, %v2218
    %v2359 = vpack.c.b16 %v2223, %v2219
    %v2360 = vpack.c.b16 %v2224, %v2220
    %v2361 = vpack.c.b16 %v2229, %v2225
    %v2362 = vpack.c.b16 %v2230, %v2226
    %v2363 = vpack.c.b16 %v2231, %v2227
    %v2364 = vpack.c.b16 %v2232, %v2228
    %v2365 = vpack.c.b16 %v2237, %v2233
    %v2366 = vpack.c.b16 %v2238, %v2234
    %v2367 = vpack.c.b16 %v2239, %v2235
    %v2368 = vpack.c.b16 %v2240, %v2236
    %2497 = vmatpush.bf16.msra.mxu0 %v2269
    %2498 = vmatpush.bf16.msra.mxu0 %v2265
    %2499 = vmatpush.bf16.msra.mxu0 %v2261
    %2500 = vmatpush.bf16.msra.mxu0 %v2257
    %2501 = vmatpush.bf16.msra.mxu0 %v2253
    %2502 = vmatpush.bf16.msra.mxu0 %v2249
    %2503 = vmatpush.bf16.msra.mxu0 %v2245
    %2504 = vmatpush.bf16.msra.mxu0 %v2241
    %2505 = vmatmul.bf16.gmra.mxu0 %v1715
    %v2506 = vpop.f32.mrf.mxu0
    %v2507 = vadd.f32 %v1849, %v2506
    %v2508 = vpop.f32.mrf.mxu0
    %2509 = vdwg.mxu0
    %2510 = vmatpush.bf16.msra.mxu0 %v2301
    %2511 = vmatpush.bf16.msra.mxu0 %v2297
    %2512 = vmatpush.bf16.msra.mxu0 %v2293
    %2513 = vmatpush.bf16.msra.mxu0 %v2289
    %2514 = vmatpush.bf16.msra.mxu0 %v2285
    %2515 = vmatpush.bf16.msra.mxu0 %v2281
    %2516 = vmatpush.bf16.msra.mxu0 %v2277
    %2517 = vmatpush.bf16.msra.mxu0 %v2273
    %2518 = vmatmul.bf16.gmra.mxu0 %v1716
    %v2519 = vpop.f32.mrf.mxu0
    %v2520 = vadd.f32 %v2507, %v2519
    %v2521 = vpop.f32.mrf.mxu0
    %2522 = vdwg.mxu0
    %2523 = vmatpush.bf16.msra.mxu0 %v2333
    %2524 = vmatpush.bf16.msra.mxu0 %v2329
    %2525 = vmatpush.bf16.msra.mxu0 %v2325
    %2526 = vmatpush.bf16.msra.mxu0 %v2321
    %2527 = vmatpush.bf16.msra.mxu0 %v2317
    %2528 = vmatpush.bf16.msra.mxu0 %v2313
    %2529 = vmatpush.bf16.msra.mxu0 %v2309
    %2530 = vmatpush.bf16.msra.mxu0 %v2305
    %2531 = vmatmul.bf16.gmra.mxu0 %v1717
    %v2532 = vpop.f32.mrf.mxu0
    %v2533 = vadd.f32 %v2520, %v2532
    %v2534 = vpop.f32.mrf.mxu0
    %2535 = vdwg.mxu0
    %2536 = vmatpush.bf16.msra.mxu0 %v2365
    %2537 = vmatpush.bf16.msra.mxu0 %v2361
    %2538 = vmatpush.bf16.msra.mxu0 %v2357
    %2539 = vmatpush.bf16.msra.mxu0 %v2353
    %2540 = vmatpush.bf16.msra.mxu0 %v2349
    %2541 = vmatpush.bf16.msra.mxu0 %v2345
    %2542 = vmatpush.bf16.msra.mxu0 %v2341
    %2543 = vmatpush.bf16.msra.mxu0 %v2337
    %2544 = vmatmul.bf16.gmra.mxu0 %v1718
    %v2545 = vpop.f32.mrf.mxu0
    %v2546 = vadd.f32 %v2533, %v2545
    %v2547 = vpop.f32.mrf.mxu0
    %2548 = vdwg.mxu0
    %2549 = vmatpush.bf16.msra.mxu0 %v2270
    %2550 = vmatpush.bf16.msra.mxu0 %v2266
    %2551 = vmatpush.bf16.msra.mxu0 %v2262
    %2552 = vmatpush.bf16.msra.mxu0 %v2258
    %2553 = vmatpush.bf16.msra.mxu0 %v2254
    %2554 = vmatpush.bf16.msra.mxu0 %v2250
    %2555 = vmatpush.bf16.msra.mxu0 %v2246
    %2556 = vmatpush.bf16.msra.mxu0 %v2242
    %2557 = vmatmul.bf16.gmra.mxu0 %v1715
    %v2558 = vpop.f32.mrf.mxu0
    %v2559 = vadd.f32 %v1850, %v2558
    %v2560 = vpop.f32.mrf.mxu0
    %2561 = vdwg.mxu0
    %2562 = vmatpush.bf16.msra.mxu0 %v2302
    %2563 = vmatpush.bf16.msra.mxu0 %v2298
    %2564 = vmatpush.bf16.msra.mxu0 %v2294
    %2565 = vmatpush.bf16.msra.mxu0 %v2290
    %2566 = vmatpush.bf16.msra.mxu0 %v2286
    %2567 = vmatpush.bf16.msra.mxu0 %v2282
    %2568 = vmatpush.bf16.msra.mxu0 %v2278
    %2569 = vmatpush.bf16.msra.mxu0 %v2274
    %2570 = vmatmul.bf16.gmra.mxu0 %v1716
    %v2571 = vpop.f32.mrf.mxu0
    %v2572 = vadd.f32 %v2559, %v2571
    %v2573 = vpop.f32.mrf.mxu0
    %2574 = vdwg.mxu0
    %2575 = vmatpush.bf16.msra.mxu0 %v2334
    %2576 = vmatpush.bf16.msra.mxu0 %v2330
    %2577 = vmatpush.bf16.msra.mxu0 %v2326
    %2578 = vmatpush.bf16.msra.mxu0 %v2322
    %2579 = vmatpush.bf16.msra.mxu0 %v2318
    %2580 = vmatpush.bf16.msra.mxu0 %v2314
    %2581 = vmatpush.bf16.msra.mxu0 %v2310
    %2582 = vmatpush.bf16.msra.mxu0 %v2306
    %2583 = vmatmul.bf16.gmra.mxu0 %v1717
    %v2584 = vpop.f32.mrf.mxu0
    %v2585 = vadd.f32 %v2572, %v2584
    %v2586 = vpop.f32.mrf.mxu0
    %2587 = vdwg.mxu0
    %2588 = vmatpush.bf16.msra.mxu0 %v2366
    %2589 = vmatpush.bf16.msra.mxu0 %v2362
    %2590 = vmatpush.bf16.msra.mxu0 %v2358
    %2591 = vmatpush.bf16.msra.mxu0 %v2354
    %2592 = vmatpush.bf16.msra.mxu0 %v2350
    %2593 = vmatpush.bf16.msra.mxu0 %v2346
    %2594 = vmatpush.bf16.msra.mxu0 %v2342
    %2595 = vmatpush.bf16.msra.mxu0 %v2338
    %2596 = vmatmul.bf16.gmra.mxu0 %v1718
    %v2597 = vpop.f32.mrf.mxu0
    %v2598 = vadd.f32 %v2585, %v2597
    %v2599 = vpop.f32.mrf.mxu0
    %2600 = vdwg.mxu0
    %2601 = vmatpush.bf16.msra.mxu0 %v2271
    %2602 = vmatpush.bf16.msra.mxu0 %v2267
    %2603 = vmatpush.bf16.msra.mxu0 %v2263
    %2604 = vmatpush.bf16.msra.mxu0 %v2259
    %2605 = vmatpush.bf16.msra.mxu0 %v2255
    %2606 = vmatpush.bf16.msra.mxu0 %v2251
    %2607 = vmatpush.bf16.msra.mxu0 %v2247
    %2608 = vmatpush.bf16.msra.mxu0 %v2243
    %2609 = vmatmul.bf16.gmra.mxu0 %v1715
    %v2610 = vpop.f32.mrf.mxu0
    %v2611 = vadd.f32 %v1851, %v2610
    %v2612 = vpop.f32.mrf.mxu0
    %2613 = vdwg.mxu0
    %2614 = vmatpush.bf16.msra.mxu0 %v2303
    %2615 = vmatpush.bf16.msra.mxu0 %v2299
    %2616 = vmatpush.bf16.msra.mxu0 %v2295
    %2617 = vmatpush.bf16.msra.mxu0 %v2291
    %2618 = vmatpush.bf16.msra.mxu0 %v2287
    %2619 = vmatpush.bf16.msra.mxu0 %v2283
    %2620 = vmatpush.bf16.msra.mxu0 %v2279
    %2621 = vmatpush.bf16.msra.mxu0 %v2275
    %2622 = vmatmul.bf16.gmra.mxu0 %v1716
    %v2623 = vpop.f32.mrf.mxu0
    %v2624 = vadd.f32 %v2611, %v2623
    %v2625 = vpop.f32.mrf.mxu0
    %2626 = vdwg.mxu0
    %2627 = vmatpush.bf16.msra.mxu0 %v2335
    %2628 = vmatpush.bf16.msra.mxu0 %v2331
    %2629 = vmatpush.bf16.msra.mxu0 %v2327
    %2630 = vmatpush.bf16.msra.mxu0 %v2323
    %2631 = vmatpush.bf16.msra.mxu0 %v2319
    %2632 = vmatpush.bf16.msra.mxu0 %v2315
    %2633 = vmatpush.bf16.msra.mxu0 %v2311
    %2634 = vmatpush.bf16.msra.mxu0 %v2307
    %2635 = vmatmul.bf16.gmra.mxu0 %v1717
    %v2636 = vpop.f32.mrf.mxu0
    %v2637 = vadd.f32 %v2624, %v2636
    %v2638 = vpop.f32.mrf.mxu0
    %2639 = vdwg.mxu0
    %2640 = vmatpush.bf16.msra.mxu0 %v2367
    %2641 = vmatpush.bf16.msra.mxu0 %v2363
    %2642 = vmatpush.bf16.msra.mxu0 %v2359
    %2643 = vmatpush.bf16.msra.mxu0 %v2355
    %2644 = vmatpush.bf16.msra.mxu0 %v2351
    %2645 = vmatpush.bf16.msra.mxu0 %v2347
    %2646 = vmatpush.bf16.msra.mxu0 %v2343
    %2647 = vmatpush.bf16.msra.mxu0 %v2339
    %2648 = vmatmul.bf16.gmra.mxu0 %v1718
    %v2649 = vpop.f32.mrf.mxu0
    %v2650 = vadd.f32 %v2637, %v2649
    %v2651 = vpop.f32.mrf.mxu0
    %2652 = vdwg.mxu0
    %2653 = vmatpush.bf16.msra.mxu0 %v2272
    %2654 = vmatpush.bf16.msra.mxu0 %v2268
    %2655 = vmatpush.bf16.msra.mxu0 %v2264
    %2656 = vmatpush.bf16.msra.mxu0 %v2260
    %2657 = vmatpush.bf16.msra.mxu0 %v2256
    %2658 = vmatpush.bf16.msra.mxu0 %v2252
    %2659 = vmatpush.bf16.msra.mxu0 %v2248
    %2660 = vmatpush.bf16.msra.mxu0 %v2244
    %2661 = vmatmul.bf16.gmra.mxu0 %v1715
    %v2662 = vpop.f32.mrf.mxu0
    %v2663 = vadd.f32 %v1852, %v2662
    %v2664 = vpop.f32.mrf.mxu0
    %2665 = vdwg.mxu0
    %2666 = vmatpush.bf16.msra.mxu0 %v2304
    %2667 = vmatpush.bf16.msra.mxu0 %v2300
    %2668 = vmatpush.bf16.msra.mxu0 %v2296
    %2669 = vmatpush.bf16.msra.mxu0 %v2292
    %2670 = vmatpush.bf16.msra.mxu0 %v2288
    %2671 = vmatpush.bf16.msra.mxu0 %v2284
    %2672 = vmatpush.bf16.msra.mxu0 %v2280
    %2673 = vmatpush.bf16.msra.mxu0 %v2276
    %2674 = vmatmul.bf16.gmra.mxu0 %v1716
    %v2675 = vpop.f32.mrf.mxu0
    %v2676 = vadd.f32 %v2663, %v2675
    %v2677 = vpop.f32.mrf.mxu0
    %2678 = vdwg.mxu0
    %2679 = vmatpush.bf16.msra.mxu0 %v2336
    %2680 = vmatpush.bf16.msra.mxu0 %v2332
    %2681 = vmatpush.bf16.msra.mxu0 %v2328
    %2682 = vmatpush.bf16.msra.mxu0 %v2324
    %2683 = vmatpush.bf16.msra.mxu0 %v2320
    %2684 = vmatpush.bf16.msra.mxu0 %v2316
    %2685 = vmatpush.bf16.msra.mxu0 %v2312
    %2686 = vmatpush.bf16.msra.mxu0 %v2308
    %2687 = vmatmul.bf16.gmra.mxu0 %v1717
    %v2688 = vpop.f32.mrf.mxu0
    %v2689 = vadd.f32 %v2676, %v2688
    %v2690 = vpop.f32.mrf.mxu0
    %2691 = vdwg.mxu0
    %2692 = vmatpush.bf16.msra.mxu0 %v2368
    %2693 = vmatpush.bf16.msra.mxu0 %v2364
    %2694 = vmatpush.bf16.msra.mxu0 %v2360
    %2695 = vmatpush.bf16.msra.mxu0 %v2356
    %2696 = vmatpush.bf16.msra.mxu0 %v2352
    %2697 = vmatpush.bf16.msra.mxu0 %v2348
    %2698 = vmatpush.bf16.msra.mxu0 %v2344
    %2699 = vmatpush.bf16.msra.mxu0 %v2340
    %2700 = vmatmul.bf16.gmra.mxu0 %v1718
    %v2701 = vpop.f32.mrf.mxu0
    %v2702 = vadd.f32 %v2689, %v2701
    %v2703 = vpop.f32.mrf.mxu0
    %2704 = vdwg.mxu0
    %v2705 = vmax.f32 %v2546, 0.0
    %v2706 = vmax.f32 %v2598, 0.0
    %v2707 = vmax.f32 %v2650, 0.0
    %v2708 = vmax.f32 %v2702, 0.0
    %v2709 = vpack.c.bf16 %v2705, %v2705
    %v2710 = vpack.c.bf16 %v2706, %v2706
    %v2711 = vpack.c.bf16 %v2707, %v2707
    %v2712 = vpack.c.bf16 %v2708, %v2708
    %v2713 = vld [vmem:[#allocation11] sm:$0xff]
    %v2714 = vld [vmem:[#allocation11 + $0x8] sm:$0xff]
    %v2715 = vld [vmem:[#allocation11 + $0x10] sm:$0xff]
    %v2716 = vld [vmem:[#allocation11 + $0x18] sm:$0xf]
    %v2717 = vld [vmem:[#allocation11 + $0x1c] sm:$0xff]
    %v2718 = vld [vmem:[#allocation11 + $0x24] sm:$0xff]
    %v2719 = vld [vmem:[#allocation11 + $0x2c] sm:$0xff]
    %v2720 = vld [vmem:[#allocation11 + $0x34] sm:$0xf]
    %v2721 = vld [vmem:[#allocation11 + $0x38] sm:$0xff]
    %v2722 = vld [vmem:[#allocation11 + $0x40] sm:$0xff]
    %v2723 = vld [vmem:[#allocation11 + $0x48] sm:$0xff]
    %v2724 = vld [vmem:[#allocation11 + $0x50] sm:$0xf]
    %v2725 = vld [vmem:[#allocation11 + $0x54] sm:$0xff]
    %v2726 = vld [vmem:[#allocation11 + $0x5c] sm:$0xff]
    %v2727 = vld [vmem:[#allocation11 + $0x64] sm:$0xff]
    %v2728 = vld [vmem:[#allocation11 + $0x6c] sm:$0xf]
    %v2729 = vld [vmem:[#allocation11 + $0x70] sm:$0xff]
    %v2730 = vld [vmem:[#allocation11 + $0x78] sm:$0xff]
    %v2731 = vld [vmem:[#allocation11 + $0x80] sm:$0xff]
    %v2732 = vld [vmem:[#allocation11 + $0x88] sm:$0xf]
    %v2733 = vld [vmem:[#allocation11 + $0x8c] sm:$0xff]
    %v2734 = vld [vmem:[#allocation11 + $0x94] sm:$0xff]
    %v2735 = vld [vmem:[#allocation11 + $0x9c] sm:$0xff]
    %v2736 = vld [vmem:[#allocation11 + $0xa4] sm:$0xf]
    %v2737 = vld [vmem:[#allocation11 + $0xa8] sm:$0xff]
    %v2738 = vld [vmem:[#allocation11 + $0xb0] sm:$0xff]
    %v2739 = vld [vmem:[#allocation11 + $0xb8] sm:$0xff]
    %v2740 = vld [vmem:[#allocation11 + $0xc0] sm:$0xf]
    %v2741 = vld [vmem:[#allocation11 + $0xc4] sm:$0xff]
    %v2742 = vld [vmem:[#allocation11 + $0xcc] sm:$0xff]
    %v2743 = vld [vmem:[#allocation11 + $0xd4] sm:$0xff]
    %v2744 = vld [vmem:[#allocation11 + $0xdc] sm:$0xf]
    %v2745 = vld [vmem:[#allocation11 + $0xe0] sm:$0xff]
    %v2746 = vld [vmem:[#allocation11 + $0xe8] sm:$0xff]
    %v2747 = vld [vmem:[#allocation11 + $0xf0] sm:$0xff]
    %v2748 = vld [vmem:[#allocation11 + $0xf8] sm:$0xf]
    %v2749 = vld [vmem:[#allocation11 + $0xfc] sm:$0xff]
    %v2750 = vld [vmem:[#allocation11 + $0x104] sm:$0xff]
    %v2751 = vld [vmem:[#allocation11 + $0x10c] sm:$0xff]
    %v2752 = vld [vmem:[#allocation11 + $0x114] sm:$0xf]
    %v2753 = vld [vmem:[#allocation11 + $0x118] sm:$0xff]
    %v2754 = vld [vmem:[#allocation11 + $0x120] sm:$0xff]
    %v2755 = vld [vmem:[#allocation11 + $0x128] sm:$0xff]
    %v2756 = vld [vmem:[#allocation11 + $0x130] sm:$0xf]
    %v2757 = vld [vmem:[#allocation11 + $0x134] sm:$0xff]
    %v2758 = vld [vmem:[#allocation11 + $0x13c] sm:$0xff]
    %v2759 = vld [vmem:[#allocation11 + $0x144] sm:$0xff]
    %v2760 = vld [vmem:[#allocation11 + $0x14c] sm:$0xf]
    %v2761 = vld [vmem:[#allocation11 + $0x150] sm:$0xff]
    %v2762 = vld [vmem:[#allocation11 + $0x158] sm:$0xff]
    %v2763 = vld [vmem:[#allocation11 + $0x160] sm:$0xff]
    %v2764 = vld [vmem:[#allocation11 + $0x168] sm:$0xf]
    %v2765 = vld [vmem:[#allocation11 + $0x16c] sm:$0xff]
    %v2766 = vld [vmem:[#allocation11 + $0x174] sm:$0xff]
    %v2767 = vld [vmem:[#allocation11 + $0x17c] sm:$0xff]
    %v2768 = vld [vmem:[#allocation11 + $0x184] sm:$0xf]
    %v2769 = vld [vmem:[#allocation11 + $0x188] sm:$0xff]
    %v2770 = vld [vmem:[#allocation11 + $0x190] sm:$0xff]
    %v2771 = vld [vmem:[#allocation11 + $0x198] sm:$0xff]
    %v2772 = vld [vmem:[#allocation11 + $0x1a0] sm:$0xf]
    %v2773 = vld [vmem:[#allocation11 + $0x1a4] sm:$0xff]
    %v2774 = vld [vmem:[#allocation11 + $0x1ac] sm:$0xff]
    %v2775 = vld [vmem:[#allocation11 + $0x1b4] sm:$0xff]
    %v2776 = vld [vmem:[#allocation11 + $0x1bc] sm:$0xf]
    %v2777 = vld [vmem:[#allocation11 + $0x1c0] sm:$0xff]
    %v2778 = vld [vmem:[#allocation11 + $0x1c8] sm:$0xff]
    %v2779 = vld [vmem:[#allocation11 + $0x1d0] sm:$0xff]
    %v2780 = vld [vmem:[#allocation11 + $0x1d8] sm:$0xf]
    %v2781 = vld [vmem:[#allocation11 + $0x1dc] sm:$0xff]
    %v2782 = vld [vmem:[#allocation11 + $0x1e4] sm:$0xff]
    %v2783 = vld [vmem:[#allocation11 + $0x1ec] sm:$0xff]
    %v2784 = vld [vmem:[#allocation11 + $0x1f4] sm:$0xf]
    %v2785 = vld [vmem:[#allocation11 + $0x1f8] sm:$0xff]
    %v2786 = vld [vmem:[#allocation11 + $0x200] sm:$0xff]
    %v2787 = vld [vmem:[#allocation11 + $0x208] sm:$0xff]
    %v2788 = vld [vmem:[#allocation11 + $0x210] sm:$0xf]
    %v2789 = vld [vmem:[#allocation11 + $0x214] sm:$0xff]
    %v2790 = vld [vmem:[#allocation11 + $0x21c] sm:$0xff]
    %v2791 = vld [vmem:[#allocation11 + $0x224] sm:$0xff]
    %v2792 = vld [vmem:[#allocation11 + $0x22c] sm:$0xf]
    %v2793 = vld [vmem:[#allocation11 + $0x230] sm:$0xff]
    %v2794 = vld [vmem:[#allocation11 + $0x238] sm:$0xff]
    %v2795 = vld [vmem:[#allocation11 + $0x240] sm:$0xff]
    %v2796 = vld [vmem:[#allocation11 + $0x248] sm:$0xf]
    %v2797 = vld [vmem:[#allocation11 + $0x24c] sm:$0xff]
    %v2798 = vld [vmem:[#allocation11 + $0x254] sm:$0xff]
    %v2799 = vld [vmem:[#allocation11 + $0x25c] sm:$0xff]
    %v2800 = vld [vmem:[#allocation11 + $0x264] sm:$0xf]
    %v2801 = vld [vmem:[#allocation11 + $0x268] sm:$0xff]
    %v2802 = vld [vmem:[#allocation11 + $0x270] sm:$0xff]
    %v2803 = vld [vmem:[#allocation11 + $0x278] sm:$0xff]
    %v2804 = vld [vmem:[#allocation11 + $0x280] sm:$0xf]
    %v2805 = vld [vmem:[#allocation11 + $0x284] sm:$0xff]
    %v2806 = vld [vmem:[#allocation11 + $0x28c] sm:$0xff]
    %v2807 = vld [vmem:[#allocation11 + $0x294] sm:$0xff]
    %v2808 = vld [vmem:[#allocation11 + $0x29c] sm:$0xf]
    %v2809 = vld [vmem:[#allocation11 + $0x2a0] sm:$0xff]
    %v2810 = vld [vmem:[#allocation11 + $0x2a8] sm:$0xff]
    %v2811 = vld [vmem:[#allocation11 + $0x2b0] sm:$0xff]
    %v2812 = vld [vmem:[#allocation11 + $0x2b8] sm:$0xf]
    %v2813 = vld [vmem:[#allocation11 + $0x2bc] sm:$0xff]
    %v2814 = vld [vmem:[#allocation11 + $0x2c4] sm:$0xff]
    %v2815 = vld [vmem:[#allocation11 + $0x2cc] sm:$0xff]
    %v2816 = vld [vmem:[#allocation11 + $0x2d4] sm:$0xf]
    %v2817 = vld [vmem:[#allocation11 + $0x2d8] sm:$0xff]
    %v2818 = vld [vmem:[#allocation11 + $0x2e0] sm:$0xff]
    %v2819 = vld [vmem:[#allocation11 + $0x2e8] sm:$0xff]
    %v2820 = vld [vmem:[#allocation11 + $0x2f0] sm:$0xf]
    %v2821 = vld [vmem:[#allocation11 + $0x2f4] sm:$0xff]
    %v2822 = vld [vmem:[#allocation11 + $0x2fc] sm:$0xff]
    %v2823 = vld [vmem:[#allocation11 + $0x304] sm:$0xff]
    %v2824 = vld [vmem:[#allocation11 + $0x30c] sm:$0xf]
    %v2825 = vld [vmem:[#allocation11 + $0x310] sm:$0xff]
    %v2826 = vld [vmem:[#allocation11 + $0x318] sm:$0xff]
    %v2827 = vld [vmem:[#allocation11 + $0x320] sm:$0xff]
    %v2828 = vld [vmem:[#allocation11 + $0x328] sm:$0xf]
    %v2829 = vld [vmem:[#allocation11 + $0x32c] sm:$0xff]
    %v2830 = vld [vmem:[#allocation11 + $0x334] sm:$0xff]
    %v2831 = vld [vmem:[#allocation11 + $0x33c] sm:$0xff]
    %v2832 = vld [vmem:[#allocation11 + $0x344] sm:$0xf]
    %v2833 = vld [vmem:[#allocation11 + $0x348] sm:$0xff]
    %v2834 = vld [vmem:[#allocation11 + $0x350] sm:$0xff]
    %v2835 = vld [vmem:[#allocation11 + $0x358] sm:$0xff]
    %v2836 = vld [vmem:[#allocation11 + $0x360] sm:$0xf]
    %v2837 = vld [vmem:[#allocation11 + $0x364] sm:$0xff]
    %v2838 = vld [vmem:[#allocation11 + $0x36c] sm:$0xff]
    %v2839 = vld [vmem:[#allocation11 + $0x374] sm:$0xff]
    %v2840 = vld [vmem:[#allocation11 + $0x37c] sm:$0xf]
    %v2841 = vld [vmem:[#allocation11 + $0x380] sm:$0xff]
    %v2842 = vld [vmem:[#allocation11 + $0x388] sm:$0xff]
    %v2843 = vld [vmem:[#allocation11 + $0x390] sm:$0xff]
    %v2844 = vld [vmem:[#allocation11 + $0x398] sm:$0xf]
    %v2845 = vld [vmem:[#allocation11 + $0x39c] sm:$0xff]
    %v2846 = vld [vmem:[#allocation11 + $0x3a4] sm:$0xff]
    %v2847 = vld [vmem:[#allocation11 + $0x3ac] sm:$0xff]
    %v2848 = vld [vmem:[#allocation11 + $0x3b4] sm:$0xf]
    %v2849 = vld [vmem:[#allocation11 + $0x3b8] sm:$0xff]
    %v2850 = vld [vmem:[#allocation11 + $0x3c0] sm:$0xff]
    %v2851 = vld [vmem:[#allocation11 + $0x3c8] sm:$0xff]
    %v2852 = vld [vmem:[#allocation11 + $0x3d0] sm:$0xf]
    %v2853 = vld [vmem:[#allocation11 + $0x3d4] sm:$0xff]
    %v2854 = vld [vmem:[#allocation11 + $0x3dc] sm:$0xff]
    %v2855 = vld [vmem:[#allocation11 + $0x3e4] sm:$0xff]
    %v2856 = vld [vmem:[#allocation11 + $0x3ec] sm:$0xf]
    %v2857 = vld [vmem:[#allocation11 + $0x3f0] sm:$0xff]
    %v2858 = vld [vmem:[#allocation11 + $0x3f8] sm:$0xff]
    %v2859 = vld [vmem:[#allocation11 + $0x400] sm:$0xff]
    %v2860 = vld [vmem:[#allocation11 + $0x408] sm:$0xf]
    %v2861 = vld [vmem:[#allocation11 + $0x40c] sm:$0xff]
    %v2862 = vld [vmem:[#allocation11 + $0x414] sm:$0xff]
    %v2863 = vld [vmem:[#allocation11 + $0x41c] sm:$0xff]
    %v2864 = vld [vmem:[#allocation11 + $0x424] sm:$0xf]
    %v2865 = vld [vmem:[#allocation11 + $0x428] sm:$0xff]
    %v2866 = vld [vmem:[#allocation11 + $0x430] sm:$0xff]
    %v2867 = vld [vmem:[#allocation11 + $0x438] sm:$0xff]
    %v2868 = vld [vmem:[#allocation11 + $0x440] sm:$0xf]
    %v2869 = vld [vmem:[#allocation11 + $0x444] sm:$0xff]
    %v2870 = vld [vmem:[#allocation11 + $0x44c] sm:$0xff]
    %v2871 = vld [vmem:[#allocation11 + $0x454] sm:$0xff]
    %v2872 = vld [vmem:[#allocation11 + $0x45c] sm:$0xf]
    %v2873 = vld [vmem:[#allocation11 + $0x460] sm:$0xff]
    %v2874 = vld [vmem:[#allocation11 + $0x468] sm:$0xff]
    %v2875 = vld [vmem:[#allocation11 + $0x470] sm:$0xff]
    %v2876 = vld [vmem:[#allocation11 + $0x478] sm:$0xf]
    %v2877 = vld [vmem:[#allocation11 + $0x47c] sm:$0xff]
    %v2878 = vld [vmem:[#allocation11 + $0x484] sm:$0xff]
    %v2879 = vld [vmem:[#allocation11 + $0x48c] sm:$0xff]
    %v2880 = vld [vmem:[#allocation11 + $0x494] sm:$0xf]
    %v2881 = vld [vmem:[#allocation11 + $0x498] sm:$0xff]
    %v2882 = vld [vmem:[#allocation11 + $0x4a0] sm:$0xff]
    %v2883 = vld [vmem:[#allocation11 + $0x4a8] sm:$0xff]
    %v2884 = vld [vmem:[#allocation11 + $0x4b0] sm:$0xf]
    %v2885 = vld [vmem:[#allocation11 + $0x4b4] sm:$0xff]
    %v2886 = vld [vmem:[#allocation11 + $0x4bc] sm:$0xff]
    %v2887 = vld [vmem:[#allocation11 + $0x4c4] sm:$0xff]
    %v2888 = vld [vmem:[#allocation11 + $0x4cc] sm:$0xf]
    %v2889 = vld [vmem:[#allocation11 + $0x4d0] sm:$0xff]
    %v2890 = vld [vmem:[#allocation11 + $0x4d8] sm:$0xff]
    %v2891 = vld [vmem:[#allocation11 + $0x4e0] sm:$0xff]
    %v2892 = vld [vmem:[#allocation11 + $0x4e8] sm:$0xf]
    %v2893 = vld [vmem:[#allocation11 + $0x4ec] sm:$0xff]
    %v2894 = vld [vmem:[#allocation11 + $0x4f4] sm:$0xff]
    %v2895 = vld [vmem:[#allocation11 + $0x4fc] sm:$0xff]
    %v2896 = vld [vmem:[#allocation11 + $0x504] sm:$0xf]
    %v2897 = vld [vmem:[#allocation11 + $0x508] sm:$0xff]
    %v2898 = vld [vmem:[#allocation11 + $0x510] sm:$0xff]
    %v2899 = vld [vmem:[#allocation11 + $0x518] sm:$0xff]
    %v2900 = vld [vmem:[#allocation11 + $0x520] sm:$0xf]
    %v2901 = vld [vmem:[#allocation11 + $0x524] sm:$0xff]
    %v2902 = vld [vmem:[#allocation11 + $0x52c] sm:$0xff]
    %v2903 = vld [vmem:[#allocation11 + $0x534] sm:$0xff]
    %v2904 = vld [vmem:[#allocation11 + $0x53c] sm:$0xf]
    %v2905 = vld [vmem:[#allocation11 + $0x540] sm:$0xff]
    %v2906 = vld [vmem:[#allocation11 + $0x548] sm:$0xff]
    %v2907 = vld [vmem:[#allocation11 + $0x550] sm:$0xff]
    %v2908 = vld [vmem:[#allocation11 + $0x558] sm:$0xf]
    %v2909 = vld [vmem:[#allocation11 + $0x55c] sm:$0xff]
    %v2910 = vld [vmem:[#allocation11 + $0x564] sm:$0xff]
    %v2911 = vld [vmem:[#allocation11 + $0x56c] sm:$0xff]
    %v2912 = vld [vmem:[#allocation11 + $0x574] sm:$0xf]
    %v2913 = vld [vmem:[#allocation11 + $0x578] sm:$0xff]
    %v2914 = vld [vmem:[#allocation11 + $0x580] sm:$0xff]
    %v2915 = vld [vmem:[#allocation11 + $0x588] sm:$0xff]
    %v2916 = vld [vmem:[#allocation11 + $0x590] sm:$0xf]
    %v2917 = vld [vmem:[#allocation11 + $0x594] sm:$0xff]
    %v2918 = vld [vmem:[#allocation11 + $0x59c] sm:$0xff]
    %v2919 = vld [vmem:[#allocation11 + $0x5a4] sm:$0xff]
    %v2920 = vld [vmem:[#allocation11 + $0x5ac] sm:$0xf]
    %v2921 = vld [vmem:[#allocation11 + $0x5b0] sm:$0xff]
    %v2922 = vld [vmem:[#allocation11 + $0x5b8] sm:$0xff]
    %v2923 = vld [vmem:[#allocation11 + $0x5c0] sm:$0xff]
    %v2924 = vld [vmem:[#allocation11 + $0x5c8] sm:$0xf]
    %v2925 = vld [vmem:[#allocation11 + $0x5cc] sm:$0xff]
    %v2926 = vld [vmem:[#allocation11 + $0x5d4] sm:$0xff]
    %v2927 = vld [vmem:[#allocation11 + $0x5dc] sm:$0xff]
    %v2928 = vld [vmem:[#allocation11 + $0x5e4] sm:$0xf]
    %v2929 = vld [vmem:[#allocation11 + $0x5e8] sm:$0xff]
    %v2930 = vld [vmem:[#allocation11 + $0x5f0] sm:$0xff]
    %v2931 = vld [vmem:[#allocation11 + $0x5f8] sm:$0xff]
    %v2932 = vld [vmem:[#allocation11 + $0x600] sm:$0xf]
    %v2933 = vld [vmem:[#allocation11 + $0x604] sm:$0xff]
    %v2934 = vld [vmem:[#allocation11 + $0x60c] sm:$0xff]
    %v2935 = vld [vmem:[#allocation11 + $0x614] sm:$0xff]
    %v2936 = vld [vmem:[#allocation11 + $0x61c] sm:$0xf]
    %v2937 = vld [vmem:[#allocation11 + $0x620] sm:$0xff]
    %v2938 = vld [vmem:[#allocation11 + $0x628] sm:$0xff]
    %v2939 = vld [vmem:[#allocation11 + $0x630] sm:$0xff]
    %v2940 = vld [vmem:[#allocation11 + $0x638] sm:$0xf]
    %v2941 = vld [vmem:[#allocation11 + $0x63c] sm:$0xff]
    %v2942 = vld [vmem:[#allocation11 + $0x644] sm:$0xff]
    %v2943 = vld [vmem:[#allocation11 + $0x64c] sm:$0xff]
    %v2944 = vld [vmem:[#allocation11 + $0x654] sm:$0xf]
    %v2945 = vld [vmem:[#allocation11 + $0x658] sm:$0xff]
    %v2946 = vld [vmem:[#allocation11 + $0x660] sm:$0xff]
    %v2947 = vld [vmem:[#allocation11 + $0x668] sm:$0xff]
    %v2948 = vld [vmem:[#allocation11 + $0x670] sm:$0xf]
    %v2949 = vld [vmem:[#allocation11 + $0x674] sm:$0xff]
    %v2950 = vld [vmem:[#allocation11 + $0x67c] sm:$0xff]
    %v2951 = vld [vmem:[#allocation11 + $0x684] sm:$0xff]
    %v2952 = vld [vmem:[#allocation11 + $0x68c] sm:$0xf]
    %v2953 = vld [vmem:[#allocation11 + $0x690] sm:$0xff]
    %v2954 = vld [vmem:[#allocation11 + $0x698] sm:$0xff]
    %v2955 = vld [vmem:[#allocation11 + $0x6a0] sm:$0xff]
    %v2956 = vld [vmem:[#allocation11 + $0x6a8] sm:$0xf]
    %v2957 = vld [vmem:[#allocation11 + $0x6ac] sm:$0xff]
    %v2958 = vld [vmem:[#allocation11 + $0x6b4] sm:$0xff]
    %v2959 = vld [vmem:[#allocation11 + $0x6bc] sm:$0xff]
    %v2960 = vld [vmem:[#allocation11 + $0x6c4] sm:$0xf]
    %v2961 = vld [vmem:[#allocation11 + $0x6c8] sm:$0xff]
    %v2962 = vld [vmem:[#allocation11 + $0x6d0] sm:$0xff]
    %v2963 = vld [vmem:[#allocation11 + $0x6d8] sm:$0xff]
    %v2964 = vld [vmem:[#allocation11 + $0x6e0] sm:$0xf]
    %v2965 = vld [vmem:[#allocation11 + $0x6e4] sm:$0xff]
    %v2966 = vld [vmem:[#allocation11 + $0x6ec] sm:$0xff]
    %v2967 = vld [vmem:[#allocation11 + $0x6f4] sm:$0xff]
    %v2968 = vld [vmem:[#allocation11 + $0x6fc] sm:$0xf]
    %v2969 = vld [vmem:[#allocation13] sm:$0xff]
    %v2971 = vperm.slane %v2969, 0
    %v2972 = vperm.slane %v2969, 1
    %v2973 = vperm.slane %v2969, 2
    %v2974 = vperm.slane %v2969, 3
    %v2975 = vperm.slane %v2969, 4
    %v2976 = vperm.slane %v2969, 5
    %v2977 = vperm.slane %v2969, 6
    %v3241 = vunpack.c.l.b16 %v2713
    %v3242 = vunpack.c.h.b16 %v2713
    %v3243 = vunpack.c.l.b16 %v2714
    %v3244 = vunpack.c.h.b16 %v2714
    %v3245 = vunpack.c.l.b16 %v2715
    %v3246 = vunpack.c.h.b16 %v2715
    %v3247 = vunpack.c.l.b16 %v2716
    %v3248 = vunpack.c.l.b16 %v2717
    %v3249 = vunpack.c.h.b16 %v2717
    %v3250 = vunpack.c.l.b16 %v2718
    %v3251 = vunpack.c.h.b16 %v2718
    %v3252 = vunpack.c.l.b16 %v2719
    %v3253 = vunpack.c.h.b16 %v2719
    %v3254 = vunpack.c.l.b16 %v2720
    %v3255 = vunpack.c.l.b16 %v2721
    %v3256 = vunpack.c.h.b16 %v2721
    %v3257 = vunpack.c.l.b16 %v2722
    %v3258 = vunpack.c.h.b16 %v2722
    %v3259 = vunpack.c.l.b16 %v2723
    %v3260 = vunpack.c.h.b16 %v2723
    %v3261 = vunpack.c.l.b16 %v2724
    %v3262 = vunpack.c.l.b16 %v2725
    %v3263 = vunpack.c.h.b16 %v2725
    %v3264 = vunpack.c.l.b16 %v2726
    %v3265 = vunpack.c.h.b16 %v2726
    %v3266 = vunpack.c.l.b16 %v2727
    %v3267 = vunpack.c.h.b16 %v2727
    %v3268 = vunpack.c.l.b16 %v2728
    %v3269 = vunpack.c.l.b16 %v2729
    %v3270 = vunpack.c.h.b16 %v2729
    %v3271 = vunpack.c.l.b16 %v2730
    %v3272 = vunpack.c.h.b16 %v2730
    %v3273 = vunpack.c.l.b16 %v2731
    %v3274 = vunpack.c.h.b16 %v2731
    %v3275 = vunpack.c.l.b16 %v2732
    %v3276 = vunpack.c.l.b16 %v2733
    %v3277 = vunpack.c.h.b16 %v2733
    %v3278 = vunpack.c.l.b16 %v2734
    %v3279 = vunpack.c.h.b16 %v2734
    %v3280 = vunpack.c.l.b16 %v2735
    %v3281 = vunpack.c.h.b16 %v2735
    %v3282 = vunpack.c.l.b16 %v2736
    %v3283 = vunpack.c.l.b16 %v2737
    %v3284 = vunpack.c.h.b16 %v2737
    %v3285 = vunpack.c.l.b16 %v2738
    %v3286 = vunpack.c.h.b16 %v2738
    %v3287 = vunpack.c.l.b16 %v2739
    %v3288 = vunpack.c.h.b16 %v2739
    %v3289 = vunpack.c.l.b16 %v2740
    %v3290 = vunpack.c.l.b16 %v2741
    %v3291 = vunpack.c.h.b16 %v2741
    %v3292 = vunpack.c.l.b16 %v2742
    %v3293 = vunpack.c.h.b16 %v2742
    %v3294 = vunpack.c.l.b16 %v2743
    %v3295 = vunpack.c.h.b16 %v2743
    %v3296 = vunpack.c.l.b16 %v2744
    %v3297 = vunpack.c.l.b16 %v2745
    %v3298 = vunpack.c.h.b16 %v2745
    %v3299 = vunpack.c.l.b16 %v2746
    %v3300 = vunpack.c.h.b16 %v2746
    %v3301 = vunpack.c.l.b16 %v2747
    %v3302 = vunpack.c.h.b16 %v2747
    %v3303 = vunpack.c.l.b16 %v2748
    %v3304 = vunpack.c.l.b16 %v2749
    %v3305 = vunpack.c.h.b16 %v2749
    %v3306 = vunpack.c.l.b16 %v2750
    %v3307 = vunpack.c.h.b16 %v2750
    %v3308 = vunpack.c.l.b16 %v2751
    %v3309 = vunpack.c.h.b16 %v2751
    %v3310 = vunpack.c.l.b16 %v2752
    %v3311 = vunpack.c.l.b16 %v2753
    %v3312 = vunpack.c.h.b16 %v2753
    %v3313 = vunpack.c.l.b16 %v2754
    %v3314 = vunpack.c.h.b16 %v2754
    %v3315 = vunpack.c.l.b16 %v2755
    %v3316 = vunpack.c.h.b16 %v2755
    %v3317 = vunpack.c.l.b16 %v2756
    %v3318 = vunpack.c.l.b16 %v2757
    %v3319 = vunpack.c.h.b16 %v2757
    %v3320 = vunpack.c.l.b16 %v2758
    %v3321 = vunpack.c.h.b16 %v2758
    %v3322 = vunpack.c.l.b16 %v2759
    %v3323 = vunpack.c.h.b16 %v2759
    %v3324 = vunpack.c.l.b16 %v2760
    %v3325 = vunpack.c.l.b16 %v2761
    %v3326 = vunpack.c.h.b16 %v2761
    %v3327 = vunpack.c.l.b16 %v2762
    %v3328 = vunpack.c.h.b16 %v2762
    %v3329 = vunpack.c.l.b16 %v2763
    %v3330 = vunpack.c.h.b16 %v2763
    %v3331 = vunpack.c.l.b16 %v2764
    %v3332 = vunpack.c.l.b16 %v2765
    %v3333 = vunpack.c.h.b16 %v2765
    %v3334 = vunpack.c.l.b16 %v2766
    %v3335 = vunpack.c.h.b16 %v2766
    %v3336 = vunpack.c.l.b16 %v2767
    %v3337 = vunpack.c.h.b16 %v2767
    %v3338 = vunpack.c.l.b16 %v2768
    %v3339 = vunpack.c.l.b16 %v2769
    %v3340 = vunpack.c.h.b16 %v2769
    %v3341 = vunpack.c.l.b16 %v2770
    %v3342 = vunpack.c.h.b16 %v2770
    %v3343 = vunpack.c.l.b16 %v2771
    %v3344 = vunpack.c.h.b16 %v2771
    %v3345 = vunpack.c.l.b16 %v2772
    %v3346 = vunpack.c.l.b16 %v2773
    %v3347 = vunpack.c.h.b16 %v2773
    %v3348 = vunpack.c.l.b16 %v2774
    %v3349 = vunpack.c.h.b16 %v2774
    %v3350 = vunpack.c.l.b16 %v2775
    %v3351 = vunpack.c.h.b16 %v2775
    %v3352 = vunpack.c.l.b16 %v2776
    %v3353 = vunpack.c.l.b16 %v2777
    %v3354 = vunpack.c.h.b16 %v2777
    %v3355 = vunpack.c.l.b16 %v2778
    %v3356 = vunpack.c.h.b16 %v2778
    %v3357 = vunpack.c.l.b16 %v2779
    %v3358 = vunpack.c.h.b16 %v2779
    %v3359 = vunpack.c.l.b16 %v2780
    %v3360 = vunpack.c.l.b16 %v2781
    %v3361 = vunpack.c.h.b16 %v2781
    %v3362 = vunpack.c.l.b16 %v2782
    %v3363 = vunpack.c.h.b16 %v2782
    %v3364 = vunpack.c.l.b16 %v2783
    %v3365 = vunpack.c.h.b16 %v2783
    %v3366 = vunpack.c.l.b16 %v2784
    %v3367 = vunpack.c.l.b16 %v2785
    %v3368 = vunpack.c.h.b16 %v2785
    %v3369 = vunpack.c.l.b16 %v2786
    %v3370 = vunpack.c.h.b16 %v2786
    %v3371 = vunpack.c.l.b16 %v2787
    %v3372 = vunpack.c.h.b16 %v2787
    %v3373 = vunpack.c.l.b16 %v2788
    %v3374 = vunpack.c.l.b16 %v2789
    %v3375 = vunpack.c.h.b16 %v2789
    %v3376 = vunpack.c.l.b16 %v2790
    %v3377 = vunpack.c.h.b16 %v2790
    %v3378 = vunpack.c.l.b16 %v2791
    %v3379 = vunpack.c.h.b16 %v2791
    %v3380 = vunpack.c.l.b16 %v2792
    %v3381 = vunpack.c.l.b16 %v2793
    %v3382 = vunpack.c.h.b16 %v2793
    %v3383 = vunpack.c.l.b16 %v2794
    %v3384 = vunpack.c.h.b16 %v2794
    %v3385 = vunpack.c.l.b16 %v2795
    %v3386 = vunpack.c.h.b16 %v2795
    %v3387 = vunpack.c.l.b16 %v2796
    %v3388 = vunpack.c.l.b16 %v2797
    %v3389 = vunpack.c.h.b16 %v2797
    %v3390 = vunpack.c.l.b16 %v2798
    %v3391 = vunpack.c.h.b16 %v2798
    %v3392 = vunpack.c.l.b16 %v2799
    %v3393 = vunpack.c.h.b16 %v2799
    %v3394 = vunpack.c.l.b16 %v2800
    %v3395 = vunpack.c.l.b16 %v2801
    %v3396 = vunpack.c.h.b16 %v2801
    %v3397 = vunpack.c.l.b16 %v2802
    %v3398 = vunpack.c.h.b16 %v2802
    %v3399 = vunpack.c.l.b16 %v2803
    %v3400 = vunpack.c.h.b16 %v2803
    %v3401 = vunpack.c.l.b16 %v2804
    %v3402 = vunpack.c.l.b16 %v2805
    %v3403 = vunpack.c.h.b16 %v2805
    %v3404 = vunpack.c.l.b16 %v2806
    %v3405 = vunpack.c.h.b16 %v2806
    %v3406 = vunpack.c.l.b16 %v2807
    %v3407 = vunpack.c.h.b16 %v2807
    %v3408 = vunpack.c.l.b16 %v2808
    %v3409 = vunpack.c.l.b16 %v2809
    %v3410 = vunpack.c.h.b16 %v2809
    %v3411 = vunpack.c.l.b16 %v2810
    %v3412 = vunpack.c.h.b16 %v2810
    %v3413 = vunpack.c.l.b16 %v2811
    %v3414 = vunpack.c.h.b16 %v2811
    %v3415 = vunpack.c.l.b16 %v2812
    %v3416 = vunpack.c.l.b16 %v2813
    %v3417 = vunpack.c.h.b16 %v2813
    %v3418 = vunpack.c.l.b16 %v2814
    %v3419 = vunpack.c.h.b16 %v2814
    %v3420 = vunpack.c.l.b16 %v2815
    %v3421 = vunpack.c.h.b16 %v2815
    %v3422 = vunpack.c.l.b16 %v2816
    %v3423 = vunpack.c.l.b16 %v2817
    %v3424 = vunpack.c.h.b16 %v2817
    %v3425 = vunpack.c.l.b16 %v2818
    %v3426 = vunpack.c.h.b16 %v2818
    %v3427 = vunpack.c.l.b16 %v2819
    %v3428 = vunpack.c.h.b16 %v2819
    %v3429 = vunpack.c.l.b16 %v2820
    %v3430 = vunpack.c.l.b16 %v2821
    %v3431 = vunpack.c.h.b16 %v2821
    %v3432 = vunpack.c.l.b16 %v2822
    %v3433 = vunpack.c.h.b16 %v2822
    %v3434 = vunpack.c.l.b16 %v2823
    %v3435 = vunpack.c.h.b16 %v2823
    %v3436 = vunpack.c.l.b16 %v2824
    %v3437 = vunpack.c.l.b16 %v2825
    %v3438 = vunpack.c.h.b16 %v2825
    %v3439 = vunpack.c.l.b16 %v2826
    %v3440 = vunpack.c.h.b16 %v2826
    %v3441 = vunpack.c.l.b16 %v2827
    %v3442 = vunpack.c.h.b16 %v2827
    %v3443 = vunpack.c.l.b16 %v2828
    %v3444 = vunpack.c.l.b16 %v2829
    %v3445 = vunpack.c.h.b16 %v2829
    %v3446 = vunpack.c.l.b16 %v2830
    %v3447 = vunpack.c.h.b16 %v2830
    %v3448 = vunpack.c.l.b16 %v2831
    %v3449 = vunpack.c.h.b16 %v2831
    %v3450 = vunpack.c.l.b16 %v2832
    %v3451 = vunpack.c.l.b16 %v2833
    %v3452 = vunpack.c.h.b16 %v2833
    %v3453 = vunpack.c.l.b16 %v2834
    %v3454 = vunpack.c.h.b16 %v2834
    %v3455 = vunpack.c.l.b16 %v2835
    %v3456 = vunpack.c.h.b16 %v2835
    %v3457 = vunpack.c.l.b16 %v2836
    %v3458 = vunpack.c.l.b16 %v2837
    %v3459 = vunpack.c.h.b16 %v2837
    %v3460 = vunpack.c.l.b16 %v2838
    %v3461 = vunpack.c.h.b16 %v2838
    %v3462 = vunpack.c.l.b16 %v2839
    %v3463 = vunpack.c.h.b16 %v2839
    %v3464 = vunpack.c.l.b16 %v2840
    %v3465 = vunpack.c.l.b16 %v2841
    %v3466 = vunpack.c.h.b16 %v2841
    %v3467 = vunpack.c.l.b16 %v2842
    %v3468 = vunpack.c.h.b16 %v2842
    %v3469 = vunpack.c.l.b16 %v2843
    %v3470 = vunpack.c.h.b16 %v2843
    %v3471 = vunpack.c.l.b16 %v2844
    %v3472 = vunpack.c.l.b16 %v2845
    %v3473 = vunpack.c.h.b16 %v2845
    %v3474 = vunpack.c.l.b16 %v2846
    %v3475 = vunpack.c.h.b16 %v2846
    %v3476 = vunpack.c.l.b16 %v2847
    %v3477 = vunpack.c.h.b16 %v2847
    %v3478 = vunpack.c.l.b16 %v2848
    %v3479 = vunpack.c.l.b16 %v2849
    %v3480 = vunpack.c.h.b16 %v2849
    %v3481 = vunpack.c.l.b16 %v2850
    %v3482 = vunpack.c.h.b16 %v2850
    %v3483 = vunpack.c.l.b16 %v2851
    %v3484 = vunpack.c.h.b16 %v2851
    %v3485 = vunpack.c.l.b16 %v2852
    %v3486 = vunpack.c.l.b16 %v2853
    %v3487 = vunpack.c.h.b16 %v2853
    %v3488 = vunpack.c.l.b16 %v2854
    %v3489 = vunpack.c.h.b16 %v2854
    %v3490 = vunpack.c.l.b16 %v2855
    %v3491 = vunpack.c.h.b16 %v2855
    %v3492 = vunpack.c.l.b16 %v2856
    %v3493 = vunpack.c.l.b16 %v2857
    %v3494 = vunpack.c.h.b16 %v2857
    %v3495 = vunpack.c.l.b16 %v2858
    %v3496 = vunpack.c.h.b16 %v2858
    %v3497 = vunpack.c.l.b16 %v2859
    %v3498 = vunpack.c.h.b16 %v2859
    %v3499 = vunpack.c.l.b16 %v2860
    %v3500 = vunpack.c.l.b16 %v2861
    %v3501 = vunpack.c.h.b16 %v2861
    %v3502 = vunpack.c.l.b16 %v2862
    %v3503 = vunpack.c.h.b16 %v2862
    %v3504 = vunpack.c.l.b16 %v2863
    %v3505 = vunpack.c.h.b16 %v2863
    %v3506 = vunpack.c.l.b16 %v2864
    %v3507 = vunpack.c.l.b16 %v2865
    %v3508 = vunpack.c.h.b16 %v2865
    %v3509 = vunpack.c.l.b16 %v2866
    %v3510 = vunpack.c.h.b16 %v2866
    %v3511 = vunpack.c.l.b16 %v2867
    %v3512 = vunpack.c.h.b16 %v2867
    %v3513 = vunpack.c.l.b16 %v2868
    %v3514 = vunpack.c.l.b16 %v2869
    %v3515 = vunpack.c.h.b16 %v2869
    %v3516 = vunpack.c.l.b16 %v2870
    %v3517 = vunpack.c.h.b16 %v2870
    %v3518 = vunpack.c.l.b16 %v2871
    %v3519 = vunpack.c.h.b16 %v2871
    %v3520 = vunpack.c.l.b16 %v2872
    %v3521 = vunpack.c.l.b16 %v2873
    %v3522 = vunpack.c.h.b16 %v2873
    %v3523 = vunpack.c.l.b16 %v2874
    %v3524 = vunpack.c.h.b16 %v2874
    %v3525 = vunpack.c.l.b16 %v2875
    %v3526 = vunpack.c.h.b16 %v2875
    %v3527 = vunpack.c.l.b16 %v2876
    %v3528 = vunpack.c.l.b16 %v2877
    %v3529 = vunpack.c.h.b16 %v2877
    %v3530 = vunpack.c.l.b16 %v2878
    %v3531 = vunpack.c.h.b16 %v2878
    %v3532 = vunpack.c.l.b16 %v2879
    %v3533 = vunpack.c.h.b16 %v2879
    %v3534 = vunpack.c.l.b16 %v2880
    %v3535 = vunpack.c.l.b16 %v2881
    %v3536 = vunpack.c.h.b16 %v2881
    %v3537 = vunpack.c.l.b16 %v2882
    %v3538 = vunpack.c.h.b16 %v2882
    %v3539 = vunpack.c.l.b16 %v2883
    %v3540 = vunpack.c.h.b16 %v2883
    %v3541 = vunpack.c.l.b16 %v2884
    %v3542 = vunpack.c.l.b16 %v2885
    %v3543 = vunpack.c.h.b16 %v2885
    %v3544 = vunpack.c.l.b16 %v2886
    %v3545 = vunpack.c.h.b16 %v2886
    %v3546 = vunpack.c.l.b16 %v2887
    %v3547 = vunpack.c.h.b16 %v2887
    %v3548 = vunpack.c.l.b16 %v2888
    %v3549 = vunpack.c.l.b16 %v2889
    %v3550 = vunpack.c.h.b16 %v2889
    %v3551 = vunpack.c.l.b16 %v2890
    %v3552 = vunpack.c.h.b16 %v2890
    %v3553 = vunpack.c.l.b16 %v2891
    %v3554 = vunpack.c.h.b16 %v2891
    %v3555 = vunpack.c.l.b16 %v2892
    %v3556 = vunpack.c.l.b16 %v2893
    %v3557 = vunpack.c.h.b16 %v2893
    %v3558 = vunpack.c.l.b16 %v2894
    %v3559 = vunpack.c.h.b16 %v2894
    %v3560 = vunpack.c.l.b16 %v2895
    %v3561 = vunpack.c.h.b16 %v2895
    %v3562 = vunpack.c.l.b16 %v2896
    %v3563 = vunpack.c.l.b16 %v2897
    %v3564 = vunpack.c.h.b16 %v2897
    %v3565 = vunpack.c.l.b16 %v2898
    %v3566 = vunpack.c.h.b16 %v2898
    %v3567 = vunpack.c.l.b16 %v2899
    %v3568 = vunpack.c.h.b16 %v2899
    %v3569 = vunpack.c.l.b16 %v2900
    %v3570 = vunpack.c.l.b16 %v2901
    %v3571 = vunpack.c.h.b16 %v2901
    %v3572 = vunpack.c.l.b16 %v2902
    %v3573 = vunpack.c.h.b16 %v2902
    %v3574 = vunpack.c.l.b16 %v2903
    %v3575 = vunpack.c.h.b16 %v2903
    %v3576 = vunpack.c.l.b16 %v2904
    %v3577 = vunpack.c.l.b16 %v2905
    %v3578 = vunpack.c.h.b16 %v2905
    %v3579 = vunpack.c.l.b16 %v2906
    %v3580 = vunpack.c.h.b16 %v2906
    %v3581 = vunpack.c.l.b16 %v2907
    %v3582 = vunpack.c.h.b16 %v2907
    %v3583 = vunpack.c.l.b16 %v2908
    %v3584 = vunpack.c.l.b16 %v2909
    %v3585 = vunpack.c.h.b16 %v2909
    %v3586 = vunpack.c.l.b16 %v2910
    %v3587 = vunpack.c.h.b16 %v2910
    %v3588 = vunpack.c.l.b16 %v2911
    %v3589 = vunpack.c.h.b16 %v2911
    %v3590 = vunpack.c.l.b16 %v2912
    %v3591 = vunpack.c.l.b16 %v2913
    %v3592 = vunpack.c.h.b16 %v2913
    %v3593 = vunpack.c.l.b16 %v2914
    %v3594 = vunpack.c.h.b16 %v2914
    %v3595 = vunpack.c.l.b16 %v2915
    %v3596 = vunpack.c.h.b16 %v2915
    %v3597 = vunpack.c.l.b16 %v2916
    %v3598 = vunpack.c.l.b16 %v2917
    %v3599 = vunpack.c.h.b16 %v2917
    %v3600 = vunpack.c.l.b16 %v2918
    %v3601 = vunpack.c.h.b16 %v2918
    %v3602 = vunpack.c.l.b16 %v2919
    %v3603 = vunpack.c.h.b16 %v2919
    %v3604 = vunpack.c.l.b16 %v2920
    %v3605 = vunpack.c.l.b16 %v2921
    %v3606 = vunpack.c.h.b16 %v2921
    %v3607 = vunpack.c.l.b16 %v2922
    %v3608 = vunpack.c.h.b16 %v2922
    %v3609 = vunpack.c.l.b16 %v2923
    %v3610 = vunpack.c.h.b16 %v2923
    %v3611 = vunpack.c.l.b16 %v2924
    %v3612 = vunpack.c.l.b16 %v2925
    %v3613 = vunpack.c.h.b16 %v2925
    %v3614 = vunpack.c.l.b16 %v2926
    %v3615 = vunpack.c.h.b16 %v2926
    %v3616 = vunpack.c.l.b16 %v2927
    %v3617 = vunpack.c.h.b16 %v2927
    %v3618 = vunpack.c.l.b16 %v2928
    %v3619 = vunpack.c.l.b16 %v2929
    %v3620 = vunpack.c.h.b16 %v2929
    %v3621 = vunpack.c.l.b16 %v2930
    %v3622 = vunpack.c.h.b16 %v2930
    %v3623 = vunpack.c.l.b16 %v2931
    %v3624 = vunpack.c.h.b16 %v2931
    %v3625 = vunpack.c.l.b16 %v2932
    %v3626 = vunpack.c.l.b16 %v2933
    %v3627 = vunpack.c.h.b16 %v2933
    %v3628 = vunpack.c.l.b16 %v2934
    %v3629 = vunpack.c.h.b16 %v2934
    %v3630 = vunpack.c.l.b16 %v2935
    %v3631 = vunpack.c.h.b16 %v2935
    %v3632 = vunpack.c.l.b16 %v2936
    %v3633 = vunpack.c.l.b16 %v2937
    %v3634 = vunpack.c.h.b16 %v2937
    %v3635 = vunpack.c.l.b16 %v2938
    %v3636 = vunpack.c.h.b16 %v2938
    %v3637 = vunpack.c.l.b16 %v2939
    %v3638 = vunpack.c.h.b16 %v2939
    %v3639 = vunpack.c.l.b16 %v2940
    %v3640 = vunpack.c.l.b16 %v2941
    %v3641 = vunpack.c.h.b16 %v2941
    %v3642 = vunpack.c.l.b16 %v2942
    %v3643 = vunpack.c.h.b16 %v2942
    %v3644 = vunpack.c.l.b16 %v2943
    %v3645 = vunpack.c.h.b16 %v2943
    %v3646 = vunpack.c.l.b16 %v2944
    %v3647 = vunpack.c.l.b16 %v2945
    %v3648 = vunpack.c.h.b16 %v2945
    %v3649 = vunpack.c.l.b16 %v2946
    %v3650 = vunpack.c.h.b16 %v2946
    %v3651 = vunpack.c.l.b16 %v2947
    %v3652 = vunpack.c.h.b16 %v2947
    %v3653 = vunpack.c.l.b16 %v2948
    %v3654 = vunpack.c.l.b16 %v2949
    %v3655 = vunpack.c.h.b16 %v2949
    %v3656 = vunpack.c.l.b16 %v2950
    %v3657 = vunpack.c.h.b16 %v2950
    %v3658 = vunpack.c.l.b16 %v2951
    %v3659 = vunpack.c.h.b16 %v2951
    %v3660 = vunpack.c.l.b16 %v2952
    %v3661 = vunpack.c.l.b16 %v2953
    %v3662 = vunpack.c.h.b16 %v2953
    %v3663 = vunpack.c.l.b16 %v2954
    %v3664 = vunpack.c.h.b16 %v2954
    %v3665 = vunpack.c.l.b16 %v2955
    %v3666 = vunpack.c.h.b16 %v2955
    %v3667 = vunpack.c.l.b16 %v2956
    %v3668 = vunpack.c.l.b16 %v2957
    %v3669 = vunpack.c.h.b16 %v2957
    %v3670 = vunpack.c.l.b16 %v2958
    %v3671 = vunpack.c.h.b16 %v2958
    %v3672 = vunpack.c.l.b16 %v2959
    %v3673 = vunpack.c.h.b16 %v2959
    %v3674 = vunpack.c.l.b16 %v2960
    %v3675 = vunpack.c.l.b16 %v2961
    %v3676 = vunpack.c.h.b16 %v2961
    %v3677 = vunpack.c.l.b16 %v2962
    %v3678 = vunpack.c.h.b16 %v2962
    %v3679 = vunpack.c.l.b16 %v2963
    %v3680 = vunpack.c.h.b16 %v2963
    %v3681 = vunpack.c.l.b16 %v2964
    %v3682 = vunpack.c.l.b16 %v2965
    %v3683 = vunpack.c.h.b16 %v2965
    %v3684 = vunpack.c.l.b16 %v2966
    %v3685 = vunpack.c.h.b16 %v2966
    %v3686 = vunpack.c.l.b16 %v2967
    %v3687 = vunpack.c.h.b16 %v2967
    %v3688 = vunpack.c.l.b16 %v2968
    %v3689 = vpack.c.b16 %v3248, %v3241
    %v3690 = vpack.c.b16 %v3249, %v3242
    %v3691 = vpack.c.b16 %v3250, %v3243
    %v3692 = vpack.c.b16 %v3251, %v3244
    %v3693 = vpack.c.b16 %v3252, %v3245
    %v3694 = vpack.c.b16 %v3253, %v3246
    %v3695 = vpack.c.b16 %v3254, %v3247
    %v3696 = vpack.c.b16 %v3262, %v3255
    %v3697 = vpack.c.b16 %v3263, %v3256
    %v3698 = vpack.c.b16 %v3264, %v3257
    %v3699 = vpack.c.b16 %v3265, %v3258
    %v3700 = vpack.c.b16 %v3266, %v3259
    %v3701 = vpack.c.b16 %v3267, %v3260
    %v3702 = vpack.c.b16 %v3268, %v3261
    %v3703 = vpack.c.b16 %v3276, %v3269
    %v3704 = vpack.c.b16 %v3277, %v3270
    %v3705 = vpack.c.b16 %v3278, %v3271
    %v3706 = vpack.c.b16 %v3279, %v3272
    %v3707 = vpack.c.b16 %v3280, %v3273
    %v3708 = vpack.c.b16 %v3281, %v3274
    %v3709 = vpack.c.b16 %v3282, %v3275
    %v3710 = vpack.c.b16 %v3290, %v3283
    %v3711 = vpack.c.b16 %v3291, %v3284
    %v3712 = vpack.c.b16 %v3292, %v3285
    %v3713 = vpack.c.b16 %v3293, %v3286
    %v3714 = vpack.c.b16 %v3294, %v3287
    %v3715 = vpack.c.b16 %v3295, %v3288
    %v3716 = vpack.c.b16 %v3296, %v3289
    %v3717 = vpack.c.b16 %v3304, %v3297
    %v3718 = vpack.c.b16 %v3305, %v3298
    %v3719 = vpack.c.b16 %v3306, %v3299
    %v3720 = vpack.c.b16 %v3307, %v3300
    %v3721 = vpack.c.b16 %v3308, %v3301
    %v3722 = vpack.c.b16 %v3309, %v3302
    %v3723 = vpack.c.b16 %v3310, %v3303
    %v3724 = vpack.c.b16 %v3318, %v3311
    %v3725 = vpack.c.b16 %v3319, %v3312
    %v3726 = vpack.c.b16 %v3320, %v3313
    %v3727 = vpack.c.b16 %v3321, %v3314
    %v3728 = vpack.c.b16 %v3322, %v3315
    %v3729 = vpack.c.b16 %v3323, %v3316
    %v3730 = vpack.c.b16 %v3324, %v3317
    %v3731 = vpack.c.b16 %v3332, %v3325
    %v3732 = vpack.c.b16 %v3333, %v3326
    %v3733 = vpack.c.b16 %v3334, %v3327
    %v3734 = vpack.c.b16 %v3335, %v3328
    %v3735 = vpack.c.b16 %v3336, %v3329
    %v3736 = vpack.c.b16 %v3337, %v3330
    %v3737 = vpack.c.b16 %v3338, %v3331
    %v3738 = vpack.c.b16 %v3346, %v3339
    %v3739 = vpack.c.b16 %v3347, %v3340
    %v3740 = vpack.c.b16 %v3348, %v3341
    %v3741 = vpack.c.b16 %v3349, %v3342
    %v3742 = vpack.c.b16 %v3350, %v3343
    %v3743 = vpack.c.b16 %v3351, %v3344
    %v3744 = vpack.c.b16 %v3352, %v3345
    %v3745 = vpack.c.b16 %v3360, %v3353
    %v3746 = vpack.c.b16 %v3361, %v3354
    %v3747 = vpack.c.b16 %v3362, %v3355
    %v3748 = vpack.c.b16 %v3363, %v3356
    %v3749 = vpack.c.b16 %v3364, %v3357
    %v3750 = vpack.c.b16 %v3365, %v3358
    %v3751 = vpack.c.b16 %v3366, %v3359
    %v3752 = vpack.c.b16 %v3374, %v3367
    %v3753 = vpack.c.b16 %v3375, %v3368
    %v3754 = vpack.c.b16 %v3376, %v3369
    %v3755 = vpack.c.b16 %v3377, %v3370
    %v3756 = vpack.c.b16 %v3378, %v3371
    %v3757 = vpack.c.b16 %v3379, %v3372
    %v3758 = vpack.c.b16 %v3380, %v3373
    %v3759 = vpack.c.b16 %v3388, %v3381
    %v3760 = vpack.c.b16 %v3389, %v3382
    %v3761 = vpack.c.b16 %v3390, %v3383
    %v3762 = vpack.c.b16 %v3391, %v3384
    %v3763 = vpack.c.b16 %v3392, %v3385
    %v3764 = vpack.c.b16 %v3393, %v3386
    %v3765 = vpack.c.b16 %v3394, %v3387
    %v3766 = vpack.c.b16 %v3402, %v3395
    %v3767 = vpack.c.b16 %v3403, %v3396
    %v3768 = vpack.c.b16 %v3404, %v3397
    %v3769 = vpack.c.b16 %v3405, %v3398
    %v3770 = vpack.c.b16 %v3406, %v3399
    %v3771 = vpack.c.b16 %v3407, %v3400
    %v3772 = vpack.c.b16 %v3408, %v3401
    %v3773 = vpack.c.b16 %v3416, %v3409
    %v3774 = vpack.c.b16 %v3417, %v3410
    %v3775 = vpack.c.b16 %v3418, %v3411
    %v3776 = vpack.c.b16 %v3419, %v3412
    %v3777 = vpack.c.b16 %v3420, %v3413
    %v3778 = vpack.c.b16 %v3421, %v3414
    %v3779 = vpack.c.b16 %v3422, %v3415
    %v3780 = vpack.c.b16 %v3430, %v3423
    %v3781 = vpack.c.b16 %v3431, %v3424
    %v3782 = vpack.c.b16 %v3432, %v3425
    %v3783 = vpack.c.b16 %v3433, %v3426
    %v3784 = vpack.c.b16 %v3434, %v3427
    %v3785 = vpack.c.b16 %v3435, %v3428
    %v3786 = vpack.c.b16 %v3436, %v3429
    %v3787 = vpack.c.b16 %v3444, %v3437
    %v3788 = vpack.c.b16 %v3445, %v3438
    %v3789 = vpack.c.b16 %v3446, %v3439
    %v3790 = vpack.c.b16 %v3447, %v3440
    %v3791 = vpack.c.b16 %v3448, %v3441
    %v3792 = vpack.c.b16 %v3449, %v3442
    %v3793 = vpack.c.b16 %v3450, %v3443
    %v3794 = vpack.c.b16 %v3458, %v3451
    %v3795 = vpack.c.b16 %v3459, %v3452
    %v3796 = vpack.c.b16 %v3460, %v3453
    %v3797 = vpack.c.b16 %v3461, %v3454
    %v3798 = vpack.c.b16 %v3462, %v3455
    %v3799 = vpack.c.b16 %v3463, %v3456
    %v3800 = vpack.c.b16 %v3464, %v3457
    %v3801 = vpack.c.b16 %v3472, %v3465
    %v3802 = vpack.c.b16 %v3473, %v3466
    %v3803 = vpack.c.b16 %v3474, %v3467
    %v3804 = vpack.c.b16 %v3475, %v3468
    %v3805 = vpack.c.b16 %v3476, %v3469
    %v3806 = vpack.c.b16 %v3477, %v3470
    %v3807 = vpack.c.b16 %v3478, %v3471
    %v3808 = vpack.c.b16 %v3486, %v3479
    %v3809 = vpack.c.b16 %v3487, %v3480
    %v3810 = vpack.c.b16 %v3488, %v3481
    %v3811 = vpack.c.b16 %v3489, %v3482
    %v3812 = vpack.c.b16 %v3490, %v3483
    %v3813 = vpack.c.b16 %v3491, %v3484
    %v3814 = vpack.c.b16 %v3492, %v3485
    %v3815 = vpack.c.b16 %v3500, %v3493
    %v3816 = vpack.c.b16 %v3501, %v3494
    %v3817 = vpack.c.b16 %v3502, %v3495
    %v3818 = vpack.c.b16 %v3503, %v3496
    %v3819 = vpack.c.b16 %v3504, %v3497
    %v3820 = vpack.c.b16 %v3505, %v3498
    %v3821 = vpack.c.b16 %v3506, %v3499
    %v3822 = vpack.c.b16 %v3514, %v3507
    %v3823 = vpack.c.b16 %v3515, %v3508
    %v3824 = vpack.c.b16 %v3516, %v3509
    %v3825 = vpack.c.b16 %v3517, %v3510
    %v3826 = vpack.c.b16 %v3518, %v3511
    %v3827 = vpack.c.b16 %v3519, %v3512
    %v3828 = vpack.c.b16 %v3520, %v3513
    %v3829 = vpack.c.b16 %v3528, %v3521
    %v3830 = vpack.c.b16 %v3529, %v3522
    %v3831 = vpack.c.b16 %v3530, %v3523
    %v3832 = vpack.c.b16 %v3531, %v3524
    %v3833 = vpack.c.b16 %v3532, %v3525
    %v3834 = vpack.c.b16 %v3533, %v3526
    %v3835 = vpack.c.b16 %v3534, %v3527
    %v3836 = vpack.c.b16 %v3542, %v3535
    %v3837 = vpack.c.b16 %v3543, %v3536
    %v3838 = vpack.c.b16 %v3544, %v3537
    %v3839 = vpack.c.b16 %v3545, %v3538
    %v3840 = vpack.c.b16 %v3546, %v3539
    %v3841 = vpack.c.b16 %v3547, %v3540
    %v3842 = vpack.c.b16 %v3548, %v3541
    %v3843 = vpack.c.b16 %v3556, %v3549
    %v3844 = vpack.c.b16 %v3557, %v3550
    %v3845 = vpack.c.b16 %v3558, %v3551
    %v3846 = vpack.c.b16 %v3559, %v3552
    %v3847 = vpack.c.b16 %v3560, %v3553
    %v3848 = vpack.c.b16 %v3561, %v3554
    %v3849 = vpack.c.b16 %v3562, %v3555
    %v3850 = vpack.c.b16 %v3570, %v3563
    %v3851 = vpack.c.b16 %v3571, %v3564
    %v3852 = vpack.c.b16 %v3572, %v3565
    %v3853 = vpack.c.b16 %v3573, %v3566
    %v3854 = vpack.c.b16 %v3574, %v3567
    %v3855 = vpack.c.b16 %v3575, %v3568
    %v3856 = vpack.c.b16 %v3576, %v3569
    %v3857 = vpack.c.b16 %v3584, %v3577
    %v3858 = vpack.c.b16 %v3585, %v3578
    %v3859 = vpack.c.b16 %v3586, %v3579
    %v3860 = vpack.c.b16 %v3587, %v3580
    %v3861 = vpack.c.b16 %v3588, %v3581
    %v3862 = vpack.c.b16 %v3589, %v3582
    %v3863 = vpack.c.b16 %v3590, %v3583
    %v3864 = vpack.c.b16 %v3598, %v3591
    %v3865 = vpack.c.b16 %v3599, %v3592
    %v3866 = vpack.c.b16 %v3600, %v3593
    %v3867 = vpack.c.b16 %v3601, %v3594
    %v3868 = vpack.c.b16 %v3602, %v3595
    %v3869 = vpack.c.b16 %v3603, %v3596
    %v3870 = vpack.c.b16 %v3604, %v3597
    %v3871 = vpack.c.b16 %v3612, %v3605
    %v3872 = vpack.c.b16 %v3613, %v3606
    %v3873 = vpack.c.b16 %v3614, %v3607
    %v3874 = vpack.c.b16 %v3615, %v3608
    %v3875 = vpack.c.b16 %v3616, %v3609
    %v3876 = vpack.c.b16 %v3617, %v3610
    %v3877 = vpack.c.b16 %v3618, %v3611
    %v3878 = vpack.c.b16 %v3626, %v3619
    %v3879 = vpack.c.b16 %v3627, %v3620
    %v3880 = vpack.c.b16 %v3628, %v3621
    %v3881 = vpack.c.b16 %v3629, %v3622
    %v3882 = vpack.c.b16 %v3630, %v3623
    %v3883 = vpack.c.b16 %v3631, %v3624
    %v3884 = vpack.c.b16 %v3632, %v3625
    %v3885 = vpack.c.b16 %v3640, %v3633
    %v3886 = vpack.c.b16 %v3641, %v3634
    %v3887 = vpack.c.b16 %v3642, %v3635
    %v3888 = vpack.c.b16 %v3643, %v3636
    %v3889 = vpack.c.b16 %v3644, %v3637
    %v3890 = vpack.c.b16 %v3645, %v3638
    %v3891 = vpack.c.b16 %v3646, %v3639
    %v3892 = vpack.c.b16 %v3654, %v3647
    %v3893 = vpack.c.b16 %v3655, %v3648
    %v3894 = vpack.c.b16 %v3656, %v3649
    %v3895 = vpack.c.b16 %v3657, %v3650
    %v3896 = vpack.c.b16 %v3658, %v3651
    %v3897 = vpack.c.b16 %v3659, %v3652
    %v3898 = vpack.c.b16 %v3660, %v3653
    %v3899 = vpack.c.b16 %v3668, %v3661
    %v3900 = vpack.c.b16 %v3669, %v3662
    %v3901 = vpack.c.b16 %v3670, %v3663
    %v3902 = vpack.c.b16 %v3671, %v3664
    %v3903 = vpack.c.b16 %v3672, %v3665
    %v3904 = vpack.c.b16 %v3673, %v3666
    %v3905 = vpack.c.b16 %v3674, %v3667
    %v3906 = vpack.c.b16 %v3682, %v3675
    %v3907 = vpack.c.b16 %v3683, %v3676
    %v3908 = vpack.c.b16 %v3684, %v3677
    %v3909 = vpack.c.b16 %v3685, %v3678
    %v3910 = vpack.c.b16 %v3686, %v3679
    %v3911 = vpack.c.b16 %v3687, %v3680
    %v3912 = vpack.c.b16 %v3688, %v3681
    %4137 = vmatpush.bf16.msra.mxu0 %v3738
    %4138 = vmatpush.bf16.msra.mxu0 %v3731
    %4139 = vmatpush.bf16.msra.mxu0 %v3724
    %4140 = vmatpush.bf16.msra.mxu0 %v3717
    %4141 = vmatpush.bf16.msra.mxu0 %v3710
    %4142 = vmatpush.bf16.msra.mxu0 %v3703
    %4143 = vmatpush.bf16.msra.mxu0 %v3696
    %4144 = vmatpush.bf16.msra.mxu0 %v3689
    %4145 = vmatmul.bf16.gmra.mxu0 %v2709
    %v4146 = vpop.f32.mrf.mxu0
    %v4147 = vadd.f32 %v2971, %v4146
    %v4148 = vpop.f32.mrf.mxu0
    %4149 = vdwg.mxu0
    %4150 = vmatpush.bf16.msra.mxu0 %v3794
    %4151 = vmatpush.bf16.msra.mxu0 %v3787
    %4152 = vmatpush.bf16.msra.mxu0 %v3780
    %4153 = vmatpush.bf16.msra.mxu0 %v3773
    %4154 = vmatpush.bf16.msra.mxu0 %v3766
    %4155 = vmatpush.bf16.msra.mxu0 %v3759
    %4156 = vmatpush.bf16.msra.mxu0 %v3752
    %4157 = vmatpush.bf16.msra.mxu0 %v3745
    %4158 = vmatmul.bf16.gmra.mxu0 %v2710
    %v4159 = vpop.f32.mrf.mxu0
    %v4160 = vadd.f32 %v4147, %v4159
    %v4161 = vpop.f32.mrf.mxu0
    %4162 = vdwg.mxu0
    %4163 = vmatpush.bf16.msra.mxu0 %v3850
    %4164 = vmatpush.bf16.msra.mxu0 %v3843
    %4165 = vmatpush.bf16.msra.mxu0 %v3836
    %4166 = vmatpush.bf16.msra.mxu0 %v3829
    %4167 = vmatpush.bf16.msra.mxu0 %v3822
    %4168 = vmatpush.bf16.msra.mxu0 %v3815
    %4169 = vmatpush.bf16.msra.mxu0 %v3808
    %4170 = vmatpush.bf16.msra.mxu0 %v3801
    %4171 = vmatmul.bf16.gmra.mxu0 %v2711
    %v4172 = vpop.f32.mrf.mxu0
    %v4173 = vadd.f32 %v4160, %v4172
    %v4174 = vpop.f32.mrf.mxu0
    %4175 = vdwg.mxu0
    %4176 = vmatpush.bf16.msra.mxu0 %v3906
    %4177 = vmatpush.bf16.msra.mxu0 %v3899
    %4178 = vmatpush.bf16.msra.mxu0 %v3892
    %4179 = vmatpush.bf16.msra.mxu0 %v3885
    %4180 = vmatpush.bf16.msra.mxu0 %v3878
    %4181 = vmatpush.bf16.msra.mxu0 %v3871
    %4182 = vmatpush.bf16.msra.mxu0 %v3864
    %4183 = vmatpush.bf16.msra.mxu0 %v3857
    %4184 = vmatmul.bf16.gmra.mxu0 %v2712
    %v4185 = vpop.f32.mrf.mxu0
    %v4186 = vadd.f32 %v4173, %v4185
    %v4187 = vpop.f32.mrf.mxu0
    %4188 = vdwg.mxu0
    %4189 = vmatpush.bf16.msra.mxu0 %v3739
    %4190 = vmatpush.bf16.msra.mxu0 %v3732
    %4191 = vmatpush.bf16.msra.mxu0 %v3725
    %4192 = vmatpush.bf16.msra.mxu0 %v3718
    %4193 = vmatpush.bf16.msra.mxu0 %v3711
    %4194 = vmatpush.bf16.msra.mxu0 %v3704
    %4195 = vmatpush.bf16.msra.mxu0 %v3697
    %4196 = vmatpush.bf16.msra.mxu0 %v3690
    %4197 = vmatmul.bf16.gmra.mxu0 %v2709
    %v4198 = vpop.f32.mrf.mxu0
    %v4199 = vadd.f32 %v2972, %v4198
    %v4200 = vpop.f32.mrf.mxu0
    %4201 = vdwg.mxu0
    %4202 = vmatpush.bf16.msra.mxu0 %v3795
    %4203 = vmatpush.bf16.msra.mxu0 %v3788
    %4204 = vmatpush.bf16.msra.mxu0 %v3781
    %4205 = vmatpush.bf16.msra.mxu0 %v3774
    %4206 = vmatpush.bf16.msra.mxu0 %v3767
    %4207 = vmatpush.bf16.msra.mxu0 %v3760
    %4208 = vmatpush.bf16.msra.mxu0 %v3753
    %4209 = vmatpush.bf16.msra.mxu0 %v3746
    %4210 = vmatmul.bf16.gmra.mxu0 %v2710
    %v4211 = vpop.f32.mrf.mxu0
    %v4212 = vadd.f32 %v4199, %v4211
    %v4213 = vpop.f32.mrf.mxu0
    %4214 = vdwg.mxu0
    %4215 = vmatpush.bf16.msra.mxu0 %v3851
    %4216 = vmatpush.bf16.msra.mxu0 %v3844
    %4217 = vmatpush.bf16.msra.mxu0 %v3837
    %4218 = vmatpush.bf16.msra.mxu0 %v3830
    %4219 = vmatpush.bf16.msra.mxu0 %v3823
    %4220 = vmatpush.bf16.msra.mxu0 %v3816
    %4221 = vmatpush.bf16.msra.mxu0 %v3809
    %4222 = vmatpush.bf16.msra.mxu0 %v3802
    %4223 = vmatmul.bf16.gmra.mxu0 %v2711
    %v4224 = vpop.f32.mrf.mxu0
    %v4225 = vadd.f32 %v4212, %v4224
    %v4226 = vpop.f32.mrf.mxu0
    %4227 = vdwg.mxu0
    %4228 = vmatpush.bf16.msra.mxu0 %v3907
    %4229 = vmatpush.bf16.msra.mxu0 %v3900
    %4230 = vmatpush.bf16.msra.mxu0 %v3893
    %4231 = vmatpush.bf16.msra.mxu0 %v3886
    %4232 = vmatpush.bf16.msra.mxu0 %v3879
    %4233 = vmatpush.bf16.msra.mxu0 %v3872
    %4234 = vmatpush.bf16.msra.mxu0 %v3865
    %4235 = vmatpush.bf16.msra.mxu0 %v3858
    %4236 = vmatmul.bf16.gmra.mxu0 %v2712
    %v4237 = vpop.f32.mrf.mxu0
    %v4238 = vadd.f32 %v4225, %v4237
    %v4239 = vpop.f32.mrf.mxu0
    %4240 = vdwg.mxu0
    %4241 = vmatpush.bf16.msra.mxu0 %v3740
    %4242 = vmatpush.bf16.msra.mxu0 %v3733
    %4243 = vmatpush.bf16.msra.mxu0 %v3726
    %4244 = vmatpush.bf16.msra.mxu0 %v3719
    %4245 = vmatpush.bf16.msra.mxu0 %v3712
    %4246 = vmatpush.bf16.msra.mxu0 %v3705
    %4247 = vmatpush.bf16.msra.mxu0 %v3698
    %4248 = vmatpush.bf16.msra.mxu0 %v3691
    %4249 = vmatmul.bf16.gmra.mxu0 %v2709
    %v4250 = vpop.f32.mrf.mxu0
    %v4251 = vadd.f32 %v2973, %v4250
    %v4252 = vpop.f32.mrf.mxu0
    %4253 = vdwg.mxu0
    %4254 = vmatpush.bf16.msra.mxu0 %v3796
    %4255 = vmatpush.bf16.msra.mxu0 %v3789
    %4256 = vmatpush.bf16.msra.mxu0 %v3782
    %4257 = vmatpush.bf16.msra.mxu0 %v3775
    %4258 = vmatpush.bf16.msra.mxu0 %v3768
    %4259 = vmatpush.bf16.msra.mxu0 %v3761
    %4260 = vmatpush.bf16.msra.mxu0 %v3754
    %4261 = vmatpush.bf16.msra.mxu0 %v3747
    %4262 = vmatmul.bf16.gmra.mxu0 %v2710
    %v4263 = vpop.f32.mrf.mxu0
    %v4264 = vadd.f32 %v4251, %v4263
    %v4265 = vpop.f32.mrf.mxu0
    %4266 = vdwg.mxu0
    %4267 = vmatpush.bf16.msra.mxu0 %v3852
    %4268 = vmatpush.bf16.msra.mxu0 %v3845
    %4269 = vmatpush.bf16.msra.mxu0 %v3838
    %4270 = vmatpush.bf16.msra.mxu0 %v3831
    %4271 = vmatpush.bf16.msra.mxu0 %v3824
    %4272 = vmatpush.bf16.msra.mxu0 %v3817
    %4273 = vmatpush.bf16.msra.mxu0 %v3810
    %4274 = vmatpush.bf16.msra.mxu0 %v3803
    %4275 = vmatmul.bf16.gmra.mxu0 %v2711
    %v4276 = vpop.f32.mrf.mxu0
    %v4277 = vadd.f32 %v4264, %v4276
    %v4278 = vpop.f32.mrf.mxu0
    %4279 = vdwg.mxu0
    %4280 = vmatpush.bf16.msra.mxu0 %v3908
    %4281 = vmatpush.bf16.msra.mxu0 %v3901
    %4282 = vmatpush.bf16.msra.mxu0 %v3894
    %4283 = vmatpush.bf16.msra.mxu0 %v3887
    %4284 = vmatpush.bf16.msra.mxu0 %v3880
    %4285 = vmatpush.bf16.msra.mxu0 %v3873
    %4286 = vmatpush.bf16.msra.mxu0 %v3866
    %4287 = vmatpush.bf16.msra.mxu0 %v3859
    %4288 = vmatmul.bf16.gmra.mxu0 %v2712
    %v4289 = vpop.f32.mrf.mxu0
    %v4290 = vadd.f32 %v4277, %v4289
    %v4291 = vpop.f32.mrf.mxu0
    %4292 = vdwg.mxu0
    %4293 = vmatpush.bf16.msra.mxu0 %v3741
    %4294 = vmatpush.bf16.msra.mxu0 %v3734
    %4295 = vmatpush.bf16.msra.mxu0 %v3727
    %4296 = vmatpush.bf16.msra.mxu0 %v3720
    %4297 = vmatpush.bf16.msra.mxu0 %v3713
    %4298 = vmatpush.bf16.msra.mxu0 %v3706
    %4299 = vmatpush.bf16.msra.mxu0 %v3699
    %4300 = vmatpush.bf16.msra.mxu0 %v3692
    %4301 = vmatmul.bf16.gmra.mxu0 %v2709
    %v4302 = vpop.f32.mrf.mxu0
    %v4303 = vadd.f32 %v2974, %v4302
    %v4304 = vpop.f32.mrf.mxu0
    %4305 = vdwg.mxu0
    %4306 = vmatpush.bf16.msra.mxu0 %v3797
    %4307 = vmatpush.bf16.msra.mxu0 %v3790
    %4308 = vmatpush.bf16.msra.mxu0 %v3783
    %4309 = vmatpush.bf16.msra.mxu0 %v3776
    %4310 = vmatpush.bf16.msra.mxu0 %v3769
    %4311 = vmatpush.bf16.msra.mxu0 %v3762
    %4312 = vmatpush.bf16.msra.mxu0 %v3755
    %4313 = vmatpush.bf16.msra.mxu0 %v3748
    %4314 = vmatmul.bf16.gmra.mxu0 %v2710
    %v4315 = vpop.f32.mrf.mxu0
    %v4316 = vadd.f32 %v4303, %v4315
    %v4317 = vpop.f32.mrf.mxu0
    %4318 = vdwg.mxu0
    %4319 = vmatpush.bf16.msra.mxu0 %v3853
    %4320 = vmatpush.bf16.msra.mxu0 %v3846
    %4321 = vmatpush.bf16.msra.mxu0 %v3839
    %4322 = vmatpush.bf16.msra.mxu0 %v3832
    %4323 = vmatpush.bf16.msra.mxu0 %v3825
    %4324 = vmatpush.bf16.msra.mxu0 %v3818
    %4325 = vmatpush.bf16.msra.mxu0 %v3811
    %4326 = vmatpush.bf16.msra.mxu0 %v3804
    %4327 = vmatmul.bf16.gmra.mxu0 %v2711
    %v4328 = vpop.f32.mrf.mxu0
    %v4329 = vadd.f32 %v4316, %v4328
    %v4330 = vpop.f32.mrf.mxu0
    %4331 = vdwg.mxu0
    %4332 = vmatpush.bf16.msra.mxu0 %v3909
    %4333 = vmatpush.bf16.msra.mxu0 %v3902
    %4334 = vmatpush.bf16.msra.mxu0 %v3895
    %4335 = vmatpush.bf16.msra.mxu0 %v3888
    %4336 = vmatpush.bf16.msra.mxu0 %v3881
    %4337 = vmatpush.bf16.msra.mxu0 %v3874
    %4338 = vmatpush.bf16.msra.mxu0 %v3867
    %4339 = vmatpush.bf16.msra.mxu0 %v3860
    %4340 = vmatmul.bf16.gmra.mxu0 %v2712
    %v4341 = vpop.f32.mrf.mxu0
    %v4342 = vadd.f32 %v4329, %v4341
    %v4343 = vpop.f32.mrf.mxu0
    %4344 = vdwg.mxu0
    %4345 = vmatpush.bf16.msra.mxu0 %v3742
    %4346 = vmatpush.bf16.msra.mxu0 %v3735
    %4347 = vmatpush.bf16.msra.mxu0 %v3728
    %4348 = vmatpush.bf16.msra.mxu0 %v3721
    %4349 = vmatpush.bf16.msra.mxu0 %v3714
    %4350 = vmatpush.bf16.msra.mxu0 %v3707
    %4351 = vmatpush.bf16.msra.mxu0 %v3700
    %4352 = vmatpush.bf16.msra.mxu0 %v3693
    %4353 = vmatmul.bf16.gmra.mxu0 %v2709
    %v4354 = vpop.f32.mrf.mxu0
    %v4355 = vadd.f32 %v2975, %v4354
    %v4356 = vpop.f32.mrf.mxu0
    %4357 = vdwg.mxu0
    %4358 = vmatpush.bf16.msra.mxu0 %v3798
    %4359 = vmatpush.bf16.msra.mxu0 %v3791
    %4360 = vmatpush.bf16.msra.mxu0 %v3784
    %4361 = vmatpush.bf16.msra.mxu0 %v3777
    %4362 = vmatpush.bf16.msra.mxu0 %v3770
    %4363 = vmatpush.bf16.msra.mxu0 %v3763
    %4364 = vmatpush.bf16.msra.mxu0 %v3756
    %4365 = vmatpush.bf16.msra.mxu0 %v3749
    %4366 = vmatmul.bf16.gmra.mxu0 %v2710
    %v4367 = vpop.f32.mrf.mxu0
    %v4368 = vadd.f32 %v4355, %v4367
    %v4369 = vpop.f32.mrf.mxu0
    %4370 = vdwg.mxu0
    %4371 = vmatpush.bf16.msra.mxu0 %v3854
    %4372 = vmatpush.bf16.msra.mxu0 %v3847
    %4373 = vmatpush.bf16.msra.mxu0 %v3840
    %4374 = vmatpush.bf16.msra.mxu0 %v3833
    %4375 = vmatpush.bf16.msra.mxu0 %v3826
    %4376 = vmatpush.bf16.msra.mxu0 %v3819
    %4377 = vmatpush.bf16.msra.mxu0 %v3812
    %4378 = vmatpush.bf16.msra.mxu0 %v3805
    %4379 = vmatmul.bf16.gmra.mxu0 %v2711
    %v4380 = vpop.f32.mrf.mxu0
    %v4381 = vadd.f32 %v4368, %v4380
    %v4382 = vpop.f32.mrf.mxu0
    %4383 = vdwg.mxu0
    %4384 = vmatpush.bf16.msra.mxu0 %v3910
    %4385 = vmatpush.bf16.msra.mxu0 %v3903
    %4386 = vmatpush.bf16.msra.mxu0 %v3896
    %4387 = vmatpush.bf16.msra.mxu0 %v3889
    %4388 = vmatpush.bf16.msra.mxu0 %v3882
    %4389 = vmatpush.bf16.msra.mxu0 %v3875
    %4390 = vmatpush.bf16.msra.mxu0 %v3868
    %4391 = vmatpush.bf16.msra.mxu0 %v3861
    %4392 = vmatmul.bf16.gmra.mxu0 %v2712
    %v4393 = vpop.f32.mrf.mxu0
    %v4394 = vadd.f32 %v4381, %v4393
    %v4395 = vpop.f32.mrf.mxu0
    %4396 = vdwg.mxu0
    %4397 = vmatpush.bf16.msra.mxu0 %v3743
    %4398 = vmatpush.bf16.msra.mxu0 %v3736
    %4399 = vmatpush.bf16.msra.mxu0 %v3729
    %4400 = vmatpush.bf16.msra.mxu0 %v3722
    %4401 = vmatpush.bf16.msra.mxu0 %v3715
    %4402 = vmatpush.bf16.msra.mxu0 %v3708
    %4403 = vmatpush.bf16.msra.mxu0 %v3701
    %4404 = vmatpush.bf16.msra.mxu0 %v3694
    %4405 = vmatmul.bf16.gmra.mxu0 %v2709
    %v4406 = vpop.f32.mrf.mxu0
    %v4407 = vadd.f32 %v2976, %v4406
    %v4408 = vpop.f32.mrf.mxu0
    %4409 = vdwg.mxu0
    %4410 = vmatpush.bf16.msra.mxu0 %v3799
    %4411 = vmatpush.bf16.msra.mxu0 %v3792
    %4412 = vmatpush.bf16.msra.mxu0 %v3785
    %4413 = vmatpush.bf16.msra.mxu0 %v3778
    %4414 = vmatpush.bf16.msra.mxu0 %v3771
    %4415 = vmatpush.bf16.msra.mxu0 %v3764
    %4416 = vmatpush.bf16.msra.mxu0 %v3757
    %4417 = vmatpush.bf16.msra.mxu0 %v3750
    %4418 = vmatmul.bf16.gmra.mxu0 %v2710
    %v4419 = vpop.f32.mrf.mxu0
    %v4420 = vadd.f32 %v4407, %v4419
    %v4421 = vpop.f32.mrf.mxu0
    %4422 = vdwg.mxu0
    %4423 = vmatpush.bf16.msra.mxu0 %v3855
    %4424 = vmatpush.bf16.msra.mxu0 %v3848
    %4425 = vmatpush.bf16.msra.mxu0 %v3841
    %4426 = vmatpush.bf16.msra.mxu0 %v3834
    %4427 = vmatpush.bf16.msra.mxu0 %v3827
    %4428 = vmatpush.bf16.msra.mxu0 %v3820
    %4429 = vmatpush.bf16.msra.mxu0 %v3813
    %4430 = vmatpush.bf16.msra.mxu0 %v3806
    %4431 = vmatmul.bf16.gmra.mxu0 %v2711
    %v4432 = vpop.f32.mrf.mxu0
    %v4433 = vadd.f32 %v4420, %v4432
    %v4434 = vpop.f32.mrf.mxu0
    %4435 = vdwg.mxu0
    %4436 = vmatpush.bf16.msra.mxu0 %v3911
    %4437 = vmatpush.bf16.msra.mxu0 %v3904
    %4438 = vmatpush.bf16.msra.mxu0 %v3897
    %4439 = vmatpush.bf16.msra.mxu0 %v3890
    %4440 = vmatpush.bf16.msra.mxu0 %v3883
    %4441 = vmatpush.bf16.msra.mxu0 %v3876
    %4442 = vmatpush.bf16.msra.mxu0 %v3869
    %4443 = vmatpush.bf16.msra.mxu0 %v3862
    %4444 = vmatmul.bf16.gmra.mxu0 %v2712
    %v4445 = vpop.f32.mrf.mxu0
    %v4446 = vadd.f32 %v4433, %v4445
    %v4447 = vpop.f32.mrf.mxu0
    %4448 = vdwg.mxu0
    %4449 = vmatpush.bf16.msra.mxu0 %v3744
    %4450 = vmatpush.bf16.msra.mxu0 %v3737
    %4451 = vmatpush.bf16.msra.mxu0 %v3730
    %4452 = vmatpush.bf16.msra.mxu0 %v3723
    %4453 = vmatpush.bf16.msra.mxu0 %v3716
    %4454 = vmatpush.bf16.msra.mxu0 %v3709
    %4455 = vmatpush.bf16.msra.mxu0 %v3702
    %4456 = vmatpush.bf16.msra.mxu0 %v3695
    %4457 = vmatmul.bf16.gmra.mxu0 %v2709
    %v4458 = vpop.f32.mrf.mxu0
    %v4459 = vadd.f32 %v2977, %v4458
    %v4460 = vpop.f32.mrf.mxu0
    %4461 = vdwg.mxu0
    %4462 = vmatpush.bf16.msra.mxu0 %v3800
    %4463 = vmatpush.bf16.msra.mxu0 %v3793
    %4464 = vmatpush.bf16.msra.mxu0 %v3786
    %4465 = vmatpush.bf16.msra.mxu0 %v3779
    %4466 = vmatpush.bf16.msra.mxu0 %v3772
    %4467 = vmatpush.bf16.msra.mxu0 %v3765
    %4468 = vmatpush.bf16.msra.mxu0 %v3758
    %4469 = vmatpush.bf16.msra.mxu0 %v3751
    %4470 = vmatmul.bf16.gmra.mxu0 %v2710
    %v4471 = vpop.f32.mrf.mxu0
    %v4472 = vadd.f32 %v4459, %v4471
    %v4473 = vpop.f32.mrf.mxu0
    %4474 = vdwg.mxu0
    %4475 = vmatpush.bf16.msra.mxu0 %v3856
    %4476 = vmatpush.bf16.msra.mxu0 %v3849
    %4477 = vmatpush.bf16.msra.mxu0 %v3842
    %4478 = vmatpush.bf16.msra.mxu0 %v3835
    %4479 = vmatpush.bf16.msra.mxu0 %v3828
    %4480 = vmatpush.bf16.msra.mxu0 %v3821
    %4481 = vmatpush.bf16.msra.mxu0 %v3814
    %4482 = vmatpush.bf16.msra.mxu0 %v3807
    %4483 = vmatmul.bf16.gmra.mxu0 %v2711
    %v4484 = vpop.f32.mrf.mxu0
    %v4485 = vadd.f32 %v4472, %v4484
    %v4486 = vpop.f32.mrf.mxu0
    %4487 = vdwg.mxu0
    %4488 = vmatpush.bf16.msra.mxu0 %v3912
    %4489 = vmatpush.bf16.msra.mxu0 %v3905
    %4490 = vmatpush.bf16.msra.mxu0 %v3898
    %4491 = vmatpush.bf16.msra.mxu0 %v3891
    %4492 = vmatpush.bf16.msra.mxu0 %v3884
    %4493 = vmatpush.bf16.msra.mxu0 %v3877
    %4494 = vmatpush.bf16.msra.mxu0 %v3870
    %4495 = vmatpush.bf16.msra.mxu0 %v3863
    %4496 = vmatmul.bf16.gmra.mxu0 %v2712
    %v4497 = vpop.f32.mrf.mxu0
    %v4498 = vadd.f32 %v4485, %v4497
    %v4499 = vpop.f32.mrf.mxu0
    %4500 = vdwg.mxu0
    %v4501 = vxor.u32 %v4186, 2147483648
    %v4502 = vxor.u32 %v4238, 2147483648
    %v4503 = vxor.u32 %v4290, 2147483648
    %v4504 = vxor.u32 %v4342, 2147483648
    %v4505 = vxor.u32 %v4394, 2147483648
    %v4506 = vxor.u32 %v4446, 2147483648
    %v4507 = vxor.u32 %v4498, 2147483648
    %v4508 = vmul.f32 %v4501, 1.442695
    %v4509 = vpow.pop %v4508
    %v4510 = vmul.f32 %v4502, 1.442695
    %v4511 = vpow.pop %v4510
    %v4512 = vmul.f32 %v4503, 1.442695
    %v4513 = vpow.pop %v4512
    %v4514 = vmul.f32 %v4504, 1.442695
    %v4515 = vpow.pop %v4514
    %v4516 = vmul.f32 %v4505, 1.442695
    %v4517 = vpow.pop %v4516
    %v4518 = vmul.f32 %v4506, 1.442695
    %v4519 = vpow.pop %v4518
    %v4520 = vmul.f32 %v4507, 1.442695
    %v4521 = vpow.pop %v4520
    %v4522 = vadd.f32 %v4509, 1.0
    %v4523 = vadd.f32 %v4511, 1.0
    %v4524 = vadd.f32 %v4513, 1.0
    %v4525 = vadd.f32 %v4515, 1.0
    %v4526 = vadd.f32 %v4517, 1.0
    %v4527 = vadd.f32 %v4519, 1.0
    %v4528 = vadd.f32 %v4521, 1.0
    %v4529 = vrcp.pop %v4522
    %v4530 = vmul.f32 %v4522, %v4529
    %v4531 = vsub.f32 1.0, %v4530
    %v4532 = vmul.f32 %v4529, %v4531
    %v4533 = vadd.f32 %v4529, %v4532
    %vm4534 = vweird.f32 %v4522
    %vm4535 = vweird.f32 %v4529
    %vm4536 = vmor %vm4534, %vm4535
    %v4537 = vsel %vm4536, %v4529, %v4533
    %v4538 = vand.u32 2147483647, %v4522
    %vm4539 = vcmp.eq.f32.partialorder %v4538, 8.507059e+37
    %v4540 = vand.u32 %v4522, 2147483648
    %v4541 = vor.u32 1.1754944e-38, %v4540
    %v4542 = vsel %vm4539, %v4541, %v4537
    %v4543 = vmul.f32 1.0, %v4542
    %v4544 = vrcp.pop %v4523
    %v4545 = vmul.f32 %v4523, %v4544
    %v4546 = vsub.f32 1.0, %v4545
    %v4547 = vmul.f32 %v4544, %v4546
    %v4548 = vadd.f32 %v4544, %v4547
    %vm4549 = vweird.f32 %v4523
    %vm4550 = vweird.f32 %v4544
    %vm4551 = vmor %vm4549, %vm4550
    %v4552 = vsel %vm4551, %v4544, %v4548
    %v4553 = vand.u32 2147483647, %v4523
    %vm4554 = vcmp.eq.f32.partialorder %v4553, 8.507059e+37
    %v4555 = vand.u32 %v4523, 2147483648
    %v4556 = vor.u32 1.1754944e-38, %v4555
    %v4557 = vsel %vm4554, %v4556, %v4552
    %v4558 = vmul.f32 1.0, %v4557
    %v4559 = vrcp.pop %v4524
    %v4560 = vmul.f32 %v4524, %v4559
    %v4561 = vsub.f32 1.0, %v4560
    %v4562 = vmul.f32 %v4559, %v4561
    %v4563 = vadd.f32 %v4559, %v4562
    %vm4564 = vweird.f32 %v4524
    %vm4565 = vweird.f32 %v4559
    %vm4566 = vmor %vm4564, %vm4565
    %v4567 = vsel %vm4566, %v4559, %v4563
    %v4568 = vand.u32 2147483647, %v4524
    %vm4569 = vcmp.eq.f32.partialorder %v4568, 8.507059e+37
    %v4570 = vand.u32 %v4524, 2147483648
    %v4571 = vor.u32 1.1754944e-38, %v4570
    %v4572 = vsel %vm4569, %v4571, %v4567
    %v4573 = vmul.f32 1.0, %v4572
    %v4574 = vrcp.pop %v4525
    %v4575 = vmul.f32 %v4525, %v4574
    %v4576 = vsub.f32 1.0, %v4575
    %v4577 = vmul.f32 %v4574, %v4576
    %v4578 = vadd.f32 %v4574, %v4577
    %vm4579 = vweird.f32 %v4525
    %vm4580 = vweird.f32 %v4574
    %vm4581 = vmor %vm4579, %vm4580
    %v4582 = vsel %vm4581, %v4574, %v4578
    %v4583 = vand.u32 2147483647, %v4525
    %vm4584 = vcmp.eq.f32.partialorder %v4583, 8.507059e+37
    %v4585 = vand.u32 %v4525, 2147483648
    %v4586 = vor.u32 1.1754944e-38, %v4585
    %v4587 = vsel %vm4584, %v4586, %v4582
    %v4588 = vmul.f32 1.0, %v4587
    %v4589 = vrcp.pop %v4526
    %v4590 = vmul.f32 %v4526, %v4589
    %v4591 = vsub.f32 1.0, %v4590
    %v4592 = vmul.f32 %v4589, %v4591
    %v4593 = vadd.f32 %v4589, %v4592
    %vm4594 = vweird.f32 %v4526
    %vm4595 = vweird.f32 %v4589
    %vm4596 = vmor %vm4594, %vm4595
    %v4597 = vsel %vm4596, %v4589, %v4593
    %v4598 = vand.u32 2147483647, %v4526
    %vm4599 = vcmp.eq.f32.partialorder %v4598, 8.507059e+37
    %v4600 = vand.u32 %v4526, 2147483648
    %v4601 = vor.u32 1.1754944e-38, %v4600
    %v4602 = vsel %vm4599, %v4601, %v4597
    %v4603 = vmul.f32 1.0, %v4602
    %v4604 = vrcp.pop %v4527
    %v4605 = vmul.f32 %v4527, %v4604
    %v4606 = vsub.f32 1.0, %v4605
    %v4607 = vmul.f32 %v4604, %v4606
    %v4608 = vadd.f32 %v4604, %v4607
    %vm4609 = vweird.f32 %v4527
    %vm4610 = vweird.f32 %v4604
    %vm4611 = vmor %vm4609, %vm4610
    %v4612 = vsel %vm4611, %v4604, %v4608
    %v4613 = vand.u32 2147483647, %v4527
    %vm4614 = vcmp.eq.f32.partialorder %v4613, 8.507059e+37
    %v4615 = vand.u32 %v4527, 2147483648
    %v4616 = vor.u32 1.1754944e-38, %v4615
    %v4617 = vsel %vm4614, %v4616, %v4612
    %v4618 = vmul.f32 1.0, %v4617
    %v4619 = vrcp.pop %v4528
    %v4620 = vmul.f32 %v4528, %v4619
    %v4621 = vsub.f32 1.0, %v4620
    %v4622 = vmul.f32 %v4619, %v4621
    %v4623 = vadd.f32 %v4619, %v4622
    %vm4624 = vweird.f32 %v4528
    %vm4625 = vweird.f32 %v4619
    %vm4626 = vmor %vm4624, %vm4625
    %v4627 = vsel %vm4626, %v4619, %v4623
    %v4628 = vand.u32 2147483647, %v4528
    %vm4629 = vcmp.eq.f32.partialorder %v4628, 8.507059e+37
    %v4630 = vand.u32 %v4528, 2147483648
    %v4631 = vor.u32 1.1754944e-38, %v4630
    %v4632 = vsel %vm4629, %v4631, %v4627
    %v4633 = vmul.f32 1.0, %v4632
    %4634 = vst [vmem:[#allocation14] sm:$0xff] %v4543
    %4635 = vst [vmem:[#allocation14 + $0x8] sm:$0xff] %v4558
    %4636 = vst [vmem:[#allocation14 + $0x10] sm:$0xff] %v4573
    %4637 = vst [vmem:[#allocation14 + $0x18] sm:$0xff] %v4588
    %4638 = vst [vmem:[#allocation14 + $0x20] sm:$0xff] %v4603
    %4639 = vst [vmem:[#allocation14 + $0x28] sm:$0xff] %v4618
    %4640 = vst [vmem:[#allocation14 + $0x30] sm:$0xff] %v4633
    // Predicated region
    $region58: #{tpu_custom_call.1} parent=1 // pred_check
      _
    $region59: #{tpu_custom_call.1} parent=1 // pred_check_branch
      %4642 = sbr.rel (0) target = $region61
    $region60: #{tpu_custom_call.1} parent=1 // pred_region
      %4644 = vsyncadd [#allocation4], 0
      %s4646 = sshll.u32 [#allocation14], 4
      %s4647 = int_to_ptr.vmem [resolvable:$true] %s4646
      %s4648 = sshll.u32 %s7, 4
      %s4649 = int_to_ptr.hbm [resolvable:$true] %s4648
      %4651 = dma.vmem_to_hbm [thread:$0]  %s4647, 896, %s4649, [#allocation4]
    $region61: #{tpu_custom_call.1} parent=1 // pred_fallthru
      _
    // Predicated region
    $region62: #{tpu_custom_call.1} parent=1 // pred_check
      _
    $region63: #{tpu_custom_call.1} parent=1 // pred_check_branch
      %4653 = sbr.rel (0) target = $region65
    $region64: #{tpu_custom_call.1} parent=1 // pred_region
      %4655 = dma.done [#allocation4], 896
    $region65: #{tpu_custom_call.1} parent=1 // pred_fallthru
      _
    %4656 = vsyncpa [#allocation3], 1
    %4657 = vsyncpa [#allocation6], 1
    %4658 = vsyncpa [#allocation9], 1
    %4659 = vsyncpa [#allocation12], 1
    %4660 = vsyncpa [#allocation4], 1

// kernel: tpu_custom_call.1
$region0: #{tpu_custom_call.1}
  #allocation0 [shape = 'u32[]', space=smem, size = 0x4, offset = 0x4, fixed_abs, tag = 'smem constant byte address 0x4 - core index']
  #allocation1 [shape = 'u32[72,128]{1,0:T(1,128)}', space=vmem, size = 0x9000, scoped, tag = 'internal scratch']
  %s0 = inlined_call_operand.hbm [shape: bf16[8,784], index: 0, kind: input, shape index: {}]
  %s1 = inlined_call_operand.hbm [shape: bf16[784,512], index: 1, kind: input, shape index: {}]
  %s2 = inlined_call_operand.hbm [shape: f32[1,512], index: 2, kind: input, shape index: {}]
  %s3 = inlined_call_operand.hbm [shape: bf16[512,512], index: 3, kind: input, shape index: {}]
  %s4 = inlined_call_operand.hbm [shape: f32[1,512], index: 4, kind: input, shape index: {}]
  %s5 = inlined_call_operand.hbm [shape: bf16[512,896], index: 5, kind: input, shape index: {}]
  %s6 = inlined_call_operand.hbm [shape: f32[1,896], index: 6, kind: input, shape index: {}]
  %s7 = inlined_call_operand.hbm [shape: f32[8,896], index: 7, kind: output, shape index: {}]
  %s8 = sld [smem:[#allocation0]]
  $region66: #{tpu_custom_call.1} parent=0
    _
  %s10 = ssub.s32 1, %s8
  %s11 = scalar_select 0, %s10, %s8
  $region1: #{tpu_custom_call.1} parent=0
    #allocation2 [shape = 'u8[14336]{0}', space=vmem, size = 0x3800, scoped, tag = 'input window, operand 0, single buffered']
    #allocation3 [shape = 's32[1]{0}', space=sflag, size = 0x4, scoped, tag = 'scoped memory for tpu_custom_call.1']
    #allocation4 [shape = 's32[1]{0}', space=sflag, size = 0x4, scoped, tag = 'scoped memory for tpu_custom_call.1']
    #allocation5 [shape = 'u8[802816]{0}', space=vmem, size = 0xc4000, scoped, tag = 'input window, operand 1, single buffered']
    #allocation6 [shape = 's32[1]{0}', space=sflag, size = 0x4, scoped, tag = 'scoped memory for tpu_custom_call.1']
    #allocation7 [shape = 'u8[2048]{0}', space=vmem, size = 0x800, scoped, tag = 'input window, operand 2, single buffered']
    #allocation8 [shape = 'u8[524288]{0}', space=vmem, size = 0x80000, scoped, tag = 'input window, operand 3, single buffered']
    #allocation9 [shape = 's32[1]{0}', space=sflag, size = 0x4, scoped, tag = 'scoped memory for tpu_custom_call.1']
    #allocation10 [shape = 'u8[2048]{0}', space=vmem, size = 0x800, scoped, tag = 'input window, operand 4, single buffered']
    #allocation11 [shape = 'u8[917504]{0}', space=vmem, size = 0xe0000, scoped, tag = 'input window, operand 5, single buffered']
    #allocation12 [shape = 's32[1]{0}', space=sflag, size = 0x4, scoped, tag = 'scoped memory for tpu_custom_call.1']
    #allocation13 [shape = 'u8[3584]{0}', space=vmem, size = 0x1000, scoped, tag = 'input window, operand 6, single buffered']
    #allocation14 [shape = 'u8[28672]{0}', space=vmem, size = 0x7000, scoped, tag = 'output window, operand 0, single buffered']
    %12 = vsyncpa [#allocation3], 0
    %13 = vsyncpa [#allocation6], 0
    %14 = vsyncpa [#allocation9], 0
    %15 = vsyncpa [#allocation12], 0
    %16 = vsyncpa [#allocation4], 0
    // Predicated region
    $region2: #{tpu_custom_call.1} parent=1 // pred_check
      _
    $region3: #{tpu_custom_call.1} parent=1 // pred_check_branch
      %18 = sbr.rel (0) target = $region5
    $region4: #{tpu_custom_call.1} parent=1 // pred_region
      %20 = vsyncadd [#allocation3], 0
      %s22 = sshll.u32 %s0, 4
      %s23 = int_to_ptr.hbm [resolvable:$true] %s22
      %s24 = sshll.u32 [#allocation2], 4
      %s25 = int_to_ptr.vmem [resolvable:$true] %s24
      %27 = dma.hbm_to_vmem [thread:$0]  %s23, 448, %s25, [#allocation3]
    $region5: #{tpu_custom_call.1} parent=1 // pred_fallthru
      _
    // Predicated region
    $region6: #{tpu_custom_call.1} parent=1 // pred_check
      _
    $region7: #{tpu_custom_call.1} parent=1 // pred_check_branch
      %29 = sbr.rel (0) target = $region9
    $region8: #{tpu_custom_call.1} parent=1 // pred_region
      %31 = vsyncadd [#allocation6], 0
      %s32 = sshll.u32 %s1, 4
      %s33 = int_to_ptr.hbm [resolvable:$true] %s32
      %s34 = sshll.u32 [#allocation5], 4
      %s35 = int_to_ptr.vmem [resolvable:$true] %s34
      %40 = dma.hbm_to_vmem [thread:$0]  %s33, 25088, %s35, [#allocation6], 256, 256, 16
    $region9: #{tpu_custom_call.1} parent=1 // pred_fallthru
      _
    // Predicated region
    $region10: #{tpu_custom_call.1} parent=1 // pred_check
      _
    $region11: #{tpu_custom_call.1} parent=1 // pred_check_branch
      %42 = sbr.rel (0) target = $region13
    $region12: #{tpu_custom_call.1} parent=1 // pred_region
      %44 = vsyncadd [#allocation6], 0
      %s46 = sshll.u32 %s2, 4
      %s47 = int_to_ptr.hbm [resolvable:$true] %s46
      %s48 = sshll.u32 [#allocation7], 4
      %s49 = int_to_ptr.vmem [resolvable:$true] %s48
      %51 = dma.hbm_to_vmem [thread:$0]  %s47, 64, %s49, [#allocation6]
    $region13: #{tpu_custom_call.1} parent=1 // pred_fallthru
      _
    // Predicated region
    $region14: #{tpu_custom_call.1} parent=1 // pred_check
      _
    $region15: #{tpu_custom_call.1} parent=1 // pred_check_branch
      %53 = sbr.rel (0) target = $region17
    $region16: #{tpu_custom_call.1} parent=1 // pred_region
      %55 = vsyncadd [#allocation9], 0
      %s56 = sshll.u32 %s3, 4
      %s57 = int_to_ptr.hbm [resolvable:$true] %s56
      %s58 = sshll.u32 [#allocation8], 4
      %s59 = int_to_ptr.vmem [resolvable:$true] %s58
      %64 = dma.hbm_to_vmem [thread:$0]  %s57, 16384, %s59, [#allocation9], 256, 256, 16
    $region17: #{tpu_custom_call.1} parent=1 // pred_fallthru
      _
    // Predicated region
    $region18: #{tpu_custom_call.1} parent=1 // pred_check
      _
    $region19: #{tpu_custom_call.1} parent=1 // pred_check_branch
      %66 = sbr.rel (0) target = $region21
    $region20: #{tpu_custom_call.1} parent=1 // pred_region
      %68 = vsyncadd [#allocation9], 0
      %s70 = sshll.u32 %s4, 4
      %s71 = int_to_ptr.hbm [resolvable:$true] %s70
      %s72 = sshll.u32 [#allocation10], 4
      %s73 = int_to_ptr.vmem [resolvable:$true] %s72
      %75 = dma.hbm_to_vmem [thread:$0]  %s71, 64, %s73, [#allocation9]
    $region21: #{tpu_custom_call.1} parent=1 // pred_fallthru
      _
    // Predicated region
    $region22: #{tpu_custom_call.1} parent=1 // pred_check
      _
    $region23: #{tpu_custom_call.1} parent=1 // pred_check_branch
      %77 = sbr.rel (0) target = $region25
    $region24: #{tpu_custom_call.1} parent=1 // pred_region
      %79 = vsyncadd [#allocation12], 0
      %s80 = sshll.u32 %s5, 4
      %s81 = int_to_ptr.hbm [resolvable:$true] %s80
      %s82 = sshll.u32 [#allocation11], 4
      %s83 = int_to_ptr.vmem [resolvable:$true] %s82
      %88 = dma.hbm_to_vmem [thread:$0]  %s81, 28672, %s83, [#allocation12], 448, 448, 28
    $region25: #{tpu_custom_call.1} parent=1 // pred_fallthru
      _
    // Predicated region
    $region26: #{tpu_custom_call.1} parent=1 // pred_check
      _
    $region27: #{tpu_custom_call.1} parent=1 // pred_check_branch
      %90 = sbr.rel (0) target = $region29
    $region28: #{tpu_custom_call.1} parent=1 // pred_region
      %92 = vsyncadd [#allocation12], 0
      %s94 = sshll.u32 %s6, 4
      %s95 = int_to_ptr.hbm [resolvable:$true] %s94
      %s96 = sshll.u32 [#allocation13], 4
      %s97 = int_to_ptr.vmem [resolvable:$true] %s96
      %99 = dma.hbm_to_vmem [thread:$0]  %s95, 112, %s97, [#allocation12]
    $region29: #{tpu_custom_call.1} parent=1 // pred_fallthru
      _
    // Predicated region
    $region30: #{tpu_custom_call.1} parent=1 // pred_check
      _
    $region31: #{tpu_custom_call.1} parent=1 // pred_check_branch
      %101 = sbr.rel (0) target = $region33
    $region32: #{tpu_custom_call.1} parent=1 // pred_region
      %103 = dma.done [#allocation3], 448
    $region33: #{tpu_custom_call.1} parent=1 // pred_fallthru
      _
    // Predicated region
    $region34: #{tpu_custom_call.1} parent=1 // pred_check
      _
    $region35: #{tpu_custom_call.1} parent=1 // pred_check_branch
      %105 = sbr.rel (0) target = $region37
    $region36: #{tpu_custom_call.1} parent=1 // pred_region
      %107 = dma.done [#allocation6], 25088
    $region37: #{tpu_custom_call.1} parent=1 // pred_fallthru
      _
    // Predicated region
    $region38: #{tpu_custom_call.1} parent=1 // pred_check
      _
    $region39: #{tpu_custom_call.1} parent=1 // pred_check_branch
      %109 = sbr.rel (0) target = $region41
    $region40: #{tpu_custom_call.1} parent=1 // pred_region
      %111 = dma.done [#allocation6], 64
    $region41: #{tpu_custom_call.1} parent=1 // pred_fallthru
      _
    // Predicated region
    $region42: #{tpu_custom_call.1} parent=1 // pred_check
      _
    $region43: #{tpu_custom_call.1} parent=1 // pred_check_branch
      %113 = sbr.rel (0) target = $region45
    $region44: #{tpu_custom_call.1} parent=1 // pred_region
      %115 = dma.done [#allocation9], 16384
    $region45: #{tpu_custom_call.1} parent=1 // pred_fallthru
      _
    // Predicated region
    $region46: #{tpu_custom_call.1} parent=1 // pred_check
      _
    $region47: #{tpu_custom_call.1} parent=1 // pred_check_branch
      %117 = sbr.rel (0) target = $region49
    $region48: #{tpu_custom_call.1} parent=1 // pred_region
      %119 = dma.done [#allocation9], 64
    $region49: #{tpu_custom_call.1} parent=1 // pred_fallthru
      _
    // Predicated region
    $region50: #{tpu_custom_call.1} parent=1 // pred_check
      _
    $region51: #{tpu_custom_call.1} parent=1 // pred_check_branch
      %121 = sbr.rel (0) target = $region53
    $region52: #{tpu_custom_call.1} parent=1 // pred_region
      %123 = dma.done [#allocation12], 28672
    $region53: #{tpu_custom_call.1} parent=1 // pred_fallthru
      _
    // Predicated region
    $region54: #{tpu_custom_call.1} parent=1 // pred_check
      _
    $region55: #{tpu_custom_call.1} parent=1 // pred_check_branch
      %125 = sbr.rel (0) target = $region57
    $region56: #{tpu_custom_call.1} parent=1 // pred_region
      %127 = dma.done [#allocation12], 112
    $region57: #{tpu_custom_call.1} parent=1 // pred_fallthru
      _
    %v129 = vld [vmem:[#allocation2] sm:$0xff]
    %v130 = vld [vmem:[#allocation2 + $0x8] sm:$0xff]
    %v131 = vld [vmem:[#allocation2 + $0x10] sm:$0xff]
    %v132 = vld [vmem:[#allocation2 + $0x18] sm:$0xf]
    %v133 = vld [vmem:[#allocation5] sm:$0xff]
    %v134 = vld [vmem:[#allocation5 + $0x8] sm:$0xff]
    %v135 = vld [vmem:[#allocation5 + $0x10] sm:$0xff]
    %v136 = vld [vmem:[#allocation5 + $0x18] sm:$0xff]
    %v137 = vld [vmem:[#allocation5 + $0x20] sm:$0xff]
    %v138 = vld [vmem:[#allocation5 + $0x28] sm:$0xff]
    %v139 = vld [vmem:[#allocation5 + $0x30] sm:$0xff]
    %v140 = vld [vmem:[#allocation5 + $0x38] sm:$0xff]
    %v141 = vld [vmem:[#allocation5 + $0x40] sm:$0xff]
    %v142 = vld [vmem:[#allocation5 + $0x48] sm:$0xff]
    %v143 = vld [vmem:[#allocation5 + $0x50] sm:$0xff]
    %v144 = vld [vmem:[#allocation5 + $0x58] sm:$0xff]
    %v145 = vld [vmem:[#allocation5 + $0x60] sm:$0xff]
    %v146 = vld [vmem:[#allocation5 + $0x68] sm:$0xff]
    %v147 = vld [vmem:[#allocation5 + $0x70] sm:$0xff]
    %v148 = vld [vmem:[#allocation5 + $0x78] sm:$0xff]
    %v149 = vld [vmem:[#allocation5 + $0x80] sm:$0xff]
    %v150 = vld [vmem:[#allocation5 + $0x88] sm:$0xff]
    %v151 = vld [vmem:[#allocation5 + $0x90] sm:$0xff]
    %v152 = vld [vmem:[#allocation5 + $0x98] sm:$0xff]
    %v153 = vld [vmem:[#allocation5 + $0xa0] sm:$0xff]
    %v154 = vld [vmem:[#allocation5 + $0xa8] sm:$0xff]
    %v155 = vld [vmem:[#allocation5 + $0xb0] sm:$0xff]
    %v156 = vld [vmem:[#allocation5 + $0xb8] sm:$0xff]
    %v157 = vld [vmem:[#allocation5 + $0xc0] sm:$0xff]
    %v158 = vld [vmem:[#allocation5 + $0xc8] sm:$0xff]
    %v159 = vld [vmem:[#allocation5 + $0xd0] sm:$0xff]
    %v160 = vld [vmem:[#allocation5 + $0xd8] sm:$0xff]
    %v161 = vld [vmem:[#allocation5 + $0xe0] sm:$0xff]
    %v162 = vld [vmem:[#allocation5 + $0xe8] sm:$0xff]
    %v163 = vld [vmem:[#allocation5 + $0xf0] sm:$0xff]
    %v164 = vld [vmem:[#allocation5 + $0xf8] sm:$0xff]
    %v165 = vld [vmem:[#allocation5 + $0x100] sm:$0xff]
    %v166 = vld [vmem:[#allocation5 + $0x108] sm:$0xff]
    %v167 = vld [vmem:[#allocation5 + $0x110] sm:$0xff]
    %v168 = vld [vmem:[#allocation5 + $0x118] sm:$0xff]
    %v169 = vld [vmem:[#allocation5 + $0x120] sm:$0xff]
    %v170 = vld [vmem:[#allocation5 + $0x128] sm:$0xff]
    %v171 = vld [vmem:[#allocation5 + $0x130] sm:$0xff]
    %v172 = vld [vmem:[#allocation5 + $0x138] sm:$0xff]
    %v173 = vld [vmem:[#allocation5 + $0x140] sm:$0xff]
    %v174 = vld [vmem:[#allocation5 + $0x148] sm:$0xff]
    %v175 = vld [vmem:[#allocation5 + $0x150] sm:$0xff]
    %v176 = vld [vmem:[#allocation5 + $0x158] sm:$0xff]
    %v177 = vld [vmem:[#allocation5 + $0x160] sm:$0xff]
    %v178 = vld [vmem:[#allocation5 + $0x168] sm:$0xff]
    %v179 = vld [vmem:[#allocation5 + $0x170] sm:$0xff]
    %v180 = vld [vmem:[#allocation5 + $0x178] sm:$0xff]
    %v181 = vld [vmem:[#allocation5 + $0x180] sm:$0xff]
    %v182 = vld [vmem:[#allocation5 + $0x188] sm:$0xff]
    %v183 = vld [vmem:[#allocation5 + $0x190] sm:$0xff]
    %v184 = vld [vmem:[#allocation5 + $0x198] sm:$0xff]
    %v185 = vld [vmem:[#allocation5 + $0x1a0] sm:$0xff]
    %v186 = vld [vmem:[#allocation5 + $0x1a8] sm:$0xff]
    %v187 = vld [vmem:[#allocation5 + $0x1b0] sm:$0xff]
    %v188 = vld [vmem:[#allocation5 + $0x1b8] sm:$0xff]
    %v189 = vld [vmem:[#allocation5 + $0x1c0] sm:$0xff]
    %v190 = vld [vmem:[#allocation5 + $0x1c8] sm:$0xff]
    %v191 = vld [vmem:[#allocation5 + $0x1d0] sm:$0xff]
    %v192 = vld [vmem:[#allocation5 + $0x1d8] sm:$0xff]
    %v193 = vld [vmem:[#allocation5 + $0x1e0] sm:$0xff]
    %v194 = vld [vmem:[#allocation5 + $0x1e8] sm:$0xff]
    %v195 = vld [vmem:[#allocation5 + $0x1f0] sm:$0xff]
    %v196 = vld [vmem:[#allocation5 + $0x1f8] sm:$0xff]
    %v197 = vld [vmem:[#allocation5 + $0x200] sm:$0xff]
    %v198 = vld [vmem:[#allocation5 + $0x208] sm:$0xff]
    %v199 = vld [vmem:[#allocation5 + $0x210] sm:$0xff]
    %v200 = vld [vmem:[#allocation5 + $0x218] sm:$0xff]
    %v201 = vld [vmem:[#allocation5 + $0x220] sm:$0xff]
    %v202 = vld [vmem:[#allocation5 + $0x228] sm:$0xff]
    %v203 = vld [vmem:[#allocation5 + $0x230] sm:$0xff]
    %v204 = vld [vmem:[#allocation5 + $0x238] sm:$0xff]
    %v205 = vld [vmem:[#allocation5 + $0x240] sm:$0xff]
    %v206 = vld [vmem:[#allocation5 + $0x248] sm:$0xff]
    %v207 = vld [vmem:[#allocation5 + $0x250] sm:$0xff]
    %v208 = vld [vmem:[#allocation5 + $0x258] sm:$0xff]
    %v209 = vld [vmem:[#allocation5 + $0x260] sm:$0xff]
    %v210 = vld [vmem:[#allocation5 + $0x268] sm:$0xff]
    %v211 = vld [vmem:[#allocation5 + $0x270] sm:$0xff]
    %v212 = vld [vmem:[#allocation5 + $0x278] sm:$0xff]
    %v213 = vld [vmem:[#allocation5 + $0x280] sm:$0xff]
    %v214 = vld [vmem:[#allocation5 + $0x288] sm:$0xff]
    %v215 = vld [vmem:[#allocation5 + $0x290] sm:$0xff]
    %v216 = vld [vmem:[#allocation5 + $0x298] sm:$0xff]
    %v217 = vld [vmem:[#allocation5 + $0x2a0] sm:$0xff]
    %v218 = vld [vmem:[#allocation5 + $0x2a8] sm:$0xff]
    %v219 = vld [vmem:[#allocation5 + $0x2b0] sm:$0xff]
    %v220 = vld [vmem:[#allocation5 + $0x2b8] sm:$0xff]
    %v221 = vld [vmem:[#allocation5 + $0x2c0] sm:$0xff]
    %v222 = vld [vmem:[#allocation5 + $0x2c8] sm:$0xff]
    %v223 = vld [vmem:[#allocation5 + $0x2d0] sm:$0xff]
    %v224 = vld [vmem:[#allocation5 + $0x2d8] sm:$0xff]
    %v225 = vld [vmem:[#allocation5 + $0x2e0] sm:$0xff]
    %v226 = vld [vmem:[#allocation5 + $0x2e8] sm:$0xff]
    %v227 = vld [vmem:[#allocation5 + $0x2f0] sm:$0xff]
    %v228 = vld [vmem:[#allocation5 + $0x2f8] sm:$0xff]
    %v229 = vld [vmem:[#allocation5 + $0x300] sm:$0xff]
    %v230 = vld [vmem:[#allocation5 + $0x308] sm:$0xff]
    %v231 = vld [vmem:[#allocation5 + $0x310] sm:$0xff]
    %v232 = vld [vmem:[#allocation5 + $0x318] sm:$0xff]
    %v233 = vld [vmem:[#allocation5 + $0x320] sm:$0xff]
    %v234 = vld [vmem:[#allocation5 + $0x328] sm:$0xff]
    %v235 = vld [vmem:[#allocation5 + $0x330] sm:$0xff]
    %v236 = vld [vmem:[#allocation5 + $0x338] sm:$0xff]
    %v237 = vld [vmem:[#allocation5 + $0x340] sm:$0xff]
    %v238 = vld [vmem:[#allocation5 + $0x348] sm:$0xff]
    %v239 = vld [vmem:[#allocation5 + $0x350] sm:$0xff]
    %v240 = vld [vmem:[#allocation5 + $0x358] sm:$0xff]
    %v241 = vld [vmem:[#allocation5 + $0x360] sm:$0xff]
    %v242 = vld [vmem:[#allocation5 + $0x368] sm:$0xff]
    %v243 = vld [vmem:[#allocation5 + $0x370] sm:$0xff]
    %v244 = vld [vmem:[#allocation5 + $0x378] sm:$0xff]
    %v245 = vld [vmem:[#allocation5 + $0x380] sm:$0xff]
    %v246 = vld [vmem:[#allocation5 + $0x388] sm:$0xff]
    %v247 = vld [vmem:[#allocation5 + $0x390] sm:$0xff]
    %v248 = vld [vmem:[#allocation5 + $0x398] sm:$0xff]
    %v249 = vld [vmem:[#allocation5 + $0x3a0] sm:$0xff]
    %v250 = vld [vmem:[#allocation5 + $0x3a8] sm:$0xff]
    %v251 = vld [vmem:[#allocation5 + $0x3b0] sm:$0xff]
    %v252 = vld [vmem:[#allocation5 + $0x3b8] sm:$0xff]
    %v253 = vld [vmem:[#allocation5 + $0x3c0] sm:$0xff]
    %v254 = vld [vmem:[#allocation5 + $0x3c8] sm:$0xff]
    %v255 = vld [vmem:[#allocation5 + $0x3d0] sm:$0xff]
    %v256 = vld [vmem:[#allocation5 + $0x3d8] sm:$0xff]
    %v257 = vld [vmem:[#allocation5 + $0x3e0] sm:$0xff]
    %v258 = vld [vmem:[#allocation5 + $0x3e8] sm:$0xff]
    %v259 = vld [vmem:[#allocation5 + $0x3f0] sm:$0xff]
    %v260 = vld [vmem:[#allocation5 + $0x3f8] sm:$0xff]
    %v261 = vld [vmem:[#allocation5 + $0x400] sm:$0xff]
    %v262 = vld [vmem:[#allocation5 + $0x408] sm:$0xff]
    %v263 = vld [vmem:[#allocation5 + $0x410] sm:$0xff]
    %v264 = vld [vmem:[#allocation5 + $0x418] sm:$0xff]
    %v265 = vld [vmem:[#allocation5 + $0x420] sm:$0xff]
    %v266 = vld [vmem:[#allocation5 + $0x428] sm:$0xff]
    %v267 = vld [vmem:[#allocation5 + $0x430] sm:$0xff]
    %v268 = vld [vmem:[#allocation5 + $0x438] sm:$0xff]
    %v269 = vld [vmem:[#allocation5 + $0x440] sm:$0xff]
    %v270 = vld [vmem:[#allocation5 + $0x448] sm:$0xff]
    %v271 = vld [vmem:[#allocation5 + $0x450] sm:$0xff]
    %v272 = vld [vmem:[#allocation5 + $0x458] sm:$0xff]
    %v273 = vld [vmem:[#allocation5 + $0x460] sm:$0xff]
    %v274 = vld [vmem:[#allocation5 + $0x468] sm:$0xff]
    %v275 = vld [vmem:[#allocation5 + $0x470] sm:$0xff]
    %v276 = vld [vmem:[#allocation5 + $0x478] sm:$0xff]
    %v277 = vld [vmem:[#allocation5 + $0x480] sm:$0xff]
    %v278 = vld [vmem:[#allocation5 + $0x488] sm:$0xff]
    %v279 = vld [vmem:[#allocation5 + $0x490] sm:$0xff]
    %v280 = vld [vmem:[#allocation5 + $0x498] sm:$0xff]
    %v281 = vld [vmem:[#allocation5 + $0x4a0] sm:$0xff]
    %v282 = vld [vmem:[#allocation5 + $0x4a8] sm:$0xff]
    %v283 = vld [vmem:[#allocation5 + $0x4b0] sm:$0xff]
    %v284 = vld [vmem:[#allocation5 + $0x4b8] sm:$0xff]
    %v285 = vld [vmem:[#allocation5 + $0x4c0] sm:$0xff]
    %v286 = vld [vmem:[#allocation5 + $0x4c8] sm:$0xff]
    %v287 = vld [vmem:[#allocation5 + $0x4d0] sm:$0xff]
    %v288 = vld [vmem:[#allocation5 + $0x4d8] sm:$0xff]
    %v289 = vld [vmem:[#allocation5 + $0x4e0] sm:$0xff]
    %v290 = vld [vmem:[#allocation5 + $0x4e8] sm:$0xff]
    %v291 = vld [vmem:[#allocation5 + $0x4f0] sm:$0xff]
    %v292 = vld [vmem:[#allocation5 + $0x4f8] sm:$0xff]
    %v293 = vld [vmem:[#allocation5 + $0x500] sm:$0xff]
    %v294 = vld [vmem:[#allocation5 + $0x508] sm:$0xff]
    %v295 = vld [vmem:[#allocation5 + $0x510] sm:$0xff]
    %v296 = vld [vmem:[#allocation5 + $0x518] sm:$0xff]
    %v297 = vld [vmem:[#allocation5 + $0x520] sm:$0xff]
    %v298 = vld [vmem:[#allocation5 + $0x528] sm:$0xff]
    %v299 = vld [vmem:[#allocation5 + $0x530] sm:$0xff]
    %v300 = vld [vmem:[#allocation5 + $0x538] sm:$0xff]
    %v301 = vld [vmem:[#allocation5 + $0x540] sm:$0xff]
    %v302 = vld [vmem:[#allocation5 + $0x548] sm:$0xff]
    %v303 = vld [vmem:[#allocation5 + $0x550] sm:$0xff]
    %v304 = vld [vmem:[#allocation5 + $0x558] sm:$0xff]
    %v305 = vld [vmem:[#allocation5 + $0x560] sm:$0xff]
    %v306 = vld [vmem:[#allocation5 + $0x568] sm:$0xff]
    %v307 = vld [vmem:[#allocation5 + $0x570] sm:$0xff]
    %v308 = vld [vmem:[#allocation5 + $0x578] sm:$0xff]
    %v309 = vld [vmem:[#allocation5 + $0x580] sm:$0xff]
    %v310 = vld [vmem:[#allocation5 + $0x588] sm:$0xff]
    %v311 = vld [vmem:[#allocation5 + $0x590] sm:$0xff]
    %v312 = vld [vmem:[#allocation5 + $0x598] sm:$0xff]
    %v313 = vld [vmem:[#allocation5 + $0x5a0] sm:$0xff]
    %v314 = vld [vmem:[#allocation5 + $0x5a8] sm:$0xff]
    %v315 = vld [vmem:[#allocation5 + $0x5b0] sm:$0xff]
    %v316 = vld [vmem:[#allocation5 + $0x5b8] sm:$0xff]
    %v317 = vld [vmem:[#allocation5 + $0x5c0] sm:$0xff]
    %v318 = vld [vmem:[#allocation5 + $0x5c8] sm:$0xff]
    %v319 = vld [vmem:[#allocation5 + $0x5d0] sm:$0xff]
    %v320 = vld [vmem:[#allocation5 + $0x5d8] sm:$0xff]
    %v321 = vld [vmem:[#allocation5 + $0x5e0] sm:$0xff]
    %v322 = vld [vmem:[#allocation5 + $0x5e8] sm:$0xff]
    %v323 = vld [vmem:[#allocation5 + $0x5f0] sm:$0xff]
    %v324 = vld [vmem:[#allocation5 + $0x5f8] sm:$0xff]
    %v325 = vld [vmem:[#allocation5 + $0x600] sm:$0xff]
    %v326 = vld [vmem:[#allocation5 + $0x608] sm:$0xff]
    %v327 = vld [vmem:[#allocation5 + $0x610] sm:$0xff]
    %v328 = vld [vmem:[#allocation5 + $0x618] sm:$0xff]
    %v329 = vld [vmem:[#allocation7] sm:$0xf]
    %v331 = vperm.slane %v329, 0
    %v332 = vperm.slane %v329, 1
    %v333 = vperm.slane %v329, 2
    %v334 = vperm.slane %v329, 3
    %v343 = vunpack.c.l.b16 %v129
    %v344 = vunpack.c.h.b16 %v129
    %v345 = vunpack.c.l.b16 %v130
    %v346 = vunpack.c.h.b16 %v130
    %v347 = vunpack.c.l.b16 %v131
    %v348 = vunpack.c.h.b16 %v131
    %v349 = vunpack.c.l.b16 %v132
    %v350 = vpack.c.b16 %v343, %v343
    %v351 = vpack.c.b16 %v344, %v344
    %v352 = vpack.c.b16 %v345, %v345
    %v353 = vpack.c.b16 %v346, %v346
    %v354 = vpack.c.b16 %v347, %v347
    %v355 = vpack.c.b16 %v348, %v348
    %v356 = vpack.c.b16 %v349, %v349
    %v559 = vunpack.c.l.b16 %v133
    %v560 = vunpack.c.h.b16 %v133
    %v561 = vunpack.c.l.b16 %v134
    %v562 = vunpack.c.h.b16 %v134
    %v563 = vunpack.c.l.b16 %v135
    %v564 = vunpack.c.h.b16 %v135
    %v565 = vunpack.c.l.b16 %v136
    %v566 = vunpack.c.h.b16 %v136
    %v567 = vunpack.c.l.b16 %v137
    %v568 = vunpack.c.h.b16 %v137
    %v569 = vunpack.c.l.b16 %v138
    %v570 = vunpack.c.h.b16 %v138
    %v571 = vunpack.c.l.b16 %v139
    %v572 = vunpack.c.h.b16 %v139
    %v573 = vunpack.c.l.b16 %v140
    %v574 = vunpack.c.h.b16 %v140
    %v575 = vunpack.c.l.b16 %v141
    %v576 = vunpack.c.h.b16 %v141
    %v577 = vunpack.c.l.b16 %v142
    %v578 = vunpack.c.h.b16 %v142
    %v579 = vunpack.c.l.b16 %v143
    %v580 = vunpack.c.h.b16 %v143
    %v581 = vunpack.c.l.b16 %v144
    %v582 = vunpack.c.h.b16 %v144
    %v583 = vunpack.c.l.b16 %v145
    %v584 = vunpack.c.h.b16 %v145
    %v585 = vunpack.c.l.b16 %v146
    %v586 = vunpack.c.h.b16 %v146
    %v587 = vunpack.c.l.b16 %v147
    %v588 = vunpack.c.h.b16 %v147
    %v589 = vunpack.c.l.b16 %v148
    %v590 = vunpack.c.h.b16 %v148
    %v591 = vunpack.c.l.b16 %v149
    %v592 = vunpack.c.h.b16 %v149
    %v593 = vunpack.c.l.b16 %v150
    %v594 = vunpack.c.h.b16 %v150
    %v595 = vunpack.c.l.b16 %v151
    %v596 = vunpack.c.h.b16 %v151
    %v597 = vunpack.c.l.b16 %v152
    %v598 = vunpack.c.h.b16 %v152
    %v599 = vunpack.c.l.b16 %v153
    %v600 = vunpack.c.h.b16 %v153
    %v601 = vunpack.c.l.b16 %v154
    %v602 = vunpack.c.h.b16 %v154
    %v603 = vunpack.c.l.b16 %v155
    %v604 = vunpack.c.h.b16 %v155
    %v605 = vunpack.c.l.b16 %v156
    %v606 = vunpack.c.h.b16 %v156
    %v607 = vunpack.c.l.b16 %v157
    %v608 = vunpack.c.h.b16 %v157
    %v609 = vunpack.c.l.b16 %v158
    %v610 = vunpack.c.h.b16 %v158
    %v611 = vunpack.c.l.b16 %v159
    %v612 = vunpack.c.h.b16 %v159
    %v613 = vunpack.c.l.b16 %v160
    %v614 = vunpack.c.h.b16 %v160
    %v615 = vunpack.c.l.b16 %v161
    %v616 = vunpack.c.h.b16 %v161
    %v617 = vunpack.c.l.b16 %v162
    %v618 = vunpack.c.h.b16 %v162
    %v619 = vunpack.c.l.b16 %v163
    %v620 = vunpack.c.h.b16 %v163
    %v621 = vunpack.c.l.b16 %v164
    %v622 = vunpack.c.h.b16 %v164
    %v623 = vunpack.c.l.b16 %v165
    %v624 = vunpack.c.h.b16 %v165
    %v625 = vunpack.c.l.b16 %v166
    %v626 = vunpack.c.h.b16 %v166
    %v627 = vunpack.c.l.b16 %v167
    %v628 = vunpack.c.h.b16 %v167
    %v629 = vunpack.c.l.b16 %v168
    %v630 = vunpack.c.h.b16 %v168
    %v631 = vunpack.c.l.b16 %v169
    %v632 = vunpack.c.h.b16 %v169
    %v633 = vunpack.c.l.b16 %v170
    %v634 = vunpack.c.h.b16 %v170
    %v635 = vunpack.c.l.b16 %v171
    %v636 = vunpack.c.h.b16 %v171
    %v637 = vunpack.c.l.b16 %v172
    %v638 = vunpack.c.h.b16 %v172
    %v639 = vunpack.c.l.b16 %v173
    %v640 = vunpack.c.h.b16 %v173
    %v641 = vunpack.c.l.b16 %v174
    %v642 = vunpack.c.h.b16 %v174
    %v643 = vunpack.c.l.b16 %v175
    %v644 = vunpack.c.h.b16 %v175
    %v645 = vunpack.c.l.b16 %v176
    %v646 = vunpack.c.h.b16 %v176
    %v647 = vunpack.c.l.b16 %v177
    %v648 = vunpack.c.h.b16 %v177
    %v649 = vunpack.c.l.b16 %v178
    %v650 = vunpack.c.h.b16 %v178
    %v651 = vunpack.c.l.b16 %v179
    %v652 = vunpack.c.h.b16 %v179
    %v653 = vunpack.c.l.b16 %v180
    %v654 = vunpack.c.h.b16 %v180
    %v655 = vunpack.c.l.b16 %v181
    %v656 = vunpack.c.h.b16 %v181
    %v657 = vunpack.c.l.b16 %v182
    %v658 = vunpack.c.h.b16 %v182
    %v659 = vunpack.c.l.b16 %v183
    %v660 = vunpack.c.h.b16 %v183
    %v661 = vunpack.c.l.b16 %v184
    %v662 = vunpack.c.h.b16 %v184
    %v663 = vunpack.c.l.b16 %v185
    %v664 = vunpack.c.h.b16 %v185
    %v665 = vunpack.c.l.b16 %v186
    %v666 = vunpack.c.h.b16 %v186
    %v667 = vunpack.c.l.b16 %v187
    %v668 = vunpack.c.h.b16 %v187
    %v669 = vunpack.c.l.b16 %v188
    %v670 = vunpack.c.h.b16 %v188
    %v671 = vunpack.c.l.b16 %v189
    %v672 = vunpack.c.h.b16 %v189
    %v673 = vunpack.c.l.b16 %v190
    %v674 = vunpack.c.h.b16 %v190
    %v675 = vunpack.c.l.b16 %v191
    %v676 = vunpack.c.h.b16 %v191
    %v677 = vunpack.c.l.b16 %v192
    %v678 = vunpack.c.h.b16 %v192
    %v679 = vunpack.c.l.b16 %v193
    %v680 = vunpack.c.h.b16 %v193
    %v681 = vunpack.c.l.b16 %v194
    %v682 = vunpack.c.h.b16 %v194
    %v683 = vunpack.c.l.b16 %v195
    %v684 = vunpack.c.h.b16 %v195
    %v685 = vunpack.c.l.b16 %v196
    %v686 = vunpack.c.h.b16 %v196
    %v687 = vunpack.c.l.b16 %v197
    %v688 = vunpack.c.h.b16 %v197
    %v689 = vunpack.c.l.b16 %v198
    %v690 = vunpack.c.h.b16 %v198
    %v691 = vunpack.c.l.b16 %v199
    %v692 = vunpack.c.h.b16 %v199
    %v693 = vunpack.c.l.b16 %v200
    %v694 = vunpack.c.h.b16 %v200
    %v695 = vunpack.c.l.b16 %v201
    %v696 = vunpack.c.h.b16 %v201
    %v697 = vunpack.c.l.b16 %v202
    %v698 = vunpack.c.h.b16 %v202
    %v699 = vunpack.c.l.b16 %v203
    %v700 = vunpack.c.h.b16 %v203
    %v701 = vunpack.c.l.b16 %v204
    %v702 = vunpack.c.h.b16 %v204
    %v703 = vunpack.c.l.b16 %v205
    %v704 = vunpack.c.h.b16 %v205
    %v705 = vunpack.c.l.b16 %v206
    %v706 = vunpack.c.h.b16 %v206
    %v707 = vunpack.c.l.b16 %v207
    %v708 = vunpack.c.h.b16 %v207
    %v709 = vunpack.c.l.b16 %v208
    %v710 = vunpack.c.h.b16 %v208
    %v711 = vunpack.c.l.b16 %v209
    %v712 = vunpack.c.h.b16 %v209
    %v713 = vunpack.c.l.b16 %v210
    %v714 = vunpack.c.h.b16 %v210
    %v715 = vunpack.c.l.b16 %v211
    %v716 = vunpack.c.h.b16 %v211
    %v717 = vunpack.c.l.b16 %v212
    %v718 = vunpack.c.h.b16 %v212
    %v719 = vunpack.c.l.b16 %v213
    %v720 = vunpack.c.h.b16 %v213
    %v721 = vunpack.c.l.b16 %v214
    %v722 = vunpack.c.h.b16 %v214
    %v723 = vunpack.c.l.b16 %v215
    %v724 = vunpack.c.h.b16 %v215
    %v725 = vunpack.c.l.b16 %v216
    %v726 = vunpack.c.h.b16 %v216
    %v727 = vunpack.c.l.b16 %v217
    %v728 = vunpack.c.h.b16 %v217
    %v729 = vunpack.c.l.b16 %v218
    %v730 = vunpack.c.h.b16 %v218
    %v731 = vunpack.c.l.b16 %v219
    %v732 = vunpack.c.h.b16 %v219
    %v733 = vunpack.c.l.b16 %v220
    %v734 = vunpack.c.h.b16 %v220
    %v735 = vunpack.c.l.b16 %v221
    %v736 = vunpack.c.h.b16 %v221
    %v737 = vunpack.c.l.b16 %v222
    %v738 = vunpack.c.h.b16 %v222
    %v739 = vunpack.c.l.b16 %v223
    %v740 = vunpack.c.h.b16 %v223
    %v741 = vunpack.c.l.b16 %v224
    %v742 = vunpack.c.h.b16 %v224
    %v743 = vunpack.c.l.b16 %v225
    %v744 = vunpack.c.h.b16 %v225
    %v745 = vunpack.c.l.b16 %v226
    %v746 = vunpack.c.h.b16 %v226
    %v747 = vunpack.c.l.b16 %v227
    %v748 = vunpack.c.h.b16 %v227
    %v749 = vunpack.c.l.b16 %v228
    %v750 = vunpack.c.h.b16 %v228
    %v751 = vunpack.c.l.b16 %v229
    %v752 = vunpack.c.h.b16 %v229
    %v753 = vunpack.c.l.b16 %v230
    %v754 = vunpack.c.h.b16 %v230
    %v755 = vunpack.c.l.b16 %v231
    %v756 = vunpack.c.h.b16 %v231
    %v757 = vunpack.c.l.b16 %v232
    %v758 = vunpack.c.h.b16 %v232
    %v759 = vunpack.c.l.b16 %v233
    %v760 = vunpack.c.h.b16 %v233
    %v761 = vunpack.c.l.b16 %v234
    %v762 = vunpack.c.h.b16 %v234
    %v763 = vunpack.c.l.b16 %v235
    %v764 = vunpack.c.h.b16 %v235
    %v765 = vunpack.c.l.b16 %v236
    %v766 = vunpack.c.h.b16 %v236
    %v767 = vunpack.c.l.b16 %v237
    %v768 = vunpack.c.h.b16 %v237
    %v769 = vunpack.c.l.b16 %v238
    %v770 = vunpack.c.h.b16 %v238
    %v771 = vunpack.c.l.b16 %v239
    %v772 = vunpack.c.h.b16 %v239
    %v773 = vunpack.c.l.b16 %v240
    %v774 = vunpack.c.h.b16 %v240
    %v775 = vunpack.c.l.b16 %v241
    %v776 = vunpack.c.h.b16 %v241
    %v777 = vunpack.c.l.b16 %v242
    %v778 = vunpack.c.h.b16 %v242
    %v779 = vunpack.c.l.b16 %v243
    %v780 = vunpack.c.h.b16 %v243
    %v781 = vunpack.c.l.b16 %v244
    %v782 = vunpack.c.h.b16 %v244
    %v783 = vunpack.c.l.b16 %v245
    %v784 = vunpack.c.h.b16 %v245
    %v785 = vunpack.c.l.b16 %v246
    %v786 = vunpack.c.h.b16 %v246
    %v787 = vunpack.c.l.b16 %v247
    %v788 = vunpack.c.h.b16 %v247
    %v789 = vunpack.c.l.b16 %v248
    %v790 = vunpack.c.h.b16 %v248
    %v791 = vunpack.c.l.b16 %v249
    %v792 = vunpack.c.h.b16 %v249
    %v793 = vunpack.c.l.b16 %v250
    %v794 = vunpack.c.h.b16 %v250
    %v795 = vunpack.c.l.b16 %v251
    %v796 = vunpack.c.h.b16 %v251
    %v797 = vunpack.c.l.b16 %v252
    %v798 = vunpack.c.h.b16 %v252
    %v799 = vunpack.c.l.b16 %v253
    %v800 = vunpack.c.h.b16 %v253
    %v801 = vunpack.c.l.b16 %v254
    %v802 = vunpack.c.h.b16 %v254
    %v803 = vunpack.c.l.b16 %v255
    %v804 = vunpack.c.h.b16 %v255
    %v805 = vunpack.c.l.b16 %v256
    %v806 = vunpack.c.h.b16 %v256
    %v807 = vunpack.c.l.b16 %v257
    %v808 = vunpack.c.h.b16 %v257
    %v809 = vunpack.c.l.b16 %v258
    %v810 = vunpack.c.h.b16 %v258
    %v811 = vunpack.c.l.b16 %v259
    %v812 = vunpack.c.h.b16 %v259
    %v813 = vunpack.c.l.b16 %v260
    %v814 = vunpack.c.h.b16 %v260
    %v815 = vunpack.c.l.b16 %v261
    %v816 = vunpack.c.h.b16 %v261
    %v817 = vunpack.c.l.b16 %v262
    %v818 = vunpack.c.h.b16 %v262
    %v819 = vunpack.c.l.b16 %v263
    %v820 = vunpack.c.h.b16 %v263
    %v821 = vunpack.c.l.b16 %v264
    %v822 = vunpack.c.h.b16 %v264
    %v823 = vunpack.c.l.b16 %v265
    %v824 = vunpack.c.h.b16 %v265
    %v825 = vunpack.c.l.b16 %v266
    %v826 = vunpack.c.h.b16 %v266
    %v827 = vunpack.c.l.b16 %v267
    %v828 = vunpack.c.h.b16 %v267
    %v829 = vunpack.c.l.b16 %v268
    %v830 = vunpack.c.h.b16 %v268
    %v831 = vunpack.c.l.b16 %v269
    %v832 = vunpack.c.h.b16 %v269
    %v833 = vunpack.c.l.b16 %v270
    %v834 = vunpack.c.h.b16 %v270
    %v835 = vunpack.c.l.b16 %v271
    %v836 = vunpack.c.h.b16 %v271
    %v837 = vunpack.c.l.b16 %v272
    %v838 = vunpack.c.h.b16 %v272
    %v839 = vunpack.c.l.b16 %v273
    %v840 = vunpack.c.h.b16 %v273
    %v841 = vunpack.c.l.b16 %v274
    %v842 = vunpack.c.h.b16 %v274
    %v843 = vunpack.c.l.b16 %v275
    %v844 = vunpack.c.h.b16 %v275
    %v845 = vunpack.c.l.b16 %v276
    %v846 = vunpack.c.h.b16 %v276
    %v847 = vunpack.c.l.b16 %v277
    %v848 = vunpack.c.h.b16 %v277
    %v849 = vunpack.c.l.b16 %v278
    %v850 = vunpack.c.h.b16 %v278
    %v851 = vunpack.c.l.b16 %v279
    %v852 = vunpack.c.h.b16 %v279
    %v853 = vunpack.c.l.b16 %v280
    %v854 = vunpack.c.h.b16 %v280
    %v855 = vunpack.c.l.b16 %v281
    %v856 = vunpack.c.h.b16 %v281
    %v857 = vunpack.c.l.b16 %v282
    %v858 = vunpack.c.h.b16 %v282
    %v859 = vunpack.c.l.b16 %v283
    %v860 = vunpack.c.h.b16 %v283
    %v861 = vunpack.c.l.b16 %v284
    %v862 = vunpack.c.h.b16 %v284
    %v863 = vunpack.c.l.b16 %v285
    %v864 = vunpack.c.h.b16 %v285
    %v865 = vunpack.c.l.b16 %v286
    %v866 = vunpack.c.h.b16 %v286
    %v867 = vunpack.c.l.b16 %v287
    %v868 = vunpack.c.h.b16 %v287
    %v869 = vunpack.c.l.b16 %v288
    %v870 = vunpack.c.h.b16 %v288
    %v871 = vunpack.c.l.b16 %v289
    %v872 = vunpack.c.h.b16 %v289
    %v873 = vunpack.c.l.b16 %v290
    %v874 = vunpack.c.h.b16 %v290
    %v875 = vunpack.c.l.b16 %v291
    %v876 = vunpack.c.h.b16 %v291
    %v877 = vunpack.c.l.b16 %v292
    %v878 = vunpack.c.h.b16 %v292
    %v879 = vunpack.c.l.b16 %v293
    %v880 = vunpack.c.h.b16 %v293
    %v881 = vunpack.c.l.b16 %v294
    %v882 = vunpack.c.h.b16 %v294
    %v883 = vunpack.c.l.b16 %v295
    %v884 = vunpack.c.h.b16 %v295
    %v885 = vunpack.c.l.b16 %v296
    %v886 = vunpack.c.h.b16 %v296
    %v887 = vunpack.c.l.b16 %v297
    %v888 = vunpack.c.h.b16 %v297
    %v889 = vunpack.c.l.b16 %v298
    %v890 = vunpack.c.h.b16 %v298
    %v891 = vunpack.c.l.b16 %v299
    %v892 = vunpack.c.h.b16 %v299
    %v893 = vunpack.c.l.b16 %v300
    %v894 = vunpack.c.h.b16 %v300
    %v895 = vunpack.c.l.b16 %v301
    %v896 = vunpack.c.h.b16 %v301
    %v897 = vunpack.c.l.b16 %v302
    %v898 = vunpack.c.h.b16 %v302
    %v899 = vunpack.c.l.b16 %v303
    %v900 = vunpack.c.h.b16 %v303
    %v901 = vunpack.c.l.b16 %v304
    %v902 = vunpack.c.h.b16 %v304
    %v903 = vunpack.c.l.b16 %v305
    %v904 = vunpack.c.h.b16 %v305
    %v905 = vunpack.c.l.b16 %v306
    %v906 = vunpack.c.h.b16 %v306
    %v907 = vunpack.c.l.b16 %v307
    %v908 = vunpack.c.h.b16 %v307
    %v909 = vunpack.c.l.b16 %v308
    %v910 = vunpack.c.h.b16 %v308
    %v911 = vunpack.c.l.b16 %v309
    %v912 = vunpack.c.h.b16 %v309
    %v913 = vunpack.c.l.b16 %v310
    %v914 = vunpack.c.h.b16 %v310
    %v915 = vunpack.c.l.b16 %v311
    %v916 = vunpack.c.h.b16 %v311
    %v917 = vunpack.c.l.b16 %v312
    %v918 = vunpack.c.h.b16 %v312
    %v919 = vunpack.c.l.b16 %v313
    %v920 = vunpack.c.h.b16 %v313
    %v921 = vunpack.c.l.b16 %v314
    %v922 = vunpack.c.h.b16 %v314
    %v923 = vunpack.c.l.b16 %v315
    %v924 = vunpack.c.h.b16 %v315
    %v925 = vunpack.c.l.b16 %v316
    %v926 = vunpack.c.h.b16 %v316
    %v927 = vunpack.c.l.b16 %v317
    %v928 = vunpack.c.h.b16 %v317
    %v929 = vunpack.c.l.b16 %v318
    %v930 = vunpack.c.h.b16 %v318
    %v931 = vunpack.c.l.b16 %v319
    %v932 = vunpack.c.h.b16 %v319
    %v933 = vunpack.c.l.b16 %v320
    %v934 = vunpack.c.h.b16 %v320
    %v935 = vunpack.c.l.b16 %v321
    %v936 = vunpack.c.h.b16 %v321
    %v937 = vunpack.c.l.b16 %v322
    %v938 = vunpack.c.h.b16 %v322
    %v939 = vunpack.c.l.b16 %v323
    %v940 = vunpack.c.h.b16 %v323
    %v941 = vunpack.c.l.b16 %v324
    %v942 = vunpack.c.h.b16 %v324
    %v943 = vunpack.c.l.b16 %v325
    %v944 = vunpack.c.h.b16 %v325
    %v945 = vunpack.c.l.b16 %v326
    %v946 = vunpack.c.h.b16 %v326
    %v947 = vunpack.c.l.b16 %v327
    %v948 = vunpack.c.h.b16 %v327
    %v949 = vunpack.c.l.b16 %v328
    %v950 = vunpack.c.h.b16 %v328
    %v951 = vpack.c.b16 %v563, %v559
    %v952 = vpack.c.b16 %v564, %v560
    %v953 = vpack.c.b16 %v565, %v561
    %v954 = vpack.c.b16 %v566, %v562
    %v955 = vpack.c.b16 %v571, %v567
    %v956 = vpack.c.b16 %v572, %v568
    %v957 = vpack.c.b16 %v573, %v569
    %v958 = vpack.c.b16 %v574, %v570
    %v959 = vpack.c.b16 %v579, %v575
    %v960 = vpack.c.b16 %v580, %v576
    %v961 = vpack.c.b16 %v581, %v577
    %v962 = vpack.c.b16 %v582, %v578
    %v963 = vpack.c.b16 %v587, %v583
    %v964 = vpack.c.b16 %v588, %v584
    %v965 = vpack.c.b16 %v589, %v585
    %v966 = vpack.c.b16 %v590, %v586
    %v967 = vpack.c.b16 %v595, %v591
    %v968 = vpack.c.b16 %v596, %v592
    %v969 = vpack.c.b16 %v597, %v593
    %v970 = vpack.c.b16 %v598, %v594
    %v971 = vpack.c.b16 %v603, %v599
    %v972 = vpack.c.b16 %v604, %v600
    %v973 = vpack.c.b16 %v605, %v601
    %v974 = vpack.c.b16 %v606, %v602
    %v975 = vpack.c.b16 %v611, %v607
    %v976 = vpack.c.b16 %v612, %v608
    %v977 = vpack.c.b16 %v613, %v609
    %v978 = vpack.c.b16 %v614, %v610
    %v979 = vpack.c.b16 %v619, %v615
    %v980 = vpack.c.b16 %v620, %v616
    %v981 = vpack.c.b16 %v621, %v617
    %v982 = vpack.c.b16 %v622, %v618
    %v983 = vpack.c.b16 %v627, %v623
    %v984 = vpack.c.b16 %v628, %v624
    %v985 = vpack.c.b16 %v629, %v625
    %v986 = vpack.c.b16 %v630, %v626
    %v987 = vpack.c.b16 %v635, %v631
    %v988 = vpack.c.b16 %v636, %v632
    %v989 = vpack.c.b16 %v637, %v633
    %v990 = vpack.c.b16 %v638, %v634
    %v991 = vpack.c.b16 %v643, %v639
    %v992 = vpack.c.b16 %v644, %v640
    %v993 = vpack.c.b16 %v645, %v641
    %v994 = vpack.c.b16 %v646, %v642
    %v995 = vpack.c.b16 %v651, %v647
    %v996 = vpack.c.b16 %v652, %v648
    %v997 = vpack.c.b16 %v653, %v649
    %v998 = vpack.c.b16 %v654, %v650
    %v999 = vpack.c.b16 %v659, %v655
    %v1000 = vpack.c.b16 %v660, %v656
    %v1001 = vpack.c.b16 %v661, %v657
    %v1002 = vpack.c.b16 %v662, %v658
    %v1003 = vpack.c.b16 %v667, %v663
    %v1004 = vpack.c.b16 %v668, %v664
    %v1005 = vpack.c.b16 %v669, %v665
    %v1006 = vpack.c.b16 %v670, %v666
    %v1007 = vpack.c.b16 %v675, %v671
    %v1008 = vpack.c.b16 %v676, %v672
    %v1009 = vpack.c.b16 %v677, %v673
    %v1010 = vpack.c.b16 %v678, %v674
    %v1011 = vpack.c.b16 %v683, %v679
    %v1012 = vpack.c.b16 %v684, %v680
    %v1013 = vpack.c.b16 %v685, %v681
    %v1014 = vpack.c.b16 %v686, %v682
    %v1015 = vpack.c.b16 %v691, %v687
    %v1016 = vpack.c.b16 %v692, %v688
    %v1017 = vpack.c.b16 %v693, %v689
    %v1018 = vpack.c.b16 %v694, %v690
    %v1019 = vpack.c.b16 %v699, %v695
    %v1020 = vpack.c.b16 %v700, %v696
    %v1021 = vpack.c.b16 %v701, %v697
    %v1022 = vpack.c.b16 %v702, %v698
    %v1023 = vpack.c.b16 %v707, %v703
    %v1024 = vpack.c.b16 %v708, %v704
    %v1025 = vpack.c.b16 %v709, %v705
    %v1026 = vpack.c.b16 %v710, %v706
    %v1027 = vpack.c.b16 %v715, %v711
    %v1028 = vpack.c.b16 %v716, %v712
    %v1029 = vpack.c.b16 %v717, %v713
    %v1030 = vpack.c.b16 %v718, %v714
    %v1031 = vpack.c.b16 %v723, %v719
    %v1032 = vpack.c.b16 %v724, %v720
    %v1033 = vpack.c.b16 %v725, %v721
    %v1034 = vpack.c.b16 %v726, %v722
    %v1035 = vpack.c.b16 %v731, %v727
    %v1036 = vpack.c.b16 %v732, %v728
    %v1037 = vpack.c.b16 %v733, %v729
    %v1038 = vpack.c.b16 %v734, %v730
    %v1039 = vpack.c.b16 %v739, %v735
    %v1040 = vpack.c.b16 %v740, %v736
    %v1041 = vpack.c.b16 %v741, %v737
    %v1042 = vpack.c.b16 %v742, %v738
    %v1043 = vpack.c.b16 %v747, %v743
    %v1044 = vpack.c.b16 %v748, %v744
    %v1045 = vpack.c.b16 %v749, %v745
    %v1046 = vpack.c.b16 %v750, %v746
    %v1047 = vpack.c.b16 %v755, %v751
    %v1048 = vpack.c.b16 %v756, %v752
    %v1049 = vpack.c.b16 %v757, %v753
    %v1050 = vpack.c.b16 %v758, %v754
    %v1051 = vpack.c.b16 %v763, %v759
    %v1052 = vpack.c.b16 %v764, %v760
    %v1053 = vpack.c.b16 %v765, %v761
    %v1054 = vpack.c.b16 %v766, %v762
    %v1055 = vpack.c.b16 %v771, %v767
    %v1056 = vpack.c.b16 %v772, %v768
    %v1057 = vpack.c.b16 %v773, %v769
    %v1058 = vpack.c.b16 %v774, %v770
    %v1059 = vpack.c.b16 %v779, %v775
    %v1060 = vpack.c.b16 %v780, %v776
    %v1061 = vpack.c.b16 %v781, %v777
    %v1062 = vpack.c.b16 %v782, %v778
    %v1063 = vpack.c.b16 %v787, %v783
    %v1064 = vpack.c.b16 %v788, %v784
    %v1065 = vpack.c.b16 %v789, %v785
    %v1066 = vpack.c.b16 %v790, %v786
    %v1067 = vpack.c.b16 %v795, %v791
    %v1068 = vpack.c.b16 %v796, %v792
    %v1069 = vpack.c.b16 %v797, %v793
    %v1070 = vpack.c.b16 %v798, %v794
    %v1071 = vpack.c.b16 %v803, %v799
    %v1072 = vpack.c.b16 %v804, %v800
    %v1073 = vpack.c.b16 %v805, %v801
    %v1074 = vpack.c.b16 %v806, %v802
    %v1075 = vpack.c.b16 %v811, %v807
    %v1076 = vpack.c.b16 %v812, %v808
    %v1077 = vpack.c.b16 %v813, %v809
    %v1078 = vpack.c.b16 %v814, %v810
    %v1079 = vpack.c.b16 %v819, %v815
    %v1080 = vpack.c.b16 %v820, %v816
    %v1081 = vpack.c.b16 %v821, %v817
    %v1082 = vpack.c.b16 %v822, %v818
    %v1083 = vpack.c.b16 %v827, %v823
    %v1084 = vpack.c.b16 %v828, %v824
    %v1085 = vpack.c.b16 %v829, %v825
    %v1086 = vpack.c.b16 %v830, %v826
    %v1087 = vpack.c.b16 %v835, %v831
    %v1088 = vpack.c.b16 %v836, %v832
    %v1089 = vpack.c.b16 %v837, %v833
    %v1090 = vpack.c.b16 %v838, %v834
    %v1091 = vpack.c.b16 %v843, %v839
    %v1092 = vpack.c.b16 %v844, %v840
    %v1093 = vpack.c.b16 %v845, %v841
    %v1094 = vpack.c.b16 %v846, %v842
    %v1095 = vpack.c.b16 %v851, %v847
    %v1096 = vpack.c.b16 %v852, %v848
    %v1097 = vpack.c.b16 %v853, %v849
    %v1098 = vpack.c.b16 %v854, %v850
    %v1099 = vpack.c.b16 %v859, %v855
    %v1100 = vpack.c.b16 %v860, %v856
    %v1101 = vpack.c.b16 %v861, %v857
    %v1102 = vpack.c.b16 %v862, %v858
    %v1103 = vpack.c.b16 %v867, %v863
    %v1104 = vpack.c.b16 %v868, %v864
    %v1105 = vpack.c.b16 %v869, %v865
    %v1106 = vpack.c.b16 %v870, %v866
    %v1107 = vpack.c.b16 %v875, %v871
    %v1108 = vpack.c.b16 %v876, %v872
    %v1109 = vpack.c.b16 %v877, %v873
    %v1110 = vpack.c.b16 %v878, %v874
    %v1111 = vpack.c.b16 %v883, %v879
    %v1112 = vpack.c.b16 %v884, %v880
    %v1113 = vpack.c.b16 %v885, %v881
    %v1114 = vpack.c.b16 %v886, %v882
    %v1115 = vpack.c.b16 %v891, %v887
    %v1116 = vpack.c.b16 %v892, %v888
    %v1117 = vpack.c.b16 %v893, %v889
    %v1118 = vpack.c.b16 %v894, %v890
    %v1119 = vpack.c.b16 %v899, %v895
    %v1120 = vpack.c.b16 %v900, %v896
    %v1121 = vpack.c.b16 %v901, %v897
    %v1122 = vpack.c.b16 %v902, %v898
    %v1123 = vpack.c.b16 %v907, %v903
    %v1124 = vpack.c.b16 %v908, %v904
    %v1125 = vpack.c.b16 %v909, %v905
    %v1126 = vpack.c.b16 %v910, %v906
    %v1127 = vpack.c.b16 %v915, %v911
    %v1128 = vpack.c.b16 %v916, %v912
    %v1129 = vpack.c.b16 %v917, %v913
    %v1130 = vpack.c.b16 %v918, %v914
    %v1131 = vpack.c.b16 %v923, %v919
    %v1132 = vpack.c.b16 %v924, %v920
    %v1133 = vpack.c.b16 %v925, %v921
    %v1134 = vpack.c.b16 %v926, %v922
    %v1135 = vpack.c.b16 %v931, %v927
    %v1136 = vpack.c.b16 %v932, %v928
    %v1137 = vpack.c.b16 %v933, %v929
    %v1138 = vpack.c.b16 %v934, %v930
    %v1139 = vpack.c.b16 %v939, %v935
    %v1140 = vpack.c.b16 %v940, %v936
    %v1141 = vpack.c.b16 %v941, %v937
    %v1142 = vpack.c.b16 %v942, %v938
    %v1143 = vpack.c.b16 %v947, %v943
    %v1144 = vpack.c.b16 %v948, %v944
    %v1145 = vpack.c.b16 %v949, %v945
    %v1146 = vpack.c.b16 %v950, %v946
    %vm1343 = vcmask 130048
    %v1345 = vsel %vm1343, %v356, 0
    %1347 = vmatpush.bf16.msra.mxu0 %v979
    %1348 = vmatpush.bf16.msra.mxu0 %v975
    %1349 = vmatpush.bf16.msra.mxu0 %v971
    %1350 = vmatpush.bf16.msra.mxu0 %v967
    %1351 = vmatpush.bf16.msra.mxu0 %v963
    %1352 = vmatpush.bf16.msra.mxu0 %v959
    %1353 = vmatpush.bf16.msra.mxu0 %v955
    %1354 = vmatpush.bf16.msra.mxu0 %v951
    %1355 = vmatmul.bf16.gmra.mxu0 %v350
    %v1356 = vpop.f32.mrf.mxu0
    %v1357 = vadd.f32 %v331, %v1356
    %v1358 = vpop.f32.mrf.mxu0
    %1359 = vdwg.mxu0
    %1360 = vmatpush.bf16.msra.mxu0 %v1011
    %1361 = vmatpush.bf16.msra.mxu0 %v1007
    %1362 = vmatpush.bf16.msra.mxu0 %v1003
    %1363 = vmatpush.bf16.msra.mxu0 %v999
    %1364 = vmatpush.bf16.msra.mxu0 %v995
    %1365 = vmatpush.bf16.msra.mxu0 %v991
    %1366 = vmatpush.bf16.msra.mxu0 %v987
    %1367 = vmatpush.bf16.msra.mxu0 %v983
    %1368 = vmatmul.bf16.gmra.mxu0 %v351
    %v1369 = vpop.f32.mrf.mxu0
    %v1370 = vadd.f32 %v1357, %v1369
    %v1371 = vpop.f32.mrf.mxu0
    %1372 = vdwg.mxu0
    %1373 = vmatpush.bf16.msra.mxu0 %v1043
    %1374 = vmatpush.bf16.msra.mxu0 %v1039
    %1375 = vmatpush.bf16.msra.mxu0 %v1035
    %1376 = vmatpush.bf16.msra.mxu0 %v1031
    %1377 = vmatpush.bf16.msra.mxu0 %v1027
    %1378 = vmatpush.bf16.msra.mxu0 %v1023
    %1379 = vmatpush.bf16.msra.mxu0 %v1019
    %1380 = vmatpush.bf16.msra.mxu0 %v1015
    %1381 = vmatmul.bf16.gmra.mxu0 %v352
    %v1382 = vpop.f32.mrf.mxu0
    %v1383 = vadd.f32 %v1370, %v1382
    %v1384 = vpop.f32.mrf.mxu0
    %1385 = vdwg.mxu0
    %1386 = vmatpush.bf16.msra.mxu0 %v1075
    %1387 = vmatpush.bf16.msra.mxu0 %v1071
    %1388 = vmatpush.bf16.msra.mxu0 %v1067
    %1389 = vmatpush.bf16.msra.mxu0 %v1063
    %1390 = vmatpush.bf16.msra.mxu0 %v1059
    %1391 = vmatpush.bf16.msra.mxu0 %v1055
    %1392 = vmatpush.bf16.msra.mxu0 %v1051
    %1393 = vmatpush.bf16.msra.mxu0 %v1047
    %1394 = vmatmul.bf16.gmra.mxu0 %v353
    %v1395 = vpop.f32.mrf.mxu0
    %v1396 = vadd.f32 %v1383, %v1395
    %v1397 = vpop.f32.mrf.mxu0
    %1398 = vdwg.mxu0
    %1399 = vmatpush.bf16.msra.mxu0 %v1107
    %1400 = vmatpush.bf16.msra.mxu0 %v1103
    %1401 = vmatpush.bf16.msra.mxu0 %v1099
    %1402 = vmatpush.bf16.msra.mxu0 %v1095
    %1403 = vmatpush.bf16.msra.mxu0 %v1091
    %1404 = vmatpush.bf16.msra.mxu0 %v1087
    %1405 = vmatpush.bf16.msra.mxu0 %v1083
    %1406 = vmatpush.bf16.msra.mxu0 %v1079
    %1407 = vmatmul.bf16.gmra.mxu0 %v354
    %v1408 = vpop.f32.mrf.mxu0
    %v1409 = vadd.f32 %v1396, %v1408
    %v1410 = vpop.f32.mrf.mxu0
    %1411 = vdwg.mxu0
    %1412 = vmatpush.bf16.msra.mxu0 %v1139
    %1413 = vmatpush.bf16.msra.mxu0 %v1135
    %1414 = vmatpush.bf16.msra.mxu0 %v1131
    %1415 = vmatpush.bf16.msra.mxu0 %v1127
    %1416 = vmatpush.bf16.msra.mxu0 %v1123
    %1417 = vmatpush.bf16.msra.mxu0 %v1119
    %1418 = vmatpush.bf16.msra.mxu0 %v1115
    %1419 = vmatpush.bf16.msra.mxu0 %v1111
    %1420 = vmatmul.bf16.gmra.mxu0 %v355
    %v1421 = vpop.f32.mrf.mxu0
    %v1422 = vadd.f32 %v1409, %v1421
    %v1423 = vpop.f32.mrf.mxu0
    %1424 = vdwg.mxu0
    %1425 = vmatpush.bf16.msra.mxu0 0
    %1426 = vmatpush.bf16.msra.mxu0 0
    %1427 = vmatpush.bf16.msra.mxu0 0
    %1428 = vmatpush.bf16.msra.mxu0 0
    %1429 = vmatpush.bf16.msra.mxu0 0
    %1430 = vmatpush.bf16.msra.mxu0 0
    %1431 = vmatpush.bf16.msra.mxu0 0
    %1432 = vmatpush.bf16.msra.mxu0 %v1143
    %1433 = vmatmul.bf16.gmra.mxu0 %v1345
    %v1434 = vpop.f32.mrf.mxu0
    %v1435 = vadd.f32 %v1422, %v1434
    %v1436 = vpop.f32.mrf.mxu0
    %1437 = vdwg.mxu0
    %1438 = vmatpush.bf16.msra.mxu0 %v980
    %1439 = vmatpush.bf16.msra.mxu0 %v976
    %1440 = vmatpush.bf16.msra.mxu0 %v972
    %1441 = vmatpush.bf16.msra.mxu0 %v968
    %1442 = vmatpush.bf16.msra.mxu0 %v964
    %1443 = vmatpush.bf16.msra.mxu0 %v960
    %1444 = vmatpush.bf16.msra.mxu0 %v956
    %1445 = vmatpush.bf16.msra.mxu0 %v952
    %1446 = vmatmul.bf16.gmra.mxu0 %v350
    %v1447 = vpop.f32.mrf.mxu0
    %v1448 = vadd.f32 %v332, %v1447
    %v1449 = vpop.f32.mrf.mxu0
    %1450 = vdwg.mxu0
    %1451 = vmatpush.bf16.msra.mxu0 %v1012
    %1452 = vmatpush.bf16.msra.mxu0 %v1008
    %1453 = vmatpush.bf16.msra.mxu0 %v1004
    %1454 = vmatpush.bf16.msra.mxu0 %v1000
    %1455 = vmatpush.bf16.msra.mxu0 %v996
    %1456 = vmatpush.bf16.msra.mxu0 %v992
    %1457 = vmatpush.bf16.msra.mxu0 %v988
    %1458 = vmatpush.bf16.msra.mxu0 %v984
    %1459 = vmatmul.bf16.gmra.mxu0 %v351
    %v1460 = vpop.f32.mrf.mxu0
    %v1461 = vadd.f32 %v1448, %v1460
    %v1462 = vpop.f32.mrf.mxu0
    %1463 = vdwg.mxu0
    %1464 = vmatpush.bf16.msra.mxu0 %v1044
    %1465 = vmatpush.bf16.msra.mxu0 %v1040
    %1466 = vmatpush.bf16.msra.mxu0 %v1036
    %1467 = vmatpush.bf16.msra.mxu0 %v1032
    %1468 = vmatpush.bf16.msra.mxu0 %v1028
    %1469 = vmatpush.bf16.msra.mxu0 %v1024
    %1470 = vmatpush.bf16.msra.mxu0 %v1020
    %1471 = vmatpush.bf16.msra.mxu0 %v1016
    %1472 = vmatmul.bf16.gmra.mxu0 %v352
    %v1473 = vpop.f32.mrf.mxu0
    %v1474 = vadd.f32 %v1461, %v1473
    %v1475 = vpop.f32.mrf.mxu0
    %1476 = vdwg.mxu0
    %1477 = vmatpush.bf16.msra.mxu0 %v1076
    %1478 = vmatpush.bf16.msra.mxu0 %v1072
    %1479 = vmatpush.bf16.msra.mxu0 %v1068
    %1480 = vmatpush.bf16.msra.mxu0 %v1064
    %1481 = vmatpush.bf16.msra.mxu0 %v1060
    %1482 = vmatpush.bf16.msra.mxu0 %v1056
    %1483 = vmatpush.bf16.msra.mxu0 %v1052
    %1484 = vmatpush.bf16.msra.mxu0 %v1048
    %1485 = vmatmul.bf16.gmra.mxu0 %v353
    %v1486 = vpop.f32.mrf.mxu0
    %v1487 = vadd.f32 %v1474, %v1486
    %v1488 = vpop.f32.mrf.mxu0
    %1489 = vdwg.mxu0
    %1490 = vmatpush.bf16.msra.mxu0 %v1108
    %1491 = vmatpush.bf16.msra.mxu0 %v1104
    %1492 = vmatpush.bf16.msra.mxu0 %v1100
    %1493 = vmatpush.bf16.msra.mxu0 %v1096
    %1494 = vmatpush.bf16.msra.mxu0 %v1092
    %1495 = vmatpush.bf16.msra.mxu0 %v1088
    %1496 = vmatpush.bf16.msra.mxu0 %v1084
    %1497 = vmatpush.bf16.msra.mxu0 %v1080
    %1498 = vmatmul.bf16.gmra.mxu0 %v354
    %v1499 = vpop.f32.mrf.mxu0
    %v1500 = vadd.f32 %v1487, %v1499
    %v1501 = vpop.f32.mrf.mxu0
    %1502 = vdwg.mxu0
    %1503 = vmatpush.bf16.msra.mxu0 %v1140
    %1504 = vmatpush.bf16.msra.mxu0 %v1136
    %1505 = vmatpush.bf16.msra.mxu0 %v1132
    %1506 = vmatpush.bf16.msra.mxu0 %v1128
    %1507 = vmatpush.bf16.msra.mxu0 %v1124
    %1508 = vmatpush.bf16.msra.mxu0 %v1120
    %1509 = vmatpush.bf16.msra.mxu0 %v1116
    %1510 = vmatpush.bf16.msra.mxu0 %v1112
    %1511 = vmatmul.bf16.gmra.mxu0 %v355
    %v1512 = vpop.f32.mrf.mxu0
    %v1513 = vadd.f32 %v1500, %v1512
    %v1514 = vpop.f32.mrf.mxu0
    %1515 = vdwg.mxu0
    %1516 = vmatpush.bf16.msra.mxu0 0
    %1517 = vmatpush.bf16.msra.mxu0 0
    %1518 = vmatpush.bf16.msra.mxu0 0
    %1519 = vmatpush.bf16.msra.mxu0 0
    %1520 = vmatpush.bf16.msra.mxu0 0
    %1521 = vmatpush.bf16.msra.mxu0 0
    %1522 = vmatpush.bf16.msra.mxu0 0
    %1523 = vmatpush.bf16.msra.mxu0 %v1144
    %1524 = vmatmul.bf16.gmra.mxu0 %v1345
    %v1525 = vpop.f32.mrf.mxu0
    %v1526 = vadd.f32 %v1513, %v1525
    %v1527 = vpop.f32.mrf.mxu0
    %1528 = vdwg.mxu0
    %1529 = vmatpush.bf16.msra.mxu0 %v981
    %1530 = vmatpush.bf16.msra.mxu0 %v977
    %1531 = vmatpush.bf16.msra.mxu0 %v973
    %1532 = vmatpush.bf16.msra.mxu0 %v969
    %1533 = vmatpush.bf16.msra.mxu0 %v965
    %1534 = vmatpush.bf16.msra.mxu0 %v961
    %1535 = vmatpush.bf16.msra.mxu0 %v957
    %1536 = vmatpush.bf16.msra.mxu0 %v953
    %1537 = vmatmul.bf16.gmra.mxu0 %v350
    %v1538 = vpop.f32.mrf.mxu0
    %v1539 = vadd.f32 %v333, %v1538
    %v1540 = vpop.f32.mrf.mxu0
    %1541 = vdwg.mxu0
    %1542 = vmatpush.bf16.msra.mxu0 %v1013
    %1543 = vmatpush.bf16.msra.mxu0 %v1009
    %1544 = vmatpush.bf16.msra.mxu0 %v1005
    %1545 = vmatpush.bf16.msra.mxu0 %v1001
    %1546 = vmatpush.bf16.msra.mxu0 %v997
    %1547 = vmatpush.bf16.msra.mxu0 %v993
    %1548 = vmatpush.bf16.msra.mxu0 %v989
    %1549 = vmatpush.bf16.msra.mxu0 %v985
    %1550 = vmatmul.bf16.gmra.mxu0 %v351
    %v1551 = vpop.f32.mrf.mxu0
    %v1552 = vadd.f32 %v1539, %v1551
    %v1553 = vpop.f32.mrf.mxu0
    %1554 = vdwg.mxu0
    %1555 = vmatpush.bf16.msra.mxu0 %v1045
    %1556 = vmatpush.bf16.msra.mxu0 %v1041
    %1557 = vmatpush.bf16.msra.mxu0 %v1037
    %1558 = vmatpush.bf16.msra.mxu0 %v1033
    %1559 = vmatpush.bf16.msra.mxu0 %v1029
    %1560 = vmatpush.bf16.msra.mxu0 %v1025
    %1561 = vmatpush.bf16.msra.mxu0 %v1021
    %1562 = vmatpush.bf16.msra.mxu0 %v1017
    %1563 = vmatmul.bf16.gmra.mxu0 %v352
    %v1564 = vpop.f32.mrf.mxu0
    %v1565 = vadd.f32 %v1552, %v1564
    %v1566 = vpop.f32.mrf.mxu0
    %1567 = vdwg.mxu0
    %1568 = vmatpush.bf16.msra.mxu0 %v1077
    %1569 = vmatpush.bf16.msra.mxu0 %v1073
    %1570 = vmatpush.bf16.msra.mxu0 %v1069
    %1571 = vmatpush.bf16.msra.mxu0 %v1065
    %1572 = vmatpush.bf16.msra.mxu0 %v1061
    %1573 = vmatpush.bf16.msra.mxu0 %v1057
    %1574 = vmatpush.bf16.msra.mxu0 %v1053
    %1575 = vmatpush.bf16.msra.mxu0 %v1049
    %1576 = vmatmul.bf16.gmra.mxu0 %v353
    %v1577 = vpop.f32.mrf.mxu0
    %v1578 = vadd.f32 %v1565, %v1577
    %v1579 = vpop.f32.mrf.mxu0
    %1580 = vdwg.mxu0
    %1581 = vmatpush.bf16.msra.mxu0 %v1109
    %1582 = vmatpush.bf16.msra.mxu0 %v1105
    %1583 = vmatpush.bf16.msra.mxu0 %v1101
    %1584 = vmatpush.bf16.msra.mxu0 %v1097
    %1585 = vmatpush.bf16.msra.mxu0 %v1093
    %1586 = vmatpush.bf16.msra.mxu0 %v1089
    %1587 = vmatpush.bf16.msra.mxu0 %v1085
    %1588 = vmatpush.bf16.msra.mxu0 %v1081
    %1589 = vmatmul.bf16.gmra.mxu0 %v354
    %v1590 = vpop.f32.mrf.mxu0
    %v1591 = vadd.f32 %v1578, %v1590
    %v1592 = vpop.f32.mrf.mxu0
    %1593 = vdwg.mxu0
    %1594 = vmatpush.bf16.msra.mxu0 %v1141
    %1595 = vmatpush.bf16.msra.mxu0 %v1137
    %1596 = vmatpush.bf16.msra.mxu0 %v1133
    %1597 = vmatpush.bf16.msra.mxu0 %v1129
    %1598 = vmatpush.bf16.msra.mxu0 %v1125
    %1599 = vmatpush.bf16.msra.mxu0 %v1121
    %1600 = vmatpush.bf16.msra.mxu0 %v1117
    %1601 = vmatpush.bf16.msra.mxu0 %v1113
    %1602 = vmatmul.bf16.gmra.mxu0 %v355
    %v1603 = vpop.f32.mrf.mxu0
    %v1604 = vadd.f32 %v1591, %v1603
    %v1605 = vpop.f32.mrf.mxu0
    %1606 = vdwg.mxu0
    %1607 = vmatpush.bf16.msra.mxu0 0
    %1608 = vmatpush.bf16.msra.mxu0 0
    %1609 = vmatpush.bf16.msra.mxu0 0
    %1610 = vmatpush.bf16.msra.mxu0 0
    %1611 = vmatpush.bf16.msra.mxu0 0
    %1612 = vmatpush.bf16.msra.mxu0 0
    %1613 = vmatpush.bf16.msra.mxu0 0
    %1614 = vmatpush.bf16.msra.mxu0 %v1145
    %1615 = vmatmul.bf16.gmra.mxu0 %v1345
    %v1616 = vpop.f32.mrf.mxu0
    %v1617 = vadd.f32 %v1604, %v1616
    %v1618 = vpop.f32.mrf.mxu0
    %1619 = vdwg.mxu0
    %1620 = vmatpush.bf16.msra.mxu0 %v982
    %1621 = vmatpush.bf16.msra.mxu0 %v978
    %1622 = vmatpush.bf16.msra.mxu0 %v974
    %1623 = vmatpush.bf16.msra.mxu0 %v970
    %1624 = vmatpush.bf16.msra.mxu0 %v966
    %1625 = vmatpush.bf16.msra.mxu0 %v962
    %1626 = vmatpush.bf16.msra.mxu0 %v958
    %1627 = vmatpush.bf16.msra.mxu0 %v954
    %1628 = vmatmul.bf16.gmra.mxu0 %v350
    %v1629 = vpop.f32.mrf.mxu0
    %v1630 = vadd.f32 %v334, %v1629
    %v1631 = vpop.f32.mrf.mxu0
    %1632 = vdwg.mxu0
    %1633 = vmatpush.bf16.msra.mxu0 %v1014
    %1634 = vmatpush.bf16.msra.mxu0 %v1010
    %1635 = vmatpush.bf16.msra.mxu0 %v1006
    %1636 = vmatpush.bf16.msra.mxu0 %v1002
    %1637 = vmatpush.bf16.msra.mxu0 %v998
    %1638 = vmatpush.bf16.msra.mxu0 %v994
    %1639 = vmatpush.bf16.msra.mxu0 %v990
    %1640 = vmatpush.bf16.msra.mxu0 %v986
    %1641 = vmatmul.bf16.gmra.mxu0 %v351
    %v1642 = vpop.f32.mrf.mxu0
    %v1643 = vadd.f32 %v1630, %v1642
    %v1644 = vpop.f32.mrf.mxu0
    %1645 = vdwg.mxu0
    %1646 = vmatpush.bf16.msra.mxu0 %v1046
    %1647 = vmatpush.bf16.msra.mxu0 %v1042
    %1648 = vmatpush.bf16.msra.mxu0 %v1038
    %1649 = vmatpush.bf16.msra.mxu0 %v1034
    %1650 = vmatpush.bf16.msra.mxu0 %v1030
    %1651 = vmatpush.bf16.msra.mxu0 %v1026
    %1652 = vmatpush.bf16.msra.mxu0 %v1022
    %1653 = vmatpush.bf16.msra.mxu0 %v1018
    %1654 = vmatmul.bf16.gmra.mxu0 %v352
    %v1655 = vpop.f32.mrf.mxu0
    %v1656 = vadd.f32 %v1643, %v1655
    %v1657 = vpop.f32.mrf.mxu0
    %1658 = vdwg.mxu0
    %1659 = vmatpush.bf16.msra.mxu0 %v1078
    %1660 = vmatpush.bf16.msra.mxu0 %v1074
    %1661 = vmatpush.bf16.msra.mxu0 %v1070
    %1662 = vmatpush.bf16.msra.mxu0 %v1066
    %1663 = vmatpush.bf16.msra.mxu0 %v1062
    %1664 = vmatpush.bf16.msra.mxu0 %v1058
    %1665 = vmatpush.bf16.msra.mxu0 %v1054
    %1666 = vmatpush.bf16.msra.mxu0 %v1050
    %1667 = vmatmul.bf16.gmra.mxu0 %v353
    %v1668 = vpop.f32.mrf.mxu0
    %v1669 = vadd.f32 %v1656, %v1668
    %v1670 = vpop.f32.mrf.mxu0
    %1671 = vdwg.mxu0
    %1672 = vmatpush.bf16.msra.mxu0 %v1110
    %1673 = vmatpush.bf16.msra.mxu0 %v1106
    %1674 = vmatpush.bf16.msra.mxu0 %v1102
    %1675 = vmatpush.bf16.msra.mxu0 %v1098
    %1676 = vmatpush.bf16.msra.mxu0 %v1094
    %1677 = vmatpush.bf16.msra.mxu0 %v1090
    %1678 = vmatpush.bf16.msra.mxu0 %v1086
    %1679 = vmatpush.bf16.msra.mxu0 %v1082
    %1680 = vmatmul.bf16.gmra.mxu0 %v354
    %v1681 = vpop.f32.mrf.mxu0
    %v1682 = vadd.f32 %v1669, %v1681
    %v1683 = vpop.f32.mrf.mxu0
    %1684 = vdwg.mxu0
    %1685 = vmatpush.bf16.msra.mxu0 %v1142
    %1686 = vmatpush.bf16.msra.mxu0 %v1138
    %1687 = vmatpush.bf16.msra.mxu0 %v1134
    %1688 = vmatpush.bf16.msra.mxu0 %v1130
    %1689 = vmatpush.bf16.msra.mxu0 %v1126
    %1690 = vmatpush.bf16.msra.mxu0 %v1122
    %1691 = vmatpush.bf16.msra.mxu0 %v1118
    %1692 = vmatpush.bf16.msra.mxu0 %v1114
    %1693 = vmatmul.bf16.gmra.mxu0 %v355
    %v1694 = vpop.f32.mrf.mxu0
    %v1695 = vadd.f32 %v1682, %v1694
    %v1696 = vpop.f32.mrf.mxu0
    %1697 = vdwg.mxu0
    %1698 = vmatpush.bf16.msra.mxu0 0
    %1699 = vmatpush.bf16.msra.mxu0 0
    %1700 = vmatpush.bf16.msra.mxu0 0
    %1701 = vmatpush.bf16.msra.mxu0 0
    %1702 = vmatpush.bf16.msra.mxu0 0
    %1703 = vmatpush.bf16.msra.mxu0 0
    %1704 = vmatpush.bf16.msra.mxu0 0
    %1705 = vmatpush.bf16.msra.mxu0 %v1146
    %1706 = vmatmul.bf16.gmra.mxu0 %v1345
    %v1707 = vpop.f32.mrf.mxu0
    %v1708 = vadd.f32 %v1695, %v1707
    %v1709 = vpop.f32.mrf.mxu0
    %1710 = vdwg.mxu0
    %v1711 = vmax.f32 %v1435, 0.0
    %v1712 = vmax.f32 %v1526, 0.0
    %v1713 = vmax.f32 %v1617, 0.0
    %v1714 = vmax.f32 %v1708, 0.0
    %v1715 = vpack.c.bf16 %v1711, %v1711
    %v1716 = vpack.c.bf16 %v1712, %v1712
    %v1717 = vpack.c.bf16 %v1713, %v1713
    %v1718 = vpack.c.bf16 %v1714, %v1714
    %v1719 = vld [vmem:[#allocation8] sm:$0xff]
    %v1720 = vld [vmem:[#allocation8 + $0x8] sm:$0xff]
    %v1721 = vld [vmem:[#allocation8 + $0x10] sm:$0xff]
    %v1722 = vld [vmem:[#allocation8 + $0x18] sm:$0xff]
    %v1723 = vld [vmem:[#allocation8 + $0x20] sm:$0xff]
    %v1724 = vld [vmem:[#allocation8 + $0x28] sm:$0xff]
    %v1725 = vld [vmem:[#allocation8 + $0x30] sm:$0xff]
    %v1726 = vld [vmem:[#allocation8 + $0x38] sm:$0xff]
    %v1727 = vld [vmem:[#allocation8 + $0x40] sm:$0xff]
    %v1728 = vld [vmem:[#allocation8 + $0x48] sm:$0xff]
    %v1729 = vld [vmem:[#allocation8 + $0x50] sm:$0xff]
    %v1730 = vld [vmem:[#allocation8 + $0x58] sm:$0xff]
    %v1731 = vld [vmem:[#allocation8 + $0x60] sm:$0xff]
    %v1732 = vld [vmem:[#allocation8 + $0x68] sm:$0xff]
    %v1733 = vld [vmem:[#allocation8 + $0x70] sm:$0xff]
    %v1734 = vld [vmem:[#allocation8 + $0x78] sm:$0xff]
    %v1735 = vld [vmem:[#allocation8 + $0x80] sm:$0xff]
    %v1736 = vld [vmem:[#allocation8 + $0x88] sm:$0xff]
    %v1737 = vld [vmem:[#allocation8 + $0x90] sm:$0xff]
    %v1738 = vld [vmem:[#allocation8 + $0x98] sm:$0xff]
    %v1739 = vld [vmem:[#allocation8 + $0xa0] sm:$0xff]
    %v1740 = vld [vmem:[#allocation8 + $0xa8] sm:$0xff]
    %v1741 = vld [vmem:[#allocation8 + $0xb0] sm:$0xff]
    %v1742 = vld [vmem:[#allocation8 + $0xb8] sm:$0xff]
    %v1743 = vld [vmem:[#allocation8 + $0xc0] sm:$0xff]
    %v1744 = vld [vmem:[#allocation8 + $0xc8] sm:$0xff]
    %v1745 = vld [vmem:[#allocation8 + $0xd0] sm:$0xff]
    %v1746 = vld [vmem:[#allocation8 + $0xd8] sm:$0xff]
    %v1747 = vld [vmem:[#allocation8 + $0xe0] sm:$0xff]
    %v1748 = vld [vmem:[#allocation8 + $0xe8] sm:$0xff]
    %v1749 = vld [vmem:[#allocation8 + $0xf0] sm:$0xff]
    %v1750 = vld [vmem:[#allocation8 + $0xf8] sm:$0xff]
    %v1751 = vld [vmem:[#allocation8 + $0x100] sm:$0xff]
    %v1752 = vld [vmem:[#allocation8 + $0x108] sm:$0xff]
    %v1753 = vld [vmem:[#allocation8 + $0x110] sm:$0xff]
    %v1754 = vld [vmem:[#allocation8 + $0x118] sm:$0xff]
    %v1755 = vld [vmem:[#allocation8 + $0x120] sm:$0xff]
    %v1756 = vld [vmem:[#allocation8 + $0x128] sm:$0xff]
    %v1757 = vld [vmem:[#allocation8 + $0x130] sm:$0xff]
    %v1758 = vld [vmem:[#allocation8 + $0x138] sm:$0xff]
    %v1759 = vld [vmem:[#allocation8 + $0x140] sm:$0xff]
    %v1760 = vld [vmem:[#allocation8 + $0x148] sm:$0xff]
    %v1761 = vld [vmem:[#allocation8 + $0x150] sm:$0xff]
    %v1762 = vld [vmem:[#allocation8 + $0x158] sm:$0xff]
    %v1763 = vld [vmem:[#allocation8 + $0x160] sm:$0xff]
    %v1764 = vld [vmem:[#allocation8 + $0x168] sm:$0xff]
    %v1765 = vld [vmem:[#allocation8 + $0x170] sm:$0xff]
    %v1766 = vld [vmem:[#allocation8 + $0x178] sm:$0xff]
    %v1767 = vld [vmem:[#allocation8 + $0x180] sm:$0xff]
    %v1768 = vld [vmem:[#allocation8 + $0x188] sm:$0xff]
    %v1769 = vld [vmem:[#allocation8 + $0x190] sm:$0xff]
    %v1770 = vld [vmem:[#allocation8 + $0x198] sm:$0xff]
    %v1771 = vld [vmem:[#allocation8 + $0x1a0] sm:$0xff]
    %v1772 = vld [vmem:[#allocation8 + $0x1a8] sm:$0xff]
    %v1773 = vld [vmem:[#allocation8 + $0x1b0] sm:$0xff]
    %v1774 = vld [vmem:[#allocation8 + $0x1b8] sm:$0xff]
    %v1775 = vld [vmem:[#allocation8 + $0x1c0] sm:$0xff]
    %v1776 = vld [vmem:[#allocation8 + $0x1c8] sm:$0xff]
    %v1777 = vld [vmem:[#allocation8 + $0x1d0] sm:$0xff]
    %v1778 = vld [vmem:[#allocation8 + $0x1d8] sm:$0xff]
    %v1779 = vld [vmem:[#allocation8 + $0x1e0] sm:$0xff]
    %v1780 = vld [vmem:[#allocation8 + $0x1e8] sm:$0xff]
    %v1781 = vld [vmem:[#allocation8 + $0x1f0] sm:$0xff]
    %v1782 = vld [vmem:[#allocation8 + $0x1f8] sm:$0xff]
    %v1783 = vld [vmem:[#allocation8 + $0x200] sm:$0xff]
    %v1784 = vld [vmem:[#allocation8 + $0x208] sm:$0xff]
    %v1785 = vld [vmem:[#allocation8 + $0x210] sm:$0xff]
    %v1786 = vld [vmem:[#allocation8 + $0x218] sm:$0xff]
    %v1787 = vld [vmem:[#allocation8 + $0x220] sm:$0xff]
    %v1788 = vld [vmem:[#allocation8 + $0x228] sm:$0xff]
    %v1789 = vld [vmem:[#allocation8 + $0x230] sm:$0xff]
    %v1790 = vld [vmem:[#allocation8 + $0x238] sm:$0xff]
    %v1791 = vld [vmem:[#allocation8 + $0x240] sm:$0xff]
    %v1792 = vld [vmem:[#allocation8 + $0x248] sm:$0xff]
    %v1793 = vld [vmem:[#allocation8 + $0x250] sm:$0xff]
    %v1794 = vld [vmem:[#allocation8 + $0x258] sm:$0xff]
    %v1795 = vld [vmem:[#allocation8 + $0x260] sm:$0xff]
    %v1796 = vld [vmem:[#allocation8 + $0x268] sm:$0xff]
    %v1797 = vld [vmem:[#allocation8 + $0x270] sm:$0xff]
    %v1798 = vld [vmem:[#allocation8 + $0x278] sm:$0xff]
    %v1799 = vld [vmem:[#allocation8 + $0x280] sm:$0xff]
    %v1800 = vld [vmem:[#allocation8 + $0x288] sm:$0xff]
    %v1801 = vld [vmem:[#allocation8 + $0x290] sm:$0xff]
    %v1802 = vld [vmem:[#allocation8 + $0x298] sm:$0xff]
    %v1803 = vld [vmem:[#allocation8 + $0x2a0] sm:$0xff]
    %v1804 = vld [vmem:[#allocation8 + $0x2a8] sm:$0xff]
    %v1805 = vld [vmem:[#allocation8 + $0x2b0] sm:$0xff]
    %v1806 = vld [vmem:[#allocation8 + $0x2b8] sm:$0xff]
    %v1807 = vld [vmem:[#allocation8 + $0x2c0] sm:$0xff]
    %v1808 = vld [vmem:[#allocation8 + $0x2c8] sm:$0xff]
    %v1809 = vld [vmem:[#allocation8 + $0x2d0] sm:$0xff]
    %v1810 = vld [vmem:[#allocation8 + $0x2d8] sm:$0xff]
    %v1811 = vld [vmem:[#allocation8 + $0x2e0] sm:$0xff]
    %v1812 = vld [vmem:[#allocation8 + $0x2e8] sm:$0xff]
    %v1813 = vld [vmem:[#allocation8 + $0x2f0] sm:$0xff]
    %v1814 = vld [vmem:[#allocation8 + $0x2f8] sm:$0xff]
    %v1815 = vld [vmem:[#allocation8 + $0x300] sm:$0xff]
    %v1816 = vld [vmem:[#allocation8 + $0x308] sm:$0xff]
    %v1817 = vld [vmem:[#allocation8 + $0x310] sm:$0xff]
    %v1818 = vld [vmem:[#allocation8 + $0x318] sm:$0xff]
    %v1819 = vld [vmem:[#allocation8 + $0x320] sm:$0xff]
    %v1820 = vld [vmem:[#allocation8 + $0x328] sm:$0xff]
    %v1821 = vld [vmem:[#allocation8 + $0x330] sm:$0xff]
    %v1822 = vld [vmem:[#allocation8 + $0x338] sm:$0xff]
    %v1823 = vld [vmem:[#allocation8 + $0x340] sm:$0xff]
    %v1824 = vld [vmem:[#allocation8 + $0x348] sm:$0xff]
    %v1825 = vld [vmem:[#allocation8 + $0x350] sm:$0xff]
    %v1826 = vld [vmem:[#allocation8 + $0x358] sm:$0xff]
    %v1827 = vld [vmem:[#allocation8 + $0x360] sm:$0xff]
    %v1828 = vld [vmem:[#allocation8 + $0x368] sm:$0xff]
    %v1829 = vld [vmem:[#allocation8 + $0x370] sm:$0xff]
    %v1830 = vld [vmem:[#allocation8 + $0x378] sm:$0xff]
    %v1831 = vld [vmem:[#allocation8 + $0x380] sm:$0xff]
    %v1832 = vld [vmem:[#allocation8 + $0x388] sm:$0xff]
    %v1833 = vld [vmem:[#allocation8 + $0x390] sm:$0xff]
    %v1834 = vld [vmem:[#allocation8 + $0x398] sm:$0xff]
    %v1835 = vld [vmem:[#allocation8 + $0x3a0] sm:$0xff]
    %v1836 = vld [vmem:[#allocation8 + $0x3a8] sm:$0xff]
    %v1837 = vld [vmem:[#allocation8 + $0x3b0] sm:$0xff]
    %v1838 = vld [vmem:[#allocation8 + $0x3b8] sm:$0xff]
    %v1839 = vld [vmem:[#allocation8 + $0x3c0] sm:$0xff]
    %v1840 = vld [vmem:[#allocation8 + $0x3c8] sm:$0xff]
    %v1841 = vld [vmem:[#allocation8 + $0x3d0] sm:$0xff]
    %v1842 = vld [vmem:[#allocation8 + $0x3d8] sm:$0xff]
    %v1843 = vld [vmem:[#allocation8 + $0x3e0] sm:$0xff]
    %v1844 = vld [vmem:[#allocation8 + $0x3e8] sm:$0xff]
    %v1845 = vld [vmem:[#allocation8 + $0x3f0] sm:$0xff]
    %v1846 = vld [vmem:[#allocation8 + $0x3f8] sm:$0xff]
    %v1847 = vld [vmem:[#allocation10] sm:$0xf]
    %v1849 = vperm.slane %v1847, 0
    %v1850 = vperm.slane %v1847, 1
    %v1851 = vperm.slane %v1847, 2
    %v1852 = vperm.slane %v1847, 3
    %v1985 = vunpack.c.l.b16 %v1719
    %v1986 = vunpack.c.h.b16 %v1719
    %v1987 = vunpack.c.l.b16 %v1720
    %v1988 = vunpack.c.h.b16 %v1720
    %v1989 = vunpack.c.l.b16 %v1721
    %v1990 = vunpack.c.h.b16 %v1721
    %v1991 = vunpack.c.l.b16 %v1722
    %v1992 = vunpack.c.h.b16 %v1722
    %v1993 = vunpack.c.l.b16 %v1723
    %v1994 = vunpack.c.h.b16 %v1723
    %v1995 = vunpack.c.l.b16 %v1724
    %v1996 = vunpack.c.h.b16 %v1724
    %v1997 = vunpack.c.l.b16 %v1725
    %v1998 = vunpack.c.h.b16 %v1725
    %v1999 = vunpack.c.l.b16 %v1726
    %v2000 = vunpack.c.h.b16 %v1726
    %v2001 = vunpack.c.l.b16 %v1727
    %v2002 = vunpack.c.h.b16 %v1727
    %v2003 = vunpack.c.l.b16 %v1728
    %v2004 = vunpack.c.h.b16 %v1728
    %v2005 = vunpack.c.l.b16 %v1729
    %v2006 = vunpack.c.h.b16 %v1729
    %v2007 = vunpack.c.l.b16 %v1730
    %v2008 = vunpack.c.h.b16 %v1730
    %v2009 = vunpack.c.l.b16 %v1731
    %v2010 = vunpack.c.h.b16 %v1731
    %v2011 = vunpack.c.l.b16 %v1732
    %v2012 = vunpack.c.h.b16 %v1732
    %v2013 = vunpack.c.l.b16 %v1733
    %v2014 = vunpack.c.h.b16 %v1733
    %v2015 = vunpack.c.l.b16 %v1734
    %v2016 = vunpack.c.h.b16 %v1734
    %v2017 = vunpack.c.l.b16 %v1735
    %v2018 = vunpack.c.h.b16 %v1735
    %v2019 = vunpack.c.l.b16 %v1736
    %v2020 = vunpack.c.h.b16 %v1736
    %v2021 = vunpack.c.l.b16 %v1737
    %v2022 = vunpack.c.h.b16 %v1737
    %v2023 = vunpack.c.l.b16 %v1738
    %v2024 = vunpack.c.h.b16 %v1738
    %v2025 = vunpack.c.l.b16 %v1739
    %v2026 = vunpack.c.h.b16 %v1739
    %v2027 = vunpack.c.l.b16 %v1740
    %v2028 = vunpack.c.h.b16 %v1740
    %v2029 = vunpack.c.l.b16 %v1741
    %v2030 = vunpack.c.h.b16 %v1741
    %v2031 = vunpack.c.l.b16 %v1742
    %v2032 = vunpack.c.h.b16 %v1742
    %v2033 = vunpack.c.l.b16 %v1743
    %v2034 = vunpack.c.h.b16 %v1743
    %v2035 = vunpack.c.l.b16 %v1744
    %v2036 = vunpack.c.h.b16 %v1744
    %v2037 = vunpack.c.l.b16 %v1745
    %v2038 = vunpack.c.h.b16 %v1745
    %v2039 = vunpack.c.l.b16 %v1746
    %v2040 = vunpack.c.h.b16 %v1746
    %v2041 = vunpack.c.l.b16 %v1747
    %v2042 = vunpack.c.h.b16 %v1747
    %v2043 = vunpack.c.l.b16 %v1748
    %v2044 = vunpack.c.h.b16 %v1748
    %v2045 = vunpack.c.l.b16 %v1749
    %v2046 = vunpack.c.h.b16 %v1749
    %v2047 = vunpack.c.l.b16 %v1750
    %v2048 = vunpack.c.h.b16 %v1750
    %v2049 = vunpack.c.l.b16 %v1751
    %v2050 = vunpack.c.h.b16 %v1751
    %v2051 = vunpack.c.l.b16 %v1752
    %v2052 = vunpack.c.h.b16 %v1752
    %v2053 = vunpack.c.l.b16 %v1753
    %v2054 = vunpack.c.h.b16 %v1753
    %v2055 = vunpack.c.l.b16 %v1754
    %v2056 = vunpack.c.h.b16 %v1754
    %v2057 = vunpack.c.l.b16 %v1755
    %v2058 = vunpack.c.h.b16 %v1755
    %v2059 = vunpack.c.l.b16 %v1756
    %v2060 = vunpack.c.h.b16 %v1756
    %v2061 = vunpack.c.l.b16 %v1757
    %v2062 = vunpack.c.h.b16 %v1757
    %v2063 = vunpack.c.l.b16 %v1758
    %v2064 = vunpack.c.h.b16 %v1758
    %v2065 = vunpack.c.l.b16 %v1759
    %v2066 = vunpack.c.h.b16 %v1759
    %v2067 = vunpack.c.l.b16 %v1760
    %v2068 = vunpack.c.h.b16 %v1760
    %v2069 = vunpack.c.l.b16 %v1761
    %v2070 = vunpack.c.h.b16 %v1761
    %v2071 = vunpack.c.l.b16 %v1762
    %v2072 = vunpack.c.h.b16 %v1762
    %v2073 = vunpack.c.l.b16 %v1763
    %v2074 = vunpack.c.h.b16 %v1763
    %v2075 = vunpack.c.l.b16 %v1764
    %v2076 = vunpack.c.h.b16 %v1764
    %v2077 = vunpack.c.l.b16 %v1765
    %v2078 = vunpack.c.h.b16 %v1765
    %v2079 = vunpack.c.l.b16 %v1766
    %v2080 = vunpack.c.h.b16 %v1766
    %v2081 = vunpack.c.l.b16 %v1767
    %v2082 = vunpack.c.h.b16 %v1767
    %v2083 = vunpack.c.l.b16 %v1768
    %v2084 = vunpack.c.h.b16 %v1768
    %v2085 = vunpack.c.l.b16 %v1769
    %v2086 = vunpack.c.h.b16 %v1769
    %v2087 = vunpack.c.l.b16 %v1770
    %v2088 = vunpack.c.h.b16 %v1770
    %v2089 = vunpack.c.l.b16 %v1771
    %v2090 = vunpack.c.h.b16 %v1771
    %v2091 = vunpack.c.l.b16 %v1772
    %v2092 = vunpack.c.h.b16 %v1772
    %v2093 = vunpack.c.l.b16 %v1773
    %v2094 = vunpack.c.h.b16 %v1773
    %v2095 = vunpack.c.l.b16 %v1774
    %v2096 = vunpack.c.h.b16 %v1774
    %v2097 = vunpack.c.l.b16 %v1775
    %v2098 = vunpack.c.h.b16 %v1775
    %v2099 = vunpack.c.l.b16 %v1776
    %v2100 = vunpack.c.h.b16 %v1776
    %v2101 = vunpack.c.l.b16 %v1777
    %v2102 = vunpack.c.h.b16 %v1777
    %v2103 = vunpack.c.l.b16 %v1778
    %v2104 = vunpack.c.h.b16 %v1778
    %v2105 = vunpack.c.l.b16 %v1779
    %v2106 = vunpack.c.h.b16 %v1779
    %v2107 = vunpack.c.l.b16 %v1780
    %v2108 = vunpack.c.h.b16 %v1780
    %v2109 = vunpack.c.l.b16 %v1781
    %v2110 = vunpack.c.h.b16 %v1781
    %v2111 = vunpack.c.l.b16 %v1782
    %v2112 = vunpack.c.h.b16 %v1782
    %v2113 = vunpack.c.l.b16 %v1783
    %v2114 = vunpack.c.h.b16 %v1783
    %v2115 = vunpack.c.l.b16 %v1784
    %v2116 = vunpack.c.h.b16 %v1784
    %v2117 = vunpack.c.l.b16 %v1785
    %v2118 = vunpack.c.h.b16 %v1785
    %v2119 = vunpack.c.l.b16 %v1786
    %v2120 = vunpack.c.h.b16 %v1786
    %v2121 = vunpack.c.l.b16 %v1787
    %v2122 = vunpack.c.h.b16 %v1787
    %v2123 = vunpack.c.l.b16 %v1788
    %v2124 = vunpack.c.h.b16 %v1788
    %v2125 = vunpack.c.l.b16 %v1789
    %v2126 = vunpack.c.h.b16 %v1789
    %v2127 = vunpack.c.l.b16 %v1790
    %v2128 = vunpack.c.h.b16 %v1790
    %v2129 = vunpack.c.l.b16 %v1791
    %v2130 = vunpack.c.h.b16 %v1791
    %v2131 = vunpack.c.l.b16 %v1792
    %v2132 = vunpack.c.h.b16 %v1792
    %v2133 = vunpack.c.l.b16 %v1793
    %v2134 = vunpack.c.h.b16 %v1793
    %v2135 = vunpack.c.l.b16 %v1794
    %v2136 = vunpack.c.h.b16 %v1794
    %v2137 = vunpack.c.l.b16 %v1795
    %v2138 = vunpack.c.h.b16 %v1795
    %v2139 = vunpack.c.l.b16 %v1796
    %v2140 = vunpack.c.h.b16 %v1796
    %v2141 = vunpack.c.l.b16 %v1797
    %v2142 = vunpack.c.h.b16 %v1797
    %v2143 = vunpack.c.l.b16 %v1798
    %v2144 = vunpack.c.h.b16 %v1798
    %v2145 = vunpack.c.l.b16 %v1799
    %v2146 = vunpack.c.h.b16 %v1799
    %v2147 = vunpack.c.l.b16 %v1800
    %v2148 = vunpack.c.h.b16 %v1800
    %v2149 = vunpack.c.l.b16 %v1801
    %v2150 = vunpack.c.h.b16 %v1801
    %v2151 = vunpack.c.l.b16 %v1802
    %v2152 = vunpack.c.h.b16 %v1802
    %v2153 = vunpack.c.l.b16 %v1803
    %v2154 = vunpack.c.h.b16 %v1803
    %v2155 = vunpack.c.l.b16 %v1804
    %v2156 = vunpack.c.h.b16 %v1804
    %v2157 = vunpack.c.l.b16 %v1805
    %v2158 = vunpack.c.h.b16 %v1805
    %v2159 = vunpack.c.l.b16 %v1806
    %v2160 = vunpack.c.h.b16 %v1806
    %v2161 = vunpack.c.l.b16 %v1807
    %v2162 = vunpack.c.h.b16 %v1807
    %v2163 = vunpack.c.l.b16 %v1808
    %v2164 = vunpack.c.h.b16 %v1808
    %v2165 = vunpack.c.l.b16 %v1809
    %v2166 = vunpack.c.h.b16 %v1809
    %v2167 = vunpack.c.l.b16 %v1810
    %v2168 = vunpack.c.h.b16 %v1810
    %v2169 = vunpack.c.l.b16 %v1811
    %v2170 = vunpack.c.h.b16 %v1811
    %v2171 = vunpack.c.l.b16 %v1812
    %v2172 = vunpack.c.h.b16 %v1812
    %v2173 = vunpack.c.l.b16 %v1813
    %v2174 = vunpack.c.h.b16 %v1813
    %v2175 = vunpack.c.l.b16 %v1814
    %v2176 = vunpack.c.h.b16 %v1814
    %v2177 = vunpack.c.l.b16 %v1815
    %v2178 = vunpack.c.h.b16 %v1815
    %v2179 = vunpack.c.l.b16 %v1816
    %v2180 = vunpack.c.h.b16 %v1816
    %v2181 = vunpack.c.l.b16 %v1817
    %v2182 = vunpack.c.h.b16 %v1817
    %v2183 = vunpack.c.l.b16 %v1818
    %v2184 = vunpack.c.h.b16 %v1818
    %v2185 = vunpack.c.l.b16 %v1819
    %v2186 = vunpack.c.h.b16 %v1819
    %v2187 = vunpack.c.l.b16 %v1820
    %v2188 = vunpack.c.h.b16 %v1820
    %v2189 = vunpack.c.l.b16 %v1821
    %v2190 = vunpack.c.h.b16 %v1821
    %v2191 = vunpack.c.l.b16 %v1822
    %v2192 = vunpack.c.h.b16 %v1822
    %v2193 = vunpack.c.l.b16 %v1823
    %v2194 = vunpack.c.h.b16 %v1823
    %v2195 = vunpack.c.l.b16 %v1824
    %v2196 = vunpack.c.h.b16 %v1824
    %v2197 = vunpack.c.l.b16 %v1825
    %v2198 = vunpack.c.h.b16 %v1825
    %v2199 = vunpack.c.l.b16 %v1826
    %v2200 = vunpack.c.h.b16 %v1826
    %v2201 = vunpack.c.l.b16 %v1827
    %v2202 = vunpack.c.h.b16 %v1827
    %v2203 = vunpack.c.l.b16 %v1828
    %v2204 = vunpack.c.h.b16 %v1828
    %v2205 = vunpack.c.l.b16 %v1829
    %v2206 = vunpack.c.h.b16 %v1829
    %v2207 = vunpack.c.l.b16 %v1830
    %v2208 = vunpack.c.h.b16 %v1830
    %v2209 = vunpack.c.l.b16 %v1831
    %v2210 = vunpack.c.h.b16 %v1831
    %v2211 = vunpack.c.l.b16 %v1832
    %v2212 = vunpack.c.h.b16 %v1832
    %v2213 = vunpack.c.l.b16 %v1833
    %v2214 = vunpack.c.h.b16 %v1833
    %v2215 = vunpack.c.l.b16 %v1834
    %v2216 = vunpack.c.h.b16 %v1834
    %v2217 = vunpack.c.l.b16 %v1835
    %v2218 = vunpack.c.h.b16 %v1835
    %v2219 = vunpack.c.l.b16 %v1836
    %v2220 = vunpack.c.h.b16 %v1836
    %v2221 = vunpack.c.l.b16 %v1837
    %v2222 = vunpack.c.h.b16 %v1837
    %v2223 = vunpack.c.l.b16 %v1838
    %v2224 = vunpack.c.h.b16 %v1838
    %v2225 = vunpack.c.l.b16 %v1839
    %v2226 = vunpack.c.h.b16 %v1839
    %v2227 = vunpack.c.l.b16 %v1840
    %v2228 = vunpack.c.h.b16 %v1840
    %v2229 = vunpack.c.l.b16 %v1841
    %v2230 = vunpack.c.h.b16 %v1841
    %v2231 = vunpack.c.l.b16 %v1842
    %v2232 = vunpack.c.h.b16 %v1842
    %v2233 = vunpack.c.l.b16 %v1843
    %v2234 = vunpack.c.h.b16 %v1843
    %v2235 = vunpack.c.l.b16 %v1844
    %v2236 = vunpack.c.h.b16 %v1844
    %v2237 = vunpack.c.l.b16 %v1845
    %v2238 = vunpack.c.h.b16 %v1845
    %v2239 = vunpack.c.l.b16 %v1846
    %v2240 = vunpack.c.h.b16 %v1846
    %v2241 = vpack.c.b16 %v1989, %v1985
    %v2242 = vpack.c.b16 %v1990, %v1986
    %v2243 = vpack.c.b16 %v1991, %v1987
    %v2244 = vpack.c.b16 %v1992, %v1988
    %v2245 = vpack.c.b16 %v1997, %v1993
    %v2246 = vpack.c.b16 %v1998, %v1994
    %v2247 = vpack.c.b16 %v1999, %v1995
    %v2248 = vpack.c.b16 %v2000, %v1996
    %v2249 = vpack.c.b16 %v2005, %v2001
    %v2250 = vpack.c.b16 %v2006, %v2002
    %v2251 = vpack.c.b16 %v2007, %v2003
    %v2252 = vpack.c.b16 %v2008, %v2004
    %v2253 = vpack.c.b16 %v2013, %v2009
    %v2254 = vpack.c.b16 %v2014, %v2010
    %v2255 = vpack.c.b16 %v2015, %v2011
    %v2256 = vpack.c.b16 %v2016, %v2012
    %v2257 = vpack.c.b16 %v2021, %v2017
    %v2258 = vpack.c.b16 %v2022, %v2018
    %v2259 = vpack.c.b16 %v2023, %v2019
    %v2260 = vpack.c.b16 %v2024, %v2020
    %v2261 = vpack.c.b16 %v2029, %v2025
    %v2262 = vpack.c.b16 %v2030, %v2026
    %v2263 = vpack.c.b16 %v2031, %v2027
    %v2264 = vpack.c.b16 %v2032, %v2028
    %v2265 = vpack.c.b16 %v2037, %v2033
    %v2266 = vpack.c.b16 %v2038, %v2034
    %v2267 = vpack.c.b16 %v2039, %v2035
    %v2268 = vpack.c.b16 %v2040, %v2036
    %v2269 = vpack.c.b16 %v2045, %v2041
    %v2270 = vpack.c.b16 %v2046, %v2042
    %v2271 = vpack.c.b16 %v2047, %v2043
    %v2272 = vpack.c.b16 %v2048, %v2044
    %v2273 = vpack.c.b16 %v2053, %v2049
    %v2274 = vpack.c.b16 %v2054, %v2050
    %v2275 = vpack.c.b16 %v2055, %v2051
    %v2276 = vpack.c.b16 %v2056, %v2052
    %v2277 = vpack.c.b16 %v2061, %v2057
    %v2278 = vpack.c.b16 %v2062, %v2058
    %v2279 = vpack.c.b16 %v2063, %v2059
    %v2280 = vpack.c.b16 %v2064, %v2060
    %v2281 = vpack.c.b16 %v2069, %v2065
    %v2282 = vpack.c.b16 %v2070, %v2066
    %v2283 = vpack.c.b16 %v2071, %v2067
    %v2284 = vpack.c.b16 %v2072, %v2068
    %v2285 = vpack.c.b16 %v2077, %v2073
    %v2286 = vpack.c.b16 %v2078, %v2074
    %v2287 = vpack.c.b16 %v2079, %v2075
    %v2288 = vpack.c.b16 %v2080, %v2076
    %v2289 = vpack.c.b16 %v2085, %v2081
    %v2290 = vpack.c.b16 %v2086, %v2082
    %v2291 = vpack.c.b16 %v2087, %v2083
    %v2292 = vpack.c.b16 %v2088, %v2084
    %v2293 = vpack.c.b16 %v2093, %v2089
    %v2294 = vpack.c.b16 %v2094, %v2090
    %v2295 = vpack.c.b16 %v2095, %v2091
    %v2296 = vpack.c.b16 %v2096, %v2092
    %v2297 = vpack.c.b16 %v2101, %v2097
    %v2298 = vpack.c.b16 %v2102, %v2098
    %v2299 = vpack.c.b16 %v2103, %v2099
    %v2300 = vpack.c.b16 %v2104, %v2100
    %v2301 = vpack.c.b16 %v2109, %v2105
    %v2302 = vpack.c.b16 %v2110, %v2106
    %v2303 = vpack.c.b16 %v2111, %v2107
    %v2304 = vpack.c.b16 %v2112, %v2108
    %v2305 = vpack.c.b16 %v2117, %v2113
    %v2306 = vpack.c.b16 %v2118, %v2114
    %v2307 = vpack.c.b16 %v2119, %v2115
    %v2308 = vpack.c.b16 %v2120, %v2116
    %v2309 = vpack.c.b16 %v2125, %v2121
    %v2310 = vpack.c.b16 %v2126, %v2122
    %v2311 = vpack.c.b16 %v2127, %v2123
    %v2312 = vpack.c.b16 %v2128, %v2124
    %v2313 = vpack.c.b16 %v2133, %v2129
    %v2314 = vpack.c.b16 %v2134, %v2130
    %v2315 = vpack.c.b16 %v2135, %v2131
    %v2316 = vpack.c.b16 %v2136, %v2132
    %v2317 = vpack.c.b16 %v2141, %v2137
    %v2318 = vpack.c.b16 %v2142, %v2138
    %v2319 = vpack.c.b16 %v2143, %v2139
    %v2320 = vpack.c.b16 %v2144, %v2140
    %v2321 = vpack.c.b16 %v2149, %v2145
    %v2322 = vpack.c.b16 %v2150, %v2146
    %v2323 = vpack.c.b16 %v2151, %v2147
    %v2324 = vpack.c.b16 %v2152, %v2148
    %v2325 = vpack.c.b16 %v2157, %v2153
    %v2326 = vpack.c.b16 %v2158, %v2154
    %v2327 = vpack.c.b16 %v2159, %v2155
    %v2328 = vpack.c.b16 %v2160, %v2156
    %v2329 = vpack.c.b16 %v2165, %v2161
    %v2330 = vpack.c.b16 %v2166, %v2162
    %v2331 = vpack.c.b16 %v2167, %v2163
    %v2332 = vpack.c.b16 %v2168, %v2164
    %v2333 = vpack.c.b16 %v2173, %v2169
    %v2334 = vpack.c.b16 %v2174, %v2170
    %v2335 = vpack.c.b16 %v2175, %v2171
    %v2336 = vpack.c.b16 %v2176, %v2172
    %v2337 = vpack.c.b16 %v2181, %v2177
    %v2338 = vpack.c.b16 %v2182, %v2178
    %v2339 = vpack.c.b16 %v2183, %v2179
    %v2340 = vpack.c.b16 %v2184, %v2180
    %v2341 = vpack.c.b16 %v2189, %v2185
    %v2342 = vpack.c.b16 %v2190, %v2186
    %v2343 = vpack.c.b16 %v2191, %v2187
    %v2344 = vpack.c.b16 %v2192, %v2188
    %v2345 = vpack.c.b16 %v2197, %v2193
    %v2346 = vpack.c.b16 %v2198, %v2194
    %v2347 = vpack.c.b16 %v2199, %v2195
    %v2348 = vpack.c.b16 %v2200, %v2196
    %v2349 = vpack.c.b16 %v2205, %v2201
    %v2350 = vpack.c.b16 %v2206, %v2202
    %v2351 = vpack.c.b16 %v2207, %v2203
    %v2352 = vpack.c.b16 %v2208, %v2204
    %v2353 = vpack.c.b16 %v2213, %v2209
    %v2354 = vpack.c.b16 %v2214, %v2210
    %v2355 = vpack.c.b16 %v2215, %v2211
    %v2356 = vpack.c.b16 %v2216, %v2212
    %v2357 = vpack.c.b16 %v2221, %v2217
    %v2358 = vpack.c.b16 %v2222, %v2218
    %v2359 = vpack.c.b16 %v2223, %v2219
    %v2360 = vpack.c.b16 %v2224, %v2220
    %v2361 = vpack.c.b16 %v2229, %v2225
    %v2362 = vpack.c.b16 %v2230, %v2226
    %v2363 = vpack.c.b16 %v2231, %v2227
    %v2364 = vpack.c.b16 %v2232, %v2228
    %v2365 = vpack.c.b16 %v2237, %v2233
    %v2366 = vpack.c.b16 %v2238, %v2234
    %v2367 = vpack.c.b16 %v2239, %v2235
    %v2368 = vpack.c.b16 %v2240, %v2236
    %2497 = vmatpush.bf16.msra.mxu0 %v2269
    %2498 = vmatpush.bf16.msra.mxu0 %v2265
    %2499 = vmatpush.bf16.msra.mxu0 %v2261
    %2500 = vmatpush.bf16.msra.mxu0 %v2257
    %2501 = vmatpush.bf16.msra.mxu0 %v2253
    %2502 = vmatpush.bf16.msra.mxu0 %v2249
    %2503 = vmatpush.bf16.msra.mxu0 %v2245
    %2504 = vmatpush.bf16.msra.mxu0 %v2241
    %2505 = vmatmul.bf16.gmra.mxu0 %v1715
    %v2506 = vpop.f32.mrf.mxu0
    %v2507 = vadd.f32 %v1849, %v2506
    %v2508 = vpop.f32.mrf.mxu0
    %2509 = vdwg.mxu0
    %2510 = vmatpush.bf16.msra.mxu0 %v2301
    %2511 = vmatpush.bf16.msra.mxu0 %v2297
    %2512 = vmatpush.bf16.msra.mxu0 %v2293
    %2513 = vmatpush.bf16.msra.mxu0 %v2289
    %2514 = vmatpush.bf16.msra.mxu0 %v2285
    %2515 = vmatpush.bf16.msra.mxu0 %v2281
    %2516 = vmatpush.bf16.msra.mxu0 %v2277
    %2517 = vmatpush.bf16.msra.mxu0 %v2273
    %2518 = vmatmul.bf16.gmra.mxu0 %v1716
    %v2519 = vpop.f32.mrf.mxu0
    %v2520 = vadd.f32 %v2507, %v2519
    %v2521 = vpop.f32.mrf.mxu0
    %2522 = vdwg.mxu0
    %2523 = vmatpush.bf16.msra.mxu0 %v2333
    %2524 = vmatpush.bf16.msra.mxu0 %v2329
    %2525 = vmatpush.bf16.msra.mxu0 %v2325
    %2526 = vmatpush.bf16.msra.mxu0 %v2321
    %2527 = vmatpush.bf16.msra.mxu0 %v2317
    %2528 = vmatpush.bf16.msra.mxu0 %v2313
    %2529 = vmatpush.bf16.msra.mxu0 %v2309
    %2530 = vmatpush.bf16.msra.mxu0 %v2305
    %2531 = vmatmul.bf16.gmra.mxu0 %v1717
    %v2532 = vpop.f32.mrf.mxu0
    %v2533 = vadd.f32 %v2520, %v2532
    %v2534 = vpop.f32.mrf.mxu0
    %2535 = vdwg.mxu0
    %2536 = vmatpush.bf16.msra.mxu0 %v2365
    %2537 = vmatpush.bf16.msra.mxu0 %v2361
    %2538 = vmatpush.bf16.msra.mxu0 %v2357
    %2539 = vmatpush.bf16.msra.mxu0 %v2353
    %2540 = vmatpush.bf16.msra.mxu0 %v2349
    %2541 = vmatpush.bf16.msra.mxu0 %v2345
    %2542 = vmatpush.bf16.msra.mxu0 %v2341
    %2543 = vmatpush.bf16.msra.mxu0 %v2337
    %2544 = vmatmul.bf16.gmra.mxu0 %v1718
    %v2545 = vpop.f32.mrf.mxu0
    %v2546 = vadd.f32 %v2533, %v2545
    %v2547 = vpop.f32.mrf.mxu0
    %2548 = vdwg.mxu0
    %2549 = vmatpush.bf16.msra.mxu0 %v2270
    %2550 = vmatpush.bf16.msra.mxu0 %v2266
    %2551 = vmatpush.bf16.msra.mxu0 %v2262
    %2552 = vmatpush.bf16.msra.mxu0 %v2258
    %2553 = vmatpush.bf16.msra.mxu0 %v2254
    %2554 = vmatpush.bf16.msra.mxu0 %v2250
    %2555 = vmatpush.bf16.msra.mxu0 %v2246
    %2556 = vmatpush.bf16.msra.mxu0 %v2242
    %2557 = vmatmul.bf16.gmra.mxu0 %v1715
    %v2558 = vpop.f32.mrf.mxu0
    %v2559 = vadd.f32 %v1850, %v2558
    %v2560 = vpop.f32.mrf.mxu0
    %2561 = vdwg.mxu0
    %2562 = vmatpush.bf16.msra.mxu0 %v2302
    %2563 = vmatpush.bf16.msra.mxu0 %v2298
    %2564 = vmatpush.bf16.msra.mxu0 %v2294
    %2565 = vmatpush.bf16.msra.mxu0 %v2290
    %2566 = vmatpush.bf16.msra.mxu0 %v2286
    %2567 = vmatpush.bf16.msra.mxu0 %v2282
    %2568 = vmatpush.bf16.msra.mxu0 %v2278
    %2569 = vmatpush.bf16.msra.mxu0 %v2274
    %2570 = vmatmul.bf16.gmra.mxu0 %v1716
    %v2571 = vpop.f32.mrf.mxu0
    %v2572 = vadd.f32 %v2559, %v2571
    %v2573 = vpop.f32.mrf.mxu0
    %2574 = vdwg.mxu0
    %2575 = vmatpush.bf16.msra.mxu0 %v2334
    %2576 = vmatpush.bf16.msra.mxu0 %v2330
    %2577 = vmatpush.bf16.msra.mxu0 %v2326
    %2578 = vmatpush.bf16.msra.mxu0 %v2322
    %2579 = vmatpush.bf16.msra.mxu0 %v2318
    %2580 = vmatpush.bf16.msra.mxu0 %v2314
    %2581 = vmatpush.bf16.msra.mxu0 %v2310
    %2582 = vmatpush.bf16.msra.mxu0 %v2306
    %2583 = vmatmul.bf16.gmra.mxu0 %v1717
    %v2584 = vpop.f32.mrf.mxu0
    %v2585 = vadd.f32 %v2572, %v2584
    %v2586 = vpop.f32.mrf.mxu0
    %2587 = vdwg.mxu0
    %2588 = vmatpush.bf16.msra.mxu0 %v2366
    %2589 = vmatpush.bf16.msra.mxu0 %v2362
    %2590 = vmatpush.bf16.msra.mxu0 %v2358
    %2591 = vmatpush.bf16.msra.mxu0 %v2354
    %2592 = vmatpush.bf16.msra.mxu0 %v2350
    %2593 = vmatpush.bf16.msra.mxu0 %v2346
    %2594 = vmatpush.bf16.msra.mxu0 %v2342
    %2595 = vmatpush.bf16.msra.mxu0 %v2338
    %2596 = vmatmul.bf16.gmra.mxu0 %v1718
    %v2597 = vpop.f32.mrf.mxu0
    %v2598 = vadd.f32 %v2585, %v2597
    %v2599 = vpop.f32.mrf.mxu0
    %2600 = vdwg.mxu0
    %2601 = vmatpush.bf16.msra.mxu0 %v2271
    %2602 = vmatpush.bf16.msra.mxu0 %v2267
    %2603 = vmatpush.bf16.msra.mxu0 %v2263
    %2604 = vmatpush.bf16.msra.mxu0 %v2259
    %2605 = vmatpush.bf16.msra.mxu0 %v2255
    %2606 = vmatpush.bf16.msra.mxu0 %v2251
    %2607 = vmatpush.bf16.msra.mxu0 %v2247
    %2608 = vmatpush.bf16.msra.mxu0 %v2243
    %2609 = vmatmul.bf16.gmra.mxu0 %v1715
    %v2610 = vpop.f32.mrf.mxu0
    %v2611 = vadd.f32 %v1851, %v2610
    %v2612 = vpop.f32.mrf.mxu0
    %2613 = vdwg.mxu0
    %2614 = vmatpush.bf16.msra.mxu0 %v2303
    %2615 = vmatpush.bf16.msra.mxu0 %v2299
    %2616 = vmatpush.bf16.msra.mxu0 %v2295
    %2617 = vmatpush.bf16.msra.mxu0 %v2291
    %2618 = vmatpush.bf16.msra.mxu0 %v2287
    %2619 = vmatpush.bf16.msra.mxu0 %v2283
    %2620 = vmatpush.bf16.msra.mxu0 %v2279
    %2621 = vmatpush.bf16.msra.mxu0 %v2275
    %2622 = vmatmul.bf16.gmra.mxu0 %v1716
    %v2623 = vpop.f32.mrf.mxu0
    %v2624 = vadd.f32 %v2611, %v2623
    %v2625 = vpop.f32.mrf.mxu0
    %2626 = vdwg.mxu0
    %2627 = vmatpush.bf16.msra.mxu0 %v2335
    %2628 = vmatpush.bf16.msra.mxu0 %v2331
    %2629 = vmatpush.bf16.msra.mxu0 %v2327
    %2630 = vmatpush.bf16.msra.mxu0 %v2323
    %2631 = vmatpush.bf16.msra.mxu0 %v2319
    %2632 = vmatpush.bf16.msra.mxu0 %v2315
    %2633 = vmatpush.bf16.msra.mxu0 %v2311
    %2634 = vmatpush.bf16.msra.mxu0 %v2307
    %2635 = vmatmul.bf16.gmra.mxu0 %v1717
    %v2636 = vpop.f32.mrf.mxu0
    %v2637 = vadd.f32 %v2624, %v2636
    %v2638 = vpop.f32.mrf.mxu0
    %2639 = vdwg.mxu0
    %2640 = vmatpush.bf16.msra.mxu0 %v2367
    %2641 = vmatpush.bf16.msra.mxu0 %v2363
    %2642 = vmatpush.bf16.msra.mxu0 %v2359
    %2643 = vmatpush.bf16.msra.mxu0 %v2355
    %2644 = vmatpush.bf16.msra.mxu0 %v2351
    %2645 = vmatpush.bf16.msra.mxu0 %v2347
    %2646 = vmatpush.bf16.msra.mxu0 %v2343
    %2647 = vmatpush.bf16.msra.mxu0 %v2339
    %2648 = vmatmul.bf16.gmra.mxu0 %v1718
    %v2649 = vpop.f32.mrf.mxu0
    %v2650 = vadd.f32 %v2637, %v2649
    %v2651 = vpop.f32.mrf.mxu0
    %2652 = vdwg.mxu0
    %2653 = vmatpush.bf16.msra.mxu0 %v2272
    %2654 = vmatpush.bf16.msra.mxu0 %v2268
    %2655 = vmatpush.bf16.msra.mxu0 %v2264
    %2656 = vmatpush.bf16.msra.mxu0 %v2260
    %2657 = vmatpush.bf16.msra.mxu0 %v2256
    %2658 = vmatpush.bf16.msra.mxu0 %v2252
    %2659 = vmatpush.bf16.msra.mxu0 %v2248
    %2660 = vmatpush.bf16.msra.mxu0 %v2244
    %2661 = vmatmul.bf16.gmra.mxu0 %v1715
    %v2662 = vpop.f32.mrf.mxu0
    %v2663 = vadd.f32 %v1852, %v2662
    %v2664 = vpop.f32.mrf.mxu0
    %2665 = vdwg.mxu0
    %2666 = vmatpush.bf16.msra.mxu0 %v2304
    %2667 = vmatpush.bf16.msra.mxu0 %v2300
    %2668 = vmatpush.bf16.msra.mxu0 %v2296
    %2669 = vmatpush.bf16.msra.mxu0 %v2292
    %2670 = vmatpush.bf16.msra.mxu0 %v2288
    %2671 = vmatpush.bf16.msra.mxu0 %v2284
    %2672 = vmatpush.bf16.msra.mxu0 %v2280
    %2673 = vmatpush.bf16.msra.mxu0 %v2276
    %2674 = vmatmul.bf16.gmra.mxu0 %v1716
    %v2675 = vpop.f32.mrf.mxu0
    %v2676 = vadd.f32 %v2663, %v2675
    %v2677 = vpop.f32.mrf.mxu0
    %2678 = vdwg.mxu0
    %2679 = vmatpush.bf16.msra.mxu0 %v2336
    %2680 = vmatpush.bf16.msra.mxu0 %v2332
    %2681 = vmatpush.bf16.msra.mxu0 %v2328
    %2682 = vmatpush.bf16.msra.mxu0 %v2324
    %2683 = vmatpush.bf16.msra.mxu0 %v2320
    %2684 = vmatpush.bf16.msra.mxu0 %v2316
    %2685 = vmatpush.bf16.msra.mxu0 %v2312
    %2686 = vmatpush.bf16.msra.mxu0 %v2308
    %2687 = vmatmul.bf16.gmra.mxu0 %v1717
    %v2688 = vpop.f32.mrf.mxu0
    %v2689 = vadd.f32 %v2676, %v2688
    %v2690 = vpop.f32.mrf.mxu0
    %2691 = vdwg.mxu0
    %2692 = vmatpush.bf16.msra.mxu0 %v2368
    %2693 = vmatpush.bf16.msra.mxu0 %v2364
    %2694 = vmatpush.bf16.msra.mxu0 %v2360
    %2695 = vmatpush.bf16.msra.mxu0 %v2356
    %2696 = vmatpush.bf16.msra.mxu0 %v2352
    %2697 = vmatpush.bf16.msra.mxu0 %v2348
    %2698 = vmatpush.bf16.msra.mxu0 %v2344
    %2699 = vmatpush.bf16.msra.mxu0 %v2340
    %2700 = vmatmul.bf16.gmra.mxu0 %v1718
    %v2701 = vpop.f32.mrf.mxu0
    %v2702 = vadd.f32 %v2689, %v2701
    %v2703 = vpop.f32.mrf.mxu0
    %2704 = vdwg.mxu0
    %v2705 = vmax.f32 %v2546, 0.0
    %v2706 = vmax.f32 %v2598, 0.0
    %v2707 = vmax.f32 %v2650, 0.0
    %v2708 = vmax.f32 %v2702, 0.0
    %v2709 = vpack.c.bf16 %v2705, %v2705
    %v2710 = vpack.c.bf16 %v2706, %v2706
    %v2711 = vpack.c.bf16 %v2707, %v2707
    %v2712 = vpack.c.bf16 %v2708, %v2708
    %v2713 = vld [vmem:[#allocation11] sm:$0xff]
    %v2714 = vld [vmem:[#allocation11 + $0x8] sm:$0xff]
    %v2715 = vld [vmem:[#allocation11 + $0x10] sm:$0xff]
    %v2716 = vld [vmem:[#allocation11 + $0x18] sm:$0xf]
    %v2717 = vld [vmem:[#allocation11 + $0x1c] sm:$0xff]
    %v2718 = vld [vmem:[#allocation11 + $0x24] sm:$0xff]
    %v2719 = vld [vmem:[#allocation11 + $0x2c] sm:$0xff]
    %v2720 = vld [vmem:[#allocation11 + $0x34] sm:$0xf]
    %v2721 = vld [vmem:[#allocation11 + $0x38] sm:$0xff]
    %v2722 = vld [vmem:[#allocation11 + $0x40] sm:$0xff]
    %v2723 = vld [vmem:[#allocation11 + $0x48] sm:$0xff]
    %v2724 = vld [vmem:[#allocation11 + $0x50] sm:$0xf]
    %v2725 = vld [vmem:[#allocation11 + $0x54] sm:$0xff]
    %v2726 = vld [vmem:[#allocation11 + $0x5c] sm:$0xff]
    %v2727 = vld [vmem:[#allocation11 + $0x64] sm:$0xff]
    %v2728 = vld [vmem:[#allocation11 + $0x6c] sm:$0xf]
    %v2729 = vld [vmem:[#allocation11 + $0x70] sm:$0xff]
    %v2730 = vld [vmem:[#allocation11 + $0x78] sm:$0xff]
    %v2731 = vld [vmem:[#allocation11 + $0x80] sm:$0xff]
    %v2732 = vld [vmem:[#allocation11 + $0x88] sm:$0xf]
    %v2733 = vld [vmem:[#allocation11 + $0x8c] sm:$0xff]
    %v2734 = vld [vmem:[#allocation11 + $0x94] sm:$0xff]
    %v2735 = vld [vmem:[#allocation11 + $0x9c] sm:$0xff]
    %v2736 = vld [vmem:[#allocation11 + $0xa4] sm:$0xf]
    %v2737 = vld [vmem:[#allocation11 + $0xa8] sm:$0xff]
    %v2738 = vld [vmem:[#allocation11 + $0xb0] sm:$0xff]
    %v2739 = vld [vmem:[#allocation11 + $0xb8] sm:$0xff]
    %v2740 = vld [vmem:[#allocation11 + $0xc0] sm:$0xf]
    %v2741 = vld [vmem:[#allocation11 + $0xc4] sm:$0xff]
    %v2742 = vld [vmem:[#allocation11 + $0xcc] sm:$0xff]
    %v2743 = vld [vmem:[#allocation11 + $0xd4] sm:$0xff]
    %v2744 = vld [vmem:[#allocation11 + $0xdc] sm:$0xf]
    %v2745 = vld [vmem:[#allocation11 + $0xe0] sm:$0xff]
    %v2746 = vld [vmem:[#allocation11 + $0xe8] sm:$0xff]
    %v2747 = vld [vmem:[#allocation11 + $0xf0] sm:$0xff]
    %v2748 = vld [vmem:[#allocation11 + $0xf8] sm:$0xf]
    %v2749 = vld [vmem:[#allocation11 + $0xfc] sm:$0xff]
    %v2750 = vld [vmem:[#allocation11 + $0x104] sm:$0xff]
    %v2751 = vld [vmem:[#allocation11 + $0x10c] sm:$0xff]
    %v2752 = vld [vmem:[#allocation11 + $0x114] sm:$0xf]
    %v2753 = vld [vmem:[#allocation11 + $0x118] sm:$0xff]
    %v2754 = vld [vmem:[#allocation11 + $0x120] sm:$0xff]
    %v2755 = vld [vmem:[#allocation11 + $0x128] sm:$0xff]
    %v2756 = vld [vmem:[#allocation11 + $0x130] sm:$0xf]
    %v2757 = vld [vmem:[#allocation11 + $0x134] sm:$0xff]
    %v2758 = vld [vmem:[#allocation11 + $0x13c] sm:$0xff]
    %v2759 = vld [vmem:[#allocation11 + $0x144] sm:$0xff]
    %v2760 = vld [vmem:[#allocation11 + $0x14c] sm:$0xf]
    %v2761 = vld [vmem:[#allocation11 + $0x150] sm:$0xff]
    %v2762 = vld [vmem:[#allocation11 + $0x158] sm:$0xff]
    %v2763 = vld [vmem:[#allocation11 + $0x160] sm:$0xff]
    %v2764 = vld [vmem:[#allocation11 + $0x168] sm:$0xf]
    %v2765 = vld [vmem:[#allocation11 + $0x16c] sm:$0xff]
    %v2766 = vld [vmem:[#allocation11 + $0x174] sm:$0xff]
    %v2767 = vld [vmem:[#allocation11 + $0x17c] sm:$0xff]
    %v2768 = vld [vmem:[#allocation11 + $0x184] sm:$0xf]
    %v2769 = vld [vmem:[#allocation11 + $0x188] sm:$0xff]
    %v2770 = vld [vmem:[#allocation11 + $0x190] sm:$0xff]
    %v2771 = vld [vmem:[#allocation11 + $0x198] sm:$0xff]
    %v2772 = vld [vmem:[#allocation11 + $0x1a0] sm:$0xf]
    %v2773 = vld [vmem:[#allocation11 + $0x1a4] sm:$0xff]
    %v2774 = vld [vmem:[#allocation11 + $0x1ac] sm:$0xff]
    %v2775 = vld [vmem:[#allocation11 + $0x1b4] sm:$0xff]
    %v2776 = vld [vmem:[#allocation11 + $0x1bc] sm:$0xf]
    %v2777 = vld [vmem:[#allocation11 + $0x1c0] sm:$0xff]
    %v2778 = vld [vmem:[#allocation11 + $0x1c8] sm:$0xff]
    %v2779 = vld [vmem:[#allocation11 + $0x1d0] sm:$0xff]
    %v2780 = vld [vmem:[#allocation11 + $0x1d8] sm:$0xf]
    %v2781 = vld [vmem:[#allocation11 + $0x1dc] sm:$0xff]
    %v2782 = vld [vmem:[#allocation11 + $0x1e4] sm:$0xff]
    %v2783 = vld [vmem:[#allocation11 + $0x1ec] sm:$0xff]
    %v2784 = vld [vmem:[#allocation11 + $0x1f4] sm:$0xf]
    %v2785 = vld [vmem:[#allocation11 + $0x1f8] sm:$0xff]
    %v2786 = vld [vmem:[#allocation11 + $0x200] sm:$0xff]
    %v2787 = vld [vmem:[#allocation11 + $0x208] sm:$0xff]
    %v2788 = vld [vmem:[#allocation11 + $0x210] sm:$0xf]
    %v2789 = vld [vmem:[#allocation11 + $0x214] sm:$0xff]
    %v2790 = vld [vmem:[#allocation11 + $0x21c] sm:$0xff]
    %v2791 = vld [vmem:[#allocation11 + $0x224] sm:$0xff]
    %v2792 = vld [vmem:[#allocation11 + $0x22c] sm:$0xf]
    %v2793 = vld [vmem:[#allocation11 + $0x230] sm:$0xff]
    %v2794 = vld [vmem:[#allocation11 + $0x238] sm:$0xff]
    %v2795 = vld [vmem:[#allocation11 + $0x240] sm:$0xff]
    %v2796 = vld [vmem:[#allocation11 + $0x248] sm:$0xf]
    %v2797 = vld [vmem:[#allocation11 + $0x24c] sm:$0xff]
    %v2798 = vld [vmem:[#allocation11 + $0x254] sm:$0xff]
    %v2799 = vld [vmem:[#allocation11 + $0x25c] sm:$0xff]
    %v2800 = vld [vmem:[#allocation11 + $0x264] sm:$0xf]
    %v2801 = vld [vmem:[#allocation11 + $0x268] sm:$0xff]
    %v2802 = vld [vmem:[#allocation11 + $0x270] sm:$0xff]
    %v2803 = vld [vmem:[#allocation11 + $0x278] sm:$0xff]
    %v2804 = vld [vmem:[#allocation11 + $0x280] sm:$0xf]
    %v2805 = vld [vmem:[#allocation11 + $0x284] sm:$0xff]
    %v2806 = vld [vmem:[#allocation11 + $0x28c] sm:$0xff]
    %v2807 = vld [vmem:[#allocation11 + $0x294] sm:$0xff]
    %v2808 = vld [vmem:[#allocation11 + $0x29c] sm:$0xf]
    %v2809 = vld [vmem:[#allocation11 + $0x2a0] sm:$0xff]
    %v2810 = vld [vmem:[#allocation11 + $0x2a8] sm:$0xff]
    %v2811 = vld [vmem:[#allocation11 + $0x2b0] sm:$0xff]
    %v2812 = vld [vmem:[#allocation11 + $0x2b8] sm:$0xf]
    %v2813 = vld [vmem:[#allocation11 + $0x2bc] sm:$0xff]
    %v2814 = vld [vmem:[#allocation11 + $0x2c4] sm:$0xff]
    %v2815 = vld [vmem:[#allocation11 + $0x2cc] sm:$0xff]
    %v2816 = vld [vmem:[#allocation11 + $0x2d4] sm:$0xf]
    %v2817 = vld [vmem:[#allocation11 + $0x2d8] sm:$0xff]
    %v2818 = vld [vmem:[#allocation11 + $0x2e0] sm:$0xff]
    %v2819 = vld [vmem:[#allocation11 + $0x2e8] sm:$0xff]
    %v2820 = vld [vmem:[#allocation11 + $0x2f0] sm:$0xf]
    %v2821 = vld [vmem:[#allocation11 + $0x2f4] sm:$0xff]
    %v2822 = vld [vmem:[#allocation11 + $0x2fc] sm:$0xff]
    %v2823 = vld [vmem:[#allocation11 + $0x304] sm:$0xff]
    %v2824 = vld [vmem:[#allocation11 + $0x30c] sm:$0xf]
    %v2825 = vld [vmem:[#allocation11 + $0x310] sm:$0xff]
    %v2826 = vld [vmem:[#allocation11 + $0x318] sm:$0xff]
    %v2827 = vld [vmem:[#allocation11 + $0x320] sm:$0xff]
    %v2828 = vld [vmem:[#allocation11 + $0x328] sm:$0xf]
    %v2829 = vld [vmem:[#allocation11 + $0x32c] sm:$0xff]
    %v2830 = vld [vmem:[#allocation11 + $0x334] sm:$0xff]
    %v2831 = vld [vmem:[#allocation11 + $0x33c] sm:$0xff]
    %v2832 = vld [vmem:[#allocation11 + $0x344] sm:$0xf]
    %v2833 = vld [vmem:[#allocation11 + $0x348] sm:$0xff]
    %v2834 = vld [vmem:[#allocation11 + $0x350] sm:$0xff]
    %v2835 = vld [vmem:[#allocation11 + $0x358] sm:$0xff]
    %v2836 = vld [vmem:[#allocation11 + $0x360] sm:$0xf]
    %v2837 = vld [vmem:[#allocation11 + $0x364] sm:$0xff]
    %v2838 = vld [vmem:[#allocation11 + $0x36c] sm:$0xff]
    %v2839 = vld [vmem:[#allocation11 + $0x374] sm:$0xff]
    %v2840 = vld [vmem:[#allocation11 + $0x37c] sm:$0xf]
    %v2841 = vld [vmem:[#allocation11 + $0x380] sm:$0xff]
    %v2842 = vld [vmem:[#allocation11 + $0x388] sm:$0xff]
    %v2843 = vld [vmem:[#allocation11 + $0x390] sm:$0xff]
    %v2844 = vld [vmem:[#allocation11 + $0x398] sm:$0xf]
    %v2845 = vld [vmem:[#allocation11 + $0x39c] sm:$0xff]
    %v2846 = vld [vmem:[#allocation11 + $0x3a4] sm:$0xff]
    %v2847 = vld [vmem:[#allocation11 + $0x3ac] sm:$0xff]
    %v2848 = vld [vmem:[#allocation11 + $0x3b4] sm:$0xf]
    %v2849 = vld [vmem:[#allocation11 + $0x3b8] sm:$0xff]
    %v2850 = vld [vmem:[#allocation11 + $0x3c0] sm:$0xff]
    %v2851 = vld [vmem:[#allocation11 + $0x3c8] sm:$0xff]
    %v2852 = vld [vmem:[#allocation11 + $0x3d0] sm:$0xf]
    %v2853 = vld [vmem:[#allocation11 + $0x3d4] sm:$0xff]
    %v2854 = vld [vmem:[#allocation11 + $0x3dc] sm:$0xff]
    %v2855 = vld [vmem:[#allocation11 + $0x3e4] sm:$0xff]
    %v2856 = vld [vmem:[#allocation11 + $0x3ec] sm:$0xf]
    %v2857 = vld [vmem:[#allocation11 + $0x3f0] sm:$0xff]
    %v2858 = vld [vmem:[#allocation11 + $0x3f8] sm:$0xff]
    %v2859 = vld [vmem:[#allocation11 + $0x400] sm:$0xff]
    %v2860 = vld [vmem:[#allocation11 + $0x408] sm:$0xf]
    %v2861 = vld [vmem:[#allocation11 + $0x40c] sm:$0xff]
    %v2862 = vld [vmem:[#allocation11 + $0x414] sm:$0xff]
    %v2863 = vld [vmem:[#allocation11 + $0x41c] sm:$0xff]
    %v2864 = vld [vmem:[#allocation11 + $0x424] sm:$0xf]
    %v2865 = vld [vmem:[#allocation11 + $0x428] sm:$0xff]
    %v2866 = vld [vmem:[#allocation11 + $0x430] sm:$0xff]
    %v2867 = vld [vmem:[#allocation11 + $0x438] sm:$0xff]
    %v2868 = vld [vmem:[#allocation11 + $0x440] sm:$0xf]
    %v2869 = vld [vmem:[#allocation11 + $0x444] sm:$0xff]
    %v2870 = vld [vmem:[#allocation11 + $0x44c] sm:$0xff]
    %v2871 = vld [vmem:[#allocation11 + $0x454] sm:$0xff]
    %v2872 = vld [vmem:[#allocation11 + $0x45c] sm:$0xf]
    %v2873 = vld [vmem:[#allocation11 + $0x460] sm:$0xff]
    %v2874 = vld [vmem:[#allocation11 + $0x468] sm:$0xff]
    %v2875 = vld [vmem:[#allocation11 + $0x470] sm:$0xff]
    %v2876 = vld [vmem:[#allocation11 + $0x478] sm:$0xf]
    %v2877 = vld [vmem:[#allocation11 + $0x47c] sm:$0xff]
    %v2878 = vld [vmem:[#allocation11 + $0x484] sm:$0xff]
    %v2879 = vld [vmem:[#allocation11 + $0x48c] sm:$0xff]
    %v2880 = vld [vmem:[#allocation11 + $0x494] sm:$0xf]
    %v2881 = vld [vmem:[#allocation11 + $0x498] sm:$0xff]
    %v2882 = vld [vmem:[#allocation11 + $0x4a0] sm:$0xff]
    %v2883 = vld [vmem:[#allocation11 + $0x4a8] sm:$0xff]
    %v2884 = vld [vmem:[#allocation11 + $0x4b0] sm:$0xf]
    %v2885 = vld [vmem:[#allocation11 + $0x4b4] sm:$0xff]
    %v2886 = vld [vmem:[#allocation11 + $0x4bc] sm:$0xff]
    %v2887 = vld [vmem:[#allocation11 + $0x4c4] sm:$0xff]
    %v2888 = vld [vmem:[#allocation11 + $0x4cc] sm:$0xf]
    %v2889 = vld [vmem:[#allocation11 + $0x4d0] sm:$0xff]
    %v2890 = vld [vmem:[#allocation11 + $0x4d8] sm:$0xff]
    %v2891 = vld [vmem:[#allocation11 + $0x4e0] sm:$0xff]
    %v2892 = vld [vmem:[#allocation11 + $0x4e8] sm:$0xf]
    %v2893 = vld [vmem:[#allocation11 + $0x4ec] sm:$0xff]
    %v2894 = vld [vmem:[#allocation11 + $0x4f4] sm:$0xff]
    %v2895 = vld [vmem:[#allocation11 + $0x4fc] sm:$0xff]
    %v2896 = vld [vmem:[#allocation11 + $0x504] sm:$0xf]
    %v2897 = vld [vmem:[#allocation11 + $0x508] sm:$0xff]
    %v2898 = vld [vmem:[#allocation11 + $0x510] sm:$0xff]
    %v2899 = vld [vmem:[#allocation11 + $0x518] sm:$0xff]
    %v2900 = vld [vmem:[#allocation11 + $0x520] sm:$0xf]
    %v2901 = vld [vmem:[#allocation11 + $0x524] sm:$0xff]
    %v2902 = vld [vmem:[#allocation11 + $0x52c] sm:$0xff]
    %v2903 = vld [vmem:[#allocation11 + $0x534] sm:$0xff]
    %v2904 = vld [vmem:[#allocation11 + $0x53c] sm:$0xf]
    %v2905 = vld [vmem:[#allocation11 + $0x540] sm:$0xff]
    %v2906 = vld [vmem:[#allocation11 + $0x548] sm:$0xff]
    %v2907 = vld [vmem:[#allocation11 + $0x550] sm:$0xff]
    %v2908 = vld [vmem:[#allocation11 + $0x558] sm:$0xf]
    %v2909 = vld [vmem:[#allocation11 + $0x55c] sm:$0xff]
    %v2910 = vld [vmem:[#allocation11 + $0x564] sm:$0xff]
    %v2911 = vld [vmem:[#allocation11 + $0x56c] sm:$0xff]
    %v2912 = vld [vmem:[#allocation11 + $0x574] sm:$0xf]
    %v2913 = vld [vmem:[#allocation11 + $0x578] sm:$0xff]
    %v2914 = vld [vmem:[#allocation11 + $0x580] sm:$0xff]
    %v2915 = vld [vmem:[#allocation11 + $0x588] sm:$0xff]
    %v2916 = vld [vmem:[#allocation11 + $0x590] sm:$0xf]
    %v2917 = vld [vmem:[#allocation11 + $0x594] sm:$0xff]
    %v2918 = vld [vmem:[#allocation11 + $0x59c] sm:$0xff]
    %v2919 = vld [vmem:[#allocation11 + $0x5a4] sm:$0xff]
    %v2920 = vld [vmem:[#allocation11 + $0x5ac] sm:$0xf]
    %v2921 = vld [vmem:[#allocation11 + $0x5b0] sm:$0xff]
    %v2922 = vld [vmem:[#allocation11 + $0x5b8] sm:$0xff]
    %v2923 = vld [vmem:[#allocation11 + $0x5c0] sm:$0xff]
    %v2924 = vld [vmem:[#allocation11 + $0x5c8] sm:$0xf]
    %v2925 = vld [vmem:[#allocation11 + $0x5cc] sm:$0xff]
    %v2926 = vld [vmem:[#allocation11 + $0x5d4] sm:$0xff]
    %v2927 = vld [vmem:[#allocation11 + $0x5dc] sm:$0xff]
    %v2928 = vld [vmem:[#allocation11 + $0x5e4] sm:$0xf]
    %v2929 = vld [vmem:[#allocation11 + $0x5e8] sm:$0xff]
    %v2930 = vld [vmem:[#allocation11 + $0x5f0] sm:$0xff]
    %v2931 = vld [vmem:[#allocation11 + $0x5f8] sm:$0xff]
    %v2932 = vld [vmem:[#allocation11 + $0x600] sm:$0xf]
    %v2933 = vld [vmem:[#allocation11 + $0x604] sm:$0xff]
    %v2934 = vld [vmem:[#allocation11 + $0x60c] sm:$0xff]
    %v2935 = vld [vmem:[#allocation11 + $0x614] sm:$0xff]
    %v2936 = vld [vmem:[#allocation11 + $0x61c] sm:$0xf]
    %v2937 = vld [vmem:[#allocation11 + $0x620] sm:$0xff]
    %v2938 = vld [vmem:[#allocation11 + $0x628] sm:$0xff]
    %v2939 = vld [vmem:[#allocation11 + $0x630] sm:$0xff]
    %v2940 = vld [vmem:[#allocation11 + $0x638] sm:$0xf]
    %v2941 = vld [vmem:[#allocation11 + $0x63c] sm:$0xff]
    %v2942 = vld [vmem:[#allocation11 + $0x644] sm:$0xff]
    %v2943 = vld [vmem:[#allocation11 + $0x64c] sm:$0xff]
    %v2944 = vld [vmem:[#allocation11 + $0x654] sm:$0xf]
    %v2945 = vld [vmem:[#allocation11 + $0x658] sm:$0xff]
    %v2946 = vld [vmem:[#allocation11 + $0x660] sm:$0xff]
    %v2947 = vld [vmem:[#allocation11 + $0x668] sm:$0xff]
    %v2948 = vld [vmem:[#allocation11 + $0x670] sm:$0xf]
    %v2949 = vld [vmem:[#allocation11 + $0x674] sm:$0xff]
    %v2950 = vld [vmem:[#allocation11 + $0x67c] sm:$0xff]
    %v2951 = vld [vmem:[#allocation11 + $0x684] sm:$0xff]
    %v2952 = vld [vmem:[#allocation11 + $0x68c] sm:$0xf]
    %v2953 = vld [vmem:[#allocation11 + $0x690] sm:$0xff]
    %v2954 = vld [vmem:[#allocation11 + $0x698] sm:$0xff]
    %v2955 = vld [vmem:[#allocation11 + $0x6a0] sm:$0xff]
    %v2956 = vld [vmem:[#allocation11 + $0x6a8] sm:$0xf]
    %v2957 = vld [vmem:[#allocation11 + $0x6ac] sm:$0xff]
    %v2958 = vld [vmem:[#allocation11 + $0x6b4] sm:$0xff]
    %v2959 = vld [vmem:[#allocation11 + $0x6bc] sm:$0xff]
    %v2960 = vld [vmem:[#allocation11 + $0x6c4] sm:$0xf]
    %v2961 = vld [vmem:[#allocation11 + $0x6c8] sm:$0xff]
    %v2962 = vld [vmem:[#allocation11 + $0x6d0] sm:$0xff]
    %v2963 = vld [vmem:[#allocation11 + $0x6d8] sm:$0xff]
    %v2964 = vld [vmem:[#allocation11 + $0x6e0] sm:$0xf]
    %v2965 = vld [vmem:[#allocation11 + $0x6e4] sm:$0xff]
    %v2966 = vld [vmem:[#allocation11 + $0x6ec] sm:$0xff]
    %v2967 = vld [vmem:[#allocation11 + $0x6f4] sm:$0xff]
    %v2968 = vld [vmem:[#allocation11 + $0x6fc] sm:$0xf]
    %v2969 = vld [vmem:[#allocation13] sm:$0xff]
    %v2971 = vperm.slane %v2969, 0
    %v2972 = vperm.slane %v2969, 1
    %v2973 = vperm.slane %v2969, 2
    %v2974 = vperm.slane %v2969, 3
    %v2975 = vperm.slane %v2969, 4
    %v2976 = vperm.slane %v2969, 5
    %v2977 = vperm.slane %v2969, 6
    %v3241 = vunpack.c.l.b16 %v2713
    %v3242 = vunpack.c.h.b16 %v2713
    %v3243 = vunpack.c.l.b16 %v2714
    %v3244 = vunpack.c.h.b16 %v2714
    %v3245 = vunpack.c.l.b16 %v2715
    %v3246 = vunpack.c.h.b16 %v2715
    %v3247 = vunpack.c.l.b16 %v2716
    %v3248 = vunpack.c.l.b16 %v2717
    %v3249 = vunpack.c.h.b16 %v2717
    %v3250 = vunpack.c.l.b16 %v2718
    %v3251 = vunpack.c.h.b16 %v2718
    %v3252 = vunpack.c.l.b16 %v2719
    %v3253 = vunpack.c.h.b16 %v2719
    %v3254 = vunpack.c.l.b16 %v2720
    %v3255 = vunpack.c.l.b16 %v2721
    %v3256 = vunpack.c.h.b16 %v2721
    %v3257 = vunpack.c.l.b16 %v2722
    %v3258 = vunpack.c.h.b16 %v2722
    %v3259 = vunpack.c.l.b16 %v2723
    %v3260 = vunpack.c.h.b16 %v2723
    %v3261 = vunpack.c.l.b16 %v2724
    %v3262 = vunpack.c.l.b16 %v2725
    %v3263 = vunpack.c.h.b16 %v2725
    %v3264 = vunpack.c.l.b16 %v2726
    %v3265 = vunpack.c.h.b16 %v2726
    %v3266 = vunpack.c.l.b16 %v2727
    %v3267 = vunpack.c.h.b16 %v2727
    %v3268 = vunpack.c.l.b16 %v2728
    %v3269 = vunpack.c.l.b16 %v2729
    %v3270 = vunpack.c.h.b16 %v2729
    %v3271 = vunpack.c.l.b16 %v2730
    %v3272 = vunpack.c.h.b16 %v2730
    %v3273 = vunpack.c.l.b16 %v2731
    %v3274 = vunpack.c.h.b16 %v2731
    %v3275 = vunpack.c.l.b16 %v2732
    %v3276 = vunpack.c.l.b16 %v2733
    %v3277 = vunpack.c.h.b16 %v2733
    %v3278 = vunpack.c.l.b16 %v2734
    %v3279 = vunpack.c.h.b16 %v2734
    %v3280 = vunpack.c.l.b16 %v2735
    %v3281 = vunpack.c.h.b16 %v2735
    %v3282 = vunpack.c.l.b16 %v2736
    %v3283 = vunpack.c.l.b16 %v2737
    %v3284 = vunpack.c.h.b16 %v2737
    %v3285 = vunpack.c.l.b16 %v2738
    %v3286 = vunpack.c.h.b16 %v2738
    %v3287 = vunpack.c.l.b16 %v2739
    %v3288 = vunpack.c.h.b16 %v2739
    %v3289 = vunpack.c.l.b16 %v2740
    %v3290 = vunpack.c.l.b16 %v2741
    %v3291 = vunpack.c.h.b16 %v2741
    %v3292 = vunpack.c.l.b16 %v2742
    %v3293 = vunpack.c.h.b16 %v2742
    %v3294 = vunpack.c.l.b16 %v2743
    %v3295 = vunpack.c.h.b16 %v2743
    %v3296 = vunpack.c.l.b16 %v2744
    %v3297 = vunpack.c.l.b16 %v2745
    %v3298 = vunpack.c.h.b16 %v2745
    %v3299 = vunpack.c.l.b16 %v2746
    %v3300 = vunpack.c.h.b16 %v2746
    %v3301 = vunpack.c.l.b16 %v2747
    %v3302 = vunpack.c.h.b16 %v2747
    %v3303 = vunpack.c.l.b16 %v2748
    %v3304 = vunpack.c.l.b16 %v2749
    %v3305 = vunpack.c.h.b16 %v2749
    %v3306 = vunpack.c.l.b16 %v2750
    %v3307 = vunpack.c.h.b16 %v2750
    %v3308 = vunpack.c.l.b16 %v2751
    %v3309 = vunpack.c.h.b16 %v2751
    %v3310 = vunpack.c.l.b16 %v2752
    %v3311 = vunpack.c.l.b16 %v2753
    %v3312 = vunpack.c.h.b16 %v2753
    %v3313 = vunpack.c.l.b16 %v2754
    %v3314 = vunpack.c.h.b16 %v2754
    %v3315 = vunpack.c.l.b16 %v2755
    %v3316 = vunpack.c.h.b16 %v2755
    %v3317 = vunpack.c.l.b16 %v2756
    %v3318 = vunpack.c.l.b16 %v2757
    %v3319 = vunpack.c.h.b16 %v2757
    %v3320 = vunpack.c.l.b16 %v2758
    %v3321 = vunpack.c.h.b16 %v2758
    %v3322 = vunpack.c.l.b16 %v2759
    %v3323 = vunpack.c.h.b16 %v2759
    %v3324 = vunpack.c.l.b16 %v2760
    %v3325 = vunpack.c.l.b16 %v2761
    %v3326 = vunpack.c.h.b16 %v2761
    %v3327 = vunpack.c.l.b16 %v2762
    %v3328 = vunpack.c.h.b16 %v2762
    %v3329 = vunpack.c.l.b16 %v2763
    %v3330 = vunpack.c.h.b16 %v2763
    %v3331 = vunpack.c.l.b16 %v2764
    %v3332 = vunpack.c.l.b16 %v2765
    %v3333 = vunpack.c.h.b16 %v2765
    %v3334 = vunpack.c.l.b16 %v2766
    %v3335 = vunpack.c.h.b16 %v2766
    %v3336 = vunpack.c.l.b16 %v2767
    %v3337 = vunpack.c.h.b16 %v2767
    %v3338 = vunpack.c.l.b16 %v2768
    %v3339 = vunpack.c.l.b16 %v2769
    %v3340 = vunpack.c.h.b16 %v2769
    %v3341 = vunpack.c.l.b16 %v2770
    %v3342 = vunpack.c.h.b16 %v2770
    %v3343 = vunpack.c.l.b16 %v2771
    %v3344 = vunpack.c.h.b16 %v2771
    %v3345 = vunpack.c.l.b16 %v2772
    %v3346 = vunpack.c.l.b16 %v2773
    %v3347 = vunpack.c.h.b16 %v2773
    %v3348 = vunpack.c.l.b16 %v2774
    %v3349 = vunpack.c.h.b16 %v2774
    %v3350 = vunpack.c.l.b16 %v2775
    %v3351 = vunpack.c.h.b16 %v2775
    %v3352 = vunpack.c.l.b16 %v2776
    %v3353 = vunpack.c.l.b16 %v2777
    %v3354 = vunpack.c.h.b16 %v2777
    %v3355 = vunpack.c.l.b16 %v2778
    %v3356 = vunpack.c.h.b16 %v2778
    %v3357 = vunpack.c.l.b16 %v2779
    %v3358 = vunpack.c.h.b16 %v2779
    %v3359 = vunpack.c.l.b16 %v2780
    %v3360 = vunpack.c.l.b16 %v2781
    %v3361 = vunpack.c.h.b16 %v2781
    %v3362 = vunpack.c.l.b16 %v2782
    %v3363 = vunpack.c.h.b16 %v2782
    %v3364 = vunpack.c.l.b16 %v2783
    %v3365 = vunpack.c.h.b16 %v2783
    %v3366 = vunpack.c.l.b16 %v2784
    %v3367 = vunpack.c.l.b16 %v2785
    %v3368 = vunpack.c.h.b16 %v2785
    %v3369 = vunpack.c.l.b16 %v2786
    %v3370 = vunpack.c.h.b16 %v2786
    %v3371 = vunpack.c.l.b16 %v2787
    %v3372 = vunpack.c.h.b16 %v2787
    %v3373 = vunpack.c.l.b16 %v2788
    %v3374 = vunpack.c.l.b16 %v2789
    %v3375 = vunpack.c.h.b16 %v2789
    %v3376 = vunpack.c.l.b16 %v2790
    %v3377 = vunpack.c.h.b16 %v2790
    %v3378 = vunpack.c.l.b16 %v2791
    %v3379 = vunpack.c.h.b16 %v2791
    %v3380 = vunpack.c.l.b16 %v2792
    %v3381 = vunpack.c.l.b16 %v2793
    %v3382 = vunpack.c.h.b16 %v2793
    %v3383 = vunpack.c.l.b16 %v2794
    %v3384 = vunpack.c.h.b16 %v2794
    %v3385 = vunpack.c.l.b16 %v2795
    %v3386 = vunpack.c.h.b16 %v2795
    %v3387 = vunpack.c.l.b16 %v2796
    %v3388 = vunpack.c.l.b16 %v2797
    %v3389 = vunpack.c.h.b16 %v2797
    %v3390 = vunpack.c.l.b16 %v2798
    %v3391 = vunpack.c.h.b16 %v2798
    %v3392 = vunpack.c.l.b16 %v2799
    %v3393 = vunpack.c.h.b16 %v2799
    %v3394 = vunpack.c.l.b16 %v2800
    %v3395 = vunpack.c.l.b16 %v2801
    %v3396 = vunpack.c.h.b16 %v2801
    %v3397 = vunpack.c.l.b16 %v2802
    %v3398 = vunpack.c.h.b16 %v2802
    %v3399 = vunpack.c.l.b16 %v2803
    %v3400 = vunpack.c.h.b16 %v2803
    %v3401 = vunpack.c.l.b16 %v2804
    %v3402 = vunpack.c.l.b16 %v2805
    %v3403 = vunpack.c.h.b16 %v2805
    %v3404 = vunpack.c.l.b16 %v2806
    %v3405 = vunpack.c.h.b16 %v2806
    %v3406 = vunpack.c.l.b16 %v2807
    %v3407 = vunpack.c.h.b16 %v2807
    %v3408 = vunpack.c.l.b16 %v2808
    %v3409 = vunpack.c.l.b16 %v2809
    %v3410 = vunpack.c.h.b16 %v2809
    %v3411 = vunpack.c.l.b16 %v2810
    %v3412 = vunpack.c.h.b16 %v2810
    %v3413 = vunpack.c.l.b16 %v2811
    %v3414 = vunpack.c.h.b16 %v2811
    %v3415 = vunpack.c.l.b16 %v2812
    %v3416 = vunpack.c.l.b16 %v2813
    %v3417 = vunpack.c.h.b16 %v2813
    %v3418 = vunpack.c.l.b16 %v2814
    %v3419 = vunpack.c.h.b16 %v2814
    %v3420 = vunpack.c.l.b16 %v2815
    %v3421 = vunpack.c.h.b16 %v2815
    %v3422 = vunpack.c.l.b16 %v2816
    %v3423 = vunpack.c.l.b16 %v2817
    %v3424 = vunpack.c.h.b16 %v2817
    %v3425 = vunpack.c.l.b16 %v2818
    %v3426 = vunpack.c.h.b16 %v2818
    %v3427 = vunpack.c.l.b16 %v2819
    %v3428 = vunpack.c.h.b16 %v2819
    %v3429 = vunpack.c.l.b16 %v2820
    %v3430 = vunpack.c.l.b16 %v2821
    %v3431 = vunpack.c.h.b16 %v2821
    %v3432 = vunpack.c.l.b16 %v2822
    %v3433 = vunpack.c.h.b16 %v2822
    %v3434 = vunpack.c.l.b16 %v2823
    %v3435 = vunpack.c.h.b16 %v2823
    %v3436 = vunpack.c.l.b16 %v2824
    %v3437 = vunpack.c.l.b16 %v2825
    %v3438 = vunpack.c.h.b16 %v2825
    %v3439 = vunpack.c.l.b16 %v2826
    %v3440 = vunpack.c.h.b16 %v2826
    %v3441 = vunpack.c.l.b16 %v2827
    %v3442 = vunpack.c.h.b16 %v2827
    %v3443 = vunpack.c.l.b16 %v2828
    %v3444 = vunpack.c.l.b16 %v2829
    %v3445 = vunpack.c.h.b16 %v2829
    %v3446 = vunpack.c.l.b16 %v2830
    %v3447 = vunpack.c.h.b16 %v2830
    %v3448 = vunpack.c.l.b16 %v2831
    %v3449 = vunpack.c.h.b16 %v2831
    %v3450 = vunpack.c.l.b16 %v2832
    %v3451 = vunpack.c.l.b16 %v2833
    %v3452 = vunpack.c.h.b16 %v2833
    %v3453 = vunpack.c.l.b16 %v2834
    %v3454 = vunpack.c.h.b16 %v2834
    %v3455 = vunpack.c.l.b16 %v2835
    %v3456 = vunpack.c.h.b16 %v2835
    %v3457 = vunpack.c.l.b16 %v2836
    %v3458 = vunpack.c.l.b16 %v2837
    %v3459 = vunpack.c.h.b16 %v2837
    %v3460 = vunpack.c.l.b16 %v2838
    %v3461 = vunpack.c.h.b16 %v2838
    %v3462 = vunpack.c.l.b16 %v2839
    %v3463 = vunpack.c.h.b16 %v2839
    %v3464 = vunpack.c.l.b16 %v2840
    %v3465 = vunpack.c.l.b16 %v2841
    %v3466 = vunpack.c.h.b16 %v2841
    %v3467 = vunpack.c.l.b16 %v2842
    %v3468 = vunpack.c.h.b16 %v2842
    %v3469 = vunpack.c.l.b16 %v2843
    %v3470 = vunpack.c.h.b16 %v2843
    %v3471 = vunpack.c.l.b16 %v2844
    %v3472 = vunpack.c.l.b16 %v2845
    %v3473 = vunpack.c.h.b16 %v2845
    %v3474 = vunpack.c.l.b16 %v2846
    %v3475 = vunpack.c.h.b16 %v2846
    %v3476 = vunpack.c.l.b16 %v2847
    %v3477 = vunpack.c.h.b16 %v2847
    %v3478 = vunpack.c.l.b16 %v2848
    %v3479 = vunpack.c.l.b16 %v2849
    %v3480 = vunpack.c.h.b16 %v2849
    %v3481 = vunpack.c.l.b16 %v2850
    %v3482 = vunpack.c.h.b16 %v2850
    %v3483 = vunpack.c.l.b16 %v2851
    %v3484 = vunpack.c.h.b16 %v2851
    %v3485 = vunpack.c.l.b16 %v2852
    %v3486 = vunpack.c.l.b16 %v2853
    %v3487 = vunpack.c.h.b16 %v2853
    %v3488 = vunpack.c.l.b16 %v2854
    %v3489 = vunpack.c.h.b16 %v2854
    %v3490 = vunpack.c.l.b16 %v2855
    %v3491 = vunpack.c.h.b16 %v2855
    %v3492 = vunpack.c.l.b16 %v2856
    %v3493 = vunpack.c.l.b16 %v2857
    %v3494 = vunpack.c.h.b16 %v2857
    %v3495 = vunpack.c.l.b16 %v2858
    %v3496 = vunpack.c.h.b16 %v2858
    %v3497 = vunpack.c.l.b16 %v2859
    %v3498 = vunpack.c.h.b16 %v2859
    %v3499 = vunpack.c.l.b16 %v2860
    %v3500 = vunpack.c.l.b16 %v2861
    %v3501 = vunpack.c.h.b16 %v2861
    %v3502 = vunpack.c.l.b16 %v2862
    %v3503 = vunpack.c.h.b16 %v2862
    %v3504 = vunpack.c.l.b16 %v2863
    %v3505 = vunpack.c.h.b16 %v2863
    %v3506 = vunpack.c.l.b16 %v2864
    %v3507 = vunpack.c.l.b16 %v2865
    %v3508 = vunpack.c.h.b16 %v2865
    %v3509 = vunpack.c.l.b16 %v2866
    %v3510 = vunpack.c.h.b16 %v2866
    %v3511 = vunpack.c.l.b16 %v2867
    %v3512 = vunpack.c.h.b16 %v2867
    %v3513 = vunpack.c.l.b16 %v2868
    %v3514 = vunpack.c.l.b16 %v2869
    %v3515 = vunpack.c.h.b16 %v2869
    %v3516 = vunpack.c.l.b16 %v2870
    %v3517 = vunpack.c.h.b16 %v2870
    %v3518 = vunpack.c.l.b16 %v2871
    %v3519 = vunpack.c.h.b16 %v2871
    %v3520 = vunpack.c.l.b16 %v2872
    %v3521 = vunpack.c.l.b16 %v2873
    %v3522 = vunpack.c.h.b16 %v2873
    %v3523 = vunpack.c.l.b16 %v2874
    %v3524 = vunpack.c.h.b16 %v2874
    %v3525 = vunpack.c.l.b16 %v2875
    %v3526 = vunpack.c.h.b16 %v2875
    %v3527 = vunpack.c.l.b16 %v2876
    %v3528 = vunpack.c.l.b16 %v2877
    %v3529 = vunpack.c.h.b16 %v2877
    %v3530 = vunpack.c.l.b16 %v2878
    %v3531 = vunpack.c.h.b16 %v2878
    %v3532 = vunpack.c.l.b16 %v2879
    %v3533 = vunpack.c.h.b16 %v2879
    %v3534 = vunpack.c.l.b16 %v2880
    %v3535 = vunpack.c.l.b16 %v2881
    %v3536 = vunpack.c.h.b16 %v2881
    %v3537 = vunpack.c.l.b16 %v2882
    %v3538 = vunpack.c.h.b16 %v2882
    %v3539 = vunpack.c.l.b16 %v2883
    %v3540 = vunpack.c.h.b16 %v2883
    %v3541 = vunpack.c.l.b16 %v2884
    %v3542 = vunpack.c.l.b16 %v2885
    %v3543 = vunpack.c.h.b16 %v2885
    %v3544 = vunpack.c.l.b16 %v2886
    %v3545 = vunpack.c.h.b16 %v2886
    %v3546 = vunpack.c.l.b16 %v2887
    %v3547 = vunpack.c.h.b16 %v2887
    %v3548 = vunpack.c.l.b16 %v2888
    %v3549 = vunpack.c.l.b16 %v2889
    %v3550 = vunpack.c.h.b16 %v2889
    %v3551 = vunpack.c.l.b16 %v2890
    %v3552 = vunpack.c.h.b16 %v2890
    %v3553 = vunpack.c.l.b16 %v2891
    %v3554 = vunpack.c.h.b16 %v2891
    %v3555 = vunpack.c.l.b16 %v2892
    %v3556 = vunpack.c.l.b16 %v2893
    %v3557 = vunpack.c.h.b16 %v2893
    %v3558 = vunpack.c.l.b16 %v2894
    %v3559 = vunpack.c.h.b16 %v2894
    %v3560 = vunpack.c.l.b16 %v2895
    %v3561 = vunpack.c.h.b16 %v2895
    %v3562 = vunpack.c.l.b16 %v2896
    %v3563 = vunpack.c.l.b16 %v2897
    %v3564 = vunpack.c.h.b16 %v2897
    %v3565 = vunpack.c.l.b16 %v2898
    %v3566 = vunpack.c.h.b16 %v2898
    %v3567 = vunpack.c.l.b16 %v2899
    %v3568 = vunpack.c.h.b16 %v2899
    %v3569 = vunpack.c.l.b16 %v2900
    %v3570 = vunpack.c.l.b16 %v2901
    %v3571 = vunpack.c.h.b16 %v2901
    %v3572 = vunpack.c.l.b16 %v2902
    %v3573 = vunpack.c.h.b16 %v2902
    %v3574 = vunpack.c.l.b16 %v2903
    %v3575 = vunpack.c.h.b16 %v2903
    %v3576 = vunpack.c.l.b16 %v2904
    %v3577 = vunpack.c.l.b16 %v2905
    %v3578 = vunpack.c.h.b16 %v2905
    %v3579 = vunpack.c.l.b16 %v2906
    %v3580 = vunpack.c.h.b16 %v2906
    %v3581 = vunpack.c.l.b16 %v2907
    %v3582 = vunpack.c.h.b16 %v2907
    %v3583 = vunpack.c.l.b16 %v2908
    %v3584 = vunpack.c.l.b16 %v2909
    %v3585 = vunpack.c.h.b16 %v2909
    %v3586 = vunpack.c.l.b16 %v2910
    %v3587 = vunpack.c.h.b16 %v2910
    %v3588 = vunpack.c.l.b16 %v2911
    %v3589 = vunpack.c.h.b16 %v2911
    %v3590 = vunpack.c.l.b16 %v2912
    %v3591 = vunpack.c.l.b16 %v2913
    %v3592 = vunpack.c.h.b16 %v2913
    %v3593 = vunpack.c.l.b16 %v2914
    %v3594 = vunpack.c.h.b16 %v2914
    %v3595 = vunpack.c.l.b16 %v2915
    %v3596 = vunpack.c.h.b16 %v2915
    %v3597 = vunpack.c.l.b16 %v2916
    %v3598 = vunpack.c.l.b16 %v2917
    %v3599 = vunpack.c.h.b16 %v2917
    %v3600 = vunpack.c.l.b16 %v2918
    %v3601 = vunpack.c.h.b16 %v2918
    %v3602 = vunpack.c.l.b16 %v2919
    %v3603 = vunpack.c.h.b16 %v2919
    %v3604 = vunpack.c.l.b16 %v2920
    %v3605 = vunpack.c.l.b16 %v2921
    %v3606 = vunpack.c.h.b16 %v2921
    %v3607 = vunpack.c.l.b16 %v2922
    %v3608 = vunpack.c.h.b16 %v2922
    %v3609 = vunpack.c.l.b16 %v2923
    %v3610 = vunpack.c.h.b16 %v2923
    %v3611 = vunpack.c.l.b16 %v2924
    %v3612 = vunpack.c.l.b16 %v2925
    %v3613 = vunpack.c.h.b16 %v2925
    %v3614 = vunpack.c.l.b16 %v2926
    %v3615 = vunpack.c.h.b16 %v2926
    %v3616 = vunpack.c.l.b16 %v2927
    %v3617 = vunpack.c.h.b16 %v2927
    %v3618 = vunpack.c.l.b16 %v2928
    %v3619 = vunpack.c.l.b16 %v2929
    %v3620 = vunpack.c.h.b16 %v2929
    %v3621 = vunpack.c.l.b16 %v2930
    %v3622 = vunpack.c.h.b16 %v2930
    %v3623 = vunpack.c.l.b16 %v2931
    %v3624 = vunpack.c.h.b16 %v2931
    %v3625 = vunpack.c.l.b16 %v2932
    %v3626 = vunpack.c.l.b16 %v2933
    %v3627 = vunpack.c.h.b16 %v2933
    %v3628 = vunpack.c.l.b16 %v2934
    %v3629 = vunpack.c.h.b16 %v2934
    %v3630 = vunpack.c.l.b16 %v2935
    %v3631 = vunpack.c.h.b16 %v2935
    %v3632 = vunpack.c.l.b16 %v2936
    %v3633 = vunpack.c.l.b16 %v2937
    %v3634 = vunpack.c.h.b16 %v2937
    %v3635 = vunpack.c.l.b16 %v2938
    %v3636 = vunpack.c.h.b16 %v2938
    %v3637 = vunpack.c.l.b16 %v2939
    %v3638 = vunpack.c.h.b16 %v2939
    %v3639 = vunpack.c.l.b16 %v2940
    %v3640 = vunpack.c.l.b16 %v2941
    %v3641 = vunpack.c.h.b16 %v2941
    %v3642 = vunpack.c.l.b16 %v2942
    %v3643 = vunpack.c.h.b16 %v2942
    %v3644 = vunpack.c.l.b16 %v2943
    %v3645 = vunpack.c.h.b16 %v2943
    %v3646 = vunpack.c.l.b16 %v2944
    %v3647 = vunpack.c.l.b16 %v2945
    %v3648 = vunpack.c.h.b16 %v2945
    %v3649 = vunpack.c.l.b16 %v2946
    %v3650 = vunpack.c.h.b16 %v2946
    %v3651 = vunpack.c.l.b16 %v2947
    %v3652 = vunpack.c.h.b16 %v2947
    %v3653 = vunpack.c.l.b16 %v2948
    %v3654 = vunpack.c.l.b16 %v2949
    %v3655 = vunpack.c.h.b16 %v2949
    %v3656 = vunpack.c.l.b16 %v2950
    %v3657 = vunpack.c.h.b16 %v2950
    %v3658 = vunpack.c.l.b16 %v2951
    %v3659 = vunpack.c.h.b16 %v2951
    %v3660 = vunpack.c.l.b16 %v2952
    %v3661 = vunpack.c.l.b16 %v2953
    %v3662 = vunpack.c.h.b16 %v2953
    %v3663 = vunpack.c.l.b16 %v2954
    %v3664 = vunpack.c.h.b16 %v2954
    %v3665 = vunpack.c.l.b16 %v2955
    %v3666 = vunpack.c.h.b16 %v2955
    %v3667 = vunpack.c.l.b16 %v2956
    %v3668 = vunpack.c.l.b16 %v2957
    %v3669 = vunpack.c.h.b16 %v2957
    %v3670 = vunpack.c.l.b16 %v2958
    %v3671 = vunpack.c.h.b16 %v2958
    %v3672 = vunpack.c.l.b16 %v2959
    %v3673 = vunpack.c.h.b16 %v2959
    %v3674 = vunpack.c.l.b16 %v2960
    %v3675 = vunpack.c.l.b16 %v2961
    %v3676 = vunpack.c.h.b16 %v2961
    %v3677 = vunpack.c.l.b16 %v2962
    %v3678 = vunpack.c.h.b16 %v2962
    %v3679 = vunpack.c.l.b16 %v2963
    %v3680 = vunpack.c.h.b16 %v2963
    %v3681 = vunpack.c.l.b16 %v2964
    %v3682 = vunpack.c.l.b16 %v2965
    %v3683 = vunpack.c.h.b16 %v2965
    %v3684 = vunpack.c.l.b16 %v2966
    %v3685 = vunpack.c.h.b16 %v2966
    %v3686 = vunpack.c.l.b16 %v2967
    %v3687 = vunpack.c.h.b16 %v2967
    %v3688 = vunpack.c.l.b16 %v2968
    %v3689 = vpack.c.b16 %v3248, %v3241
    %v3690 = vpack.c.b16 %v3249, %v3242
    %v3691 = vpack.c.b16 %v3250, %v3243
    %v3692 = vpack.c.b16 %v3251, %v3244
    %v3693 = vpack.c.b16 %v3252, %v3245
    %v3694 = vpack.c.b16 %v3253, %v3246
    %v3695 = vpack.c.b16 %v3254, %v3247
    %v3696 = vpack.c.b16 %v3262, %v3255
    %v3697 = vpack.c.b16 %v3263, %v3256
    %v3698 = vpack.c.b16 %v3264, %v3257
    %v3699 = vpack.c.b16 %v3265, %v3258
    %v3700 = vpack.c.b16 %v3266, %v3259
    %v3701 = vpack.c.b16 %v3267, %v3260
    %v3702 = vpack.c.b16 %v3268, %v3261
    %v3703 = vpack.c.b16 %v3276, %v3269
    %v3704 = vpack.c.b16 %v3277, %v3270
    %v3705 = vpack.c.b16 %v3278, %v3271
    %v3706 = vpack.c.b16 %v3279, %v3272
    %v3707 = vpack.c.b16 %v3280, %v3273
    %v3708 = vpack.c.b16 %v3281, %v3274
    %v3709 = vpack.c.b16 %v3282, %v3275
    %v3710 = vpack.c.b16 %v3290, %v3283
    %v3711 = vpack.c.b16 %v3291, %v3284
    %v3712 = vpack.c.b16 %v3292, %v3285
    %v3713 = vpack.c.b16 %v3293, %v3286
    %v3714 = vpack.c.b16 %v3294, %v3287
    %v3715 = vpack.c.b16 %v3295, %v3288
    %v3716 = vpack.c.b16 %v3296, %v3289
    %v3717 = vpack.c.b16 %v3304, %v3297
    %v3718 = vpack.c.b16 %v3305, %v3298
    %v3719 = vpack.c.b16 %v3306, %v3299
    %v3720 = vpack.c.b16 %v3307, %v3300
    %v3721 = vpack.c.b16 %v3308, %v3301
    %v3722 = vpack.c.b16 %v3309, %v3302
    %v3723 = vpack.c.b16 %v3310, %v3303
    %v3724 = vpack.c.b16 %v3318, %v3311
    %v3725 = vpack.c.b16 %v3319, %v3312
    %v3726 = vpack.c.b16 %v3320, %v3313
    %v3727 = vpack.c.b16 %v3321, %v3314
    %v3728 = vpack.c.b16 %v3322, %v3315
    %v3729 = vpack.c.b16 %v3323, %v3316
    %v3730 = vpack.c.b16 %v3324, %v3317
    %v3731 = vpack.c.b16 %v3332, %v3325
    %v3732 = vpack.c.b16 %v3333, %v3326
    %v3733 = vpack.c.b16 %v3334, %v3327
    %v3734 = vpack.c.b16 %v3335, %v3328
    %v3735 = vpack.c.b16 %v3336, %v3329
    %v3736 = vpack.c.b16 %v3337, %v3330
    %v3737 = vpack.c.b16 %v3338, %v3331
    %v3738 = vpack.c.b16 %v3346, %v3339
    %v3739 = vpack.c.b16 %v3347, %v3340
    %v3740 = vpack.c.b16 %v3348, %v3341
    %v3741 = vpack.c.b16 %v3349, %v3342
    %v3742 = vpack.c.b16 %v3350, %v3343
    %v3743 = vpack.c.b16 %v3351, %v3344
    %v3744 = vpack.c.b16 %v3352, %v3345
    %v3745 = vpack.c.b16 %v3360, %v3353
    %v3746 = vpack.c.b16 %v3361, %v3354
    %v3747 = vpack.c.b16 %v3362, %v3355
    %v3748 = vpack.c.b16 %v3363, %v3356
    %v3749 = vpack.c.b16 %v3364, %v3357
    %v3750 = vpack.c.b16 %v3365, %v3358
    %v3751 = vpack.c.b16 %v3366, %v3359
    %v3752 = vpack.c.b16 %v3374, %v3367
    %v3753 = vpack.c.b16 %v3375, %v3368
    %v3754 = vpack.c.b16 %v3376, %v3369
    %v3755 = vpack.c.b16 %v3377, %v3370
    %v3756 = vpack.c.b16 %v3378, %v3371
    %v3757 = vpack.c.b16 %v3379, %v3372
    %v3758 = vpack.c.b16 %v3380, %v3373
    %v3759 = vpack.c.b16 %v3388, %v3381
    %v3760 = vpack.c.b16 %v3389, %v3382
    %v3761 = vpack.c.b16 %v3390, %v3383
    %v3762 = vpack.c.b16 %v3391, %v3384
    %v3763 = vpack.c.b16 %v3392, %v3385
    %v3764 = vpack.c.b16 %v3393, %v3386
    %v3765 = vpack.c.b16 %v3394, %v3387
    %v3766 = vpack.c.b16 %v3402, %v3395
    %v3767 = vpack.c.b16 %v3403, %v3396
    %v3768 = vpack.c.b16 %v3404, %v3397
    %v3769 = vpack.c.b16 %v3405, %v3398
    %v3770 = vpack.c.b16 %v3406, %v3399
    %v3771 = vpack.c.b16 %v3407, %v3400
    %v3772 = vpack.c.b16 %v3408, %v3401
    %v3773 = vpack.c.b16 %v3416, %v3409
    %v3774 = vpack.c.b16 %v3417, %v3410
    %v3775 = vpack.c.b16 %v3418, %v3411
    %v3776 = vpack.c.b16 %v3419, %v3412
    %v3777 = vpack.c.b16 %v3420, %v3413
    %v3778 = vpack.c.b16 %v3421, %v3414
    %v3779 = vpack.c.b16 %v3422, %v3415
    %v3780 = vpack.c.b16 %v3430, %v3423
    %v3781 = vpack.c.b16 %v3431, %v3424
    %v3782 = vpack.c.b16 %v3432, %v3425
    %v3783 = vpack.c.b16 %v3433, %v3426
    %v3784 = vpack.c.b16 %v3434, %v3427
    %v3785 = vpack.c.b16 %v3435, %v3428
    %v3786 = vpack.c.b16 %v3436, %v3429
    %v3787 = vpack.c.b16 %v3444, %v3437
    %v3788 = vpack.c.b16 %v3445, %v3438
    %v3789 = vpack.c.b16 %v3446, %v3439
    %v3790 = vpack.c.b16 %v3447, %v3440
    %v3791 = vpack.c.b16 %v3448, %v3441
    %v3792 = vpack.c.b16 %v3449, %v3442
    %v3793 = vpack.c.b16 %v3450, %v3443
    %v3794 = vpack.c.b16 %v3458, %v3451
    %v3795 = vpack.c.b16 %v3459, %v3452
    %v3796 = vpack.c.b16 %v3460, %v3453
    %v3797 = vpack.c.b16 %v3461, %v3454
    %v3798 = vpack.c.b16 %v3462, %v3455
    %v3799 = vpack.c.b16 %v3463, %v3456
    %v3800 = vpack.c.b16 %v3464, %v3457
    %v3801 = vpack.c.b16 %v3472, %v3465
    %v3802 = vpack.c.b16 %v3473, %v3466
    %v3803 = vpack.c.b16 %v3474, %v3467
    %v3804 = vpack.c.b16 %v3475, %v3468
    %v3805 = vpack.c.b16 %v3476, %v3469
    %v3806 = vpack.c.b16 %v3477, %v3470
    %v3807 = vpack.c.b16 %v3478, %v3471
    %v3808 = vpack.c.b16 %v3486, %v3479
    %v3809 = vpack.c.b16 %v3487, %v3480
    %v3810 = vpack.c.b16 %v3488, %v3481
    %v3811 = vpack.c.b16 %v3489, %v3482
    %v3812 = vpack.c.b16 %v3490, %v3483
    %v3813 = vpack.c.b16 %v3491, %v3484
    %v3814 = vpack.c.b16 %v3492, %v3485
    %v3815 = vpack.c.b16 %v3500, %v3493
    %v3816 = vpack.c.b16 %v3501, %v3494
    %v3817 = vpack.c.b16 %v3502, %v3495
    %v3818 = vpack.c.b16 %v3503, %v3496
    %v3819 = vpack.c.b16 %v3504, %v3497
    %v3820 = vpack.c.b16 %v3505, %v3498
    %v3821 = vpack.c.b16 %v3506, %v3499
    %v3822 = vpack.c.b16 %v3514, %v3507
    %v3823 = vpack.c.b16 %v3515, %v3508
    %v3824 = vpack.c.b16 %v3516, %v3509
    %v3825 = vpack.c.b16 %v3517, %v3510
    %v3826 = vpack.c.b16 %v3518, %v3511
    %v3827 = vpack.c.b16 %v3519, %v3512
    %v3828 = vpack.c.b16 %v3520, %v3513
    %v3829 = vpack.c.b16 %v3528, %v3521
    %v3830 = vpack.c.b16 %v3529, %v3522
    %v3831 = vpack.c.b16 %v3530, %v3523
    %v3832 = vpack.c.b16 %v3531, %v3524
    %v3833 = vpack.c.b16 %v3532, %v3525
    %v3834 = vpack.c.b16 %v3533, %v3526
    %v3835 = vpack.c.b16 %v3534, %v3527
    %v3836 = vpack.c.b16 %v3542, %v3535
    %v3837 = vpack.c.b16 %v3543, %v3536
    %v3838 = vpack.c.b16 %v3544, %v3537
    %v3839 = vpack.c.b16 %v3545, %v3538
    %v3840 = vpack.c.b16 %v3546, %v3539
    %v3841 = vpack.c.b16 %v3547, %v3540
    %v3842 = vpack.c.b16 %v3548, %v3541
    %v3843 = vpack.c.b16 %v3556, %v3549
    %v3844 = vpack.c.b16 %v3557, %v3550
    %v3845 = vpack.c.b16 %v3558, %v3551
    %v3846 = vpack.c.b16 %v3559, %v3552
    %v3847 = vpack.c.b16 %v3560, %v3553
    %v3848 = vpack.c.b16 %v3561, %v3554
    %v3849 = vpack.c.b16 %v3562, %v3555
    %v3850 = vpack.c.b16 %v3570, %v3563
    %v3851 = vpack.c.b16 %v3571, %v3564
    %v3852 = vpack.c.b16 %v3572, %v3565
    %v3853 = vpack.c.b16 %v3573, %v3566
    %v3854 = vpack.c.b16 %v3574, %v3567
    %v3855 = vpack.c.b16 %v3575, %v3568
    %v3856 = vpack.c.b16 %v3576, %v3569
    %v3857 = vpack.c.b16 %v3584, %v3577
    %v3858 = vpack.c.b16 %v3585, %v3578
    %v3859 = vpack.c.b16 %v3586, %v3579
    %v3860 = vpack.c.b16 %v3587, %v3580
    %v3861 = vpack.c.b16 %v3588, %v3581
    %v3862 = vpack.c.b16 %v3589, %v3582
    %v3863 = vpack.c.b16 %v3590, %v3583
    %v3864 = vpack.c.b16 %v3598, %v3591
    %v3865 = vpack.c.b16 %v3599, %v3592
    %v3866 = vpack.c.b16 %v3600, %v3593
    %v3867 = vpack.c.b16 %v3601, %v3594
    %v3868 = vpack.c.b16 %v3602, %v3595
    %v3869 = vpack.c.b16 %v3603, %v3596
    %v3870 = vpack.c.b16 %v3604, %v3597
    %v3871 = vpack.c.b16 %v3612, %v3605
    %v3872 = vpack.c.b16 %v3613, %v3606
    %v3873 = vpack.c.b16 %v3614, %v3607
    %v3874 = vpack.c.b16 %v3615, %v3608
    %v3875 = vpack.c.b16 %v3616, %v3609
    %v3876 = vpack.c.b16 %v3617, %v3610
    %v3877 = vpack.c.b16 %v3618, %v3611
    %v3878 = vpack.c.b16 %v3626, %v3619
    %v3879 = vpack.c.b16 %v3627, %v3620
    %v3880 = vpack.c.b16 %v3628, %v3621
    %v3881 = vpack.c.b16 %v3629, %v3622
    %v3882 = vpack.c.b16 %v3630, %v3623
    %v3883 = vpack.c.b16 %v3631, %v3624
    %v3884 = vpack.c.b16 %v3632, %v3625
    %v3885 = vpack.c.b16 %v3640, %v3633
    %v3886 = vpack.c.b16 %v3641, %v3634
    %v3887 = vpack.c.b16 %v3642, %v3635
    %v3888 = vpack.c.b16 %v3643, %v3636
    %v3889 = vpack.c.b16 %v3644, %v3637
    %v3890 = vpack.c.b16 %v3645, %v3638
    %v3891 = vpack.c.b16 %v3646, %v3639
    %v3892 = vpack.c.b16 %v3654, %v3647
    %v3893 = vpack.c.b16 %v3655, %v3648
    %v3894 = vpack.c.b16 %v3656, %v3649
    %v3895 = vpack.c.b16 %v3657, %v3650
    %v3896 = vpack.c.b16 %v3658, %v3651
    %v3897 = vpack.c.b16 %v3659, %v3652
    %v3898 = vpack.c.b16 %v3660, %v3653
    %v3899 = vpack.c.b16 %v3668, %v3661
    %v3900 = vpack.c.b16 %v3669, %v3662
    %v3901 = vpack.c.b16 %v3670, %v3663
    %v3902 = vpack.c.b16 %v3671, %v3664
    %v3903 = vpack.c.b16 %v3672, %v3665
    %v3904 = vpack.c.b16 %v3673, %v3666
    %v3905 = vpack.c.b16 %v3674, %v3667
    %v3906 = vpack.c.b16 %v3682, %v3675
    %v3907 = vpack.c.b16 %v3683, %v3676
    %v3908 = vpack.c.b16 %v3684, %v3677
    %v3909 = vpack.c.b16 %v3685, %v3678
    %v3910 = vpack.c.b16 %v3686, %v3679
    %v3911 = vpack.c.b16 %v3687, %v3680
    %v3912 = vpack.c.b16 %v3688, %v3681
    %4137 = vmatpush.bf16.msra.mxu0 %v3738
    %4138 = vmatpush.bf16.msra.mxu0 %v3731
    %4139 = vmatpush.bf16.msra.mxu0 %v3724
    %4140 = vmatpush.bf16.msra.mxu0 %v3717
    %4141 = vmatpush.bf16.msra.mxu0 %v3710
    %4142 = vmatpush.bf16.msra.mxu0 %v3703
    %4143 = vmatpush.bf16.msra.mxu0 %v3696
    %4144 = vmatpush.bf16.msra.mxu0 %v3689
    %4145 = vmatmul.bf16.gmra.mxu0 %v2709
    %v4146 = vpop.f32.mrf.mxu0
    %v4147 = vadd.f32 %v2971, %v4146
    %v4148 = vpop.f32.mrf.mxu0
    %4149 = vdwg.mxu0
    %4150 = vmatpush.bf16.msra.mxu0 %v3794
    %4151 = vmatpush.bf16.msra.mxu0 %v3787
    %4152 = vmatpush.bf16.msra.mxu0 %v3780
    %4153 = vmatpush.bf16.msra.mxu0 %v3773
    %4154 = vmatpush.bf16.msra.mxu0 %v3766
    %4155 = vmatpush.bf16.msra.mxu0 %v3759
    %4156 = vmatpush.bf16.msra.mxu0 %v3752
    %4157 = vmatpush.bf16.msra.mxu0 %v3745
    %4158 = vmatmul.bf16.gmra.mxu0 %v2710
    %v4159 = vpop.f32.mrf.mxu0
    %v4160 = vadd.f32 %v4147, %v4159
    %v4161 = vpop.f32.mrf.mxu0
    %4162 = vdwg.mxu0
    %4163 = vmatpush.bf16.msra.mxu0 %v3850
    %4164 = vmatpush.bf16.msra.mxu0 %v3843
    %4165 = vmatpush.bf16.msra.mxu0 %v3836
    %4166 = vmatpush.bf16.msra.mxu0 %v3829
    %4167 = vmatpush.bf16.msra.mxu0 %v3822
    %4168 = vmatpush.bf16.msra.mxu0 %v3815
    %4169 = vmatpush.bf16.msra.mxu0 %v3808
    %4170 = vmatpush.bf16.msra.mxu0 %v3801
    %4171 = vmatmul.bf16.gmra.mxu0 %v2711
    %v4172 = vpop.f32.mrf.mxu0
    %v4173 = vadd.f32 %v4160, %v4172
    %v4174 = vpop.f32.mrf.mxu0
    %4175 = vdwg.mxu0
    %4176 = vmatpush.bf16.msra.mxu0 %v3906
    %4177 = vmatpush.bf16.msra.mxu0 %v3899
    %4178 = vmatpush.bf16.msra.mxu0 %v3892
    %4179 = vmatpush.bf16.msra.mxu0 %v3885
    %4180 = vmatpush.bf16.msra.mxu0 %v3878
    %4181 = vmatpush.bf16.msra.mxu0 %v3871
    %4182 = vmatpush.bf16.msra.mxu0 %v3864
    %4183 = vmatpush.bf16.msra.mxu0 %v3857
    %4184 = vmatmul.bf16.gmra.mxu0 %v2712
    %v4185 = vpop.f32.mrf.mxu0
    %v4186 = vadd.f32 %v4173, %v4185
    %v4187 = vpop.f32.mrf.mxu0
    %4188 = vdwg.mxu0
    %4189 = vmatpush.bf16.msra.mxu0 %v3739
    %4190 = vmatpush.bf16.msra.mxu0 %v3732
    %4191 = vmatpush.bf16.msra.mxu0 %v3725
    %4192 = vmatpush.bf16.msra.mxu0 %v3718
    %4193 = vmatpush.bf16.msra.mxu0 %v3711
    %4194 = vmatpush.bf16.msra.mxu0 %v3704
    %4195 = vmatpush.bf16.msra.mxu0 %v3697
    %4196 = vmatpush.bf16.msra.mxu0 %v3690
    %4197 = vmatmul.bf16.gmra.mxu0 %v2709
    %v4198 = vpop.f32.mrf.mxu0
    %v4199 = vadd.f32 %v2972, %v4198
    %v4200 = vpop.f32.mrf.mxu0
    %4201 = vdwg.mxu0
    %4202 = vmatpush.bf16.msra.mxu0 %v3795
    %4203 = vmatpush.bf16.msra.mxu0 %v3788
    %4204 = vmatpush.bf16.msra.mxu0 %v3781
    %4205 = vmatpush.bf16.msra.mxu0 %v3774
    %4206 = vmatpush.bf16.msra.mxu0 %v3767
    %4207 = vmatpush.bf16.msra.mxu0 %v3760
    %4208 = vmatpush.bf16.msra.mxu0 %v3753
    %4209 = vmatpush.bf16.msra.mxu0 %v3746
    %4210 = vmatmul.bf16.gmra.mxu0 %v2710
    %v4211 = vpop.f32.mrf.mxu0
    %v4212 = vadd.f32 %v4199, %v4211
    %v4213 = vpop.f32.mrf.mxu0
    %4214 = vdwg.mxu0
    %4215 = vmatpush.bf16.msra.mxu0 %v3851
    %4216 = vmatpush.bf16.msra.mxu0 %v3844
    %4217 = vmatpush.bf16.msra.mxu0 %v3837
    %4218 = vmatpush.bf16.msra.mxu0 %v3830
    %4219 = vmatpush.bf16.msra.mxu0 %v3823
    %4220 = vmatpush.bf16.msra.mxu0 %v3816
    %4221 = vmatpush.bf16.msra.mxu0 %v3809
    %4222 = vmatpush.bf16.msra.mxu0 %v3802
    %4223 = vmatmul.bf16.gmra.mxu0 %v2711
    %v4224 = vpop.f32.mrf.mxu0
    %v4225 = vadd.f32 %v4212, %v4224
    %v4226 = vpop.f32.mrf.mxu0
    %4227 = vdwg.mxu0
    %4228 = vmatpush.bf16.msra.mxu0 %v3907
    %4229 = vmatpush.bf16.msra.mxu0 %v3900
    %4230 = vmatpush.bf16.msra.mxu0 %v3893
    %4231 = vmatpush.bf16.msra.mxu0 %v3886
    %4232 = vmatpush.bf16.msra.mxu0 %v3879
    %4233 = vmatpush.bf16.msra.mxu0 %v3872
    %4234 = vmatpush.bf16.msra.mxu0 %v3865
    %4235 = vmatpush.bf16.msra.mxu0 %v3858
    %4236 = vmatmul.bf16.gmra.mxu0 %v2712
    %v4237 = vpop.f32.mrf.mxu0
    %v4238 = vadd.f32 %v4225, %v4237
    %v4239 = vpop.f32.mrf.mxu0
    %4240 = vdwg.mxu0
    %4241 = vmatpush.bf16.msra.mxu0 %v3740
    %4242 = vmatpush.bf16.msra.mxu0 %v3733
    %4243 = vmatpush.bf16.msra.mxu0 %v3726
    %4244 = vmatpush.bf16.msra.mxu0 %v3719
    %4245 = vmatpush.bf16.msra.mxu0 %v3712
    %4246 = vmatpush.bf16.msra.mxu0 %v3705
    %4247 = vmatpush.bf16.msra.mxu0 %v3698
    %4248 = vmatpush.bf16.msra.mxu0 %v3691
    %4249 = vmatmul.bf16.gmra.mxu0 %v2709
    %v4250 = vpop.f32.mrf.mxu0
    %v4251 = vadd.f32 %v2973, %v4250
    %v4252 = vpop.f32.mrf.mxu0
    %4253 = vdwg.mxu0
    %4254 = vmatpush.bf16.msra.mxu0 %v3796
    %4255 = vmatpush.bf16.msra.mxu0 %v3789
    %4256 = vmatpush.bf16.msra.mxu0 %v3782
    %4257 = vmatpush.bf16.msra.mxu0 %v3775
    %4258 = vmatpush.bf16.msra.mxu0 %v3768
    %4259 = vmatpush.bf16.msra.mxu0 %v3761
    %4260 = vmatpush.bf16.msra.mxu0 %v3754
    %4261 = vmatpush.bf16.msra.mxu0 %v3747
    %4262 = vmatmul.bf16.gmra.mxu0 %v2710
    %v4263 = vpop.f32.mrf.mxu0
    %v4264 = vadd.f32 %v4251, %v4263
    %v4265 = vpop.f32.mrf.mxu0
    %4266 = vdwg.mxu0
    %4267 = vmatpush.bf16.msra.mxu0 %v3852
    %4268 = vmatpush.bf16.msra.mxu0 %v3845
    %4269 = vmatpush.bf16.msra.mxu0 %v3838
    %4270 = vmatpush.bf16.msra.mxu0 %v3831
    %4271 = vmatpush.bf16.msra.mxu0 %v3824
    %4272 = vmatpush.bf16.msra.mxu0 %v3817
    %4273 = vmatpush.bf16.msra.mxu0 %v3810
    %4274 = vmatpush.bf16.msra.mxu0 %v3803
    %4275 = vmatmul.bf16.gmra.mxu0 %v2711
    %v4276 = vpop.f32.mrf.mxu0
    %v4277 = vadd.f32 %v4264, %v4276
    %v4278 = vpop.f32.mrf.mxu0
    %4279 = vdwg.mxu0
    %4280 = vmatpush.bf16.msra.mxu0 %v3908
    %4281 = vmatpush.bf16.msra.mxu0 %v3901
    %4282 = vmatpush.bf16.msra.mxu0 %v3894
    %4283 = vmatpush.bf16.msra.mxu0 %v3887
    %4284 = vmatpush.bf16.msra.mxu0 %v3880
    %4285 = vmatpush.bf16.msra.mxu0 %v3873
    %4286 = vmatpush.bf16.msra.mxu0 %v3866
    %4287 = vmatpush.bf16.msra.mxu0 %v3859
    %4288 = vmatmul.bf16.gmra.mxu0 %v2712
    %v4289 = vpop.f32.mrf.mxu0
    %v4290 = vadd.f32 %v4277, %v4289
    %v4291 = vpop.f32.mrf.mxu0
    %4292 = vdwg.mxu0
    %4293 = vmatpush.bf16.msra.mxu0 %v3741
    %4294 = vmatpush.bf16.msra.mxu0 %v3734
    %4295 = vmatpush.bf16.msra.mxu0 %v3727
    %4296 = vmatpush.bf16.msra.mxu0 %v3720
    %4297 = vmatpush.bf16.msra.mxu0 %v3713
    %4298 = vmatpush.bf16.msra.mxu0 %v3706
    %4299 = vmatpush.bf16.msra.mxu0 %v3699
    %4300 = vmatpush.bf16.msra.mxu0 %v3692
    %4301 = vmatmul.bf16.gmra.mxu0 %v2709
    %v4302 = vpop.f32.mrf.mxu0
    %v4303 = vadd.f32 %v2974, %v4302
    %v4304 = vpop.f32.mrf.mxu0
    %4305 = vdwg.mxu0
    %4306 = vmatpush.bf16.msra.mxu0 %v3797
    %4307 = vmatpush.bf16.msra.mxu0 %v3790
    %4308 = vmatpush.bf16.msra.mxu0 %v3783
    %4309 = vmatpush.bf16.msra.mxu0 %v3776
    %4310 = vmatpush.bf16.msra.mxu0 %v3769
    %4311 = vmatpush.bf16.msra.mxu0 %v3762
    %4312 = vmatpush.bf16.msra.mxu0 %v3755
    %4313 = vmatpush.bf16.msra.mxu0 %v3748
    %4314 = vmatmul.bf16.gmra.mxu0 %v2710
    %v4315 = vpop.f32.mrf.mxu0
    %v4316 = vadd.f32 %v4303, %v4315
    %v4317 = vpop.f32.mrf.mxu0
    %4318 = vdwg.mxu0
    %4319 = vmatpush.bf16.msra.mxu0 %v3853
    %4320 = vmatpush.bf16.msra.mxu0 %v3846
    %4321 = vmatpush.bf16.msra.mxu0 %v3839
    %4322 = vmatpush.bf16.msra.mxu0 %v3832
    %4323 = vmatpush.bf16.msra.mxu0 %v3825
    %4324 = vmatpush.bf16.msra.mxu0 %v3818
    %4325 = vmatpush.bf16.msra.mxu0 %v3811
    %4326 = vmatpush.bf16.msra.mxu0 %v3804
    %4327 = vmatmul.bf16.gmra.mxu0 %v2711
    %v4328 = vpop.f32.mrf.mxu0
    %v4329 = vadd.f32 %v4316, %v4328
    %v4330 = vpop.f32.mrf.mxu0
    %4331 = vdwg.mxu0
    %4332 = vmatpush.bf16.msra.mxu0 %v3909
    %4333 = vmatpush.bf16.msra.mxu0 %v3902
    %4334 = vmatpush.bf16.msra.mxu0 %v3895
    %4335 = vmatpush.bf16.msra.mxu0 %v3888
    %4336 = vmatpush.bf16.msra.mxu0 %v3881
    %4337 = vmatpush.bf16.msra.mxu0 %v3874
    %4338 = vmatpush.bf16.msra.mxu0 %v3867
    %4339 = vmatpush.bf16.msra.mxu0 %v3860
    %4340 = vmatmul.bf16.gmra.mxu0 %v2712
    %v4341 = vpop.f32.mrf.mxu0
    %v4342 = vadd.f32 %v4329, %v4341
    %v4343 = vpop.f32.mrf.mxu0
    %4344 = vdwg.mxu0
    %4345 = vmatpush.bf16.msra.mxu0 %v3742
    %4346 = vmatpush.bf16.msra.mxu0 %v3735
    %4347 = vmatpush.bf16.msra.mxu0 %v3728
    %4348 = vmatpush.bf16.msra.mxu0 %v3721
    %4349 = vmatpush.bf16.msra.mxu0 %v3714
    %4350 = vmatpush.bf16.msra.mxu0 %v3707
    %4351 = vmatpush.bf16.msra.mxu0 %v3700
    %4352 = vmatpush.bf16.msra.mxu0 %v3693
    %4353 = vmatmul.bf16.gmra.mxu0 %v2709
    %v4354 = vpop.f32.mrf.mxu0
    %v4355 = vadd.f32 %v2975, %v4354
    %v4356 = vpop.f32.mrf.mxu0
    %4357 = vdwg.mxu0
    %4358 = vmatpush.bf16.msra.mxu0 %v3798
    %4359 = vmatpush.bf16.msra.mxu0 %v3791
    %4360 = vmatpush.bf16.msra.mxu0 %v3784
    %4361 = vmatpush.bf16.msra.mxu0 %v3777
    %4362 = vmatpush.bf16.msra.mxu0 %v3770
    %4363 = vmatpush.bf16.msra.mxu0 %v3763
    %4364 = vmatpush.bf16.msra.mxu0 %v3756
    %4365 = vmatpush.bf16.msra.mxu0 %v3749
    %4366 = vmatmul.bf16.gmra.mxu0 %v2710
    %v4367 = vpop.f32.mrf.mxu0
    %v4368 = vadd.f32 %v4355, %v4367
    %v4369 = vpop.f32.mrf.mxu0
    %4370 = vdwg.mxu0
    %4371 = vmatpush.bf16.msra.mxu0 %v3854
    %4372 = vmatpush.bf16.msra.mxu0 %v3847
    %4373 = vmatpush.bf16.msra.mxu0 %v3840
    %4374 = vmatpush.bf16.msra.mxu0 %v3833
    %4375 = vmatpush.bf16.msra.mxu0 %v3826
    %4376 = vmatpush.bf16.msra.mxu0 %v3819
    %4377 = vmatpush.bf16.msra.mxu0 %v3812
    %4378 = vmatpush.bf16.msra.mxu0 %v3805
    %4379 = vmatmul.bf16.gmra.mxu0 %v2711
    %v4380 = vpop.f32.mrf.mxu0
    %v4381 = vadd.f32 %v4368, %v4380
    %v4382 = vpop.f32.mrf.mxu0
    %4383 = vdwg.mxu0
    %4384 = vmatpush.bf16.msra.mxu0 %v3910
    %4385 = vmatpush.bf16.msra.mxu0 %v3903
    %4386 = vmatpush.bf16.msra.mxu0 %v3896
    %4387 = vmatpush.bf16.msra.mxu0 %v3889
    %4388 = vmatpush.bf16.msra.mxu0 %v3882
    %4389 = vmatpush.bf16.msra.mxu0 %v3875
    %4390 = vmatpush.bf16.msra.mxu0 %v3868
    %4391 = vmatpush.bf16.msra.mxu0 %v3861
    %4392 = vmatmul.bf16.gmra.mxu0 %v2712
    %v4393 = vpop.f32.mrf.mxu0
    %v4394 = vadd.f32 %v4381, %v4393
    %v4395 = vpop.f32.mrf.mxu0
    %4396 = vdwg.mxu0
    %4397 = vmatpush.bf16.msra.mxu0 %v3743
    %4398 = vmatpush.bf16.msra.mxu0 %v3736
    %4399 = vmatpush.bf16.msra.mxu0 %v3729
    %4400 = vmatpush.bf16.msra.mxu0 %v3722
    %4401 = vmatpush.bf16.msra.mxu0 %v3715
    %4402 = vmatpush.bf16.msra.mxu0 %v3708
    %4403 = vmatpush.bf16.msra.mxu0 %v3701
    %4404 = vmatpush.bf16.msra.mxu0 %v3694
    %4405 = vmatmul.bf16.gmra.mxu0 %v2709
    %v4406 = vpop.f32.mrf.mxu0
    %v4407 = vadd.f32 %v2976, %v4406
    %v4408 = vpop.f32.mrf.mxu0
    %4409 = vdwg.mxu0
    %4410 = vmatpush.bf16.msra.mxu0 %v3799
    %4411 = vmatpush.bf16.msra.mxu0 %v3792
    %4412 = vmatpush.bf16.msra.mxu0 %v3785
    %4413 = vmatpush.bf16.msra.mxu0 %v3778
    %4414 = vmatpush.bf16.msra.mxu0 %v3771
    %4415 = vmatpush.bf16.msra.mxu0 %v3764
    %4416 = vmatpush.bf16.msra.mxu0 %v3757
    %4417 = vmatpush.bf16.msra.mxu0 %v3750
    %4418 = vmatmul.bf16.gmra.mxu0 %v2710
    %v4419 = vpop.f32.mrf.mxu0
    %v4420 = vadd.f32 %v4407, %v4419
    %v4421 = vpop.f32.mrf.mxu0
    %4422 = vdwg.mxu0
    %4423 = vmatpush.bf16.msra.mxu0 %v3855
    %4424 = vmatpush.bf16.msra.mxu0 %v3848
    %4425 = vmatpush.bf16.msra.mxu0 %v3841
    %4426 = vmatpush.bf16.msra.mxu0 %v3834
    %4427 = vmatpush.bf16.msra.mxu0 %v3827
    %4428 = vmatpush.bf16.msra.mxu0 %v3820
    %4429 = vmatpush.bf16.msra.mxu0 %v3813
    %4430 = vmatpush.bf16.msra.mxu0 %v3806
    %4431 = vmatmul.bf16.gmra.mxu0 %v2711
    %v4432 = vpop.f32.mrf.mxu0
    %v4433 = vadd.f32 %v4420, %v4432
    %v4434 = vpop.f32.mrf.mxu0
    %4435 = vdwg.mxu0
    %4436 = vmatpush.bf16.msra.mxu0 %v3911
    %4437 = vmatpush.bf16.msra.mxu0 %v3904
    %4438 = vmatpush.bf16.msra.mxu0 %v3897
    %4439 = vmatpush.bf16.msra.mxu0 %v3890
    %4440 = vmatpush.bf16.msra.mxu0 %v3883
    %4441 = vmatpush.bf16.msra.mxu0 %v3876
    %4442 = vmatpush.bf16.msra.mxu0 %v3869
    %4443 = vmatpush.bf16.msra.mxu0 %v3862
    %4444 = vmatmul.bf16.gmra.mxu0 %v2712
    %v4445 = vpop.f32.mrf.mxu0
    %v4446 = vadd.f32 %v4433, %v4445
    %v4447 = vpop.f32.mrf.mxu0
    %4448 = vdwg.mxu0
    %4449 = vmatpush.bf16.msra.mxu0 %v3744
    %4450 = vmatpush.bf16.msra.mxu0 %v3737
    %4451 = vmatpush.bf16.msra.mxu0 %v3730
    %4452 = vmatpush.bf16.msra.mxu0 %v3723
    %4453 = vmatpush.bf16.msra.mxu0 %v3716
    %4454 = vmatpush.bf16.msra.mxu0 %v3709
    %4455 = vmatpush.bf16.msra.mxu0 %v3702
    %4456 = vmatpush.bf16.msra.mxu0 %v3695
    %4457 = vmatmul.bf16.gmra.mxu0 %v2709
    %v4458 = vpop.f32.mrf.mxu0
    %v4459 = vadd.f32 %v2977, %v4458
    %v4460 = vpop.f32.mrf.mxu0
    %4461 = vdwg.mxu0
    %4462 = vmatpush.bf16.msra.mxu0 %v3800
    %4463 = vmatpush.bf16.msra.mxu0 %v3793
    %4464 = vmatpush.bf16.msra.mxu0 %v3786
    %4465 = vmatpush.bf16.msra.mxu0 %v3779
    %4466 = vmatpush.bf16.msra.mxu0 %v3772
    %4467 = vmatpush.bf16.msra.mxu0 %v3765
    %4468 = vmatpush.bf16.msra.mxu0 %v3758
    %4469 = vmatpush.bf16.msra.mxu0 %v3751
    %4470 = vmatmul.bf16.gmra.mxu0 %v2710
    %v4471 = vpop.f32.mrf.mxu0
    %v4472 = vadd.f32 %v4459, %v4471
    %v4473 = vpop.f32.mrf.mxu0
    %4474 = vdwg.mxu0
    %4475 = vmatpush.bf16.msra.mxu0 %v3856
    %4476 = vmatpush.bf16.msra.mxu0 %v3849
    %4477 = vmatpush.bf16.msra.mxu0 %v3842
    %4478 = vmatpush.bf16.msra.mxu0 %v3835
    %4479 = vmatpush.bf16.msra.mxu0 %v3828
    %4480 = vmatpush.bf16.msra.mxu0 %v3821
    %4481 = vmatpush.bf16.msra.mxu0 %v3814
    %4482 = vmatpush.bf16.msra.mxu0 %v3807
    %4483 = vmatmul.bf16.gmra.mxu0 %v2711
    %v4484 = vpop.f32.mrf.mxu0
    %v4485 = vadd.f32 %v4472, %v4484
    %v4486 = vpop.f32.mrf.mxu0
    %4487 = vdwg.mxu0
    %4488 = vmatpush.bf16.msra.mxu0 %v3912
    %4489 = vmatpush.bf16.msra.mxu0 %v3905
    %4490 = vmatpush.bf16.msra.mxu0 %v3898
    %4491 = vmatpush.bf16.msra.mxu0 %v3891
    %4492 = vmatpush.bf16.msra.mxu0 %v3884
    %4493 = vmatpush.bf16.msra.mxu0 %v3877
    %4494 = vmatpush.bf16.msra.mxu0 %v3870
    %4495 = vmatpush.bf16.msra.mxu0 %v3863
    %4496 = vmatmul.bf16.gmra.mxu0 %v2712
    %v4497 = vpop.f32.mrf.mxu0
    %v4498 = vadd.f32 %v4485, %v4497
    %v4499 = vpop.f32.mrf.mxu0
    %4500 = vdwg.mxu0
    %v4501 = vxor.u32 %v4186, 2147483648
    %v4502 = vxor.u32 %v4238, 2147483648
    %v4503 = vxor.u32 %v4290, 2147483648
    %v4504 = vxor.u32 %v4342, 2147483648
    %v4505 = vxor.u32 %v4394, 2147483648
    %v4506 = vxor.u32 %v4446, 2147483648
    %v4507 = vxor.u32 %v4498, 2147483648
    %v4508 = vmul.f32 %v4501, 1.442695
    %v4509 = vpow.pop %v4508
    %v4510 = vmul.f32 %v4502, 1.442695
    %v4511 = vpow.pop %v4510
    %v4512 = vmul.f32 %v4503, 1.442695
    %v4513 = vpow.pop %v4512
    %v4514 = vmul.f32 %v4504, 1.442695
    %v4515 = vpow.pop %v4514
    %v4516 = vmul.f32 %v4505, 1.442695
    %v4517 = vpow.pop %v4516
    %v4518 = vmul.f32 %v4506, 1.442695
    %v4519 = vpow.pop %v4518
    %v4520 = vmul.f32 %v4507, 1.442695
    %v4521 = vpow.pop %v4520
    %v4522 = vadd.f32 %v4509, 1.0
    %v4523 = vadd.f32 %v4511, 1.0
    %v4524 = vadd.f32 %v4513, 1.0
    %v4525 = vadd.f32 %v4515, 1.0
    %v4526 = vadd.f32 %v4517, 1.0
    %v4527 = vadd.f32 %v4519, 1.0
    %v4528 = vadd.f32 %v4521, 1.0
    %v4529 = vrcp.pop %v4522
    %v4530 = vmul.f32 %v4522, %v4529
    %v4531 = vsub.f32 1.0, %v4530
    %v4532 = vmul.f32 %v4529, %v4531
    %v4533 = vadd.f32 %v4529, %v4532
    %vm4534 = vweird.f32 %v4522
    %vm4535 = vweird.f32 %v4529
    %vm4536 = vmor %vm4534, %vm4535
    %v4537 = vsel %vm4536, %v4529, %v4533
    %v4538 = vand.u32 2147483647, %v4522
    %vm4539 = vcmp.eq.f32.partialorder %v4538, 8.507059e+37
    %v4540 = vand.u32 %v4522, 2147483648
    %v4541 = vor.u32 1.1754944e-38, %v4540
    %v4542 = vsel %vm4539, %v4541, %v4537
    %v4543 = vmul.f32 1.0, %v4542
    %v4544 = vrcp.pop %v4523
    %v4545 = vmul.f32 %v4523, %v4544
    %v4546 = vsub.f32 1.0, %v4545
    %v4547 = vmul.f32 %v4544, %v4546
    %v4548 = vadd.f32 %v4544, %v4547
    %vm4549 = vweird.f32 %v4523
    %vm4550 = vweird.f32 %v4544
    %vm4551 = vmor %vm4549, %vm4550
    %v4552 = vsel %vm4551, %v4544, %v4548
    %v4553 = vand.u32 2147483647, %v4523
    %vm4554 = vcmp.eq.f32.partialorder %v4553, 8.507059e+37
    %v4555 = vand.u32 %v4523, 2147483648
    %v4556 = vor.u32 1.1754944e-38, %v4555
    %v4557 = vsel %vm4554, %v4556, %v4552
    %v4558 = vmul.f32 1.0, %v4557
    %v4559 = vrcp.pop %v4524
    %v4560 = vmul.f32 %v4524, %v4559
    %v4561 = vsub.f32 1.0, %v4560
    %v4562 = vmul.f32 %v4559, %v4561
    %v4563 = vadd.f32 %v4559, %v4562
    %vm4564 = vweird.f32 %v4524
    %vm4565 = vweird.f32 %v4559
    %vm4566 = vmor %vm4564, %vm4565
    %v4567 = vsel %vm4566, %v4559, %v4563
    %v4568 = vand.u32 2147483647, %v4524
    %vm4569 = vcmp.eq.f32.partialorder %v4568, 8.507059e+37
    %v4570 = vand.u32 %v4524, 2147483648
    %v4571 = vor.u32 1.1754944e-38, %v4570
    %v4572 = vsel %vm4569, %v4571, %v4567
    %v4573 = vmul.f32 1.0, %v4572
    %v4574 = vrcp.pop %v4525
    %v4575 = vmul.f32 %v4525, %v4574
    %v4576 = vsub.f32 1.0, %v4575
    %v4577 = vmul.f32 %v4574, %v4576
    %v4578 = vadd.f32 %v4574, %v4577
    %vm4579 = vweird.f32 %v4525
    %vm4580 = vweird.f32 %v4574
    %vm4581 = vmor %vm4579, %vm4580
    %v4582 = vsel %vm4581, %v4574, %v4578
    %v4583 = vand.u32 2147483647, %v4525
    %vm4584 = vcmp.eq.f32.partialorder %v4583, 8.507059e+37
    %v4585 = vand.u32 %v4525, 2147483648
    %v4586 = vor.u32 1.1754944e-38, %v4585
    %v4587 = vsel %vm4584, %v4586, %v4582
    %v4588 = vmul.f32 1.0, %v4587
    %v4589 = vrcp.pop %v4526
    %v4590 = vmul.f32 %v4526, %v4589
    %v4591 = vsub.f32 1.0, %v4590
    %v4592 = vmul.f32 %v4589, %v4591
    %v4593 = vadd.f32 %v4589, %v4592
    %vm4594 = vweird.f32 %v4526
    %vm4595 = vweird.f32 %v4589
    %vm4596 = vmor %vm4594, %vm4595
    %v4597 = vsel %vm4596, %v4589, %v4593
    %v4598 = vand.u32 2147483647, %v4526
    %vm4599 = vcmp.eq.f32.partialorder %v4598, 8.507059e+37
    %v4600 = vand.u32 %v4526, 2147483648
    %v4601 = vor.u32 1.1754944e-38, %v4600
    %v4602 = vsel %vm4599, %v4601, %v4597
    %v4603 = vmul.f32 1.0, %v4602
    %v4604 = vrcp.pop %v4527
    %v4605 = vmul.f32 %v4527, %v4604
    %v4606 = vsub.f32 1.0, %v4605
    %v4607 = vmul.f32 %v4604, %v4606
    %v4608 = vadd.f32 %v4604, %v4607
    %vm4609 = vweird.f32 %v4527
    %vm4610 = vweird.f32 %v4604
    %vm4611 = vmor %vm4609, %vm4610
    %v4612 = vsel %vm4611, %v4604, %v4608
    %v4613 = vand.u32 2147483647, %v4527
    %vm4614 = vcmp.eq.f32.partialorder %v4613, 8.507059e+37
    %v4615 = vand.u32 %v4527, 2147483648
    %v4616 = vor.u32 1.1754944e-38, %v4615
    %v4617 = vsel %vm4614, %v4616, %v4612
    %v4618 = vmul.f32 1.0, %v4617
    %v4619 = vrcp.pop %v4528
    %v4620 = vmul.f32 %v4528, %v4619
    %v4621 = vsub.f32 1.0, %v4620
    %v4622 = vmul.f32 %v4619, %v4621
    %v4623 = vadd.f32 %v4619, %v4622
    %vm4624 = vweird.f32 %v4528
    %vm4625 = vweird.f32 %v4619
    %vm4626 = vmor %vm4624, %vm4625
    %v4627 = vsel %vm4626, %v4619, %v4623
    %v4628 = vand.u32 2147483647, %v4528
    %vm4629 = vcmp.eq.f32.partialorder %v4628, 8.507059e+37
    %v4630 = vand.u32 %v4528, 2147483648
    %v4631 = vor.u32 1.1754944e-38, %v4630
    %v4632 = vsel %vm4629, %v4631, %v4627
    %v4633 = vmul.f32 1.0, %v4632
    %4634 = vst [vmem:[#allocation14] sm:$0xff] %v4543
    %4635 = vst [vmem:[#allocation14 + $0x8] sm:$0xff] %v4558
    %4636 = vst [vmem:[#allocation14 + $0x10] sm:$0xff] %v4573
    %4637 = vst [vmem:[#allocation14 + $0x18] sm:$0xff] %v4588
    %4638 = vst [vmem:[#allocation14 + $0x20] sm:$0xff] %v4603
    %4639 = vst [vmem:[#allocation14 + $0x28] sm:$0xff] %v4618
    %4640 = vst [vmem:[#allocation14 + $0x30] sm:$0xff] %v4633
    // Predicated region
    $region58: #{tpu_custom_call.1} parent=1 // pred_check
      _
    $region59: #{tpu_custom_call.1} parent=1 // pred_check_branch
      %4642 = sbr.rel (0) target = $region61
    $region60: #{tpu_custom_call.1} parent=1 // pred_region
      %4644 = vsyncadd [#allocation4], 0
      %s4646 = sshll.u32 [#allocation14], 4
      %s4647 = int_to_ptr.vmem [resolvable:$true] %s4646
      %s4648 = sshll.u32 %s7, 4
      %s4649 = int_to_ptr.hbm [resolvable:$true] %s4648
      %4651 = dma.vmem_to_hbm [thread:$0]  %s4647, 896, %s4649, [#allocation4]
    $region61: #{tpu_custom_call.1} parent=1 // pred_fallthru
      _
    // Predicated region
    $region62: #{tpu_custom_call.1} parent=1 // pred_check
      _
    $region63: #{tpu_custom_call.1} parent=1 // pred_check_branch
      %4653 = sbr.rel (0) target = $region65
    $region64: #{tpu_custom_call.1} parent=1 // pred_region
      %4655 = dma.done [#allocation4], 896
    $region65: #{tpu_custom_call.1} parent=1 // pred_fallthru
      _
    %4656 = vsyncpa [#allocation3], 1
    %4657 = vsyncpa [#allocation6], 1
    %4658 = vsyncpa [#allocation9], 1
    %4659 = vsyncpa [#allocation12], 1
    %4660 = vsyncpa [#allocation4], 1

</llo_original>
